<compile_context>
chip_gen: v6e
topology: v6e:2x2x1
jax: 0.10.0
libtpu: 0.0.40
codegen_flags: <defaults>
</compile_context>

<pallas_src>
import functools
import math

import jax
import jax.numpy as jnp
from jax import lax
from jax.experimental import pallas as pl
from jax.experimental.pallas import tpu as pltpu

D_MODEL = 10
N_HEADS = 2
HEAD_DIM = D_MODEL // N_HEADS
DIM_FF = 20
MLP_EMB_HID = 10
MLP_DEC_HID = 12
LN_EPS = 1e-5
_LOG_2PI = math.log(2.0 * math.pi)

_SLAB_COLS = 128
_VMEM = pl.BlockSpec(memory_space=pltpu.MemorySpace.VMEM)


# --------------------------- single-slab weight layout ---------------------------

def _make_slab_layout():
    D, F, H1, H2 = D_MODEL, DIM_FF, MLP_EMB_HID, MLP_DEC_HID
    entries = [
        ('emb_w1', (1, H1)), ('emb_b1', (1, H1)),
        ('emb_w2', (H1, H1)), ('emb_b2', (1, H1)),
        ('emb_w3', (H1, D)), ('emb_b3', (1, D)),
        ('sa_wq', (D, D)), ('sa_bq', (1, D)),
        ('sa_wk', (D, D)), ('sa_bk', (1, D)),
        ('sa_wv', (D, D)), ('sa_bv', (1, D)),
        ('sa_wo', (D, D)), ('sa_bo', (1, D)),
        ('ca_wq', (D, D)), ('ca_bq', (1, D)),
        ('ca_wk', (D, D)), ('ca_bk', (1, D)),
        ('ca_wv', (D, D)), ('ca_bv', (1, D)),
        ('ca_wo_h0', (D, D)), ('ca_wo_h1', (D, D)), ('ca_bo', (1, D)),
        ('ln1_w', (1, D)), ('ln1_b', (1, D)),
        ('ln2_w', (1, D)), ('ln2_b', (1, D)),
        ('ln3_w', (1, D)), ('ln3_b', (1, D)),
        ('ff_w1', (D, F)), ('ff_b1', (1, F)),
        ('ff_w2', (F, D)), ('ff_b2', (1, D)),
        ('mu_w1', (D, H2)), ('mu_b1', (1, H2)), ('mu_w2', (H2, 1)), ('mu_b2', (1, 1)),
        ('sg_w1', (D, H2)), ('sg_b1', (1, H2)), ('sg_w2', (H2, 1)), ('sg_b2', (1, 1)),
        ('mp_w1', (D, H2)), ('mp_b1', (1, H2)), ('mp_w2', (H2, 1)), ('mp_b2', (1, 1)),
        ('head_map', (D, N_HEADS)), ('head_expand', (N_HEADS, D)),
        ('mask_h0', (1, D)), ('mask_h1', (1, D)),
        ('start', (1, D)),
    ]
    layout, off = {}, 0
    for name, (r, c) in entries:
        layout[name] = (off, r, c)
        off += r
    rows = ((off + 7) // 8) * 8
    return layout, rows


_LAYOUT, _SLAB_ROWS = _make_slab_layout()


# ------------------------------ the fused kernel ------------------------------

def fused_forward_kernel(obs_ref, theta_ref, slab_ref, loss_ref, *, B, S, K):
    D = D_MODEL

    def W(name):
        off, r, c = _LAYOUT[name]
        return slab_ref[pl.ds(off, r), pl.ds(0, c)]

    def lin(x, wname, bname):
        return jnp.dot(x, W(wname), preferred_element_type=jnp.float32) + W(bname)

    def layer_norm(x, wname, bname):
        m = jnp.mean(x, axis=-1, keepdims=True)
        c = x - m
        v = jnp.mean(c * c, axis=-1, keepdims=True)
        return c * lax.rsqrt(v + LN_EPS) * W(wname) + W(bname)

    theta = theta_ref[...]                                    # (B, 1)

    # ---- embed_obs MLP: Linear(1,10)+ReLU, Linear(10,10)+ReLU, Linear(10,10) ----
    obs = obs_ref[...]                                        # (B*S, 1)
    h = jnp.maximum(obs * W('emb_w1') + W('emb_b1'), 0.0)     # (B*S, 10)
    h = jnp.maximum(lin(h, 'emb_w2', 'emb_b2'), 0.0)
    mem = lin(h, 'emb_w3', 'emb_b3')                          # (B*S, D)

    # ---- loop-invariant cross-attention K/V (keys transposed exactly ONCE) ----
    k_mem_t = jnp.transpose(lin(mem, 'ca_wk', 'ca_bk').reshape(B, S, D), (0, 2, 1))
    v_mem = lin(mem, 'ca_wv', 'ca_bv').reshape(B, S, D)       # (B, S, D)

    # ---- start token: the S identical prefix copies are collapsed analytically ----
    start = W('start')                                        # (1, D)
    k_start = lin(start, 'sa_wk', 'sa_bk')                    # (1, D)
    v_start = lin(start, 'sa_wv', 'sa_bv')                    # (1, D)
    log_s = math.log(float(S))

    x_last = jnp.broadcast_to(start, (B, D))                  # last so_far token (step-0 query)
    gen_k, gen_v = [], []       # self-attn K/V of the <= K-1 generated tokens
    a_list, logmp_list = [], []

    for k in range(K):
        # K/V of the token generated last step joins the self-attention context.
        if k > 0:
            gen_k.append(lin(x_last, 'sa_wk', 'sa_bk'))
            gen_v.append(lin(x_last, 'sa_wv', 'sa_bv'))

        # --- self-attention (single query = last so_far token) ---
        q = lin(x_last, 'sa_wq', 'sa_bq')                     # 1/sqrt(head_dim) pre-folded
        hmap, hexp = W('head_map'), W('head_expand')
        s_start = jnp.dot(q * k_start, hmap,
                          preferred_element_type=jnp.float32) + log_s  # +log(S): multiplicity
        s_gen = [jnp.dot(q * kj, hmap, preferred_element_type=jnp.float32)
                 for kj in gen_k]
        m = s_start
        for s in s_gen:
            m = jnp.maximum(m, s)
        e_start = jnp.exp(s_start - m)
        e_gen = [jnp.exp(s - m) for s in s_gen]
        z = e_start
        for e in e_gen:
            z = z + e
        inv = pl.reciprocal(z, approx=True)                   # (B, N_HEADS)
        o = jnp.dot(e_start, hexp, preferred_element_type=jnp.float32) * v_start
        for e, vj in zip(e_gen, gen_v):
            o = o + jnp.dot(e, hexp, preferred_element_type=jnp.float32) * vj
        o = o * jnp.dot(inv, hexp, preferred_element_type=jnp.float32)
        sa = jnp.dot(o, W('sa_wo'), preferred_element_type=jnp.float32) + W('sa_bo')
        x1 = layer_norm(x_last + sa, 'ln1_w', 'ln1_b')

        # --- cross-attention against the pre-transposed memory keys ---
        qc3 = lin(x1, 'ca_wq', 'ca_bq').reshape(B, 1, D)      # scale pre-folded

        def head_attend(mask_name):
            s = jnp.einsum('bqd,bdt->bqt', qc3 * W(mask_name), k_mem_t,
                           preferred_element_type=jnp.float32)        # (B, 1, S)
            mm = jnp.max(s, axis=-1, keepdims=True)
            p = jnp.exp(s - mm)
            p = p * pl.reciprocal(jnp.sum(p, axis=-1, keepdims=True), approx=True)
            return jnp.einsum('bqt,btd->bqd', p, v_mem,
                              preferred_element_type=jnp.float32).reshape(B, D)

        ca = (jnp.dot(head_attend('mask_h0'), W('ca_wo_h0'),
                      preferred_element_type=jnp.float32)
              + jnp.dot(head_attend('mask_h1'), W('ca_wo_h1'),
                        preferred_element_type=jnp.float32)
              + W('ca_bo'))
        x2 = layer_norm(x1 + ca, 'ln2_w', 'ln2_b')

        # --- feed-forward ---
        hf = jnp.maximum(lin(x2, 'ff_w1', 'ff_b1'), 0.0)
        x3 = layer_norm(x2 + lin(hf, 'ff_w2', 'ff_b2'), 'ln3_w', 'ln3_b')

        # --- decode heads; keep log-sigma / log-mixp logits (no exp<->log round trips) ---
        y_mu = lin(jnp.maximum(lin(x3, 'mu_w1', 'mu_b1'), 0.0), 'mu_w2', 'mu_b2')
        y_sg = lin(jnp.maximum(lin(x3, 'sg_w1', 'sg_b1'), 0.0), 'sg_w2', 'sg_b2')
        y_mp = lin(jnp.maximum(lin(x3, 'mp_w1', 'mp_b1'), 0.0), 'mp_w2', 'mp_b2')
        mu = jnp.tanh(y_mu) * 10.0
        zed = (theta - mu) * jnp.exp(-y_sg)
        a_list.append(-0.5 * zed * zed - y_sg - 0.5 * _LOG_2PI + y_mp)
        logmp_list.append(y_mp)
        x_last = x3            # "append to so_far"; .detach() is a forward-pass no-op

    # ---- mixture NLL: -mean_b [ lse_k(normal_lp_k + log mixp_k) - lse_k(log mixp_k) ] ----
    def lse(xs):
        m = xs[0]
        for x in xs[1:]:
            m = jnp.maximum(m, x)
        s = jnp.zeros_like(m)
        for x in xs:
            s = s + jnp.exp(x - m)
        return m + jnp.log(s)

    per_example = lse(a_list) - lse(logmp_list)               # (B, 1)
    loss_ref[...] = -(jnp.sum(per_example, axis=0, keepdims=True) * (1.0 / B))


# -------------------------------- wrappers ------------------------------------

def pack_params(p):
    """One-time host-side packing: pre-transpose to (Din, Dout), fold attention
    scales, split the cross-attn out-projection per head, and pack everything into
    a single (rows, 128) f32 slab (one HBM->VMEM DMA per forward)."""
    D = D_MODEL
    scale = 1.0 / math.sqrt(HEAD_DIM)

    def t(w):  # PyTorch (Dout, Din) -> (Din, Dout)
        return jnp.asarray(w, jnp.float32).T

    head_map = jnp.zeros((D, N_HEADS), jnp.float32)
    for hh in range(N_HEADS):
        head_map = head_map.at[hh * HEAD_DIM:(hh + 1) * HEAD_DIM, hh].set(1.0)
    head_expand = head_map.T
    mask_h0 = head_map[:, 0].reshape(1, D)
    mask_h1 = head_map[:, 1].reshape(1, D)
    ca_wo_t = t(p['ca_wo'])

    entries = {
        'emb_w1': t(p['emb_w1']), 'emb_b1': p['emb_b1'],
        'emb_w2': t(p['emb_w2']), 'emb_b2': p['emb_b2'],
        'emb_w3': t(p['emb_w3']), 'emb_b3': p['emb_b3'],
        'sa_wq': t(p['sa_wq']) * scale, 'sa_bq': p['sa_bq'] * scale,
        'sa_wk': t(p['sa_wk']), 'sa_bk': p['sa_bk'],
        'sa_wv': t(p['sa_wv']), 'sa_bv': p['sa_bv'],
        'sa_wo': t(p['sa_wo']), 'sa_bo': p['sa_bo'],
        'ca_wq': t(p['ca_wq']) * scale, 'ca_bq': p['ca_bq'] * scale,
        'ca_wk': t(p['ca_wk']), 'ca_bk': p['ca_bk'],
        'ca_wv': t(p['ca_wv']), 'ca_bv': p['ca_bv'],
        'ca_wo_h0': ca_wo_t * mask_h0.reshape(D, 1),
        'ca_wo_h1': ca_wo_t * mask_h1.reshape(D, 1),
        'ca_bo': p['ca_bo'],
        'ln1_w': p['ln1_w'], 'ln1_b': p['ln1_b'],
        'ln2_w': p['ln2_w'], 'ln2_b': p['ln2_b'],
        'ln3_w': p['ln3_w'], 'ln3_b': p['ln3_b'],
        'ff_w1': t(p['ff_w1']), 'ff_b1': p['ff_b1'],
        'ff_w2': t(p['ff_w2']), 'ff_b2': p['ff_b2'],
        'mu_w1': t(p['mu_w1']), 'mu_b1': p['mu_b1'],
        'mu_w2': t(p['mu_w2']), 'mu_b2': p['mu_b2'],
        'sg_w1': t(p['sigma_w1']), 'sg_b1': p['sigma_b1'],
        'sg_w2': t(p['sigma_w2']), 'sg_b2': p['sigma_b2'],
        'mp_w1': t(p['mixp_w1']), 'mp_b1': p['mixp_b1'],
        'mp_w2': t(p['mixp_w2']), 'mp_b2': p['mixp_b2'],
        'head_map': head_map, 'head_expand': head_expand,
        'mask_h0': mask_h0, 'mask_h1': mask_h1,
        'start': jnp.asarray(p['start'], jnp.float32).reshape(1, D),
    }

    slab = jnp.zeros((_SLAB_ROWS, _SLAB_COLS), jnp.float32)
    for name, (off, r, c) in _LAYOUT.items():
        slab = slab.at[off:off + r, 0:c].set(
            jnp.asarray(entries[name], jnp.float32).reshape(r, c))
    return slab


@functools.partial(jax.jit, static_argnames=('num_mixtures',))
def seq_gauss_mix_posterior_forward(theta, obs, slab, num_mixtures):
    assert num_mixtures >= 1
    B, S, _ = obs.shape
    kern = functools.partial(fused_forward_kernel, B=B, S=S, K=num_mixtures)
    loss = pl.pallas_call(
        kern,
        out_shape=jax.ShapeDtypeStruct((1, 1), jnp.float32),
        in_specs=[_VMEM, _VMEM, _VMEM],
        out_specs=_VMEM,
    )(obs.reshape(B * S, 1).astype(jnp.float32),
      theta.reshape(B, 1).astype(jnp.float32),
      slab.astype(jnp.float32))
    return loss[0, 0]


# ------------------------------ parameter init --------------------------------

def init_params(key):
    keys = iter(jax.random.split(key, 64))

    def nrm(shape, scale=0.3):
        return (scale * jax.random.normal(next(keys), shape)).astype(jnp.float32)

    p = {}
    # embed_obs MLP (PyTorch layout: weight (Dout, Din), bias (1, Dout))
    p['emb_w1'] = nrm((MLP_EMB_HID, 1))
    p['emb_b1'] = nrm((1, MLP_EMB_HID))
    p['emb_w2'] = nrm((MLP_EMB_HID, MLP_EMB_HID))
    p['emb_b2'] = nrm((1, MLP_EMB_HID))
    p['emb_w3'] = nrm((D_MODEL, MLP_EMB_HID))
    p['emb_b3'] = nrm((1, D_MODEL))
    # decode heads
    for name in ('mu', 'sigma', 'mixp'):
        p[f'{name}_w1'] = nrm((MLP_DEC_HID, D_MODEL))
        p[f'{name}_b1'] = nrm((1, MLP_DEC_HID))
        p[f'{name}_w2'] = nrm((1, MLP_DEC_HID))
        p[f'{name}_b2'] = nrm((1, 1))
    # transformer decoder layer (self- and cross-attention)
    for pre in ('sa', 'ca'):
        for nm in ('wq', 'wk', 'wv', 'wo'):
            p[f'{pre}_{nm}'] = nrm((D_MODEL, D_MODEL))
        for nm in ('bq', 'bk', 'bv', 'bo'):
            p[f'{pre}_{nm}'] = nrm((1, D_MODEL), 0.1)
    for i in (1, 2, 3):
        p[f'ln{i}_w'] = jnp.ones((1, D_MODEL), jnp.float32)
        p[f'ln{i}_b'] = jnp.zeros((1, D_MODEL), jnp.float32)
    p['ff_w1'] = nrm((DIM_FF, D_MODEL))
    p['ff_b1'] = nrm((1, DIM_FF), 0.1)
    p['ff_w2'] = nrm((D_MODEL, DIM_FF))
    p['ff_b2'] = nrm((1, D_MODEL), 0.1)
    # start token, torch.rand(1, 1, 10)
    p['start'] = jax.random.uniform(next(keys), (1, 1, D_MODEL), jnp.float32)
    return p


# ----------------------------------- main --------------------------------------

if __name__ == "__main__":
    key = jax.random.PRNGKey(0)
    k_param, k_obs, k_theta = jax.random.split(key, 3)

    B, S, NUM_MIXTURES = 2, 8, 3
    params = init_params(k_param)
    slab = jax.block_until_ready(pack_params(params))   # one-time packing, outside the forward
    obs = jax.random.normal(k_obs, (B, S, 1), jnp.float32)
    theta = jax.random.normal(k_theta, (B,), jnp.float32)

    loss = seq_gauss_mix_posterior_forward(theta, obs, slab,
                                           num_mixtures=NUM_MIXTURES)
    jax.block_until_ready(loss)
    assert loss.shape == () and bool(jnp.isfinite(loss))
    print("KERNEL_OK")
</pallas_src>

<mosaic_0001>
module attributes {stable_mosaic.version = 11 : i64} {
  func.func @fused_forward_kernel(%arg0: memref<16x1xf32, #tpu.memory_space<vmem>>, %arg1: memref<2x1xf32, #tpu.memory_space<vmem>>, %arg2: memref<248x128xf32, #tpu.memory_space<vmem>>, %arg3: memref<1x1xf32, #tpu.memory_space<vmem>>) attributes {dimension_semantics = [], scalar_prefetch = 0 : i64, scratch_operands = 0 : i64, tpu.core_type = #tpu.core_type<tc>} {
    %c0 = arith.constant 0 : index
    %c0_0 = arith.constant 0 : index
    %0 = vector.load %arg1[%c0, %c0_0] : memref<2x1xf32, #tpu.memory_space<vmem>>, vector<2x1xf32>
    %c0_1 = arith.constant 0 : index
    %c0_2 = arith.constant 0 : index
    %1 = vector.load %arg0[%c0_1, %c0_2] : memref<16x1xf32, #tpu.memory_space<vmem>>, vector<16x1xf32>
    %c0_3 = arith.constant 0 : index
    %c0_4 = arith.constant 0 : index
    %2 = vector.load %arg2[%c0_3, %c0_4] : memref<248x128xf32, #tpu.memory_space<vmem>>, vector<1x10xf32>
    %3 = vector.broadcast %1 : vector<16x1xf32> to vector<16x10xf32>
    %4 = vector.broadcast %2 : vector<1x10xf32> to vector<16x10xf32>
    %5 = arith.mulf %3, %4 : vector<16x10xf32>
    %c1 = arith.constant 1 : index
    %c0_5 = arith.constant 0 : index
    %6 = vector.load %arg2[%c1, %c0_5] : memref<248x128xf32, #tpu.memory_space<vmem>>, vector<1x10xf32>
    %7 = vector.broadcast %6 : vector<1x10xf32> to vector<16x10xf32>
    %8 = arith.addf %5, %7 : vector<16x10xf32>
    %cst = arith.constant 0.000000e+00 : f32
    %9 = vector.broadcast %cst : f32 to vector<16x10xf32>
    %10 = arith.maximumf %8, %9 : vector<16x10xf32>
    %c2 = arith.constant 2 : index
    %c0_6 = arith.constant 0 : index
    %11 = vector.load %arg2[%c2, %c0_6] : memref<248x128xf32, #tpu.memory_space<vmem>>, vector<10x10xf32>
    %cst_7 = arith.constant dense<0.000000e+00> : vector<16x10xf32>
    %12 = tpu.matmul %10, %11, %cst_7 {dimension_numbers = #tpu.dot_dimension_numbers<[1], [0], [0], [1], [0, 0, 1, 1], [], []>} : vector<16x10xf32>, vector<10x10xf32>, vector<16x10xf32> -> vector<16x10xf32>
    %c12 = arith.constant 12 : index
    %c0_8 = arith.constant 0 : index
    %13 = vector.load %arg2[%c12, %c0_8] : memref<248x128xf32, #tpu.memory_space<vmem>>, vector<1x10xf32>
    %14 = vector.broadcast %13 : vector<1x10xf32> to vector<16x10xf32>
    %15 = arith.addf %12, %14 : vector<16x10xf32>
    %cst_9 = arith.constant 0.000000e+00 : f32
    %16 = vector.broadcast %cst_9 : f32 to vector<16x10xf32>
    %17 = arith.maximumf %15, %16 : vector<16x10xf32>
    %c13 = arith.constant 13 : index
    %c0_10 = arith.constant 0 : index
    %18 = vector.load %arg2[%c13, %c0_10] : memref<248x128xf32, #tpu.memory_space<vmem>>, vector<10x10xf32>
    %cst_11 = arith.constant dense<0.000000e+00> : vector<16x10xf32>
    %19 = tpu.matmul %17, %18, %cst_11 {dimension_numbers = #tpu.dot_dimension_numbers<[1], [0], [0], [1], [0, 0, 1, 1], [], []>} : vector<16x10xf32>, vector<10x10xf32>, vector<16x10xf32> -> vector<16x10xf32>
    %c23 = arith.constant 23 : index
    %c0_12 = arith.constant 0 : index
    %20 = vector.load %arg2[%c23, %c0_12] : memref<248x128xf32, #tpu.memory_space<vmem>>, vector<1x10xf32>
    %21 = vector.broadcast %20 : vector<1x10xf32> to vector<16x10xf32>
    %22 = arith.addf %19, %21 : vector<16x10xf32>
    %c79 = arith.constant 79 : index
    %c0_13 = arith.constant 0 : index
    %23 = vector.load %arg2[%c79, %c0_13] : memref<248x128xf32, #tpu.memory_space<vmem>>, vector<10x10xf32>
    %cst_14 = arith.constant dense<0.000000e+00> : vector<16x10xf32>
    %24 = tpu.matmul %22, %23, %cst_14 {dimension_numbers = #tpu.dot_dimension_numbers<[1], [0], [0], [1], [0, 0, 1, 1], [], []>} : vector<16x10xf32>, vector<10x10xf32>, vector<16x10xf32> -> vector<16x10xf32>
    %c89 = arith.constant 89 : index
    %c0_15 = arith.constant 0 : index
    %25 = vector.load %arg2[%c89, %c0_15] : memref<248x128xf32, #tpu.memory_space<vmem>>, vector<1x10xf32>
    %26 = vector.broadcast %25 : vector<1x10xf32> to vector<16x10xf32>
    %27 = arith.addf %24, %26 : vector<16x10xf32>
    %28 = vector.shape_cast %27 : vector<16x10xf32> to vector<2x8x10xf32>
    %29 = tpu.transpose %28, [0, 2, 1] : vector<2x8x10xf32> -> vector<2x10x8xf32>
    %c90 = arith.constant 90 : index
    %c0_16 = arith.constant 0 : index
    %30 = vector.load %arg2[%c90, %c0_16] : memref<248x128xf32, #tpu.memory_space<vmem>>, vector<10x10xf32>
    %cst_17 = arith.constant dense<0.000000e+00> : vector<16x10xf32>
    %31 = tpu.matmul %22, %30, %cst_17 {dimension_numbers = #tpu.dot_dimension_numbers<[1], [0], [0], [1], [0, 0, 1, 1], [], []>} : vector<16x10xf32>, vector<10x10xf32>, vector<16x10xf32> -> vector<16x10xf32>
    %c100 = arith.constant 100 : index
    %c0_18 = arith.constant 0 : index
    %32 = vector.load %arg2[%c100, %c0_18] : memref<248x128xf32, #tpu.memory_space<vmem>>, vector<1x10xf32>
    %33 = vector.broadcast %32 : vector<1x10xf32> to vector<16x10xf32>
    %34 = arith.addf %31, %33 : vector<16x10xf32>
    %35 = vector.shape_cast %34 : vector<16x10xf32> to vector<2x8x10xf32>
    %c246 = arith.constant 246 : index
    %c0_19 = arith.constant 0 : index
    %36 = vector.load %arg2[%c246, %c0_19] : memref<248x128xf32, #tpu.memory_space<vmem>>, vector<1x10xf32>
    %c35 = arith.constant 35 : index
    %c0_20 = arith.constant 0 : index
    %37 = vector.load %arg2[%c35, %c0_20] : memref<248x128xf32, #tpu.memory_space<vmem>>, vector<10x10xf32>
    %cst_21 = arith.constant dense<0.000000e+00> : vector<1x10xf32>
    %38 = tpu.matmul %36, %37, %cst_21 {dimension_numbers = #tpu.dot_dimension_numbers<[1], [0], [0], [1], [0, 0, 1, 1], [], []>} : vector<1x10xf32>, vector<10x10xf32>, vector<1x10xf32> -> vector<1x10xf32>
    %c45 = arith.constant 45 : index
    %c0_22 = arith.constant 0 : index
    %39 = vector.load %arg2[%c45, %c0_22] : memref<248x128xf32, #tpu.memory_space<vmem>>, vector<1x10xf32>
    %40 = arith.addf %38, %39 : vector<1x10xf32>
    %c46 = arith.constant 46 : index
    %c0_23 = arith.constant 0 : index
    %41 = vector.load %arg2[%c46, %c0_23] : memref<248x128xf32, #tpu.memory_space<vmem>>, vector<10x10xf32>
    %cst_24 = arith.constant dense<0.000000e+00> : vector<1x10xf32>
    %42 = tpu.matmul %36, %41, %cst_24 {dimension_numbers = #tpu.dot_dimension_numbers<[1], [0], [0], [1], [0, 0, 1, 1], [], []>} : vector<1x10xf32>, vector<10x10xf32>, vector<1x10xf32> -> vector<1x10xf32>
    %c56 = arith.constant 56 : index
    %c0_25 = arith.constant 0 : index
    %43 = vector.load %arg2[%c56, %c0_25] : memref<248x128xf32, #tpu.memory_space<vmem>>, vector<1x10xf32>
    %44 = arith.addf %42, %43 : vector<1x10xf32>
    %45 = vector.shape_cast %36 : vector<1x10xf32> to vector<1x10xf32>
    %46 = vector.broadcast %45 : vector<1x10xf32> to vector<2x10xf32>
    %c24 = arith.constant 24 : index
    %c0_26 = arith.constant 0 : index
    %47 = vector.load %arg2[%c24, %c0_26] : memref<248x128xf32, #tpu.memory_space<vmem>>, vector<10x10xf32>
    %cst_27 = arith.constant dense<0.000000e+00> : vector<2x10xf32>
    %48 = tpu.matmul %46, %47, %cst_27 {dimension_numbers = #tpu.dot_dimension_numbers<[1], [0], [0], [1], [0, 0, 1, 1], [], []>} : vector<2x10xf32>, vector<10x10xf32>, vector<2x10xf32> -> vector<2x10xf32>
    %c34 = arith.constant 34 : index
    %c0_28 = arith.constant 0 : index
    %49 = vector.load %arg2[%c34, %c0_28] : memref<248x128xf32, #tpu.memory_space<vmem>>, vector<1x10xf32>
    %50 = vector.broadcast %49 : vector<1x10xf32> to vector<2x10xf32>
    %51 = arith.addf %48, %50 : vector<2x10xf32>
    %c232 = arith.constant 232 : index
    %c0_29 = arith.constant 0 : index
    %52 = vector.load %arg2[%c232, %c0_29] : memref<248x128xf32, #tpu.memory_space<vmem>>, vector<10x2xf32>
    %c242 = arith.constant 242 : index
    %c0_30 = arith.constant 0 : index
    %53 = vector.load %arg2[%c242, %c0_30] : memref<248x128xf32, #tpu.memory_space<vmem>>, vector<2x10xf32>
    %54 = vector.broadcast %40 : vector<1x10xf32> to vector<2x10xf32>
    %55 = arith.mulf %51, %54 : vector<2x10xf32>
    %cst_31 = arith.constant dense<0.000000e+00> : vector<2x2xf32>
    %56 = tpu.matmul %55, %52, %cst_31 {dimension_numbers = #tpu.dot_dimension_numbers<[1], [0], [0], [1], [0, 0, 1, 1], [], []>} : vector<2x10xf32>, vector<10x2xf32>, vector<2x2xf32> -> vector<2x2xf32>
    %cst_32 = arith.constant 2.07944155 : f32
    %57 = vector.broadcast %cst_32 : f32 to vector<2x2xf32>
    %58 = arith.addf %56, %57 : vector<2x2xf32>
    %59 = arith.subf %58, %58 : vector<2x2xf32>
    %60 = math.exp %59 : vector<2x2xf32>
    %61 = tpu.reciprocal %60 {approx = true} : vector<2x2xf32> -> vector<2x2xf32>
    %cst_33 = arith.constant dense<0.000000e+00> : vector<2x10xf32>
    %62 = tpu.matmul %60, %53, %cst_33 {dimension_numbers = #tpu.dot_dimension_numbers<[1], [0], [0], [1], [0, 0, 1, 1], [], []>} : vector<2x2xf32>, vector<2x10xf32>, vector<2x10xf32> -> vector<2x10xf32>
    %63 = vector.broadcast %44 : vector<1x10xf32> to vector<2x10xf32>
    %64 = arith.mulf %62, %63 : vector<2x10xf32>
    %cst_34 = arith.constant dense<0.000000e+00> : vector<2x10xf32>
    %65 = tpu.matmul %61, %53, %cst_34 {dimension_numbers = #tpu.dot_dimension_numbers<[1], [0], [0], [1], [0, 0, 1, 1], [], []>} : vector<2x2xf32>, vector<2x10xf32>, vector<2x10xf32> -> vector<2x10xf32>
    %66 = arith.mulf %64, %65 : vector<2x10xf32>
    %c57 = arith.constant 57 : index
    %c0_35 = arith.constant 0 : index
    %67 = vector.load %arg2[%c57, %c0_35] : memref<248x128xf32, #tpu.memory_space<vmem>>, vector<10x10xf32>
    %cst_36 = arith.constant dense<0.000000e+00> : vector<2x10xf32>
    %68 = tpu.matmul %66, %67, %cst_36 {dimension_numbers = #tpu.dot_dimension_numbers<[1], [0], [0], [1], [0, 0, 1, 1], [], []>} : vector<2x10xf32>, vector<10x10xf32>, vector<2x10xf32> -> vector<2x10xf32>
    %c67 = arith.constant 67 : index
    %c0_37 = arith.constant 0 : index
    %69 = vector.load %arg2[%c67, %c0_37] : memref<248x128xf32, #tpu.memory_space<vmem>>, vector<1x10xf32>
    %70 = vector.broadcast %69 : vector<1x10xf32> to vector<2x10xf32>
    %71 = arith.addf %68, %70 : vector<2x10xf32>
    %72 = arith.addf %46, %71 : vector<2x10xf32>
    %cst_38 = arith.constant dense<0.000000e+00> : vector<2xf32>
    %73 = vector.multi_reduction <add>, %72, %cst_38 [1] : vector<2x10xf32> to vector<2xf32>
    %74 = vector.shape_cast %73 : vector<2xf32> to vector<2x1xf32>
    %cst_39 = arith.constant 1.000000e+01 : f32
    %75 = vector.broadcast %cst_39 : f32 to vector<2x1xf32>
    %76 = arith.divf %74, %75 : vector<2x1xf32>
    %77 = vector.broadcast %76 : vector<2x1xf32> to vector<2x10xf32>
    %78 = arith.subf %72, %77 : vector<2x10xf32>
    %79 = arith.mulf %78, %78 : vector<2x10xf32>
    %cst_40 = arith.constant dense<0.000000e+00> : vector<2xf32>
    %80 = vector.multi_reduction <add>, %79, %cst_40 [1] : vector<2x10xf32> to vector<2xf32>
    %81 = vector.shape_cast %80 : vector<2xf32> to vector<2x1xf32>
    %cst_41 = arith.constant 1.000000e+01 : f32
    %82 = vector.broadcast %cst_41 : f32 to vector<2x1xf32>
    %83 = arith.divf %81, %82 : vector<2x1xf32>
    %cst_42 = arith.constant 9.99999974E-6 : f32
    %84 = vector.broadcast %cst_42 : f32 to vector<2x1xf32>
    %85 = arith.addf %83, %84 : vector<2x1xf32>
    %86 = math.rsqrt %85 : vector<2x1xf32>
    %87 = vector.broadcast %86 : vector<2x1xf32> to vector<2x10xf32>
    %88 = arith.mulf %78, %87 : vector<2x10xf32>
    %c122 = arith.constant 122 : index
    %c0_43 = arith.constant 0 : index
    %89 = vector.load %arg2[%c122, %c0_43] : memref<248x128xf32, #tpu.memory_space<vmem>>, vector<1x10xf32>
    %90 = vector.broadcast %89 : vector<1x10xf32> to vector<2x10xf32>
    %91 = arith.mulf %88, %90 : vector<2x10xf32>
    %c123 = arith.constant 123 : index
    %c0_44 = arith.constant 0 : index
    %92 = vector.load %arg2[%c123, %c0_44] : memref<248x128xf32, #tpu.memory_space<vmem>>, vector<1x10xf32>
    %93 = vector.broadcast %92 : vector<1x10xf32> to vector<2x10xf32>
    %94 = arith.addf %91, %93 : vector<2x10xf32>
    %c68 = arith.constant 68 : index
    %c0_45 = arith.constant 0 : index
    %95 = vector.load %arg2[%c68, %c0_45] : memref<248x128xf32, #tpu.memory_space<vmem>>, vector<10x10xf32>
    %cst_46 = arith.constant dense<0.000000e+00> : vector<2x10xf32>
    %96 = tpu.matmul %94, %95, %cst_46 {dimension_numbers = #tpu.dot_dimension_numbers<[1], [0], [0], [1], [0, 0, 1, 1], [], []>} : vector<2x10xf32>, vector<10x10xf32>, vector<2x10xf32> -> vector<2x10xf32>
    %c78 = arith.constant 78 : index
    %c0_47 = arith.constant 0 : index
    %97 = vector.load %arg2[%c78, %c0_47] : memref<248x128xf32, #tpu.memory_space<vmem>>, vector<1x10xf32>
    %98 = vector.broadcast %97 : vector<1x10xf32> to vector<2x10xf32>
    %99 = arith.addf %96, %98 : vector<2x10xf32>
    %100 = vector.shape_cast %99 : vector<2x10xf32> to vector<2x1x10xf32>
    %c244 = arith.constant 244 : index
    %c0_48 = arith.constant 0 : index
    %101 = vector.load %arg2[%c244, %c0_48] : memref<248x128xf32, #tpu.memory_space<vmem>>, vector<1x10xf32>
    %102 = vector.shape_cast %101 : vector<1x10xf32> to vector<1x1x10xf32>
    %103 = vector.broadcast %102 : vector<1x1x10xf32> to vector<2x1x10xf32>
    %104 = arith.mulf %100, %103 : vector<2x1x10xf32>
    "tpu.trace_start"() <{level = 10 : i32, message = "bqd,bdt->bqt"}> : () -> ()
    %cst_49 = arith.constant dense<0.000000e+00> : vector<2x1x8xf32>
    %105 = tpu.matmul %104, %29, %cst_49 {dimension_numbers = #tpu.dot_dimension_numbers<[2], [1], [1], [2], [0, 0, 0, 1, 1, 2], [0], [0]>} : vector<2x1x10xf32>, vector<2x10x8xf32>, vector<2x1x8xf32> -> vector<2x1x8xf32>
    "tpu.trace_stop"() : () -> ()
    %cst_50 = arith.constant dense<0xFF800000> : vector<2x1xf32>
    %106 = vector.multi_reduction <maximumf>, %105, %cst_50 [2] : vector<2x1x8xf32> to vector<2x1xf32>
    %107 = vector.shape_cast %106 : vector<2x1xf32> to vector<2x1x1xf32>
    %108 = vector.broadcast %107 : vector<2x1x1xf32> to vector<2x1x8xf32>
    %109 = arith.subf %105, %108 : vector<2x1x8xf32>
    %110 = math.exp %109 : vector<2x1x8xf32>
    %cst_51 = arith.constant dense<0.000000e+00> : vector<2x1xf32>
    %111 = vector.multi_reduction <add>, %110, %cst_51 [2] : vector<2x1x8xf32> to vector<2x1xf32>
    %112 = vector.shape_cast %111 : vector<2x1xf32> to vector<2x1x1xf32>
    %113 = tpu.reciprocal %112 {approx = true} : vector<2x1x1xf32> -> vector<2x1x1xf32>
    %114 = vector.broadcast %113 : vector<2x1x1xf32> to vector<2x1x8xf32>
    %115 = arith.mulf %110, %114 : vector<2x1x8xf32>
    "tpu.trace_start"() <{level = 10 : i32, message = "bqt,btd->bqd"}> : () -> ()
    %cst_52 = arith.constant dense<0.000000e+00> : vector<2x1x10xf32>
    %116 = tpu.matmul %115, %35, %cst_52 {dimension_numbers = #tpu.dot_dimension_numbers<[2], [1], [1], [2], [0, 0, 0, 1, 1, 2], [0], [0]>} : vector<2x1x8xf32>, vector<2x8x10xf32>, vector<2x1x10xf32> -> vector<2x1x10xf32>
    "tpu.trace_stop"() : () -> ()
    %117 = vector.shape_cast %116 : vector<2x1x10xf32> to vector<2x10xf32>
    %c101 = arith.constant 101 : index
    %c0_53 = arith.constant 0 : index
    %118 = vector.load %arg2[%c101, %c0_53] : memref<248x128xf32, #tpu.memory_space<vmem>>, vector<10x10xf32>
    %cst_54 = arith.constant dense<0.000000e+00> : vector<2x10xf32>
    %119 = tpu.matmul %117, %118, %cst_54 {dimension_numbers = #tpu.dot_dimension_numbers<[1], [0], [0], [1], [0, 0, 1, 1], [], []>} : vector<2x10xf32>, vector<10x10xf32>, vector<2x10xf32> -> vector<2x10xf32>
    %c245 = arith.constant 245 : index
    %c0_55 = arith.constant 0 : index
    %120 = vector.load %arg2[%c245, %c0_55] : memref<248x128xf32, #tpu.memory_space<vmem>>, vector<1x10xf32>
    %121 = vector.shape_cast %120 : vector<1x10xf32> to vector<1x1x10xf32>
    %122 = vector.broadcast %121 : vector<1x1x10xf32> to vector<2x1x10xf32>
    %123 = arith.mulf %100, %122 : vector<2x1x10xf32>
    "tpu.trace_start"() <{level = 10 : i32, message = "bqd,bdt->bqt"}> : () -> ()
    %cst_56 = arith.constant dense<0.000000e+00> : vector<2x1x8xf32>
    %124 = tpu.matmul %123, %29, %cst_56 {dimension_numbers = #tpu.dot_dimension_numbers<[2], [1], [1], [2], [0, 0, 0, 1, 1, 2], [0], [0]>} : vector<2x1x10xf32>, vector<2x10x8xf32>, vector<2x1x8xf32> -> vector<2x1x8xf32>
    "tpu.trace_stop"() : () -> ()
    %cst_57 = arith.constant dense<0xFF800000> : vector<2x1xf32>
    %125 = vector.multi_reduction <maximumf>, %124, %cst_57 [2] : vector<2x1x8xf32> to vector<2x1xf32>
    %126 = vector.shape_cast %125 : vector<2x1xf32> to vector<2x1x1xf32>
    %127 = vector.broadcast %126 : vector<2x1x1xf32> to vector<2x1x8xf32>
    %128 = arith.subf %124, %127 : vector<2x1x8xf32>
    %129 = math.exp %128 : vector<2x1x8xf32>
    %cst_58 = arith.constant dense<0.000000e+00> : vector<2x1xf32>
    %130 = vector.multi_reduction <add>, %129, %cst_58 [2] : vector<2x1x8xf32> to vector<2x1xf32>
    %131 = vector.shape_cast %130 : vector<2x1xf32> to vector<2x1x1xf32>
    %132 = tpu.reciprocal %131 {approx = true} : vector<2x1x1xf32> -> vector<2x1x1xf32>
    %133 = vector.broadcast %132 : vector<2x1x1xf32> to vector<2x1x8xf32>
    %134 = arith.mulf %129, %133 : vector<2x1x8xf32>
    "tpu.trace_start"() <{level = 10 : i32, message = "bqt,btd->bqd"}> : () -> ()
    %cst_59 = arith.constant dense<0.000000e+00> : vector<2x1x10xf32>
    %135 = tpu.matmul %134, %35, %cst_59 {dimension_numbers = #tpu.dot_dimension_numbers<[2], [1], [1], [2], [0, 0, 0, 1, 1, 2], [0], [0]>} : vector<2x1x8xf32>, vector<2x8x10xf32>, vector<2x1x10xf32> -> vector<2x1x10xf32>
    "tpu.trace_stop"() : () -> ()
    %136 = vector.shape_cast %135 : vector<2x1x10xf32> to vector<2x10xf32>
    %c111 = arith.constant 111 : index
    %c0_60 = arith.constant 0 : index
    %137 = vector.load %arg2[%c111, %c0_60] : memref<248x128xf32, #tpu.memory_space<vmem>>, vector<10x10xf32>
    %cst_61 = arith.constant dense<0.000000e+00> : vector<2x10xf32>
    %138 = tpu.matmul %136, %137, %cst_61 {dimension_numbers = #tpu.dot_dimension_numbers<[1], [0], [0], [1], [0, 0, 1, 1], [], []>} : vector<2x10xf32>, vector<10x10xf32>, vector<2x10xf32> -> vector<2x10xf32>
    %139 = arith.addf %119, %138 : vector<2x10xf32>
    %c121 = arith.constant 121 : index
    %c0_62 = arith.constant 0 : index
    %140 = vector.load %arg2[%c121, %c0_62] : memref<248x128xf32, #tpu.memory_space<vmem>>, vector<1x10xf32>
    %141 = vector.broadcast %140 : vector<1x10xf32> to vector<2x10xf32>
    %142 = arith.addf %139, %141 : vector<2x10xf32>
    %143 = arith.addf %94, %142 : vector<2x10xf32>
    %cst_63 = arith.constant dense<0.000000e+00> : vector<2xf32>
    %144 = vector.multi_reduction <add>, %143, %cst_63 [1] : vector<2x10xf32> to vector<2xf32>
    %145 = vector.shape_cast %144 : vector<2xf32> to vector<2x1xf32>
    %cst_64 = arith.constant 1.000000e+01 : f32
    %146 = vector.broadcast %cst_64 : f32 to vector<2x1xf32>
    %147 = arith.divf %145, %146 : vector<2x1xf32>
    %148 = vector.broadcast %147 : vector<2x1xf32> to vector<2x10xf32>
    %149 = arith.subf %143, %148 : vector<2x10xf32>
    %150 = arith.mulf %149, %149 : vector<2x10xf32>
    %cst_65 = arith.constant dense<0.000000e+00> : vector<2xf32>
    %151 = vector.multi_reduction <add>, %150, %cst_65 [1] : vector<2x10xf32> to vector<2xf32>
    %152 = vector.shape_cast %151 : vector<2xf32> to vector<2x1xf32>
    %cst_66 = arith.constant 1.000000e+01 : f32
    %153 = vector.broadcast %cst_66 : f32 to vector<2x1xf32>
    %154 = arith.divf %152, %153 : vector<2x1xf32>
    %cst_67 = arith.constant 9.99999974E-6 : f32
    %155 = vector.broadcast %cst_67 : f32 to vector<2x1xf32>
    %156 = arith.addf %154, %155 : vector<2x1xf32>
    %157 = math.rsqrt %156 : vector<2x1xf32>
    %158 = vector.broadcast %157 : vector<2x1xf32> to vector<2x10xf32>
    %159 = arith.mulf %149, %158 : vector<2x10xf32>
    %c124 = arith.constant 124 : index
    %c0_68 = arith.constant 0 : index
    %160 = vector.load %arg2[%c124, %c0_68] : memref<248x128xf32, #tpu.memory_space<vmem>>, vector<1x10xf32>
    %161 = vector.broadcast %160 : vector<1x10xf32> to vector<2x10xf32>
    %162 = arith.mulf %159, %161 : vector<2x10xf32>
    %c125 = arith.constant 125 : index
    %c0_69 = arith.constant 0 : index
    %163 = vector.load %arg2[%c125, %c0_69] : memref<248x128xf32, #tpu.memory_space<vmem>>, vector<1x10xf32>
    %164 = vector.broadcast %163 : vector<1x10xf32> to vector<2x10xf32>
    %165 = arith.addf %162, %164 : vector<2x10xf32>
    %c128 = arith.constant 128 : index
    %c0_70 = arith.constant 0 : index
    %166 = vector.load %arg2[%c128, %c0_70] : memref<248x128xf32, #tpu.memory_space<vmem>>, vector<10x20xf32>
    %cst_71 = arith.constant dense<0.000000e+00> : vector<2x20xf32>
    %167 = tpu.matmul %165, %166, %cst_71 {dimension_numbers = #tpu.dot_dimension_numbers<[1], [0], [0], [1], [0, 0, 1, 1], [], []>} : vector<2x10xf32>, vector<10x20xf32>, vector<2x20xf32> -> vector<2x20xf32>
    %c138 = arith.constant 138 : index
    %c0_72 = arith.constant 0 : index
    %168 = vector.load %arg2[%c138, %c0_72] : memref<248x128xf32, #tpu.memory_space<vmem>>, vector<1x20xf32>
    %169 = vector.broadcast %168 : vector<1x20xf32> to vector<2x20xf32>
    %170 = arith.addf %167, %169 : vector<2x20xf32>
    %cst_73 = arith.constant 0.000000e+00 : f32
    %171 = vector.broadcast %cst_73 : f32 to vector<2x20xf32>
    %172 = arith.maximumf %170, %171 : vector<2x20xf32>
    %c139 = arith.constant 139 : index
    %c0_74 = arith.constant 0 : index
    %173 = vector.load %arg2[%c139, %c0_74] : memref<248x128xf32, #tpu.memory_space<vmem>>, vector<20x10xf32>
    %cst_75 = arith.constant dense<0.000000e+00> : vector<2x10xf32>
    %174 = tpu.matmul %172, %173, %cst_75 {dimension_numbers = #tpu.dot_dimension_numbers<[1], [0], [0], [1], [0, 0, 1, 1], [], []>} : vector<2x20xf32>, vector<20x10xf32>, vector<2x10xf32> -> vector<2x10xf32>
    %c159 = arith.constant 159 : index
    %c0_76 = arith.constant 0 : index
    %175 = vector.load %arg2[%c159, %c0_76] : memref<248x128xf32, #tpu.memory_space<vmem>>, vector<1x10xf32>
    %176 = vector.broadcast %175 : vector<1x10xf32> to vector<2x10xf32>
    %177 = arith.addf %174, %176 : vector<2x10xf32>
    %178 = arith.addf %165, %177 : vector<2x10xf32>
    %cst_77 = arith.constant dense<0.000000e+00> : vector<2xf32>
    %179 = vector.multi_reduction <add>, %178, %cst_77 [1] : vector<2x10xf32> to vector<2xf32>
    %180 = vector.shape_cast %179 : vector<2xf32> to vector<2x1xf32>
    %cst_78 = arith.constant 1.000000e+01 : f32
    %181 = vector.broadcast %cst_78 : f32 to vector<2x1xf32>
    %182 = arith.divf %180, %181 : vector<2x1xf32>
    %183 = vector.broadcast %182 : vector<2x1xf32> to vector<2x10xf32>
    %184 = arith.subf %178, %183 : vector<2x10xf32>
    %185 = arith.mulf %184, %184 : vector<2x10xf32>
    %cst_79 = arith.constant dense<0.000000e+00> : vector<2xf32>
    %186 = vector.multi_reduction <add>, %185, %cst_79 [1] : vector<2x10xf32> to vector<2xf32>
    %187 = vector.shape_cast %186 : vector<2xf32> to vector<2x1xf32>
    %cst_80 = arith.constant 1.000000e+01 : f32
    %188 = vector.broadcast %cst_80 : f32 to vector<2x1xf32>
    %189 = arith.divf %187, %188 : vector<2x1xf32>
    %cst_81 = arith.constant 9.99999974E-6 : f32
    %190 = vector.broadcast %cst_81 : f32 to vector<2x1xf32>
    %191 = arith.addf %189, %190 : vector<2x1xf32>
    %192 = math.rsqrt %191 : vector<2x1xf32>
    %193 = vector.broadcast %192 : vector<2x1xf32> to vector<2x10xf32>
    %194 = arith.mulf %184, %193 : vector<2x10xf32>
    %c126 = arith.constant 126 : index
    %c0_82 = arith.constant 0 : index
    %195 = vector.load %arg2[%c126, %c0_82] : memref<248x128xf32, #tpu.memory_space<vmem>>, vector<1x10xf32>
    %196 = vector.broadcast %195 : vector<1x10xf32> to vector<2x10xf32>
    %197 = arith.mulf %194, %196 : vector<2x10xf32>
    %c127 = arith.constant 127 : index
    %c0_83 = arith.constant 0 : index
    %198 = vector.load %arg2[%c127, %c0_83] : memref<248x128xf32, #tpu.memory_space<vmem>>, vector<1x10xf32>
    %199 = vector.broadcast %198 : vector<1x10xf32> to vector<2x10xf32>
    %200 = arith.addf %197, %199 : vector<2x10xf32>
    %c160 = arith.constant 160 : index
    %c0_84 = arith.constant 0 : index
    %201 = vector.load %arg2[%c160, %c0_84] : memref<248x128xf32, #tpu.memory_space<vmem>>, vector<10x12xf32>
    %cst_85 = arith.constant dense<0.000000e+00> : vector<2x12xf32>
    %202 = tpu.matmul %200, %201, %cst_85 {dimension_numbers = #tpu.dot_dimension_numbers<[1], [0], [0], [1], [0, 0, 1, 1], [], []>} : vector<2x10xf32>, vector<10x12xf32>, vector<2x12xf32> -> vector<2x12xf32>
    %c170 = arith.constant 170 : index
    %c0_86 = arith.constant 0 : index
    %203 = vector.load %arg2[%c170, %c0_86] : memref<248x128xf32, #tpu.memory_space<vmem>>, vector<1x12xf32>
    %204 = vector.broadcast %203 : vector<1x12xf32> to vector<2x12xf32>
    %205 = arith.addf %202, %204 : vector<2x12xf32>
    %cst_87 = arith.constant 0.000000e+00 : f32
    %206 = vector.broadcast %cst_87 : f32 to vector<2x12xf32>
    %207 = arith.maximumf %205, %206 : vector<2x12xf32>
    %c171 = arith.constant 171 : index
    %c0_88 = arith.constant 0 : index
    %208 = vector.load %arg2[%c171, %c0_88] : memref<248x128xf32, #tpu.memory_space<vmem>>, vector<12x1xf32>
    %cst_89 = arith.constant dense<0.000000e+00> : vector<2x1xf32>
    %209 = tpu.matmul %207, %208, %cst_89 {dimension_numbers = #tpu.dot_dimension_numbers<[1], [0], [0], [1], [0, 0, 1, 1], [], []>} : vector<2x12xf32>, vector<12x1xf32>, vector<2x1xf32> -> vector<2x1xf32>
    %c183 = arith.constant 183 : index
    %c0_90 = arith.constant 0 : index
    %210 = vector.load %arg2[%c183, %c0_90] : memref<248x128xf32, #tpu.memory_space<vmem>>, vector<1x1xf32>
    %211 = vector.broadcast %210 : vector<1x1xf32> to vector<2x1xf32>
    %212 = arith.addf %209, %211 : vector<2x1xf32>
    %c184 = arith.constant 184 : index
    %c0_91 = arith.constant 0 : index
    %213 = vector.load %arg2[%c184, %c0_91] : memref<248x128xf32, #tpu.memory_space<vmem>>, vector<10x12xf32>
    %cst_92 = arith.constant dense<0.000000e+00> : vector<2x12xf32>
    %214 = tpu.matmul %200, %213, %cst_92 {dimension_numbers = #tpu.dot_dimension_numbers<[1], [0], [0], [1], [0, 0, 1, 1], [], []>} : vector<2x10xf32>, vector<10x12xf32>, vector<2x12xf32> -> vector<2x12xf32>
    %c194 = arith.constant 194 : index
    %c0_93 = arith.constant 0 : index
    %215 = vector.load %arg2[%c194, %c0_93] : memref<248x128xf32, #tpu.memory_space<vmem>>, vector<1x12xf32>
    %216 = vector.broadcast %215 : vector<1x12xf32> to vector<2x12xf32>
    %217 = arith.addf %214, %216 : vector<2x12xf32>
    %cst_94 = arith.constant 0.000000e+00 : f32
    %218 = vector.broadcast %cst_94 : f32 to vector<2x12xf32>
    %219 = arith.maximumf %217, %218 : vector<2x12xf32>
    %c195 = arith.constant 195 : index
    %c0_95 = arith.constant 0 : index
    %220 = vector.load %arg2[%c195, %c0_95] : memref<248x128xf32, #tpu.memory_space<vmem>>, vector<12x1xf32>
    %cst_96 = arith.constant dense<0.000000e+00> : vector<2x1xf32>
    %221 = tpu.matmul %219, %220, %cst_96 {dimension_numbers = #tpu.dot_dimension_numbers<[1], [0], [0], [1], [0, 0, 1, 1], [], []>} : vector<2x12xf32>, vector<12x1xf32>, vector<2x1xf32> -> vector<2x1xf32>
    %c207 = arith.constant 207 : index
    %c0_97 = arith.constant 0 : index
    %222 = vector.load %arg2[%c207, %c0_97] : memref<248x128xf32, #tpu.memory_space<vmem>>, vector<1x1xf32>
    %223 = vector.broadcast %222 : vector<1x1xf32> to vector<2x1xf32>
    %224 = arith.addf %221, %223 : vector<2x1xf32>
    %c208 = arith.constant 208 : index
    %c0_98 = arith.constant 0 : index
    %225 = vector.load %arg2[%c208, %c0_98] : memref<248x128xf32, #tpu.memory_space<vmem>>, vector<10x12xf32>
    %cst_99 = arith.constant dense<0.000000e+00> : vector<2x12xf32>
    %226 = tpu.matmul %200, %225, %cst_99 {dimension_numbers = #tpu.dot_dimension_numbers<[1], [0], [0], [1], [0, 0, 1, 1], [], []>} : vector<2x10xf32>, vector<10x12xf32>, vector<2x12xf32> -> vector<2x12xf32>
    %c218 = arith.constant 218 : index
    %c0_100 = arith.constant 0 : index
    %227 = vector.load %arg2[%c218, %c0_100] : memref<248x128xf32, #tpu.memory_space<vmem>>, vector<1x12xf32>
    %228 = vector.broadcast %227 : vector<1x12xf32> to vector<2x12xf32>
    %229 = arith.addf %226, %228 : vector<2x12xf32>
    %cst_101 = arith.constant 0.000000e+00 : f32
    %230 = vector.broadcast %cst_101 : f32 to vector<2x12xf32>
    %231 = arith.maximumf %229, %230 : vector<2x12xf32>
    %c219 = arith.constant 219 : index
    %c0_102 = arith.constant 0 : index
    %232 = vector.load %arg2[%c219, %c0_102] : memref<248x128xf32, #tpu.memory_space<vmem>>, vector<12x1xf32>
    %cst_103 = arith.constant dense<0.000000e+00> : vector<2x1xf32>
    %233 = tpu.matmul %231, %232, %cst_103 {dimension_numbers = #tpu.dot_dimension_numbers<[1], [0], [0], [1], [0, 0, 1, 1], [], []>} : vector<2x12xf32>, vector<12x1xf32>, vector<2x1xf32> -> vector<2x1xf32>
    %c231 = arith.constant 231 : index
    %c0_104 = arith.constant 0 : index
    %234 = vector.load %arg2[%c231, %c0_104] : memref<248x128xf32, #tpu.memory_space<vmem>>, vector<1x1xf32>
    %235 = vector.broadcast %234 : vector<1x1xf32> to vector<2x1xf32>
    %236 = arith.addf %233, %235 : vector<2x1xf32>
    %237 = math.tanh %212 : vector<2x1xf32>
    %cst_105 = arith.constant 1.000000e+01 : f32
    %238 = vector.broadcast %cst_105 : f32 to vector<2x1xf32>
    %239 = arith.mulf %237, %238 : vector<2x1xf32>
    %240 = arith.subf %0, %239 : vector<2x1xf32>
    %cst_106 = arith.constant 0.000000e+00 : f32
    %241 = vector.broadcast %cst_106 : f32 to vector<2x1xf32>
    %242 = arith.subf %241, %224 : vector<2x1xf32>
    %243 = math.exp %242 : vector<2x1xf32>
    %244 = arith.mulf %240, %243 : vector<2x1xf32>
    %cst_107 = arith.constant -5.000000e-01 : f32
    %245 = vector.broadcast %cst_107 : f32 to vector<2x1xf32>
    %246 = arith.mulf %245, %244 : vector<2x1xf32>
    %247 = arith.mulf %246, %244 : vector<2x1xf32>
    %248 = arith.subf %247, %224 : vector<2x1xf32>
    %cst_108 = arith.constant 0.918938517 : f32
    %249 = vector.broadcast %cst_108 : f32 to vector<2x1xf32>
    %250 = arith.subf %248, %249 : vector<2x1xf32>
    %251 = arith.addf %250, %236 : vector<2x1xf32>
    %c35_109 = arith.constant 35 : index
    %c0_110 = arith.constant 0 : index
    %252 = vector.load %arg2[%c35_109, %c0_110] : memref<248x128xf32, #tpu.memory_space<vmem>>, vector<10x10xf32>
    %cst_111 = arith.constant dense<0.000000e+00> : vector<2x10xf32>
    %253 = tpu.matmul %200, %252, %cst_111 {dimension_numbers = #tpu.dot_dimension_numbers<[1], [0], [0], [1], [0, 0, 1, 1], [], []>} : vector<2x10xf32>, vector<10x10xf32>, vector<2x10xf32> -> vector<2x10xf32>
    %c45_112 = arith.constant 45 : index
    %c0_113 = arith.constant 0 : index
    %254 = vector.load %arg2[%c45_112, %c0_113] : memref<248x128xf32, #tpu.memory_space<vmem>>, vector<1x10xf32>
    %255 = vector.broadcast %254 : vector<1x10xf32> to vector<2x10xf32>
    %256 = arith.addf %253, %255 : vector<2x10xf32>
    %c46_114 = arith.constant 46 : index
    %c0_115 = arith.constant 0 : index
    %257 = vector.load %arg2[%c46_114, %c0_115] : memref<248x128xf32, #tpu.memory_space<vmem>>, vector<10x10xf32>
    %cst_116 = arith.constant dense<0.000000e+00> : vector<2x10xf32>
    %258 = tpu.matmul %200, %257, %cst_116 {dimension_numbers = #tpu.dot_dimension_numbers<[1], [0], [0], [1], [0, 0, 1, 1], [], []>} : vector<2x10xf32>, vector<10x10xf32>, vector<2x10xf32> -> vector<2x10xf32>
    %c56_117 = arith.constant 56 : index
    %c0_118 = arith.constant 0 : index
    %259 = vector.load %arg2[%c56_117, %c0_118] : memref<248x128xf32, #tpu.memory_space<vmem>>, vector<1x10xf32>
    %260 = vector.broadcast %259 : vector<1x10xf32> to vector<2x10xf32>
    %261 = arith.addf %258, %260 : vector<2x10xf32>
    %c24_119 = arith.constant 24 : index
    %c0_120 = arith.constant 0 : index
    %262 = vector.load %arg2[%c24_119, %c0_120] : memref<248x128xf32, #tpu.memory_space<vmem>>, vector<10x10xf32>
    %cst_121 = arith.constant dense<0.000000e+00> : vector<2x10xf32>
    %263 = tpu.matmul %200, %262, %cst_121 {dimension_numbers = #tpu.dot_dimension_numbers<[1], [0], [0], [1], [0, 0, 1, 1], [], []>} : vector<2x10xf32>, vector<10x10xf32>, vector<2x10xf32> -> vector<2x10xf32>
    %c34_122 = arith.constant 34 : index
    %c0_123 = arith.constant 0 : index
    %264 = vector.load %arg2[%c34_122, %c0_123] : memref<248x128xf32, #tpu.memory_space<vmem>>, vector<1x10xf32>
    %265 = vector.broadcast %264 : vector<1x10xf32> to vector<2x10xf32>
    %266 = arith.addf %263, %265 : vector<2x10xf32>
    %c232_124 = arith.constant 232 : index
    %c0_125 = arith.constant 0 : index
    %267 = vector.load %arg2[%c232_124, %c0_125] : memref<248x128xf32, #tpu.memory_space<vmem>>, vector<10x2xf32>
    %c242_126 = arith.constant 242 : index
    %c0_127 = arith.constant 0 : index
    %268 = vector.load %arg2[%c242_126, %c0_127] : memref<248x128xf32, #tpu.memory_space<vmem>>, vector<2x10xf32>
    %269 = vector.broadcast %40 : vector<1x10xf32> to vector<2x10xf32>
    %270 = arith.mulf %266, %269 : vector<2x10xf32>
    %cst_128 = arith.constant dense<0.000000e+00> : vector<2x2xf32>
    %271 = tpu.matmul %270, %267, %cst_128 {dimension_numbers = #tpu.dot_dimension_numbers<[1], [0], [0], [1], [0, 0, 1, 1], [], []>} : vector<2x10xf32>, vector<10x2xf32>, vector<2x2xf32> -> vector<2x2xf32>
    %cst_129 = arith.constant 2.07944155 : f32
    %272 = vector.broadcast %cst_129 : f32 to vector<2x2xf32>
    %273 = arith.addf %271, %272 : vector<2x2xf32>
    %274 = arith.mulf %266, %256 : vector<2x10xf32>
    %cst_130 = arith.constant dense<0.000000e+00> : vector<2x2xf32>
    %275 = tpu.matmul %274, %267, %cst_130 {dimension_numbers = #tpu.dot_dimension_numbers<[1], [0], [0], [1], [0, 0, 1, 1], [], []>} : vector<2x10xf32>, vector<10x2xf32>, vector<2x2xf32> -> vector<2x2xf32>
    %276 = arith.maximumf %273, %275 : vector<2x2xf32>
    %277 = arith.subf %273, %276 : vector<2x2xf32>
    %278 = math.exp %277 : vector<2x2xf32>
    %279 = arith.subf %275, %276 : vector<2x2xf32>
    %280 = math.exp %279 : vector<2x2xf32>
    %281 = arith.addf %278, %280 : vector<2x2xf32>
    %282 = tpu.reciprocal %281 {approx = true} : vector<2x2xf32> -> vector<2x2xf32>
    %cst_131 = arith.constant dense<0.000000e+00> : vector<2x10xf32>
    %283 = tpu.matmul %278, %268, %cst_131 {dimension_numbers = #tpu.dot_dimension_numbers<[1], [0], [0], [1], [0, 0, 1, 1], [], []>} : vector<2x2xf32>, vector<2x10xf32>, vector<2x10xf32> -> vector<2x10xf32>
    %284 = vector.broadcast %44 : vector<1x10xf32> to vector<2x10xf32>
    %285 = arith.mulf %283, %284 : vector<2x10xf32>
    %cst_132 = arith.constant dense<0.000000e+00> : vector<2x10xf32>
    %286 = tpu.matmul %280, %268, %cst_132 {dimension_numbers = #tpu.dot_dimension_numbers<[1], [0], [0], [1], [0, 0, 1, 1], [], []>} : vector<2x2xf32>, vector<2x10xf32>, vector<2x10xf32> -> vector<2x10xf32>
    %287 = arith.mulf %286, %261 : vector<2x10xf32>
    %288 = arith.addf %285, %287 : vector<2x10xf32>
    %cst_133 = arith.constant dense<0.000000e+00> : vector<2x10xf32>
    %289 = tpu.matmul %282, %268, %cst_133 {dimension_numbers = #tpu.dot_dimension_numbers<[1], [0], [0], [1], [0, 0, 1, 1], [], []>} : vector<2x2xf32>, vector<2x10xf32>, vector<2x10xf32> -> vector<2x10xf32>
    %290 = arith.mulf %288, %289 : vector<2x10xf32>
    %c57_134 = arith.constant 57 : index
    %c0_135 = arith.constant 0 : index
    %291 = vector.load %arg2[%c57_134, %c0_135] : memref<248x128xf32, #tpu.memory_space<vmem>>, vector<10x10xf32>
    %cst_136 = arith.constant dense<0.000000e+00> : vector<2x10xf32>
    %292 = tpu.matmul %290, %291, %cst_136 {dimension_numbers = #tpu.dot_dimension_numbers<[1], [0], [0], [1], [0, 0, 1, 1], [], []>} : vector<2x10xf32>, vector<10x10xf32>, vector<2x10xf32> -> vector<2x10xf32>
    %c67_137 = arith.constant 67 : index
    %c0_138 = arith.constant 0 : index
    %293 = vector.load %arg2[%c67_137, %c0_138] : memref<248x128xf32, #tpu.memory_space<vmem>>, vector<1x10xf32>
    %294 = vector.broadcast %293 : vector<1x10xf32> to vector<2x10xf32>
    %295 = arith.addf %292, %294 : vector<2x10xf32>
    %296 = arith.addf %200, %295 : vector<2x10xf32>
    %cst_139 = arith.constant dense<0.000000e+00> : vector<2xf32>
    %297 = vector.multi_reduction <add>, %296, %cst_139 [1] : vector<2x10xf32> to vector<2xf32>
    %298 = vector.shape_cast %297 : vector<2xf32> to vector<2x1xf32>
    %cst_140 = arith.constant 1.000000e+01 : f32
    %299 = vector.broadcast %cst_140 : f32 to vector<2x1xf32>
    %300 = arith.divf %298, %299 : vector<2x1xf32>
    %301 = vector.broadcast %300 : vector<2x1xf32> to vector<2x10xf32>
    %302 = arith.subf %296, %301 : vector<2x10xf32>
    %303 = arith.mulf %302, %302 : vector<2x10xf32>
    %cst_141 = arith.constant dense<0.000000e+00> : vector<2xf32>
    %304 = vector.multi_reduction <add>, %303, %cst_141 [1] : vector<2x10xf32> to vector<2xf32>
    %305 = vector.shape_cast %304 : vector<2xf32> to vector<2x1xf32>
    %cst_142 = arith.constant 1.000000e+01 : f32
    %306 = vector.broadcast %cst_142 : f32 to vector<2x1xf32>
    %307 = arith.divf %305, %306 : vector<2x1xf32>
    %cst_143 = arith.constant 9.99999974E-6 : f32
    %308 = vector.broadcast %cst_143 : f32 to vector<2x1xf32>
    %309 = arith.addf %307, %308 : vector<2x1xf32>
    %310 = math.rsqrt %309 : vector<2x1xf32>
    %311 = vector.broadcast %310 : vector<2x1xf32> to vector<2x10xf32>
    %312 = arith.mulf %302, %311 : vector<2x10xf32>
    %c122_144 = arith.constant 122 : index
    %c0_145 = arith.constant 0 : index
    %313 = vector.load %arg2[%c122_144, %c0_145] : memref<248x128xf32, #tpu.memory_space<vmem>>, vector<1x10xf32>
    %314 = vector.broadcast %313 : vector<1x10xf32> to vector<2x10xf32>
    %315 = arith.mulf %312, %314 : vector<2x10xf32>
    %c123_146 = arith.constant 123 : index
    %c0_147 = arith.constant 0 : index
    %316 = vector.load %arg2[%c123_146, %c0_147] : memref<248x128xf32, #tpu.memory_space<vmem>>, vector<1x10xf32>
    %317 = vector.broadcast %316 : vector<1x10xf32> to vector<2x10xf32>
    %318 = arith.addf %315, %317 : vector<2x10xf32>
    %c68_148 = arith.constant 68 : index
    %c0_149 = arith.constant 0 : index
    %319 = vector.load %arg2[%c68_148, %c0_149] : memref<248x128xf32, #tpu.memory_space<vmem>>, vector<10x10xf32>
    %cst_150 = arith.constant dense<0.000000e+00> : vector<2x10xf32>
    %320 = tpu.matmul %318, %319, %cst_150 {dimension_numbers = #tpu.dot_dimension_numbers<[1], [0], [0], [1], [0, 0, 1, 1], [], []>} : vector<2x10xf32>, vector<10x10xf32>, vector<2x10xf32> -> vector<2x10xf32>
    %c78_151 = arith.constant 78 : index
    %c0_152 = arith.constant 0 : index
    %321 = vector.load %arg2[%c78_151, %c0_152] : memref<248x128xf32, #tpu.memory_space<vmem>>, vector<1x10xf32>
    %322 = vector.broadcast %321 : vector<1x10xf32> to vector<2x10xf32>
    %323 = arith.addf %320, %322 : vector<2x10xf32>
    %324 = vector.shape_cast %323 : vector<2x10xf32> to vector<2x1x10xf32>
    %c244_153 = arith.constant 244 : index
    %c0_154 = arith.constant 0 : index
    %325 = vector.load %arg2[%c244_153, %c0_154] : memref<248x128xf32, #tpu.memory_space<vmem>>, vector<1x10xf32>
    %326 = vector.shape_cast %325 : vector<1x10xf32> to vector<1x1x10xf32>
    %327 = vector.broadcast %326 : vector<1x1x10xf32> to vector<2x1x10xf32>
    %328 = arith.mulf %324, %327 : vector<2x1x10xf32>
    "tpu.trace_start"() <{level = 10 : i32, message = "bqd,bdt->bqt"}> : () -> ()
    %cst_155 = arith.constant dense<0.000000e+00> : vector<2x1x8xf32>
    %329 = tpu.matmul %328, %29, %cst_155 {dimension_numbers = #tpu.dot_dimension_numbers<[2], [1], [1], [2], [0, 0, 0, 1, 1, 2], [0], [0]>} : vector<2x1x10xf32>, vector<2x10x8xf32>, vector<2x1x8xf32> -> vector<2x1x8xf32>
    "tpu.trace_stop"() : () -> ()
    %cst_156 = arith.constant dense<0xFF800000> : vector<2x1xf32>
    %330 = vector.multi_reduction <maximumf>, %329, %cst_156 [2] : vector<2x1x8xf32> to vector<2x1xf32>
    %331 = vector.shape_cast %330 : vector<2x1xf32> to vector<2x1x1xf32>
    %332 = vector.broadcast %331 : vector<2x1x1xf32> to vector<2x1x8xf32>
    %333 = arith.subf %329, %332 : vector<2x1x8xf32>
    %334 = math.exp %333 : vector<2x1x8xf32>
    %cst_157 = arith.constant dense<0.000000e+00> : vector<2x1xf32>
    %335 = vector.multi_reduction <add>, %334, %cst_157 [2] : vector<2x1x8xf32> to vector<2x1xf32>
    %336 = vector.shape_cast %335 : vector<2x1xf32> to vector<2x1x1xf32>
    %337 = tpu.reciprocal %336 {approx = true} : vector<2x1x1xf32> -> vector<2x1x1xf32>
    %338 = vector.broadcast %337 : vector<2x1x1xf32> to vector<2x1x8xf32>
    %339 = arith.mulf %334, %338 : vector<2x1x8xf32>
    "tpu.trace_start"() <{level = 10 : i32, message = "bqt,btd->bqd"}> : () -> ()
    %cst_158 = arith.constant dense<0.000000e+00> : vector<2x1x10xf32>
    %340 = tpu.matmul %339, %35, %cst_158 {dimension_numbers = #tpu.dot_dimension_numbers<[2], [1], [1], [2], [0, 0, 0, 1, 1, 2], [0], [0]>} : vector<2x1x8xf32>, vector<2x8x10xf32>, vector<2x1x10xf32> -> vector<2x1x10xf32>
    "tpu.trace_stop"() : () -> ()
    %341 = vector.shape_cast %340 : vector<2x1x10xf32> to vector<2x10xf32>
    %c101_159 = arith.constant 101 : index
    %c0_160 = arith.constant 0 : index
    %342 = vector.load %arg2[%c101_159, %c0_160] : memref<248x128xf32, #tpu.memory_space<vmem>>, vector<10x10xf32>
    %cst_161 = arith.constant dense<0.000000e+00> : vector<2x10xf32>
    %343 = tpu.matmul %341, %342, %cst_161 {dimension_numbers = #tpu.dot_dimension_numbers<[1], [0], [0], [1], [0, 0, 1, 1], [], []>} : vector<2x10xf32>, vector<10x10xf32>, vector<2x10xf32> -> vector<2x10xf32>
    %c245_162 = arith.constant 245 : index
    %c0_163 = arith.constant 0 : index
    %344 = vector.load %arg2[%c245_162, %c0_163] : memref<248x128xf32, #tpu.memory_space<vmem>>, vector<1x10xf32>
    %345 = vector.shape_cast %344 : vector<1x10xf32> to vector<1x1x10xf32>
    %346 = vector.broadcast %345 : vector<1x1x10xf32> to vector<2x1x10xf32>
    %347 = arith.mulf %324, %346 : vector<2x1x10xf32>
    "tpu.trace_start"() <{level = 10 : i32, message = "bqd,bdt->bqt"}> : () -> ()
    %cst_164 = arith.constant dense<0.000000e+00> : vector<2x1x8xf32>
    %348 = tpu.matmul %347, %29, %cst_164 {dimension_numbers = #tpu.dot_dimension_numbers<[2], [1], [1], [2], [0, 0, 0, 1, 1, 2], [0], [0]>} : vector<2x1x10xf32>, vector<2x10x8xf32>, vector<2x1x8xf32> -> vector<2x1x8xf32>
    "tpu.trace_stop"() : () -> ()
    %cst_165 = arith.constant dense<0xFF800000> : vector<2x1xf32>
    %349 = vector.multi_reduction <maximumf>, %348, %cst_165 [2] : vector<2x1x8xf32> to vector<2x1xf32>
    %350 = vector.shape_cast %349 : vector<2x1xf32> to vector<2x1x1xf32>
    %351 = vector.broadcast %350 : vector<2x1x1xf32> to vector<2x1x8xf32>
    %352 = arith.subf %348, %351 : vector<2x1x8xf32>
    %353 = math.exp %352 : vector<2x1x8xf32>
    %cst_166 = arith.constant dense<0.000000e+00> : vector<2x1xf32>
    %354 = vector.multi_reduction <add>, %353, %cst_166 [2] : vector<2x1x8xf32> to vector<2x1xf32>
    %355 = vector.shape_cast %354 : vector<2x1xf32> to vector<2x1x1xf32>
    %356 = tpu.reciprocal %355 {approx = true} : vector<2x1x1xf32> -> vector<2x1x1xf32>
    %357 = vector.broadcast %356 : vector<2x1x1xf32> to vector<2x1x8xf32>
    %358 = arith.mulf %353, %357 : vector<2x1x8xf32>
    "tpu.trace_start"() <{level = 10 : i32, message = "bqt,btd->bqd"}> : () -> ()
    %cst_167 = arith.constant dense<0.000000e+00> : vector<2x1x10xf32>
    %359 = tpu.matmul %358, %35, %cst_167 {dimension_numbers = #tpu.dot_dimension_numbers<[2], [1], [1], [2], [0, 0, 0, 1, 1, 2], [0], [0]>} : vector<2x1x8xf32>, vector<2x8x10xf32>, vector<2x1x10xf32> -> vector<2x1x10xf32>
    "tpu.trace_stop"() : () -> ()
    %360 = vector.shape_cast %359 : vector<2x1x10xf32> to vector<2x10xf32>
    %c111_168 = arith.constant 111 : index
    %c0_169 = arith.constant 0 : index
    %361 = vector.load %arg2[%c111_168, %c0_169] : memref<248x128xf32, #tpu.memory_space<vmem>>, vector<10x10xf32>
    %cst_170 = arith.constant dense<0.000000e+00> : vector<2x10xf32>
    %362 = tpu.matmul %360, %361, %cst_170 {dimension_numbers = #tpu.dot_dimension_numbers<[1], [0], [0], [1], [0, 0, 1, 1], [], []>} : vector<2x10xf32>, vector<10x10xf32>, vector<2x10xf32> -> vector<2x10xf32>
    %363 = arith.addf %343, %362 : vector<2x10xf32>
    %c121_171 = arith.constant 121 : index
    %c0_172 = arith.constant 0 : index
    %364 = vector.load %arg2[%c121_171, %c0_172] : memref<248x128xf32, #tpu.memory_space<vmem>>, vector<1x10xf32>
    %365 = vector.broadcast %364 : vector<1x10xf32> to vector<2x10xf32>
    %366 = arith.addf %363, %365 : vector<2x10xf32>
    %367 = arith.addf %318, %366 : vector<2x10xf32>
    %cst_173 = arith.constant dense<0.000000e+00> : vector<2xf32>
    %368 = vector.multi_reduction <add>, %367, %cst_173 [1] : vector<2x10xf32> to vector<2xf32>
    %369 = vector.shape_cast %368 : vector<2xf32> to vector<2x1xf32>
    %cst_174 = arith.constant 1.000000e+01 : f32
    %370 = vector.broadcast %cst_174 : f32 to vector<2x1xf32>
    %371 = arith.divf %369, %370 : vector<2x1xf32>
    %372 = vector.broadcast %371 : vector<2x1xf32> to vector<2x10xf32>
    %373 = arith.subf %367, %372 : vector<2x10xf32>
    %374 = arith.mulf %373, %373 : vector<2x10xf32>
    %cst_175 = arith.constant dense<0.000000e+00> : vector<2xf32>
    %375 = vector.multi_reduction <add>, %374, %cst_175 [1] : vector<2x10xf32> to vector<2xf32>
    %376 = vector.shape_cast %375 : vector<2xf32> to vector<2x1xf32>
    %cst_176 = arith.constant 1.000000e+01 : f32
    %377 = vector.broadcast %cst_176 : f32 to vector<2x1xf32>
    %378 = arith.divf %376, %377 : vector<2x1xf32>
    %cst_177 = arith.constant 9.99999974E-6 : f32
    %379 = vector.broadcast %cst_177 : f32 to vector<2x1xf32>
    %380 = arith.addf %378, %379 : vector<2x1xf32>
    %381 = math.rsqrt %380 : vector<2x1xf32>
    %382 = vector.broadcast %381 : vector<2x1xf32> to vector<2x10xf32>
    %383 = arith.mulf %373, %382 : vector<2x10xf32>
    %c124_178 = arith.constant 124 : index
    %c0_179 = arith.constant 0 : index
    %384 = vector.load %arg2[%c124_178, %c0_179] : memref<248x128xf32, #tpu.memory_space<vmem>>, vector<1x10xf32>
    %385 = vector.broadcast %384 : vector<1x10xf32> to vector<2x10xf32>
    %386 = arith.mulf %383, %385 : vector<2x10xf32>
    %c125_180 = arith.constant 125 : index
    %c0_181 = arith.constant 0 : index
    %387 = vector.load %arg2[%c125_180, %c0_181] : memref<248x128xf32, #tpu.memory_space<vmem>>, vector<1x10xf32>
    %388 = vector.broadcast %387 : vector<1x10xf32> to vector<2x10xf32>
    %389 = arith.addf %386, %388 : vector<2x10xf32>
    %c128_182 = arith.constant 128 : index
    %c0_183 = arith.constant 0 : index
    %390 = vector.load %arg2[%c128_182, %c0_183] : memref<248x128xf32, #tpu.memory_space<vmem>>, vector<10x20xf32>
    %cst_184 = arith.constant dense<0.000000e+00> : vector<2x20xf32>
    %391 = tpu.matmul %389, %390, %cst_184 {dimension_numbers = #tpu.dot_dimension_numbers<[1], [0], [0], [1], [0, 0, 1, 1], [], []>} : vector<2x10xf32>, vector<10x20xf32>, vector<2x20xf32> -> vector<2x20xf32>
    %c138_185 = arith.constant 138 : index
    %c0_186 = arith.constant 0 : index
    %392 = vector.load %arg2[%c138_185, %c0_186] : memref<248x128xf32, #tpu.memory_space<vmem>>, vector<1x20xf32>
    %393 = vector.broadcast %392 : vector<1x20xf32> to vector<2x20xf32>
    %394 = arith.addf %391, %393 : vector<2x20xf32>
    %cst_187 = arith.constant 0.000000e+00 : f32
    %395 = vector.broadcast %cst_187 : f32 to vector<2x20xf32>
    %396 = arith.maximumf %394, %395 : vector<2x20xf32>
    %c139_188 = arith.constant 139 : index
    %c0_189 = arith.constant 0 : index
    %397 = vector.load %arg2[%c139_188, %c0_189] : memref<248x128xf32, #tpu.memory_space<vmem>>, vector<20x10xf32>
    %cst_190 = arith.constant dense<0.000000e+00> : vector<2x10xf32>
    %398 = tpu.matmul %396, %397, %cst_190 {dimension_numbers = #tpu.dot_dimension_numbers<[1], [0], [0], [1], [0, 0, 1, 1], [], []>} : vector<2x20xf32>, vector<20x10xf32>, vector<2x10xf32> -> vector<2x10xf32>
    %c159_191 = arith.constant 159 : index
    %c0_192 = arith.constant 0 : index
    %399 = vector.load %arg2[%c159_191, %c0_192] : memref<248x128xf32, #tpu.memory_space<vmem>>, vector<1x10xf32>
    %400 = vector.broadcast %399 : vector<1x10xf32> to vector<2x10xf32>
    %401 = arith.addf %398, %400 : vector<2x10xf32>
    %402 = arith.addf %389, %401 : vector<2x10xf32>
    %cst_193 = arith.constant dense<0.000000e+00> : vector<2xf32>
    %403 = vector.multi_reduction <add>, %402, %cst_193 [1] : vector<2x10xf32> to vector<2xf32>
    %404 = vector.shape_cast %403 : vector<2xf32> to vector<2x1xf32>
    %cst_194 = arith.constant 1.000000e+01 : f32
    %405 = vector.broadcast %cst_194 : f32 to vector<2x1xf32>
    %406 = arith.divf %404, %405 : vector<2x1xf32>
    %407 = vector.broadcast %406 : vector<2x1xf32> to vector<2x10xf32>
    %408 = arith.subf %402, %407 : vector<2x10xf32>
    %409 = arith.mulf %408, %408 : vector<2x10xf32>
    %cst_195 = arith.constant dense<0.000000e+00> : vector<2xf32>
    %410 = vector.multi_reduction <add>, %409, %cst_195 [1] : vector<2x10xf32> to vector<2xf32>
    %411 = vector.shape_cast %410 : vector<2xf32> to vector<2x1xf32>
    %cst_196 = arith.constant 1.000000e+01 : f32
    %412 = vector.broadcast %cst_196 : f32 to vector<2x1xf32>
    %413 = arith.divf %411, %412 : vector<2x1xf32>
    %cst_197 = arith.constant 9.99999974E-6 : f32
    %414 = vector.broadcast %cst_197 : f32 to vector<2x1xf32>
    %415 = arith.addf %413, %414 : vector<2x1xf32>
    %416 = math.rsqrt %415 : vector<2x1xf32>
    %417 = vector.broadcast %416 : vector<2x1xf32> to vector<2x10xf32>
    %418 = arith.mulf %408, %417 : vector<2x10xf32>
    %c126_198 = arith.constant 126 : index
    %c0_199 = arith.constant 0 : index
    %419 = vector.load %arg2[%c126_198, %c0_199] : memref<248x128xf32, #tpu.memory_space<vmem>>, vector<1x10xf32>
    %420 = vector.broadcast %419 : vector<1x10xf32> to vector<2x10xf32>
    %421 = arith.mulf %418, %420 : vector<2x10xf32>
    %c127_200 = arith.constant 127 : index
    %c0_201 = arith.constant 0 : index
    %422 = vector.load %arg2[%c127_200, %c0_201] : memref<248x128xf32, #tpu.memory_space<vmem>>, vector<1x10xf32>
    %423 = vector.broadcast %422 : vector<1x10xf32> to vector<2x10xf32>
    %424 = arith.addf %421, %423 : vector<2x10xf32>
    %c160_202 = arith.constant 160 : index
    %c0_203 = arith.constant 0 : index
    %425 = vector.load %arg2[%c160_202, %c0_203] : memref<248x128xf32, #tpu.memory_space<vmem>>, vector<10x12xf32>
    %cst_204 = arith.constant dense<0.000000e+00> : vector<2x12xf32>
    %426 = tpu.matmul %424, %425, %cst_204 {dimension_numbers = #tpu.dot_dimension_numbers<[1], [0], [0], [1], [0, 0, 1, 1], [], []>} : vector<2x10xf32>, vector<10x12xf32>, vector<2x12xf32> -> vector<2x12xf32>
    %c170_205 = arith.constant 170 : index
    %c0_206 = arith.constant 0 : index
    %427 = vector.load %arg2[%c170_205, %c0_206] : memref<248x128xf32, #tpu.memory_space<vmem>>, vector<1x12xf32>
    %428 = vector.broadcast %427 : vector<1x12xf32> to vector<2x12xf32>
    %429 = arith.addf %426, %428 : vector<2x12xf32>
    %cst_207 = arith.constant 0.000000e+00 : f32
    %430 = vector.broadcast %cst_207 : f32 to vector<2x12xf32>
    %431 = arith.maximumf %429, %430 : vector<2x12xf32>
    %c171_208 = arith.constant 171 : index
    %c0_209 = arith.constant 0 : index
    %432 = vector.load %arg2[%c171_208, %c0_209] : memref<248x128xf32, #tpu.memory_space<vmem>>, vector<12x1xf32>
    %cst_210 = arith.constant dense<0.000000e+00> : vector<2x1xf32>
    %433 = tpu.matmul %431, %432, %cst_210 {dimension_numbers = #tpu.dot_dimension_numbers<[1], [0], [0], [1], [0, 0, 1, 1], [], []>} : vector<2x12xf32>, vector<12x1xf32>, vector<2x1xf32> -> vector<2x1xf32>
    %c183_211 = arith.constant 183 : index
    %c0_212 = arith.constant 0 : index
    %434 = vector.load %arg2[%c183_211, %c0_212] : memref<248x128xf32, #tpu.memory_space<vmem>>, vector<1x1xf32>
    %435 = vector.broadcast %434 : vector<1x1xf32> to vector<2x1xf32>
    %436 = arith.addf %433, %435 : vector<2x1xf32>
    %c184_213 = arith.constant 184 : index
    %c0_214 = arith.constant 0 : index
    %437 = vector.load %arg2[%c184_213, %c0_214] : memref<248x128xf32, #tpu.memory_space<vmem>>, vector<10x12xf32>
    %cst_215 = arith.constant dense<0.000000e+00> : vector<2x12xf32>
    %438 = tpu.matmul %424, %437, %cst_215 {dimension_numbers = #tpu.dot_dimension_numbers<[1], [0], [0], [1], [0, 0, 1, 1], [], []>} : vector<2x10xf32>, vector<10x12xf32>, vector<2x12xf32> -> vector<2x12xf32>
    %c194_216 = arith.constant 194 : index
    %c0_217 = arith.constant 0 : index
    %439 = vector.load %arg2[%c194_216, %c0_217] : memref<248x128xf32, #tpu.memory_space<vmem>>, vector<1x12xf32>
    %440 = vector.broadcast %439 : vector<1x12xf32> to vector<2x12xf32>
    %441 = arith.addf %438, %440 : vector<2x12xf32>
    %cst_218 = arith.constant 0.000000e+00 : f32
    %442 = vector.broadcast %cst_218 : f32 to vector<2x12xf32>
    %443 = arith.maximumf %441, %442 : vector<2x12xf32>
    %c195_219 = arith.constant 195 : index
    %c0_220 = arith.constant 0 : index
    %444 = vector.load %arg2[%c195_219, %c0_220] : memref<248x128xf32, #tpu.memory_space<vmem>>, vector<12x1xf32>
    %cst_221 = arith.constant dense<0.000000e+00> : vector<2x1xf32>
    %445 = tpu.matmul %443, %444, %cst_221 {dimension_numbers = #tpu.dot_dimension_numbers<[1], [0], [0], [1], [0, 0, 1, 1], [], []>} : vector<2x12xf32>, vector<12x1xf32>, vector<2x1xf32> -> vector<2x1xf32>
    %c207_222 = arith.constant 207 : index
    %c0_223 = arith.constant 0 : index
    %446 = vector.load %arg2[%c207_222, %c0_223] : memref<248x128xf32, #tpu.memory_space<vmem>>, vector<1x1xf32>
    %447 = vector.broadcast %446 : vector<1x1xf32> to vector<2x1xf32>
    %448 = arith.addf %445, %447 : vector<2x1xf32>
    %c208_224 = arith.constant 208 : index
    %c0_225 = arith.constant 0 : index
    %449 = vector.load %arg2[%c208_224, %c0_225] : memref<248x128xf32, #tpu.memory_space<vmem>>, vector<10x12xf32>
    %cst_226 = arith.constant dense<0.000000e+00> : vector<2x12xf32>
    %450 = tpu.matmul %424, %449, %cst_226 {dimension_numbers = #tpu.dot_dimension_numbers<[1], [0], [0], [1], [0, 0, 1, 1], [], []>} : vector<2x10xf32>, vector<10x12xf32>, vector<2x12xf32> -> vector<2x12xf32>
    %c218_227 = arith.constant 218 : index
    %c0_228 = arith.constant 0 : index
    %451 = vector.load %arg2[%c218_227, %c0_228] : memref<248x128xf32, #tpu.memory_space<vmem>>, vector<1x12xf32>
    %452 = vector.broadcast %451 : vector<1x12xf32> to vector<2x12xf32>
    %453 = arith.addf %450, %452 : vector<2x12xf32>
    %cst_229 = arith.constant 0.000000e+00 : f32
    %454 = vector.broadcast %cst_229 : f32 to vector<2x12xf32>
    %455 = arith.maximumf %453, %454 : vector<2x12xf32>
    %c219_230 = arith.constant 219 : index
    %c0_231 = arith.constant 0 : index
    %456 = vector.load %arg2[%c219_230, %c0_231] : memref<248x128xf32, #tpu.memory_space<vmem>>, vector<12x1xf32>
    %cst_232 = arith.constant dense<0.000000e+00> : vector<2x1xf32>
    %457 = tpu.matmul %455, %456, %cst_232 {dimension_numbers = #tpu.dot_dimension_numbers<[1], [0], [0], [1], [0, 0, 1, 1], [], []>} : vector<2x12xf32>, vector<12x1xf32>, vector<2x1xf32> -> vector<2x1xf32>
    %c231_233 = arith.constant 231 : index
    %c0_234 = arith.constant 0 : index
    %458 = vector.load %arg2[%c231_233, %c0_234] : memref<248x128xf32, #tpu.memory_space<vmem>>, vector<1x1xf32>
    %459 = vector.broadcast %458 : vector<1x1xf32> to vector<2x1xf32>
    %460 = arith.addf %457, %459 : vector<2x1xf32>
    %461 = math.tanh %436 : vector<2x1xf32>
    %cst_235 = arith.constant 1.000000e+01 : f32
    %462 = vector.broadcast %cst_235 : f32 to vector<2x1xf32>
    %463 = arith.mulf %461, %462 : vector<2x1xf32>
    %464 = arith.subf %0, %463 : vector<2x1xf32>
    %cst_236 = arith.constant 0.000000e+00 : f32
    %465 = vector.broadcast %cst_236 : f32 to vector<2x1xf32>
    %466 = arith.subf %465, %448 : vector<2x1xf32>
    %467 = math.exp %466 : vector<2x1xf32>
    %468 = arith.mulf %464, %467 : vector<2x1xf32>
    %cst_237 = arith.constant -5.000000e-01 : f32
    %469 = vector.broadcast %cst_237 : f32 to vector<2x1xf32>
    %470 = arith.mulf %469, %468 : vector<2x1xf32>
    %471 = arith.mulf %470, %468 : vector<2x1xf32>
    %472 = arith.subf %471, %448 : vector<2x1xf32>
    %cst_238 = arith.constant 0.918938517 : f32
    %473 = vector.broadcast %cst_238 : f32 to vector<2x1xf32>
    %474 = arith.subf %472, %473 : vector<2x1xf32>
    %475 = arith.addf %474, %460 : vector<2x1xf32>
    %c35_239 = arith.constant 35 : index
    %c0_240 = arith.constant 0 : index
    %476 = vector.load %arg2[%c35_239, %c0_240] : memref<248x128xf32, #tpu.memory_space<vmem>>, vector<10x10xf32>
    %cst_241 = arith.constant dense<0.000000e+00> : vector<2x10xf32>
    %477 = tpu.matmul %424, %476, %cst_241 {dimension_numbers = #tpu.dot_dimension_numbers<[1], [0], [0], [1], [0, 0, 1, 1], [], []>} : vector<2x10xf32>, vector<10x10xf32>, vector<2x10xf32> -> vector<2x10xf32>
    %c45_242 = arith.constant 45 : index
    %c0_243 = arith.constant 0 : index
    %478 = vector.load %arg2[%c45_242, %c0_243] : memref<248x128xf32, #tpu.memory_space<vmem>>, vector<1x10xf32>
    %479 = vector.broadcast %478 : vector<1x10xf32> to vector<2x10xf32>
    %480 = arith.addf %477, %479 : vector<2x10xf32>
    %c46_244 = arith.constant 46 : index
    %c0_245 = arith.constant 0 : index
    %481 = vector.load %arg2[%c46_244, %c0_245] : memref<248x128xf32, #tpu.memory_space<vmem>>, vector<10x10xf32>
    %cst_246 = arith.constant dense<0.000000e+00> : vector<2x10xf32>
    %482 = tpu.matmul %424, %481, %cst_246 {dimension_numbers = #tpu.dot_dimension_numbers<[1], [0], [0], [1], [0, 0, 1, 1], [], []>} : vector<2x10xf32>, vector<10x10xf32>, vector<2x10xf32> -> vector<2x10xf32>
    %c56_247 = arith.constant 56 : index
    %c0_248 = arith.constant 0 : index
    %483 = vector.load %arg2[%c56_247, %c0_248] : memref<248x128xf32, #tpu.memory_space<vmem>>, vector<1x10xf32>
    %484 = vector.broadcast %483 : vector<1x10xf32> to vector<2x10xf32>
    %485 = arith.addf %482, %484 : vector<2x10xf32>
    %c24_249 = arith.constant 24 : index
    %c0_250 = arith.constant 0 : index
    %486 = vector.load %arg2[%c24_249, %c0_250] : memref<248x128xf32, #tpu.memory_space<vmem>>, vector<10x10xf32>
    %cst_251 = arith.constant dense<0.000000e+00> : vector<2x10xf32>
    %487 = tpu.matmul %424, %486, %cst_251 {dimension_numbers = #tpu.dot_dimension_numbers<[1], [0], [0], [1], [0, 0, 1, 1], [], []>} : vector<2x10xf32>, vector<10x10xf32>, vector<2x10xf32> -> vector<2x10xf32>
    %c34_252 = arith.constant 34 : index
    %c0_253 = arith.constant 0 : index
    %488 = vector.load %arg2[%c34_252, %c0_253] : memref<248x128xf32, #tpu.memory_space<vmem>>, vector<1x10xf32>
    %489 = vector.broadcast %488 : vector<1x10xf32> to vector<2x10xf32>
    %490 = arith.addf %487, %489 : vector<2x10xf32>
    %c232_254 = arith.constant 232 : index
    %c0_255 = arith.constant 0 : index
    %491 = vector.load %arg2[%c232_254, %c0_255] : memref<248x128xf32, #tpu.memory_space<vmem>>, vector<10x2xf32>
    %c242_256 = arith.constant 242 : index
    %c0_257 = arith.constant 0 : index
    %492 = vector.load %arg2[%c242_256, %c0_257] : memref<248x128xf32, #tpu.memory_space<vmem>>, vector<2x10xf32>
    %493 = vector.broadcast %40 : vector<1x10xf32> to vector<2x10xf32>
    %494 = arith.mulf %490, %493 : vector<2x10xf32>
    %cst_258 = arith.constant dense<0.000000e+00> : vector<2x2xf32>
    %495 = tpu.matmul %494, %491, %cst_258 {dimension_numbers = #tpu.dot_dimension_numbers<[1], [0], [0], [1], [0, 0, 1, 1], [], []>} : vector<2x10xf32>, vector<10x2xf32>, vector<2x2xf32> -> vector<2x2xf32>
    %cst_259 = arith.constant 2.07944155 : f32
    %496 = vector.broadcast %cst_259 : f32 to vector<2x2xf32>
    %497 = arith.addf %495, %496 : vector<2x2xf32>
    %498 = arith.mulf %490, %256 : vector<2x10xf32>
    %cst_260 = arith.constant dense<0.000000e+00> : vector<2x2xf32>
    %499 = tpu.matmul %498, %491, %cst_260 {dimension_numbers = #tpu.dot_dimension_numbers<[1], [0], [0], [1], [0, 0, 1, 1], [], []>} : vector<2x10xf32>, vector<10x2xf32>, vector<2x2xf32> -> vector<2x2xf32>
    %500 = arith.mulf %490, %480 : vector<2x10xf32>
    %cst_261 = arith.constant dense<0.000000e+00> : vector<2x2xf32>
    %501 = tpu.matmul %500, %491, %cst_261 {dimension_numbers = #tpu.dot_dimension_numbers<[1], [0], [0], [1], [0, 0, 1, 1], [], []>} : vector<2x10xf32>, vector<10x2xf32>, vector<2x2xf32> -> vector<2x2xf32>
    %502 = arith.maximumf %497, %499 : vector<2x2xf32>
    %503 = arith.maximumf %502, %501 : vector<2x2xf32>
    %504 = arith.subf %497, %503 : vector<2x2xf32>
    %505 = math.exp %504 : vector<2x2xf32>
    %506 = arith.subf %499, %503 : vector<2x2xf32>
    %507 = math.exp %506 : vector<2x2xf32>
    %508 = arith.subf %501, %503 : vector<2x2xf32>
    %509 = math.exp %508 : vector<2x2xf32>
    %510 = arith.addf %505, %507 : vector<2x2xf32>
    %511 = arith.addf %510, %509 : vector<2x2xf32>
    %512 = tpu.reciprocal %511 {approx = true} : vector<2x2xf32> -> vector<2x2xf32>
    %cst_262 = arith.constant dense<0.000000e+00> : vector<2x10xf32>
    %513 = tpu.matmul %505, %492, %cst_262 {dimension_numbers = #tpu.dot_dimension_numbers<[1], [0], [0], [1], [0, 0, 1, 1], [], []>} : vector<2x2xf32>, vector<2x10xf32>, vector<2x10xf32> -> vector<2x10xf32>
    %514 = vector.broadcast %44 : vector<1x10xf32> to vector<2x10xf32>
    %515 = arith.mulf %513, %514 : vector<2x10xf32>
    %cst_263 = arith.constant dense<0.000000e+00> : vector<2x10xf32>
    %516 = tpu.matmul %507, %492, %cst_263 {dimension_numbers = #tpu.dot_dimension_numbers<[1], [0], [0], [1], [0, 0, 1, 1], [], []>} : vector<2x2xf32>, vector<2x10xf32>, vector<2x10xf32> -> vector<2x10xf32>
    %517 = arith.mulf %516, %261 : vector<2x10xf32>
    %518 = arith.addf %515, %517 : vector<2x10xf32>
    %cst_264 = arith.constant dense<0.000000e+00> : vector<2x10xf32>
    %519 = tpu.matmul %509, %492, %cst_264 {dimension_numbers = #tpu.dot_dimension_numbers<[1], [0], [0], [1], [0, 0, 1, 1], [], []>} : vector<2x2xf32>, vector<2x10xf32>, vector<2x10xf32> -> vector<2x10xf32>
    %520 = arith.mulf %519, %485 : vector<2x10xf32>
    %521 = arith.addf %518, %520 : vector<2x10xf32>
    %cst_265 = arith.constant dense<0.000000e+00> : vector<2x10xf32>
    %522 = tpu.matmul %512, %492, %cst_265 {dimension_numbers = #tpu.dot_dimension_numbers<[1], [0], [0], [1], [0, 0, 1, 1], [], []>} : vector<2x2xf32>, vector<2x10xf32>, vector<2x10xf32> -> vector<2x10xf32>
    %523 = arith.mulf %521, %522 : vector<2x10xf32>
    %c57_266 = arith.constant 57 : index
    %c0_267 = arith.constant 0 : index
    %524 = vector.load %arg2[%c57_266, %c0_267] : memref<248x128xf32, #tpu.memory_space<vmem>>, vector<10x10xf32>
    %cst_268 = arith.constant dense<0.000000e+00> : vector<2x10xf32>
    %525 = tpu.matmul %523, %524, %cst_268 {dimension_numbers = #tpu.dot_dimension_numbers<[1], [0], [0], [1], [0, 0, 1, 1], [], []>} : vector<2x10xf32>, vector<10x10xf32>, vector<2x10xf32> -> vector<2x10xf32>
    %c67_269 = arith.constant 67 : index
    %c0_270 = arith.constant 0 : index
    %526 = vector.load %arg2[%c67_269, %c0_270] : memref<248x128xf32, #tpu.memory_space<vmem>>, vector<1x10xf32>
    %527 = vector.broadcast %526 : vector<1x10xf32> to vector<2x10xf32>
    %528 = arith.addf %525, %527 : vector<2x10xf32>
    %529 = arith.addf %424, %528 : vector<2x10xf32>
    %cst_271 = arith.constant dense<0.000000e+00> : vector<2xf32>
    %530 = vector.multi_reduction <add>, %529, %cst_271 [1] : vector<2x10xf32> to vector<2xf32>
    %531 = vector.shape_cast %530 : vector<2xf32> to vector<2x1xf32>
    %cst_272 = arith.constant 1.000000e+01 : f32
    %532 = vector.broadcast %cst_272 : f32 to vector<2x1xf32>
    %533 = arith.divf %531, %532 : vector<2x1xf32>
    %534 = vector.broadcast %533 : vector<2x1xf32> to vector<2x10xf32>
    %535 = arith.subf %529, %534 : vector<2x10xf32>
    %536 = arith.mulf %535, %535 : vector<2x10xf32>
    %cst_273 = arith.constant dense<0.000000e+00> : vector<2xf32>
    %537 = vector.multi_reduction <add>, %536, %cst_273 [1] : vector<2x10xf32> to vector<2xf32>
    %538 = vector.shape_cast %537 : vector<2xf32> to vector<2x1xf32>
    %cst_274 = arith.constant 1.000000e+01 : f32
    %539 = vector.broadcast %cst_274 : f32 to vector<2x1xf32>
    %540 = arith.divf %538, %539 : vector<2x1xf32>
    %cst_275 = arith.constant 9.99999974E-6 : f32
    %541 = vector.broadcast %cst_275 : f32 to vector<2x1xf32>
    %542 = arith.addf %540, %541 : vector<2x1xf32>
    %543 = math.rsqrt %542 : vector<2x1xf32>
    %544 = vector.broadcast %543 : vector<2x1xf32> to vector<2x10xf32>
    %545 = arith.mulf %535, %544 : vector<2x10xf32>
    %c122_276 = arith.constant 122 : index
    %c0_277 = arith.constant 0 : index
    %546 = vector.load %arg2[%c122_276, %c0_277] : memref<248x128xf32, #tpu.memory_space<vmem>>, vector<1x10xf32>
    %547 = vector.broadcast %546 : vector<1x10xf32> to vector<2x10xf32>
    %548 = arith.mulf %545, %547 : vector<2x10xf32>
    %c123_278 = arith.constant 123 : index
    %c0_279 = arith.constant 0 : index
    %549 = vector.load %arg2[%c123_278, %c0_279] : memref<248x128xf32, #tpu.memory_space<vmem>>, vector<1x10xf32>
    %550 = vector.broadcast %549 : vector<1x10xf32> to vector<2x10xf32>
    %551 = arith.addf %548, %550 : vector<2x10xf32>
    %c68_280 = arith.constant 68 : index
    %c0_281 = arith.constant 0 : index
    %552 = vector.load %arg2[%c68_280, %c0_281] : memref<248x128xf32, #tpu.memory_space<vmem>>, vector<10x10xf32>
    %cst_282 = arith.constant dense<0.000000e+00> : vector<2x10xf32>
    %553 = tpu.matmul %551, %552, %cst_282 {dimension_numbers = #tpu.dot_dimension_numbers<[1], [0], [0], [1], [0, 0, 1, 1], [], []>} : vector<2x10xf32>, vector<10x10xf32>, vector<2x10xf32> -> vector<2x10xf32>
    %c78_283 = arith.constant 78 : index
    %c0_284 = arith.constant 0 : index
    %554 = vector.load %arg2[%c78_283, %c0_284] : memref<248x128xf32, #tpu.memory_space<vmem>>, vector<1x10xf32>
    %555 = vector.broadcast %554 : vector<1x10xf32> to vector<2x10xf32>
    %556 = arith.addf %553, %555 : vector<2x10xf32>
    %557 = vector.shape_cast %556 : vector<2x10xf32> to vector<2x1x10xf32>
    %c244_285 = arith.constant 244 : index
    %c0_286 = arith.constant 0 : index
    %558 = vector.load %arg2[%c244_285, %c0_286] : memref<248x128xf32, #tpu.memory_space<vmem>>, vector<1x10xf32>
    %559 = vector.shape_cast %558 : vector<1x10xf32> to vector<1x1x10xf32>
    %560 = vector.broadcast %559 : vector<1x1x10xf32> to vector<2x1x10xf32>
    %561 = arith.mulf %557, %560 : vector<2x1x10xf32>
    "tpu.trace_start"() <{level = 10 : i32, message = "bqd,bdt->bqt"}> : () -> ()
    %cst_287 = arith.constant dense<0.000000e+00> : vector<2x1x8xf32>
    %562 = tpu.matmul %561, %29, %cst_287 {dimension_numbers = #tpu.dot_dimension_numbers<[2], [1], [1], [2], [0, 0, 0, 1, 1, 2], [0], [0]>} : vector<2x1x10xf32>, vector<2x10x8xf32>, vector<2x1x8xf32> -> vector<2x1x8xf32>
    "tpu.trace_stop"() : () -> ()
    %cst_288 = arith.constant dense<0xFF800000> : vector<2x1xf32>
    %563 = vector.multi_reduction <maximumf>, %562, %cst_288 [2] : vector<2x1x8xf32> to vector<2x1xf32>
    %564 = vector.shape_cast %563 : vector<2x1xf32> to vector<2x1x1xf32>
    %565 = vector.broadcast %564 : vector<2x1x1xf32> to vector<2x1x8xf32>
    %566 = arith.subf %562, %565 : vector<2x1x8xf32>
    %567 = math.exp %566 : vector<2x1x8xf32>
    %cst_289 = arith.constant dense<0.000000e+00> : vector<2x1xf32>
    %568 = vector.multi_reduction <add>, %567, %cst_289 [2] : vector<2x1x8xf32> to vector<2x1xf32>
    %569 = vector.shape_cast %568 : vector<2x1xf32> to vector<2x1x1xf32>
    %570 = tpu.reciprocal %569 {approx = true} : vector<2x1x1xf32> -> vector<2x1x1xf32>
    %571 = vector.broadcast %570 : vector<2x1x1xf32> to vector<2x1x8xf32>
    %572 = arith.mulf %567, %571 : vector<2x1x8xf32>
    "tpu.trace_start"() <{level = 10 : i32, message = "bqt,btd->bqd"}> : () -> ()
    %cst_290 = arith.constant dense<0.000000e+00> : vector<2x1x10xf32>
    %573 = tpu.matmul %572, %35, %cst_290 {dimension_numbers = #tpu.dot_dimension_numbers<[2], [1], [1], [2], [0, 0, 0, 1, 1, 2], [0], [0]>} : vector<2x1x8xf32>, vector<2x8x10xf32>, vector<2x1x10xf32> -> vector<2x1x10xf32>
    "tpu.trace_stop"() : () -> ()
    %574 = vector.shape_cast %573 : vector<2x1x10xf32> to vector<2x10xf32>
    %c101_291 = arith.constant 101 : index
    %c0_292 = arith.constant 0 : index
    %575 = vector.load %arg2[%c101_291, %c0_292] : memref<248x128xf32, #tpu.memory_space<vmem>>, vector<10x10xf32>
    %cst_293 = arith.constant dense<0.000000e+00> : vector<2x10xf32>
    %576 = tpu.matmul %574, %575, %cst_293 {dimension_numbers = #tpu.dot_dimension_numbers<[1], [0], [0], [1], [0, 0, 1, 1], [], []>} : vector<2x10xf32>, vector<10x10xf32>, vector<2x10xf32> -> vector<2x10xf32>
    %c245_294 = arith.constant 245 : index
    %c0_295 = arith.constant 0 : index
    %577 = vector.load %arg2[%c245_294, %c0_295] : memref<248x128xf32, #tpu.memory_space<vmem>>, vector<1x10xf32>
    %578 = vector.shape_cast %577 : vector<1x10xf32> to vector<1x1x10xf32>
    %579 = vector.broadcast %578 : vector<1x1x10xf32> to vector<2x1x10xf32>
    %580 = arith.mulf %557, %579 : vector<2x1x10xf32>
    "tpu.trace_start"() <{level = 10 : i32, message = "bqd,bdt->bqt"}> : () -> ()
    %cst_296 = arith.constant dense<0.000000e+00> : vector<2x1x8xf32>
    %581 = tpu.matmul %580, %29, %cst_296 {dimension_numbers = #tpu.dot_dimension_numbers<[2], [1], [1], [2], [0, 0, 0, 1, 1, 2], [0], [0]>} : vector<2x1x10xf32>, vector<2x10x8xf32>, vector<2x1x8xf32> -> vector<2x1x8xf32>
    "tpu.trace_stop"() : () -> ()
    %cst_297 = arith.constant dense<0xFF800000> : vector<2x1xf32>
    %582 = vector.multi_reduction <maximumf>, %581, %cst_297 [2] : vector<2x1x8xf32> to vector<2x1xf32>
    %583 = vector.shape_cast %582 : vector<2x1xf32> to vector<2x1x1xf32>
    %584 = vector.broadcast %583 : vector<2x1x1xf32> to vector<2x1x8xf32>
    %585 = arith.subf %581, %584 : vector<2x1x8xf32>
    %586 = math.exp %585 : vector<2x1x8xf32>
    %cst_298 = arith.constant dense<0.000000e+00> : vector<2x1xf32>
    %587 = vector.multi_reduction <add>, %586, %cst_298 [2] : vector<2x1x8xf32> to vector<2x1xf32>
    %588 = vector.shape_cast %587 : vector<2x1xf32> to vector<2x1x1xf32>
    %589 = tpu.reciprocal %588 {approx = true} : vector<2x1x1xf32> -> vector<2x1x1xf32>
    %590 = vector.broadcast %589 : vector<2x1x1xf32> to vector<2x1x8xf32>
    %591 = arith.mulf %586, %590 : vector<2x1x8xf32>
    "tpu.trace_start"() <{level = 10 : i32, message = "bqt,btd->bqd"}> : () -> ()
    %cst_299 = arith.constant dense<0.000000e+00> : vector<2x1x10xf32>
    %592 = tpu.matmul %591, %35, %cst_299 {dimension_numbers = #tpu.dot_dimension_numbers<[2], [1], [1], [2], [0, 0, 0, 1, 1, 2], [0], [0]>} : vector<2x1x8xf32>, vector<2x8x10xf32>, vector<2x1x10xf32> -> vector<2x1x10xf32>
    "tpu.trace_stop"() : () -> ()
    %593 = vector.shape_cast %592 : vector<2x1x10xf32> to vector<2x10xf32>
    %c111_300 = arith.constant 111 : index
    %c0_301 = arith.constant 0 : index
    %594 = vector.load %arg2[%c111_300, %c0_301] : memref<248x128xf32, #tpu.memory_space<vmem>>, vector<10x10xf32>
    %cst_302 = arith.constant dense<0.000000e+00> : vector<2x10xf32>
    %595 = tpu.matmul %593, %594, %cst_302 {dimension_numbers = #tpu.dot_dimension_numbers<[1], [0], [0], [1], [0, 0, 1, 1], [], []>} : vector<2x10xf32>, vector<10x10xf32>, vector<2x10xf32> -> vector<2x10xf32>
    %596 = arith.addf %576, %595 : vector<2x10xf32>
    %c121_303 = arith.constant 121 : index
    %c0_304 = arith.constant 0 : index
    %597 = vector.load %arg2[%c121_303, %c0_304] : memref<248x128xf32, #tpu.memory_space<vmem>>, vector<1x10xf32>
    %598 = vector.broadcast %597 : vector<1x10xf32> to vector<2x10xf32>
    %599 = arith.addf %596, %598 : vector<2x10xf32>
    %600 = arith.addf %551, %599 : vector<2x10xf32>
    %cst_305 = arith.constant dense<0.000000e+00> : vector<2xf32>
    %601 = vector.multi_reduction <add>, %600, %cst_305 [1] : vector<2x10xf32> to vector<2xf32>
    %602 = vector.shape_cast %601 : vector<2xf32> to vector<2x1xf32>
    %cst_306 = arith.constant 1.000000e+01 : f32
    %603 = vector.broadcast %cst_306 : f32 to vector<2x1xf32>
    %604 = arith.divf %602, %603 : vector<2x1xf32>
    %605 = vector.broadcast %604 : vector<2x1xf32> to vector<2x10xf32>
    %606 = arith.subf %600, %605 : vector<2x10xf32>
    %607 = arith.mulf %606, %606 : vector<2x10xf32>
    %cst_307 = arith.constant dense<0.000000e+00> : vector<2xf32>
    %608 = vector.multi_reduction <add>, %607, %cst_307 [1] : vector<2x10xf32> to vector<2xf32>
    %609 = vector.shape_cast %608 : vector<2xf32> to vector<2x1xf32>
    %cst_308 = arith.constant 1.000000e+01 : f32
    %610 = vector.broadcast %cst_308 : f32 to vector<2x1xf32>
    %611 = arith.divf %609, %610 : vector<2x1xf32>
    %cst_309 = arith.constant 9.99999974E-6 : f32
    %612 = vector.broadcast %cst_309 : f32 to vector<2x1xf32>
    %613 = arith.addf %611, %612 : vector<2x1xf32>
    %614 = math.rsqrt %613 : vector<2x1xf32>
    %615 = vector.broadcast %614 : vector<2x1xf32> to vector<2x10xf32>
    %616 = arith.mulf %606, %615 : vector<2x10xf32>
    %c124_310 = arith.constant 124 : index
    %c0_311 = arith.constant 0 : index
    %617 = vector.load %arg2[%c124_310, %c0_311] : memref<248x128xf32, #tpu.memory_space<vmem>>, vector<1x10xf32>
    %618 = vector.broadcast %617 : vector<1x10xf32> to vector<2x10xf32>
    %619 = arith.mulf %616, %618 : vector<2x10xf32>
    %c125_312 = arith.constant 125 : index
    %c0_313 = arith.constant 0 : index
    %620 = vector.load %arg2[%c125_312, %c0_313] : memref<248x128xf32, #tpu.memory_space<vmem>>, vector<1x10xf32>
    %621 = vector.broadcast %620 : vector<1x10xf32> to vector<2x10xf32>
    %622 = arith.addf %619, %621 : vector<2x10xf32>
    %c128_314 = arith.constant 128 : index
    %c0_315 = arith.constant 0 : index
    %623 = vector.load %arg2[%c128_314, %c0_315] : memref<248x128xf32, #tpu.memory_space<vmem>>, vector<10x20xf32>
    %cst_316 = arith.constant dense<0.000000e+00> : vector<2x20xf32>
    %624 = tpu.matmul %622, %623, %cst_316 {dimension_numbers = #tpu.dot_dimension_numbers<[1], [0], [0], [1], [0, 0, 1, 1], [], []>} : vector<2x10xf32>, vector<10x20xf32>, vector<2x20xf32> -> vector<2x20xf32>
    %c138_317 = arith.constant 138 : index
    %c0_318 = arith.constant 0 : index
    %625 = vector.load %arg2[%c138_317, %c0_318] : memref<248x128xf32, #tpu.memory_space<vmem>>, vector<1x20xf32>
    %626 = vector.broadcast %625 : vector<1x20xf32> to vector<2x20xf32>
    %627 = arith.addf %624, %626 : vector<2x20xf32>
    %cst_319 = arith.constant 0.000000e+00 : f32
    %628 = vector.broadcast %cst_319 : f32 to vector<2x20xf32>
    %629 = arith.maximumf %627, %628 : vector<2x20xf32>
    %c139_320 = arith.constant 139 : index
    %c0_321 = arith.constant 0 : index
    %630 = vector.load %arg2[%c139_320, %c0_321] : memref<248x128xf32, #tpu.memory_space<vmem>>, vector<20x10xf32>
    %cst_322 = arith.constant dense<0.000000e+00> : vector<2x10xf32>
    %631 = tpu.matmul %629, %630, %cst_322 {dimension_numbers = #tpu.dot_dimension_numbers<[1], [0], [0], [1], [0, 0, 1, 1], [], []>} : vector<2x20xf32>, vector<20x10xf32>, vector<2x10xf32> -> vector<2x10xf32>
    %c159_323 = arith.constant 159 : index
    %c0_324 = arith.constant 0 : index
    %632 = vector.load %arg2[%c159_323, %c0_324] : memref<248x128xf32, #tpu.memory_space<vmem>>, vector<1x10xf32>
    %633 = vector.broadcast %632 : vector<1x10xf32> to vector<2x10xf32>
    %634 = arith.addf %631, %633 : vector<2x10xf32>
    %635 = arith.addf %622, %634 : vector<2x10xf32>
    %cst_325 = arith.constant dense<0.000000e+00> : vector<2xf32>
    %636 = vector.multi_reduction <add>, %635, %cst_325 [1] : vector<2x10xf32> to vector<2xf32>
    %637 = vector.shape_cast %636 : vector<2xf32> to vector<2x1xf32>
    %cst_326 = arith.constant 1.000000e+01 : f32
    %638 = vector.broadcast %cst_326 : f32 to vector<2x1xf32>
    %639 = arith.divf %637, %638 : vector<2x1xf32>
    %640 = vector.broadcast %639 : vector<2x1xf32> to vector<2x10xf32>
    %641 = arith.subf %635, %640 : vector<2x10xf32>
    %642 = arith.mulf %641, %641 : vector<2x10xf32>
    %cst_327 = arith.constant dense<0.000000e+00> : vector<2xf32>
    %643 = vector.multi_reduction <add>, %642, %cst_327 [1] : vector<2x10xf32> to vector<2xf32>
    %644 = vector.shape_cast %643 : vector<2xf32> to vector<2x1xf32>
    %cst_328 = arith.constant 1.000000e+01 : f32
    %645 = vector.broadcast %cst_328 : f32 to vector<2x1xf32>
    %646 = arith.divf %644, %645 : vector<2x1xf32>
    %cst_329 = arith.constant 9.99999974E-6 : f32
    %647 = vector.broadcast %cst_329 : f32 to vector<2x1xf32>
    %648 = arith.addf %646, %647 : vector<2x1xf32>
    %649 = math.rsqrt %648 : vector<2x1xf32>
    %650 = vector.broadcast %649 : vector<2x1xf32> to vector<2x10xf32>
    %651 = arith.mulf %641, %650 : vector<2x10xf32>
    %c126_330 = arith.constant 126 : index
    %c0_331 = arith.constant 0 : index
    %652 = vector.load %arg2[%c126_330, %c0_331] : memref<248x128xf32, #tpu.memory_space<vmem>>, vector<1x10xf32>
    %653 = vector.broadcast %652 : vector<1x10xf32> to vector<2x10xf32>
    %654 = arith.mulf %651, %653 : vector<2x10xf32>
    %c127_332 = arith.constant 127 : index
    %c0_333 = arith.constant 0 : index
    %655 = vector.load %arg2[%c127_332, %c0_333] : memref<248x128xf32, #tpu.memory_space<vmem>>, vector<1x10xf32>
    %656 = vector.broadcast %655 : vector<1x10xf32> to vector<2x10xf32>
    %657 = arith.addf %654, %656 : vector<2x10xf32>
    %c160_334 = arith.constant 160 : index
    %c0_335 = arith.constant 0 : index
    %658 = vector.load %arg2[%c160_334, %c0_335] : memref<248x128xf32, #tpu.memory_space<vmem>>, vector<10x12xf32>
    %cst_336 = arith.constant dense<0.000000e+00> : vector<2x12xf32>
    %659 = tpu.matmul %657, %658, %cst_336 {dimension_numbers = #tpu.dot_dimension_numbers<[1], [0], [0], [1], [0, 0, 1, 1], [], []>} : vector<2x10xf32>, vector<10x12xf32>, vector<2x12xf32> -> vector<2x12xf32>
    %c170_337 = arith.constant 170 : index
    %c0_338 = arith.constant 0 : index
    %660 = vector.load %arg2[%c170_337, %c0_338] : memref<248x128xf32, #tpu.memory_space<vmem>>, vector<1x12xf32>
    %661 = vector.broadcast %660 : vector<1x12xf32> to vector<2x12xf32>
    %662 = arith.addf %659, %661 : vector<2x12xf32>
    %cst_339 = arith.constant 0.000000e+00 : f32
    %663 = vector.broadcast %cst_339 : f32 to vector<2x12xf32>
    %664 = arith.maximumf %662, %663 : vector<2x12xf32>
    %c171_340 = arith.constant 171 : index
    %c0_341 = arith.constant 0 : index
    %665 = vector.load %arg2[%c171_340, %c0_341] : memref<248x128xf32, #tpu.memory_space<vmem>>, vector<12x1xf32>
    %cst_342 = arith.constant dense<0.000000e+00> : vector<2x1xf32>
    %666 = tpu.matmul %664, %665, %cst_342 {dimension_numbers = #tpu.dot_dimension_numbers<[1], [0], [0], [1], [0, 0, 1, 1], [], []>} : vector<2x12xf32>, vector<12x1xf32>, vector<2x1xf32> -> vector<2x1xf32>
    %c183_343 = arith.constant 183 : index
    %c0_344 = arith.constant 0 : index
    %667 = vector.load %arg2[%c183_343, %c0_344] : memref<248x128xf32, #tpu.memory_space<vmem>>, vector<1x1xf32>
    %668 = vector.broadcast %667 : vector<1x1xf32> to vector<2x1xf32>
    %669 = arith.addf %666, %668 : vector<2x1xf32>
    %c184_345 = arith.constant 184 : index
    %c0_346 = arith.constant 0 : index
    %670 = vector.load %arg2[%c184_345, %c0_346] : memref<248x128xf32, #tpu.memory_space<vmem>>, vector<10x12xf32>
    %cst_347 = arith.constant dense<0.000000e+00> : vector<2x12xf32>
    %671 = tpu.matmul %657, %670, %cst_347 {dimension_numbers = #tpu.dot_dimension_numbers<[1], [0], [0], [1], [0, 0, 1, 1], [], []>} : vector<2x10xf32>, vector<10x12xf32>, vector<2x12xf32> -> vector<2x12xf32>
    %c194_348 = arith.constant 194 : index
    %c0_349 = arith.constant 0 : index
    %672 = vector.load %arg2[%c194_348, %c0_349] : memref<248x128xf32, #tpu.memory_space<vmem>>, vector<1x12xf32>
    %673 = vector.broadcast %672 : vector<1x12xf32> to vector<2x12xf32>
    %674 = arith.addf %671, %673 : vector<2x12xf32>
    %cst_350 = arith.constant 0.000000e+00 : f32
    %675 = vector.broadcast %cst_350 : f32 to vector<2x12xf32>
    %676 = arith.maximumf %674, %675 : vector<2x12xf32>
    %c195_351 = arith.constant 195 : index
    %c0_352 = arith.constant 0 : index
    %677 = vector.load %arg2[%c195_351, %c0_352] : memref<248x128xf32, #tpu.memory_space<vmem>>, vector<12x1xf32>
    %cst_353 = arith.constant dense<0.000000e+00> : vector<2x1xf32>
    %678 = tpu.matmul %676, %677, %cst_353 {dimension_numbers = #tpu.dot_dimension_numbers<[1], [0], [0], [1], [0, 0, 1, 1], [], []>} : vector<2x12xf32>, vector<12x1xf32>, vector<2x1xf32> -> vector<2x1xf32>
    %c207_354 = arith.constant 207 : index
    %c0_355 = arith.constant 0 : index
    %679 = vector.load %arg2[%c207_354, %c0_355] : memref<248x128xf32, #tpu.memory_space<vmem>>, vector<1x1xf32>
    %680 = vector.broadcast %679 : vector<1x1xf32> to vector<2x1xf32>
    %681 = arith.addf %678, %680 : vector<2x1xf32>
    %c208_356 = arith.constant 208 : index
    %c0_357 = arith.constant 0 : index
    %682 = vector.load %arg2[%c208_356, %c0_357] : memref<248x128xf32, #tpu.memory_space<vmem>>, vector<10x12xf32>
    %cst_358 = arith.constant dense<0.000000e+00> : vector<2x12xf32>
    %683 = tpu.matmul %657, %682, %cst_358 {dimension_numbers = #tpu.dot_dimension_numbers<[1], [0], [0], [1], [0, 0, 1, 1], [], []>} : vector<2x10xf32>, vector<10x12xf32>, vector<2x12xf32> -> vector<2x12xf32>
    %c218_359 = arith.constant 218 : index
    %c0_360 = arith.constant 0 : index
    %684 = vector.load %arg2[%c218_359, %c0_360] : memref<248x128xf32, #tpu.memory_space<vmem>>, vector<1x12xf32>
    %685 = vector.broadcast %684 : vector<1x12xf32> to vector<2x12xf32>
    %686 = arith.addf %683, %685 : vector<2x12xf32>
    %cst_361 = arith.constant 0.000000e+00 : f32
    %687 = vector.broadcast %cst_361 : f32 to vector<2x12xf32>
    %688 = arith.maximumf %686, %687 : vector<2x12xf32>
    %c219_362 = arith.constant 219 : index
    %c0_363 = arith.constant 0 : index
    %689 = vector.load %arg2[%c219_362, %c0_363] : memref<248x128xf32, #tpu.memory_space<vmem>>, vector<12x1xf32>
    %cst_364 = arith.constant dense<0.000000e+00> : vector<2x1xf32>
    %690 = tpu.matmul %688, %689, %cst_364 {dimension_numbers = #tpu.dot_dimension_numbers<[1], [0], [0], [1], [0, 0, 1, 1], [], []>} : vector<2x12xf32>, vector<12x1xf32>, vector<2x1xf32> -> vector<2x1xf32>
    %c231_365 = arith.constant 231 : index
    %c0_366 = arith.constant 0 : index
    %691 = vector.load %arg2[%c231_365, %c0_366] : memref<248x128xf32, #tpu.memory_space<vmem>>, vector<1x1xf32>
    %692 = vector.broadcast %691 : vector<1x1xf32> to vector<2x1xf32>
    %693 = arith.addf %690, %692 : vector<2x1xf32>
    %694 = math.tanh %669 : vector<2x1xf32>
    %cst_367 = arith.constant 1.000000e+01 : f32
    %695 = vector.broadcast %cst_367 : f32 to vector<2x1xf32>
    %696 = arith.mulf %694, %695 : vector<2x1xf32>
    %697 = arith.subf %0, %696 : vector<2x1xf32>
    %cst_368 = arith.constant 0.000000e+00 : f32
    %698 = vector.broadcast %cst_368 : f32 to vector<2x1xf32>
    %699 = arith.subf %698, %681 : vector<2x1xf32>
    %700 = math.exp %699 : vector<2x1xf32>
    %701 = arith.mulf %697, %700 : vector<2x1xf32>
    %cst_369 = arith.constant -5.000000e-01 : f32
    %702 = vector.broadcast %cst_369 : f32 to vector<2x1xf32>
    %703 = arith.mulf %702, %701 : vector<2x1xf32>
    %704 = arith.mulf %703, %701 : vector<2x1xf32>
    %705 = arith.subf %704, %681 : vector<2x1xf32>
    %cst_370 = arith.constant 0.918938517 : f32
    %706 = vector.broadcast %cst_370 : f32 to vector<2x1xf32>
    %707 = arith.subf %705, %706 : vector<2x1xf32>
    %708 = arith.addf %707, %693 : vector<2x1xf32>
    %709 = arith.maximumf %251, %475 : vector<2x1xf32>
    %710 = arith.maximumf %709, %708 : vector<2x1xf32>
    %cst_371 = arith.constant 0.000000e+00 : f32
    %711 = vector.broadcast %cst_371 : f32 to vector<2x1xf32>
    %712 = arith.subf %251, %710 : vector<2x1xf32>
    %713 = math.exp %712 : vector<2x1xf32>
    %714 = arith.addf %711, %713 : vector<2x1xf32>
    %715 = arith.subf %475, %710 : vector<2x1xf32>
    %716 = math.exp %715 : vector<2x1xf32>
    %717 = arith.addf %714, %716 : vector<2x1xf32>
    %718 = arith.subf %708, %710 : vector<2x1xf32>
    %719 = math.exp %718 : vector<2x1xf32>
    %720 = arith.addf %717, %719 : vector<2x1xf32>
    %721 = math.log %720 : vector<2x1xf32>
    %722 = arith.addf %710, %721 : vector<2x1xf32>
    %723 = arith.maximumf %236, %460 : vector<2x1xf32>
    %724 = arith.maximumf %723, %693 : vector<2x1xf32>
    %cst_372 = arith.constant 0.000000e+00 : f32
    %725 = vector.broadcast %cst_372 : f32 to vector<2x1xf32>
    %726 = arith.subf %236, %724 : vector<2x1xf32>
    %727 = math.exp %726 : vector<2x1xf32>
    %728 = arith.addf %725, %727 : vector<2x1xf32>
    %729 = arith.subf %460, %724 : vector<2x1xf32>
    %730 = math.exp %729 : vector<2x1xf32>
    %731 = arith.addf %728, %730 : vector<2x1xf32>
    %732 = arith.subf %693, %724 : vector<2x1xf32>
    %733 = math.exp %732 : vector<2x1xf32>
    %734 = arith.addf %731, %733 : vector<2x1xf32>
    %735 = math.log %734 : vector<2x1xf32>
    %736 = arith.addf %724, %735 : vector<2x1xf32>
    %737 = arith.subf %722, %736 : vector<2x1xf32>
    %cst_373 = arith.constant dense<0.000000e+00> : vector<1xf32>
    %738 = vector.multi_reduction <add>, %737, %cst_373 [0] : vector<2x1xf32> to vector<1xf32>
    %739 = vector.shape_cast %738 : vector<1xf32> to vector<1x1xf32>
    %cst_374 = arith.constant 5.000000e-01 : f32
    %740 = vector.broadcast %cst_374 : f32 to vector<1x1xf32>
    %741 = arith.mulf %739, %740 : vector<1x1xf32>
    %cst_375 = arith.constant 0.000000e+00 : f32
    %742 = vector.broadcast %cst_375 : f32 to vector<1x1xf32>
    %743 = arith.subf %742, %741 : vector<1x1xf32>
    %c0_376 = arith.constant 0 : index
    %c0_377 = arith.constant 0 : index
    %744 = vector.load %arg3[%c0_376, %c0_377] : memref<1x1xf32, #tpu.memory_space<vmem>>, vector<1x1xf32>
    tpu.vector_store %arg3[%c0_376, %c0_377], %743 {strides = array<i32>} : memref<1x1xf32, #tpu.memory_space<vmem>>, vector<1x1xf32>,
    return
  }
}

</mosaic_0001>

<llo_original>
// kernel: seq_gauss_mix_posterior_forward.1
$region0: #{seq_gauss_mix_posterior_forward.1}
  #allocation0 [shape = 'u32[]', space=smem, size = 0x4, offset = 0x4, fixed_abs, tag = 'smem constant byte address 0x4 - core index']
  #allocation1 [shape = 'u32[144,128]{1,0:T(1,128)}', space=vmem, size = 0x12000, scoped, tag = 'internal scratch']
  %s0 = inlined_call_operand.vmem [shape: f32[16,1], index: 0, kind: input, shape index: {}]
  %s1 = inlined_call_operand.vmem [shape: f32[2,1], index: 1, kind: input, shape index: {}]
  %s2 = inlined_call_operand.hbm [shape: f32[248,128], index: 2, kind: input, shape index: {}]
  %s3 = inlined_call_operand.hbm [shape: f32[1,1], index: 3, kind: output, shape index: {}]
  %s4 = sld [smem:[#allocation0]]
  $region26: #{seq_gauss_mix_posterior_forward.1} parent=0
    _
  %s6 = ssub.s32 1, %s4
  %s7 = scalar_select 0, %s6, %s4
  $region1: #{seq_gauss_mix_posterior_forward.1} parent=0
    #allocation2 [shape = 'u8[126976]{0}', space=vmem, size = 0x1f000, scoped, tag = 'input window, operand 2, single buffered']
    #allocation3 [shape = 's32[1]{0}', space=sflag, size = 0x4, scoped, tag = 'scoped memory for seq_gauss_mix_posterior_forward.1']
    #allocation4 [shape = 's32[1]{0}', space=sflag, size = 0x4, scoped, tag = 'scoped memory for seq_gauss_mix_posterior_forward.1']
    #allocation5 [shape = 'u8[512]{0}', space=vmem, size = 0x400, scoped, tag = 'output window, operand 0, single buffered']
    %8 = vsyncpa [#allocation3], 0
    %9 = vsyncpa [#allocation4], 0
    // Predicated region
    $region2: #{seq_gauss_mix_posterior_forward.1} parent=1 // pred_check
      _
    $region3: #{seq_gauss_mix_posterior_forward.1} parent=1 // pred_check_branch
      %11 = sbr.rel (0) target = $region5
    $region4: #{seq_gauss_mix_posterior_forward.1} parent=1 // pred_region
      _
    $region5: #{seq_gauss_mix_posterior_forward.1} parent=1 // pred_fallthru
      _
    // Predicated region
    $region6: #{seq_gauss_mix_posterior_forward.1} parent=1 // pred_check
      _
    $region7: #{seq_gauss_mix_posterior_forward.1} parent=1 // pred_check_branch
      %13 = sbr.rel (0) target = $region9
    $region8: #{seq_gauss_mix_posterior_forward.1} parent=1 // pred_region
      _
    $region9: #{seq_gauss_mix_posterior_forward.1} parent=1 // pred_fallthru
      _
    // Predicated region
    $region10: #{seq_gauss_mix_posterior_forward.1} parent=1 // pred_check
      _
    $region11: #{seq_gauss_mix_posterior_forward.1} parent=1 // pred_check_branch
      %15 = sbr.rel (0) target = $region13
    $region12: #{seq_gauss_mix_posterior_forward.1} parent=1 // pred_region
      %s17 = ssub.s32 3968, 3968
      %18 = vsyncadd [#allocation3], %s17
      %s19 = sshll.u32 [#allocation2], 4
      %s20 = int_to_ptr.vmem [resolvable:$true] %s19
      %25 = dma.hbm_to_vmem [thread:$0]  %s2, 3968, %s20, [#allocation3], 128, 128, 8
    $region13: #{seq_gauss_mix_posterior_forward.1} parent=1 // pred_fallthru
      _
    // Predicated region
    $region14: #{seq_gauss_mix_posterior_forward.1} parent=1 // pred_check
      _
    $region15: #{seq_gauss_mix_posterior_forward.1} parent=1 // pred_check_branch
      %27 = sbr.rel (0) target = $region17
    $region16: #{seq_gauss_mix_posterior_forward.1} parent=1 // pred_region
      %28 = dma.done [#allocation3], 3968
    $region17: #{seq_gauss_mix_posterior_forward.1} parent=1 // pred_fallthru
      _
    %v29 = vld [vmem:[%s1] sm:$0x3]
    %v30 = vld [vmem:[%s0] sm:$0xff]
    %v31 = vld [vmem:[%s0 + $0x8] sm:$0xff]
    %v32 = vld [vmem:[#allocation2] sm:$0x1]
    %34 = vset.pattern.permute.xlu0 0
    %35 = vperm.xlu0 %34, %v30
    %v36 = vpop.permute.xlu0 %35
    %39 = vset.pattern.permute.xlu0 0
    %40 = vperm.xlu0 %39, %v31
    %v41 = vpop.permute.xlu0 %40
    %v43 = vlaneseq
    %v44 = vshrl.u32 %v43, 7
    %v45 = vsub.s32 0, %v44
    %v46 = vrot.slane %v32, %v45
    %v47 = vmul.f32 %v36, %v46
    %v48 = vmul.f32 %v41, %v46
    %v49 = vld [vmem:[#allocation2 + $0x1] sm:$0x1]
    %v50 = vlaneseq
    %v51 = vshrl.u32 %v50, 7
    %v52 = vsub.s32 0, %v51
    %v53 = vrot.slane %v49, %v52
    %v54 = vadd.f32 %v47, %v53
    %v55 = vadd.f32 %v48, %v53
    %v56 = vmax.f32 %v54, 0.0
    %v57 = vmax.f32 %v55, 0.0
    %v58 = vld [vmem:[#allocation2 + $0x2] sm:$0xff]
    %v59 = vld [vmem:[#allocation2 + $0xa] sm:$0x3]
    %v60 = vld [vmem:[#allocation2 + $0xc] sm:$0x1]
    %v61 = vlaneseq
    %v62 = vshrl.u32 %v61, 7
    %v63 = vsub.s32 0, %v62
    %v64 = vrot.slane %v60, %v63
    %vm65 = vcmask 80896
    %v67 = vsel %vm65, %v56, 0
    %v70 = vsel %vm65, %v57, 0
    %vm72 = vcmask 1041408
    %v74 = vsel %vm72, %v59, 0
    %76 = vmatprep.subr.mxu0 0.0
    %77 = vmatpush1.msra.mxu0 0.0
    %78 = vmatprep.subr.mxu0 0.0
    %79 = vmatpush1.msra.mxu0 0.0
    %80 = vmatprep.subr.mxu0 0.0
    %81 = vmatpush1.msra.mxu0 0.0
    %82 = vmatprep.subr.mxu0 0.0
    %83 = vmatpush1.msra.mxu0 0.0
    %84 = vmatprep.subr.mxu0 0.0
    %85 = vmatpush1.msra.mxu0 0.0
    %86 = vmatprep.subr.mxu0 0.0
    %87 = vmatpush1.msra.mxu0 0.0
    %88 = vmatprep.subr.mxu0 0.0
    %89 = vmatpush1.msra.mxu0 0.0
    %90 = vmatprep.subr.mxu0 0.0
    %91 = vmatpush1.msra.mxu0 0.0
    %92 = vmatprep.subr.mxu0 0.0
    %93 = vmatpush1.msra.mxu0 0.0
    %94 = vmatprep.subr.mxu0 0.0
    %95 = vmatpush1.msra.mxu0 0.0
    %96 = vmatprep.subr.mxu0 0.0
    %97 = vmatpush1.msra.mxu0 0.0
    %98 = vmatprep.subr.mxu0 0.0
    %99 = vmatpush1.msra.mxu0 0.0
    %100 = vmatprep.subr.mxu0 0.0
    %101 = vmatpush1.msra.mxu0 0.0
    %102 = vmatprep.subr.mxu0 0.0
    %103 = vmatpush1.msra.mxu0 0.0
    %104 = vmatprep.subr.mxu0 0.0
    %105 = vmatpush1.msra.mxu0 %v74
    %106 = vmatprep.subr.mxu0 0.0
    %107 = vmatpush1.msra.mxu0 %v58
    %108 = vmatprep.subr.mxu0 0.0
    %109 = vmatpush2.msra.mxu0 0.0
    %110 = vmatprep.subr.mxu0 0.0
    %111 = vmatpush2.msra.mxu0 0.0
    %112 = vmatprep.subr.mxu0 0.0
    %113 = vmatpush2.msra.mxu0 0.0
    %114 = vmatprep.subr.mxu0 0.0
    %115 = vmatpush2.msra.mxu0 0.0
    %116 = vmatprep.subr.mxu0 0.0
    %117 = vmatpush2.msra.mxu0 0.0
    %118 = vmatprep.subr.mxu0 0.0
    %119 = vmatpush2.msra.mxu0 0.0
    %120 = vmatprep.subr.mxu0 0.0
    %121 = vmatpush2.msra.mxu0 0.0
    %122 = vmatprep.subr.mxu0 0.0
    %123 = vmatpush2.msra.mxu0 0.0
    %124 = vmatprep.subr.mxu0 0.0
    %125 = vmatpush2.msra.mxu0 0.0
    %126 = vmatprep.subr.mxu0 0.0
    %127 = vmatpush2.msra.mxu0 0.0
    %128 = vmatprep.subr.mxu0 0.0
    %129 = vmatpush2.msra.mxu0 0.0
    %130 = vmatprep.subr.mxu0 0.0
    %131 = vmatpush2.msra.mxu0 0.0
    %132 = vmatprep.subr.mxu0 0.0
    %133 = vmatpush2.msra.mxu0 0.0
    %134 = vmatprep.subr.mxu0 0.0
    %135 = vmatpush2.msra.mxu0 0.0
    %136 = vmatprep.subr.mxu0 0.0
    %137 = vmatpush2.msra.mxu0 0.0
    %138 = vmatprep.subr.mxu0 0.0
    %139 = vmatpush2.msra.mxu0 0.0
    %140 = vmatprep.mubr.f32.mxu0 0.0
    %141 = vmatmul.mubr.f32.gmra.mxu0 %v67
    %v142 = vpop.f32.mrf.mxu0
    %v143 = vadd.f32 %v64, %v142
    %v144 = vpop.f32.mrf.mxu0
    %145 = vmatprep.mubr.f32.mxu0 0.0
    %146 = vmatmul.mubr.f32.gmra.mxu0 %v70
    %v147 = vpop.f32.mrf.mxu0
    %v148 = vadd.f32 %v64, %v147
    %v149 = vpop.f32.mrf.mxu0
    %150 = vdwg.mxu0
    %v151 = vmax.f32 %v143, 0.0
    %v152 = vmax.f32 %v148, 0.0
    %v153 = vld [vmem:[#allocation2 + $0xd] sm:$0xff]
    %v154 = vld [vmem:[#allocation2 + $0x15] sm:$0x3]
    %v155 = vld [vmem:[#allocation2 + $0x17] sm:$0x1]
    %v156 = vlaneseq
    %v157 = vshrl.u32 %v156, 7
    %v158 = vsub.s32 0, %v157
    %v159 = vrot.slane %v155, %v158
    %v161 = vsel %vm65, %v151, 0
    %v164 = vsel %vm65, %v152, 0
    %v167 = vsel %vm72, %v154, 0
    %169 = vmatprep.subr.mxu0 0.0
    %170 = vmatpush1.msra.mxu0 0.0
    %171 = vmatprep.subr.mxu0 0.0
    %172 = vmatpush1.msra.mxu0 0.0
    %173 = vmatprep.subr.mxu0 0.0
    %174 = vmatpush1.msra.mxu0 0.0
    %175 = vmatprep.subr.mxu0 0.0
    %176 = vmatpush1.msra.mxu0 0.0
    %177 = vmatprep.subr.mxu0 0.0
    %178 = vmatpush1.msra.mxu0 0.0
    %179 = vmatprep.subr.mxu0 0.0
    %180 = vmatpush1.msra.mxu0 0.0
    %181 = vmatprep.subr.mxu0 0.0
    %182 = vmatpush1.msra.mxu0 0.0
    %183 = vmatprep.subr.mxu0 0.0
    %184 = vmatpush1.msra.mxu0 0.0
    %185 = vmatprep.subr.mxu0 0.0
    %186 = vmatpush1.msra.mxu0 0.0
    %187 = vmatprep.subr.mxu0 0.0
    %188 = vmatpush1.msra.mxu0 0.0
    %189 = vmatprep.subr.mxu0 0.0
    %190 = vmatpush1.msra.mxu0 0.0
    %191 = vmatprep.subr.mxu0 0.0
    %192 = vmatpush1.msra.mxu0 0.0
    %193 = vmatprep.subr.mxu0 0.0
    %194 = vmatpush1.msra.mxu0 0.0
    %195 = vmatprep.subr.mxu0 0.0
    %196 = vmatpush1.msra.mxu0 0.0
    %197 = vmatprep.subr.mxu0 0.0
    %198 = vmatpush1.msra.mxu0 %v167
    %199 = vmatprep.subr.mxu0 0.0
    %200 = vmatpush1.msra.mxu0 %v153
    %201 = vmatprep.subr.mxu0 0.0
    %202 = vmatpush2.msra.mxu0 0.0
    %203 = vmatprep.subr.mxu0 0.0
    %204 = vmatpush2.msra.mxu0 0.0
    %205 = vmatprep.subr.mxu0 0.0
    %206 = vmatpush2.msra.mxu0 0.0
    %207 = vmatprep.subr.mxu0 0.0
    %208 = vmatpush2.msra.mxu0 0.0
    %209 = vmatprep.subr.mxu0 0.0
    %210 = vmatpush2.msra.mxu0 0.0
    %211 = vmatprep.subr.mxu0 0.0
    %212 = vmatpush2.msra.mxu0 0.0
    %213 = vmatprep.subr.mxu0 0.0
    %214 = vmatpush2.msra.mxu0 0.0
    %215 = vmatprep.subr.mxu0 0.0
    %216 = vmatpush2.msra.mxu0 0.0
    %217 = vmatprep.subr.mxu0 0.0
    %218 = vmatpush2.msra.mxu0 0.0
    %219 = vmatprep.subr.mxu0 0.0
    %220 = vmatpush2.msra.mxu0 0.0
    %221 = vmatprep.subr.mxu0 0.0
    %222 = vmatpush2.msra.mxu0 0.0
    %223 = vmatprep.subr.mxu0 0.0
    %224 = vmatpush2.msra.mxu0 0.0
    %225 = vmatprep.subr.mxu0 0.0
    %226 = vmatpush2.msra.mxu0 0.0
    %227 = vmatprep.subr.mxu0 0.0
    %228 = vmatpush2.msra.mxu0 0.0
    %229 = vmatprep.subr.mxu0 0.0
    %230 = vmatpush2.msra.mxu0 0.0
    %231 = vmatprep.subr.mxu0 0.0
    %232 = vmatpush2.msra.mxu0 0.0
    %233 = vmatprep.mubr.f32.mxu0 0.0
    %234 = vmatmul.mubr.f32.gmra.mxu0 %v161
    %v235 = vpop.f32.mrf.mxu0
    %v236 = vadd.f32 %v159, %v235
    %v237 = vpop.f32.mrf.mxu0
    %238 = vmatprep.mubr.f32.mxu0 0.0
    %239 = vmatmul.mubr.f32.gmra.mxu0 %v164
    %v240 = vpop.f32.mrf.mxu0
    %v241 = vadd.f32 %v159, %v240
    %v242 = vpop.f32.mrf.mxu0
    %243 = vdwg.mxu0
    %v244 = vld [vmem:[#allocation2 + $0x4f] sm:$0xff]
    %v245 = vld [vmem:[#allocation2 + $0x57] sm:$0x3]
    %v246 = vld [vmem:[#allocation2 + $0x59] sm:$0x1]
    %v247 = vlaneseq
    %v248 = vshrl.u32 %v247, 7
    %v249 = vsub.s32 0, %v248
    %v250 = vrot.slane %v246, %v249
    %v252 = vsel %vm65, %v236, 0
    %v255 = vsel %vm65, %v241, 0
    %v258 = vsel %vm72, %v245, 0
    %260 = vmatprep.subr.mxu0 0.0
    %261 = vmatpush1.msra.mxu0 0.0
    %262 = vmatprep.subr.mxu0 0.0
    %263 = vmatpush1.msra.mxu0 0.0
    %264 = vmatprep.subr.mxu0 0.0
    %265 = vmatpush1.msra.mxu0 0.0
    %266 = vmatprep.subr.mxu0 0.0
    %267 = vmatpush1.msra.mxu0 0.0
    %268 = vmatprep.subr.mxu0 0.0
    %269 = vmatpush1.msra.mxu0 0.0
    %270 = vmatprep.subr.mxu0 0.0
    %271 = vmatpush1.msra.mxu0 0.0
    %272 = vmatprep.subr.mxu0 0.0
    %273 = vmatpush1.msra.mxu0 0.0
    %274 = vmatprep.subr.mxu0 0.0
    %275 = vmatpush1.msra.mxu0 0.0
    %276 = vmatprep.subr.mxu0 0.0
    %277 = vmatpush1.msra.mxu0 0.0
    %278 = vmatprep.subr.mxu0 0.0
    %279 = vmatpush1.msra.mxu0 0.0
    %280 = vmatprep.subr.mxu0 0.0
    %281 = vmatpush1.msra.mxu0 0.0
    %282 = vmatprep.subr.mxu0 0.0
    %283 = vmatpush1.msra.mxu0 0.0
    %284 = vmatprep.subr.mxu0 0.0
    %285 = vmatpush1.msra.mxu0 0.0
    %286 = vmatprep.subr.mxu0 0.0
    %287 = vmatpush1.msra.mxu0 0.0
    %288 = vmatprep.subr.mxu0 0.0
    %289 = vmatpush1.msra.mxu0 %v258
    %290 = vmatprep.subr.mxu0 0.0
    %291 = vmatpush1.msra.mxu0 %v244
    %292 = vmatprep.subr.mxu0 0.0
    %293 = vmatpush2.msra.mxu0 0.0
    %294 = vmatprep.subr.mxu0 0.0
    %295 = vmatpush2.msra.mxu0 0.0
    %296 = vmatprep.subr.mxu0 0.0
    %297 = vmatpush2.msra.mxu0 0.0
    %298 = vmatprep.subr.mxu0 0.0
    %299 = vmatpush2.msra.mxu0 0.0
    %300 = vmatprep.subr.mxu0 0.0
    %301 = vmatpush2.msra.mxu0 0.0
    %302 = vmatprep.subr.mxu0 0.0
    %303 = vmatpush2.msra.mxu0 0.0
    %304 = vmatprep.subr.mxu0 0.0
    %305 = vmatpush2.msra.mxu0 0.0
    %306 = vmatprep.subr.mxu0 0.0
    %307 = vmatpush2.msra.mxu0 0.0
    %308 = vmatprep.subr.mxu0 0.0
    %309 = vmatpush2.msra.mxu0 0.0
    %310 = vmatprep.subr.mxu0 0.0
    %311 = vmatpush2.msra.mxu0 0.0
    %312 = vmatprep.subr.mxu0 0.0
    %313 = vmatpush2.msra.mxu0 0.0
    %314 = vmatprep.subr.mxu0 0.0
    %315 = vmatpush2.msra.mxu0 0.0
    %316 = vmatprep.subr.mxu0 0.0
    %317 = vmatpush2.msra.mxu0 0.0
    %318 = vmatprep.subr.mxu0 0.0
    %319 = vmatpush2.msra.mxu0 0.0
    %320 = vmatprep.subr.mxu0 0.0
    %321 = vmatpush2.msra.mxu0 0.0
    %322 = vmatprep.subr.mxu0 0.0
    %323 = vmatpush2.msra.mxu0 0.0
    %324 = vmatprep.mubr.f32.mxu0 0.0
    %325 = vmatmul.mubr.f32.gmra.mxu0 %v252
    %v326 = vpop.f32.mrf.mxu0
    %v327 = vadd.f32 %v250, %v326
    %v328 = vpop.f32.mrf.mxu0
    %329 = vmatprep.mubr.f32.mxu0 0.0
    %330 = vmatmul.mubr.f32.gmra.mxu0 %v255
    %v331 = vpop.f32.mrf.mxu0
    %v332 = vadd.f32 %v250, %v331
    %v333 = vpop.f32.mrf.mxu0
    %334 = vdwg.mxu0
    %v335 = vld [vmem:[#allocation2 + $0x5a] sm:$0xff]
    %v336 = vld [vmem:[#allocation2 + $0x62] sm:$0x3]
    %v337 = vld [vmem:[#allocation2 + $0x64] sm:$0x1]
    %v338 = vlaneseq
    %v339 = vshrl.u32 %v338, 7
    %v340 = vsub.s32 0, %v339
    %v341 = vrot.slane %v337, %v340
    %v343 = vsel %vm72, %v336, 0
    %345 = vmatprep.subr.mxu0 0.0
    %346 = vmatpush1.msra.mxu0 0.0
    %347 = vmatprep.subr.mxu0 0.0
    %348 = vmatpush1.msra.mxu0 0.0
    %349 = vmatprep.subr.mxu0 0.0
    %350 = vmatpush1.msra.mxu0 0.0
    %351 = vmatprep.subr.mxu0 0.0
    %352 = vmatpush1.msra.mxu0 0.0
    %353 = vmatprep.subr.mxu0 0.0
    %354 = vmatpush1.msra.mxu0 0.0
    %355 = vmatprep.subr.mxu0 0.0
    %356 = vmatpush1.msra.mxu0 0.0
    %357 = vmatprep.subr.mxu0 0.0
    %358 = vmatpush1.msra.mxu0 0.0
    %359 = vmatprep.subr.mxu0 0.0
    %360 = vmatpush1.msra.mxu0 0.0
    %361 = vmatprep.subr.mxu0 0.0
    %362 = vmatpush1.msra.mxu0 0.0
    %363 = vmatprep.subr.mxu0 0.0
    %364 = vmatpush1.msra.mxu0 0.0
    %365 = vmatprep.subr.mxu0 0.0
    %366 = vmatpush1.msra.mxu0 0.0
    %367 = vmatprep.subr.mxu0 0.0
    %368 = vmatpush1.msra.mxu0 0.0
    %369 = vmatprep.subr.mxu0 0.0
    %370 = vmatpush1.msra.mxu0 0.0
    %371 = vmatprep.subr.mxu0 0.0
    %372 = vmatpush1.msra.mxu0 0.0
    %373 = vmatprep.subr.mxu0 0.0
    %374 = vmatpush1.msra.mxu0 %v343
    %375 = vmatprep.subr.mxu0 0.0
    %376 = vmatpush1.msra.mxu0 %v335
    %377 = vmatprep.subr.mxu0 0.0
    %378 = vmatpush2.msra.mxu0 0.0
    %379 = vmatprep.subr.mxu0 0.0
    %380 = vmatpush2.msra.mxu0 0.0
    %381 = vmatprep.subr.mxu0 0.0
    %382 = vmatpush2.msra.mxu0 0.0
    %383 = vmatprep.subr.mxu0 0.0
    %384 = vmatpush2.msra.mxu0 0.0
    %385 = vmatprep.subr.mxu0 0.0
    %386 = vmatpush2.msra.mxu0 0.0
    %387 = vmatprep.subr.mxu0 0.0
    %388 = vmatpush2.msra.mxu0 0.0
    %389 = vmatprep.subr.mxu0 0.0
    %390 = vmatpush2.msra.mxu0 0.0
    %391 = vmatprep.subr.mxu0 0.0
    %392 = vmatpush2.msra.mxu0 0.0
    %393 = vmatprep.subr.mxu0 0.0
    %394 = vmatpush2.msra.mxu0 0.0
    %395 = vmatprep.subr.mxu0 0.0
    %396 = vmatpush2.msra.mxu0 0.0
    %397 = vmatprep.subr.mxu0 0.0
    %398 = vmatpush2.msra.mxu0 0.0
    %399 = vmatprep.subr.mxu0 0.0
    %400 = vmatpush2.msra.mxu0 0.0
    %401 = vmatprep.subr.mxu0 0.0
    %402 = vmatpush2.msra.mxu0 0.0
    %403 = vmatprep.subr.mxu0 0.0
    %404 = vmatpush2.msra.mxu0 0.0
    %405 = vmatprep.subr.mxu0 0.0
    %406 = vmatpush2.msra.mxu0 0.0
    %407 = vmatprep.subr.mxu0 0.0
    %408 = vmatpush2.msra.mxu0 0.0
    %409 = vmatprep.mubr.f32.mxu0 0.0
    %410 = vmatmul.mubr.f32.gmra.mxu0 %v252
    %v411 = vpop.f32.mrf.mxu0
    %v412 = vadd.f32 %v341, %v411
    %v413 = vpop.f32.mrf.mxu0
    %414 = vmatprep.mubr.f32.mxu0 0.0
    %415 = vmatmul.mubr.f32.gmra.mxu0 %v255
    %v416 = vpop.f32.mrf.mxu0
    %v417 = vadd.f32 %v341, %v416
    %v418 = vpop.f32.mrf.mxu0
    %419 = vdwg.mxu0
    %v420 = vld [vmem:[#allocation2 + $0xf6] sm:$0x1]
    %v421 = vld [vmem:[#allocation2 + $0x23] sm:$0xff]
    %v422 = vld [vmem:[#allocation2 + $0x2b] sm:$0x3]
    %v423 = vld [vmem:[#allocation2 + $0x2d] sm:$0x1]
    %v425 = vsel %vm65, %v420, 0
    %v428 = vsel %vm72, %v422, 0
    %430 = vmatprep.subr.mxu0 0.0
    %431 = vmatpush1.msra.mxu0 0.0
    %432 = vmatprep.subr.mxu0 0.0
    %433 = vmatpush1.msra.mxu0 0.0
    %434 = vmatprep.subr.mxu0 0.0
    %435 = vmatpush1.msra.mxu0 0.0
    %436 = vmatprep.subr.mxu0 0.0
    %437 = vmatpush1.msra.mxu0 0.0
    %438 = vmatprep.subr.mxu0 0.0
    %439 = vmatpush1.msra.mxu0 0.0
    %440 = vmatprep.subr.mxu0 0.0
    %441 = vmatpush1.msra.mxu0 0.0
    %442 = vmatprep.subr.mxu0 0.0
    %443 = vmatpush1.msra.mxu0 0.0
    %444 = vmatprep.subr.mxu0 0.0
    %445 = vmatpush1.msra.mxu0 0.0
    %446 = vmatprep.subr.mxu0 0.0
    %447 = vmatpush1.msra.mxu0 0.0
    %448 = vmatprep.subr.mxu0 0.0
    %449 = vmatpush1.msra.mxu0 0.0
    %450 = vmatprep.subr.mxu0 0.0
    %451 = vmatpush1.msra.mxu0 0.0
    %452 = vmatprep.subr.mxu0 0.0
    %453 = vmatpush1.msra.mxu0 0.0
    %454 = vmatprep.subr.mxu0 0.0
    %455 = vmatpush1.msra.mxu0 0.0
    %456 = vmatprep.subr.mxu0 0.0
    %457 = vmatpush1.msra.mxu0 0.0
    %458 = vmatprep.subr.mxu0 0.0
    %459 = vmatpush1.msra.mxu0 %v428
    %460 = vmatprep.subr.mxu0 0.0
    %461 = vmatpush1.msra.mxu0 %v421
    %462 = vmatprep.subr.mxu0 0.0
    %463 = vmatpush2.msra.mxu0 0.0
    %464 = vmatprep.subr.mxu0 0.0
    %465 = vmatpush2.msra.mxu0 0.0
    %466 = vmatprep.subr.mxu0 0.0
    %467 = vmatpush2.msra.mxu0 0.0
    %468 = vmatprep.subr.mxu0 0.0
    %469 = vmatpush2.msra.mxu0 0.0
    %470 = vmatprep.subr.mxu0 0.0
    %471 = vmatpush2.msra.mxu0 0.0
    %472 = vmatprep.subr.mxu0 0.0
    %473 = vmatpush2.msra.mxu0 0.0
    %474 = vmatprep.subr.mxu0 0.0
    %475 = vmatpush2.msra.mxu0 0.0
    %476 = vmatprep.subr.mxu0 0.0
    %477 = vmatpush2.msra.mxu0 0.0
    %478 = vmatprep.subr.mxu0 0.0
    %479 = vmatpush2.msra.mxu0 0.0
    %480 = vmatprep.subr.mxu0 0.0
    %481 = vmatpush2.msra.mxu0 0.0
    %482 = vmatprep.subr.mxu0 0.0
    %483 = vmatpush2.msra.mxu0 0.0
    %484 = vmatprep.subr.mxu0 0.0
    %485 = vmatpush2.msra.mxu0 0.0
    %486 = vmatprep.subr.mxu0 0.0
    %487 = vmatpush2.msra.mxu0 0.0
    %488 = vmatprep.subr.mxu0 0.0
    %489 = vmatpush2.msra.mxu0 0.0
    %490 = vmatprep.subr.mxu0 0.0
    %491 = vmatpush2.msra.mxu0 0.0
    %492 = vmatprep.subr.mxu0 0.0
    %493 = vmatpush2.msra.mxu0 0.0
    %494 = vmatprep.mubr.f32.mxu0 0.0
    %495 = vmatmul.mubr.f32.gmra.mxu0 %v425
    %v496 = vpop.f32.mrf.mxu0
    %v497 = vadd.f32 %v423, %v496
    %v498 = vpop.f32.mrf.mxu0
    %499 = vdwg.mxu0
    %v500 = vld [vmem:[#allocation2 + $0x2e] sm:$0xff]
    %v501 = vld [vmem:[#allocation2 + $0x36] sm:$0x3]
    %v502 = vld [vmem:[#allocation2 + $0x38] sm:$0x1]
    %v504 = vsel %vm72, %v501, 0
    %506 = vmatprep.subr.mxu0 0.0
    %507 = vmatpush1.msra.mxu0 0.0
    %508 = vmatprep.subr.mxu0 0.0
    %509 = vmatpush1.msra.mxu0 0.0
    %510 = vmatprep.subr.mxu0 0.0
    %511 = vmatpush1.msra.mxu0 0.0
    %512 = vmatprep.subr.mxu0 0.0
    %513 = vmatpush1.msra.mxu0 0.0
    %514 = vmatprep.subr.mxu0 0.0
    %515 = vmatpush1.msra.mxu0 0.0
    %516 = vmatprep.subr.mxu0 0.0
    %517 = vmatpush1.msra.mxu0 0.0
    %518 = vmatprep.subr.mxu0 0.0
    %519 = vmatpush1.msra.mxu0 0.0
    %520 = vmatprep.subr.mxu0 0.0
    %521 = vmatpush1.msra.mxu0 0.0
    %522 = vmatprep.subr.mxu0 0.0
    %523 = vmatpush1.msra.mxu0 0.0
    %524 = vmatprep.subr.mxu0 0.0
    %525 = vmatpush1.msra.mxu0 0.0
    %526 = vmatprep.subr.mxu0 0.0
    %527 = vmatpush1.msra.mxu0 0.0
    %528 = vmatprep.subr.mxu0 0.0
    %529 = vmatpush1.msra.mxu0 0.0
    %530 = vmatprep.subr.mxu0 0.0
    %531 = vmatpush1.msra.mxu0 0.0
    %532 = vmatprep.subr.mxu0 0.0
    %533 = vmatpush1.msra.mxu0 0.0
    %534 = vmatprep.subr.mxu0 0.0
    %535 = vmatpush1.msra.mxu0 %v504
    %536 = vmatprep.subr.mxu0 0.0
    %537 = vmatpush1.msra.mxu0 %v500
    %538 = vmatprep.subr.mxu0 0.0
    %539 = vmatpush2.msra.mxu0 0.0
    %540 = vmatprep.subr.mxu0 0.0
    %541 = vmatpush2.msra.mxu0 0.0
    %542 = vmatprep.subr.mxu0 0.0
    %543 = vmatpush2.msra.mxu0 0.0
    %544 = vmatprep.subr.mxu0 0.0
    %545 = vmatpush2.msra.mxu0 0.0
    %546 = vmatprep.subr.mxu0 0.0
    %547 = vmatpush2.msra.mxu0 0.0
    %548 = vmatprep.subr.mxu0 0.0
    %549 = vmatpush2.msra.mxu0 0.0
    %550 = vmatprep.subr.mxu0 0.0
    %551 = vmatpush2.msra.mxu0 0.0
    %552 = vmatprep.subr.mxu0 0.0
    %553 = vmatpush2.msra.mxu0 0.0
    %554 = vmatprep.subr.mxu0 0.0
    %555 = vmatpush2.msra.mxu0 0.0
    %556 = vmatprep.subr.mxu0 0.0
    %557 = vmatpush2.msra.mxu0 0.0
    %558 = vmatprep.subr.mxu0 0.0
    %559 = vmatpush2.msra.mxu0 0.0
    %560 = vmatprep.subr.mxu0 0.0
    %561 = vmatpush2.msra.mxu0 0.0
    %562 = vmatprep.subr.mxu0 0.0
    %563 = vmatpush2.msra.mxu0 0.0
    %564 = vmatprep.subr.mxu0 0.0
    %565 = vmatpush2.msra.mxu0 0.0
    %566 = vmatprep.subr.mxu0 0.0
    %567 = vmatpush2.msra.mxu0 0.0
    %568 = vmatprep.subr.mxu0 0.0
    %569 = vmatpush2.msra.mxu0 0.0
    %570 = vmatprep.mubr.f32.mxu0 0.0
    %571 = vmatmul.mubr.f32.gmra.mxu0 %v425
    %v572 = vpop.f32.mrf.mxu0
    %v573 = vadd.f32 %v502, %v572
    %v574 = vpop.f32.mrf.mxu0
    %575 = vdwg.mxu0
    %v576 = vlaneseq
    %v577 = vshrl.u32 %v576, 7
    %v578 = vsub.s32 0, %v577
    %v579 = vrot.slane %v420, %v578
    %v580 = vld [vmem:[#allocation2 + $0x18] sm:$0xff]
    %v581 = vld [vmem:[#allocation2 + $0x20] sm:$0x3]
    %v582 = vld [vmem:[#allocation2 + $0x22] sm:$0x1]
    %v583 = vlaneseq
    %v584 = vshrl.u32 %v583, 7
    %v585 = vsub.s32 0, %v584
    %v586 = vrot.slane %v582, %v585
    %v588 = vsel %vm65, %v579, 0
    %v591 = vsel %vm72, %v581, 0
    %593 = vmatprep.subr.mxu0 0.0
    %594 = vmatpush1.msra.mxu0 0.0
    %595 = vmatprep.subr.mxu0 0.0
    %596 = vmatpush1.msra.mxu0 0.0
    %597 = vmatprep.subr.mxu0 0.0
    %598 = vmatpush1.msra.mxu0 0.0
    %599 = vmatprep.subr.mxu0 0.0
    %600 = vmatpush1.msra.mxu0 0.0
    %601 = vmatprep.subr.mxu0 0.0
    %602 = vmatpush1.msra.mxu0 0.0
    %603 = vmatprep.subr.mxu0 0.0
    %604 = vmatpush1.msra.mxu0 0.0
    %605 = vmatprep.subr.mxu0 0.0
    %606 = vmatpush1.msra.mxu0 0.0
    %607 = vmatprep.subr.mxu0 0.0
    %608 = vmatpush1.msra.mxu0 0.0
    %609 = vmatprep.subr.mxu0 0.0
    %610 = vmatpush1.msra.mxu0 0.0
    %611 = vmatprep.subr.mxu0 0.0
    %612 = vmatpush1.msra.mxu0 0.0
    %613 = vmatprep.subr.mxu0 0.0
    %614 = vmatpush1.msra.mxu0 0.0
    %615 = vmatprep.subr.mxu0 0.0
    %616 = vmatpush1.msra.mxu0 0.0
    %617 = vmatprep.subr.mxu0 0.0
    %618 = vmatpush1.msra.mxu0 0.0
    %619 = vmatprep.subr.mxu0 0.0
    %620 = vmatpush1.msra.mxu0 0.0
    %621 = vmatprep.subr.mxu0 0.0
    %622 = vmatpush1.msra.mxu0 %v591
    %623 = vmatprep.subr.mxu0 0.0
    %624 = vmatpush1.msra.mxu0 %v580
    %625 = vmatprep.subr.mxu0 0.0
    %626 = vmatpush2.msra.mxu0 0.0
    %627 = vmatprep.subr.mxu0 0.0
    %628 = vmatpush2.msra.mxu0 0.0
    %629 = vmatprep.subr.mxu0 0.0
    %630 = vmatpush2.msra.mxu0 0.0
    %631 = vmatprep.subr.mxu0 0.0
    %632 = vmatpush2.msra.mxu0 0.0
    %633 = vmatprep.subr.mxu0 0.0
    %634 = vmatpush2.msra.mxu0 0.0
    %635 = vmatprep.subr.mxu0 0.0
    %636 = vmatpush2.msra.mxu0 0.0
    %637 = vmatprep.subr.mxu0 0.0
    %638 = vmatpush2.msra.mxu0 0.0
    %639 = vmatprep.subr.mxu0 0.0
    %640 = vmatpush2.msra.mxu0 0.0
    %641 = vmatprep.subr.mxu0 0.0
    %642 = vmatpush2.msra.mxu0 0.0
    %643 = vmatprep.subr.mxu0 0.0
    %644 = vmatpush2.msra.mxu0 0.0
    %645 = vmatprep.subr.mxu0 0.0
    %646 = vmatpush2.msra.mxu0 0.0
    %647 = vmatprep.subr.mxu0 0.0
    %648 = vmatpush2.msra.mxu0 0.0
    %649 = vmatprep.subr.mxu0 0.0
    %650 = vmatpush2.msra.mxu0 0.0
    %651 = vmatprep.subr.mxu0 0.0
    %652 = vmatpush2.msra.mxu0 0.0
    %653 = vmatprep.subr.mxu0 0.0
    %654 = vmatpush2.msra.mxu0 0.0
    %655 = vmatprep.subr.mxu0 0.0
    %656 = vmatpush2.msra.mxu0 0.0
    %657 = vmatprep.mubr.f32.mxu0 0.0
    %658 = vmatmul.mubr.f32.gmra.mxu0 %v588
    %v659 = vpop.f32.mrf.mxu0
    %v660 = vadd.f32 %v586, %v659
    %v661 = vpop.f32.mrf.mxu0
    %662 = vdwg.mxu0
    %v663 = vld [vmem:[#allocation2 + $0xe8] sm:$0xff]
    %v664 = vld [vmem:[#allocation2 + $0xf0] sm:$0x3]
    %v665 = vld [vmem:[#allocation2 + $0xf2] sm:$0x3]
    %v666 = vlaneseq
    %v667 = vshrl.u32 %v666, 7
    %v668 = vsub.s32 0, %v667
    %v669 = vrot.slane %v497, %v668
    %v670 = vmul.f32 %v660, %v669
    %v672 = vsel %vm65, %v670, 0
    %v675 = vsel %vm72, %v664, 0
    %677 = vmatprep.subr.mxu0 0.0
    %678 = vmatpush1.msra.mxu0 0.0
    %679 = vmatprep.subr.mxu0 0.0
    %680 = vmatpush1.msra.mxu0 0.0
    %681 = vmatprep.subr.mxu0 0.0
    %682 = vmatpush1.msra.mxu0 0.0
    %683 = vmatprep.subr.mxu0 0.0
    %684 = vmatpush1.msra.mxu0 0.0
    %685 = vmatprep.subr.mxu0 0.0
    %686 = vmatpush1.msra.mxu0 0.0
    %687 = vmatprep.subr.mxu0 0.0
    %688 = vmatpush1.msra.mxu0 0.0
    %689 = vmatprep.subr.mxu0 0.0
    %690 = vmatpush1.msra.mxu0 0.0
    %691 = vmatprep.subr.mxu0 0.0
    %692 = vmatpush1.msra.mxu0 0.0
    %693 = vmatprep.subr.mxu0 0.0
    %694 = vmatpush1.msra.mxu0 0.0
    %695 = vmatprep.subr.mxu0 0.0
    %696 = vmatpush1.msra.mxu0 0.0
    %697 = vmatprep.subr.mxu0 0.0
    %698 = vmatpush1.msra.mxu0 0.0
    %699 = vmatprep.subr.mxu0 0.0
    %700 = vmatpush1.msra.mxu0 0.0
    %701 = vmatprep.subr.mxu0 0.0
    %702 = vmatpush1.msra.mxu0 0.0
    %703 = vmatprep.subr.mxu0 0.0
    %704 = vmatpush1.msra.mxu0 0.0
    %705 = vmatprep.subr.mxu0 0.0
    %706 = vmatpush1.msra.mxu0 %v675
    %707 = vmatprep.subr.mxu0 0.0
    %708 = vmatpush1.msra.mxu0 %v663
    %709 = vmatprep.subr.mxu0 0.0
    %710 = vmatpush2.msra.mxu0 0.0
    %711 = vmatprep.subr.mxu0 0.0
    %712 = vmatpush2.msra.mxu0 0.0
    %713 = vmatprep.subr.mxu0 0.0
    %714 = vmatpush2.msra.mxu0 0.0
    %715 = vmatprep.subr.mxu0 0.0
    %716 = vmatpush2.msra.mxu0 0.0
    %717 = vmatprep.subr.mxu0 0.0
    %718 = vmatpush2.msra.mxu0 0.0
    %719 = vmatprep.subr.mxu0 0.0
    %720 = vmatpush2.msra.mxu0 0.0
    %721 = vmatprep.subr.mxu0 0.0
    %722 = vmatpush2.msra.mxu0 0.0
    %723 = vmatprep.subr.mxu0 0.0
    %724 = vmatpush2.msra.mxu0 0.0
    %725 = vmatprep.subr.mxu0 0.0
    %726 = vmatpush2.msra.mxu0 0.0
    %727 = vmatprep.subr.mxu0 0.0
    %728 = vmatpush2.msra.mxu0 0.0
    %729 = vmatprep.subr.mxu0 0.0
    %730 = vmatpush2.msra.mxu0 0.0
    %731 = vmatprep.subr.mxu0 0.0
    %732 = vmatpush2.msra.mxu0 0.0
    %733 = vmatprep.subr.mxu0 0.0
    %734 = vmatpush2.msra.mxu0 0.0
    %735 = vmatprep.subr.mxu0 0.0
    %736 = vmatpush2.msra.mxu0 0.0
    %737 = vmatprep.subr.mxu0 0.0
    %738 = vmatpush2.msra.mxu0 0.0
    %739 = vmatprep.subr.mxu0 0.0
    %740 = vmatpush2.msra.mxu0 0.0
    %741 = vmatprep.mubr.f32.mxu0 0.0
    %742 = vmatmul.mubr.f32.gmra.mxu0 %v672
    %v743 = vpop.f32.mrf.mxu0
    %v744 = vadd.f32 2.0794415, %v743
    %v745 = vpop.f32.mrf.mxu0
    %746 = vdwg.mxu0
    %v747 = vsub.f32 %v744, %v744
    %v748 = vmul.f32 %v747, 1.442695
    %v749 = vpow.pop %v748
    %v750 = vrcp.pop %v749
    %vm751 = vcmask 15360
    %v753 = vsel %vm751, %v749, 0
    %v756 = vsel %vm72, %v665, 0
    %758 = vmatprep.subr.mxu0 0.0
    %759 = vmatpush1.msra.mxu0 0.0
    %760 = vmatprep.subr.mxu0 0.0
    %761 = vmatpush1.msra.mxu0 0.0
    %762 = vmatprep.subr.mxu0 0.0
    %763 = vmatpush1.msra.mxu0 0.0
    %764 = vmatprep.subr.mxu0 0.0
    %765 = vmatpush1.msra.mxu0 0.0
    %766 = vmatprep.subr.mxu0 0.0
    %767 = vmatpush1.msra.mxu0 0.0
    %768 = vmatprep.subr.mxu0 0.0
    %769 = vmatpush1.msra.mxu0 0.0
    %770 = vmatprep.subr.mxu0 0.0
    %771 = vmatpush1.msra.mxu0 0.0
    %772 = vmatprep.subr.mxu0 0.0
    %773 = vmatpush1.msra.mxu0 0.0
    %774 = vmatprep.subr.mxu0 0.0
    %775 = vmatpush1.msra.mxu0 0.0
    %776 = vmatprep.subr.mxu0 0.0
    %777 = vmatpush1.msra.mxu0 0.0
    %778 = vmatprep.subr.mxu0 0.0
    %779 = vmatpush1.msra.mxu0 0.0
    %780 = vmatprep.subr.mxu0 0.0
    %781 = vmatpush1.msra.mxu0 0.0
    %782 = vmatprep.subr.mxu0 0.0
    %783 = vmatpush1.msra.mxu0 0.0
    %784 = vmatprep.subr.mxu0 0.0
    %785 = vmatpush1.msra.mxu0 0.0
    %786 = vmatprep.subr.mxu0 0.0
    %787 = vmatpush1.msra.mxu0 0.0
    %788 = vmatprep.subr.mxu0 0.0
    %789 = vmatpush1.msra.mxu0 %v756
    %790 = vmatprep.subr.mxu0 0.0
    %791 = vmatpush2.msra.mxu0 0.0
    %792 = vmatprep.subr.mxu0 0.0
    %793 = vmatpush2.msra.mxu0 0.0
    %794 = vmatprep.subr.mxu0 0.0
    %795 = vmatpush2.msra.mxu0 0.0
    %796 = vmatprep.subr.mxu0 0.0
    %797 = vmatpush2.msra.mxu0 0.0
    %798 = vmatprep.subr.mxu0 0.0
    %799 = vmatpush2.msra.mxu0 0.0
    %800 = vmatprep.subr.mxu0 0.0
    %801 = vmatpush2.msra.mxu0 0.0
    %802 = vmatprep.subr.mxu0 0.0
    %803 = vmatpush2.msra.mxu0 0.0
    %804 = vmatprep.subr.mxu0 0.0
    %805 = vmatpush2.msra.mxu0 0.0
    %806 = vmatprep.subr.mxu0 0.0
    %807 = vmatpush2.msra.mxu0 0.0
    %808 = vmatprep.subr.mxu0 0.0
    %809 = vmatpush2.msra.mxu0 0.0
    %810 = vmatprep.subr.mxu0 0.0
    %811 = vmatpush2.msra.mxu0 0.0
    %812 = vmatprep.subr.mxu0 0.0
    %813 = vmatpush2.msra.mxu0 0.0
    %814 = vmatprep.subr.mxu0 0.0
    %815 = vmatpush2.msra.mxu0 0.0
    %816 = vmatprep.subr.mxu0 0.0
    %817 = vmatpush2.msra.mxu0 0.0
    %818 = vmatprep.subr.mxu0 0.0
    %819 = vmatpush2.msra.mxu0 0.0
    %820 = vmatprep.subr.mxu0 0.0
    %821 = vmatpush2.msra.mxu0 0.0
    %822 = vmatprep.mubr.f32.mxu0 0.0
    %823 = vmatmul.mubr.f32.gmra.mxu0 %v753
    %v824 = vpop.f32.mrf.mxu0
    %v825 = vadd.f32 0.0, %v824
    %v826 = vpop.f32.mrf.mxu0
    %827 = vdwg.mxu0
    %v828 = vlaneseq
    %v829 = vshrl.u32 %v828, 7
    %v830 = vsub.s32 0, %v829
    %v831 = vrot.slane %v573, %v830
    %v832 = vmul.f32 %v825, %v831
    %v834 = vsel %vm751, %v750, 0
    %836 = vmatprep.subr.mxu0 0.0
    %837 = vmatpush1.msra.mxu0 0.0
    %838 = vmatprep.subr.mxu0 0.0
    %839 = vmatpush1.msra.mxu0 0.0
    %840 = vmatprep.subr.mxu0 0.0
    %841 = vmatpush1.msra.mxu0 0.0
    %842 = vmatprep.subr.mxu0 0.0
    %843 = vmatpush1.msra.mxu0 0.0
    %844 = vmatprep.subr.mxu0 0.0
    %845 = vmatpush1.msra.mxu0 0.0
    %846 = vmatprep.subr.mxu0 0.0
    %847 = vmatpush1.msra.mxu0 0.0
    %848 = vmatprep.subr.mxu0 0.0
    %849 = vmatpush1.msra.mxu0 0.0
    %850 = vmatprep.subr.mxu0 0.0
    %851 = vmatpush1.msra.mxu0 0.0
    %852 = vmatprep.subr.mxu0 0.0
    %853 = vmatpush1.msra.mxu0 0.0
    %854 = vmatprep.subr.mxu0 0.0
    %855 = vmatpush1.msra.mxu0 0.0
    %856 = vmatprep.subr.mxu0 0.0
    %857 = vmatpush1.msra.mxu0 0.0
    %858 = vmatprep.subr.mxu0 0.0
    %859 = vmatpush1.msra.mxu0 0.0
    %860 = vmatprep.subr.mxu0 0.0
    %861 = vmatpush1.msra.mxu0 0.0
    %862 = vmatprep.subr.mxu0 0.0
    %863 = vmatpush1.msra.mxu0 0.0
    %864 = vmatprep.subr.mxu0 0.0
    %865 = vmatpush1.msra.mxu0 0.0
    %866 = vmatprep.subr.mxu0 0.0
    %867 = vmatpush1.msra.mxu0 %v756
    %868 = vmatprep.subr.mxu0 0.0
    %869 = vmatpush2.msra.mxu0 0.0
    %870 = vmatprep.subr.mxu0 0.0
    %871 = vmatpush2.msra.mxu0 0.0
    %872 = vmatprep.subr.mxu0 0.0
    %873 = vmatpush2.msra.mxu0 0.0
    %874 = vmatprep.subr.mxu0 0.0
    %875 = vmatpush2.msra.mxu0 0.0
    %876 = vmatprep.subr.mxu0 0.0
    %877 = vmatpush2.msra.mxu0 0.0
    %878 = vmatprep.subr.mxu0 0.0
    %879 = vmatpush2.msra.mxu0 0.0
    %880 = vmatprep.subr.mxu0 0.0
    %881 = vmatpush2.msra.mxu0 0.0
    %882 = vmatprep.subr.mxu0 0.0
    %883 = vmatpush2.msra.mxu0 0.0
    %884 = vmatprep.subr.mxu0 0.0
    %885 = vmatpush2.msra.mxu0 0.0
    %886 = vmatprep.subr.mxu0 0.0
    %887 = vmatpush2.msra.mxu0 0.0
    %888 = vmatprep.subr.mxu0 0.0
    %889 = vmatpush2.msra.mxu0 0.0
    %890 = vmatprep.subr.mxu0 0.0
    %891 = vmatpush2.msra.mxu0 0.0
    %892 = vmatprep.subr.mxu0 0.0
    %893 = vmatpush2.msra.mxu0 0.0
    %894 = vmatprep.subr.mxu0 0.0
    %895 = vmatpush2.msra.mxu0 0.0
    %896 = vmatprep.subr.mxu0 0.0
    %897 = vmatpush2.msra.mxu0 0.0
    %898 = vmatprep.subr.mxu0 0.0
    %899 = vmatpush2.msra.mxu0 0.0
    %900 = vmatprep.mubr.f32.mxu0 0.0
    %901 = vmatmul.mubr.f32.gmra.mxu0 %v834
    %v902 = vpop.f32.mrf.mxu0
    %v903 = vadd.f32 0.0, %v902
    %v904 = vpop.f32.mrf.mxu0
    %905 = vdwg.mxu0
    %v906 = vmul.f32 %v832, %v903
    %v907 = vld [vmem:[#allocation2 + $0x39] sm:$0xff]
    %v908 = vld [vmem:[#allocation2 + $0x41] sm:$0x3]
    %v909 = vld [vmem:[#allocation2 + $0x43] sm:$0x1]
    %v910 = vlaneseq
    %v911 = vshrl.u32 %v910, 7
    %v912 = vsub.s32 0, %v911
    %v913 = vrot.slane %v909, %v912
    %v915 = vsel %vm65, %v906, 0
    %v918 = vsel %vm72, %v908, 0
    %920 = vmatprep.subr.mxu0 0.0
    %921 = vmatpush1.msra.mxu0 0.0
    %922 = vmatprep.subr.mxu0 0.0
    %923 = vmatpush1.msra.mxu0 0.0
    %924 = vmatprep.subr.mxu0 0.0
    %925 = vmatpush1.msra.mxu0 0.0
    %926 = vmatprep.subr.mxu0 0.0
    %927 = vmatpush1.msra.mxu0 0.0
    %928 = vmatprep.subr.mxu0 0.0
    %929 = vmatpush1.msra.mxu0 0.0
    %930 = vmatprep.subr.mxu0 0.0
    %931 = vmatpush1.msra.mxu0 0.0
    %932 = vmatprep.subr.mxu0 0.0
    %933 = vmatpush1.msra.mxu0 0.0
    %934 = vmatprep.subr.mxu0 0.0
    %935 = vmatpush1.msra.mxu0 0.0
    %936 = vmatprep.subr.mxu0 0.0
    %937 = vmatpush1.msra.mxu0 0.0
    %938 = vmatprep.subr.mxu0 0.0
    %939 = vmatpush1.msra.mxu0 0.0
    %940 = vmatprep.subr.mxu0 0.0
    %941 = vmatpush1.msra.mxu0 0.0
    %942 = vmatprep.subr.mxu0 0.0
    %943 = vmatpush1.msra.mxu0 0.0
    %944 = vmatprep.subr.mxu0 0.0
    %945 = vmatpush1.msra.mxu0 0.0
    %946 = vmatprep.subr.mxu0 0.0
    %947 = vmatpush1.msra.mxu0 0.0
    %948 = vmatprep.subr.mxu0 0.0
    %949 = vmatpush1.msra.mxu0 %v918
    %950 = vmatprep.subr.mxu0 0.0
    %951 = vmatpush1.msra.mxu0 %v907
    %952 = vmatprep.subr.mxu0 0.0
    %953 = vmatpush2.msra.mxu0 0.0
    %954 = vmatprep.subr.mxu0 0.0
    %955 = vmatpush2.msra.mxu0 0.0
    %956 = vmatprep.subr.mxu0 0.0
    %957 = vmatpush2.msra.mxu0 0.0
    %958 = vmatprep.subr.mxu0 0.0
    %959 = vmatpush2.msra.mxu0 0.0
    %960 = vmatprep.subr.mxu0 0.0
    %961 = vmatpush2.msra.mxu0 0.0
    %962 = vmatprep.subr.mxu0 0.0
    %963 = vmatpush2.msra.mxu0 0.0
    %964 = vmatprep.subr.mxu0 0.0
    %965 = vmatpush2.msra.mxu0 0.0
    %966 = vmatprep.subr.mxu0 0.0
    %967 = vmatpush2.msra.mxu0 0.0
    %968 = vmatprep.subr.mxu0 0.0
    %969 = vmatpush2.msra.mxu0 0.0
    %970 = vmatprep.subr.mxu0 0.0
    %971 = vmatpush2.msra.mxu0 0.0
    %972 = vmatprep.subr.mxu0 0.0
    %973 = vmatpush2.msra.mxu0 0.0
    %974 = vmatprep.subr.mxu0 0.0
    %975 = vmatpush2.msra.mxu0 0.0
    %976 = vmatprep.subr.mxu0 0.0
    %977 = vmatpush2.msra.mxu0 0.0
    %978 = vmatprep.subr.mxu0 0.0
    %979 = vmatpush2.msra.mxu0 0.0
    %980 = vmatprep.subr.mxu0 0.0
    %981 = vmatpush2.msra.mxu0 0.0
    %982 = vmatprep.subr.mxu0 0.0
    %983 = vmatpush2.msra.mxu0 0.0
    %984 = vmatprep.mubr.f32.mxu0 0.0
    %985 = vmatmul.mubr.f32.gmra.mxu0 %v915
    %v986 = vpop.f32.mrf.mxu0
    %v987 = vadd.f32 %v913, %v986
    %v988 = vpop.f32.mrf.mxu0
    %989 = vdwg.mxu0
    %v990 = vadd.f32 %v579, %v987
    %vm991 = vcmask 74752
    %v992 = vsel %vm991, %v990, 0.0
    %993 = vadd.xlane.f32.xlu0 %v992
    %v994 = vpop.xlane.xlu0 %993
    %v995 = vrcp.pop 10.0
    %v996 = vmul.f32 %v994, %v995
    %v997 = vsub.f32 %v990, %v996
    %v998 = vmul.f32 %v997, %v997
    %v999 = vsel %vm991, %v998, 0.0
    %1000 = vadd.xlane.f32.xlu0 %v999
    %v1001 = vpop.xlane.xlu0 %1000
    %v1002 = vmul.f32 %v1001, %v995
    %v1003 = vadd.f32 %v1002, 1e-05
    %v1004 = vrsqrt.pop %v1003
    %v1005 = vmul.f32 %v997, %v1004
    %v1006 = vld [vmem:[#allocation2 + $0x7a] sm:$0x1]
    %v1007 = vlaneseq
    %v1008 = vshrl.u32 %v1007, 7
    %v1009 = vsub.s32 0, %v1008
    %v1010 = vrot.slane %v1006, %v1009
    %v1011 = vmul.f32 %v1005, %v1010
    %v1012 = vld [vmem:[#allocation2 + $0x7b] sm:$0x1]
    %v1013 = vlaneseq
    %v1014 = vshrl.u32 %v1013, 7
    %v1015 = vsub.s32 0, %v1014
    %v1016 = vrot.slane %v1012, %v1015
    %v1017 = vadd.f32 %v1011, %v1016
    %v1018 = vld [vmem:[#allocation2 + $0x44] sm:$0xff]
    %v1019 = vld [vmem:[#allocation2 + $0x4c] sm:$0x3]
    %v1020 = vld [vmem:[#allocation2 + $0x4e] sm:$0x1]
    %v1021 = vlaneseq
    %v1022 = vshrl.u32 %v1021, 7
    %v1023 = vsub.s32 0, %v1022
    %v1024 = vrot.slane %v1020, %v1023
    %v1026 = vsel %vm65, %v1017, 0
    %v1029 = vsel %vm72, %v1019, 0
    %1031 = vmatprep.subr.mxu0 0.0
    %1032 = vmatpush1.msra.mxu0 0.0
    %1033 = vmatprep.subr.mxu0 0.0
    %1034 = vmatpush1.msra.mxu0 0.0
    %1035 = vmatprep.subr.mxu0 0.0
    %1036 = vmatpush1.msra.mxu0 0.0
    %1037 = vmatprep.subr.mxu0 0.0
    %1038 = vmatpush1.msra.mxu0 0.0
    %1039 = vmatprep.subr.mxu0 0.0
    %1040 = vmatpush1.msra.mxu0 0.0
    %1041 = vmatprep.subr.mxu0 0.0
    %1042 = vmatpush1.msra.mxu0 0.0
    %1043 = vmatprep.subr.mxu0 0.0
    %1044 = vmatpush1.msra.mxu0 0.0
    %1045 = vmatprep.subr.mxu0 0.0
    %1046 = vmatpush1.msra.mxu0 0.0
    %1047 = vmatprep.subr.mxu0 0.0
    %1048 = vmatpush1.msra.mxu0 0.0
    %1049 = vmatprep.subr.mxu0 0.0
    %1050 = vmatpush1.msra.mxu0 0.0
    %1051 = vmatprep.subr.mxu0 0.0
    %1052 = vmatpush1.msra.mxu0 0.0
    %1053 = vmatprep.subr.mxu0 0.0
    %1054 = vmatpush1.msra.mxu0 0.0
    %1055 = vmatprep.subr.mxu0 0.0
    %1056 = vmatpush1.msra.mxu0 0.0
    %1057 = vmatprep.subr.mxu0 0.0
    %1058 = vmatpush1.msra.mxu0 0.0
    %1059 = vmatprep.subr.mxu0 0.0
    %1060 = vmatpush1.msra.mxu0 %v1029
    %1061 = vmatprep.subr.mxu0 0.0
    %1062 = vmatpush1.msra.mxu0 %v1018
    %1063 = vmatprep.subr.mxu0 0.0
    %1064 = vmatpush2.msra.mxu0 0.0
    %1065 = vmatprep.subr.mxu0 0.0
    %1066 = vmatpush2.msra.mxu0 0.0
    %1067 = vmatprep.subr.mxu0 0.0
    %1068 = vmatpush2.msra.mxu0 0.0
    %1069 = vmatprep.subr.mxu0 0.0
    %1070 = vmatpush2.msra.mxu0 0.0
    %1071 = vmatprep.subr.mxu0 0.0
    %1072 = vmatpush2.msra.mxu0 0.0
    %1073 = vmatprep.subr.mxu0 0.0
    %1074 = vmatpush2.msra.mxu0 0.0
    %1075 = vmatprep.subr.mxu0 0.0
    %1076 = vmatpush2.msra.mxu0 0.0
    %1077 = vmatprep.subr.mxu0 0.0
    %1078 = vmatpush2.msra.mxu0 0.0
    %1079 = vmatprep.subr.mxu0 0.0
    %1080 = vmatpush2.msra.mxu0 0.0
    %1081 = vmatprep.subr.mxu0 0.0
    %1082 = vmatpush2.msra.mxu0 0.0
    %1083 = vmatprep.subr.mxu0 0.0
    %1084 = vmatpush2.msra.mxu0 0.0
    %1085 = vmatprep.subr.mxu0 0.0
    %1086 = vmatpush2.msra.mxu0 0.0
    %1087 = vmatprep.subr.mxu0 0.0
    %1088 = vmatpush2.msra.mxu0 0.0
    %1089 = vmatprep.subr.mxu0 0.0
    %1090 = vmatpush2.msra.mxu0 0.0
    %1091 = vmatprep.subr.mxu0 0.0
    %1092 = vmatpush2.msra.mxu0 0.0
    %1093 = vmatprep.subr.mxu0 0.0
    %1094 = vmatpush2.msra.mxu0 0.0
    %1095 = vmatprep.mubr.f32.mxu0 0.0
    %1096 = vmatmul.mubr.f32.gmra.mxu0 %v1026
    %v1097 = vpop.f32.mrf.mxu0
    %v1098 = vadd.f32 %v1024, %v1097
    %v1099 = vpop.f32.mrf.mxu0
    %1100 = vdwg.mxu0
    %v1103 = vunpack.c.l.s4 1966171168
    %v1104 = vunpack.c.0.s8 %v1103
    %v1105 = vlaneseq
    %v1106 = vshrl.u32 %v1105, 7
    %v1107 = vsub.s32 %v1104, %v1106
    %v1108 = vrot.slane %v1098, %v1107
    %v1109 = vcombine.high %v1108, %v1108
    %v1111 = vunpack.c.l.s4 1966171168
    %v1112 = vunpack.c.0.s8 %v1111
    %v1113 = vlaneseq
    %v1114 = vshrl.u32 %v1113, 7
    %v1115 = vsub.s32 %v1112, %v1114
    %v1116 = vrot.slane %v1108, %v1115
    %v1118 = vunpack.c.l.s4 1966171168
    %v1119 = vunpack.c.0.s8 %v1118
    %v1120 = vlaneseq
    %v1121 = vshrl.u32 %v1120, 7
    %v1122 = vsub.s32 %v1119, %v1121
    %v1123 = vrot.slane %v1109, %v1122
    %v1126 = vld [vmem:[#allocation2 + $0xf4] sm:$0x1]
    %v1127 = vmul.f32 %v1116, %v1126
    %v1128 = vmul.f32 %v1123, %v1126
    %v1130 = vsel %vm65, %v1127, 0
    %v1133 = vsel %vm65, %v327, 0
    %1135 = vmatprep.subr.mxu0 0.0
    %1136 = vmatpush1.xpose.msra.mxu0 0.0
    %1137 = vmatprep.subr.mxu0 0.0
    %1138 = vmatpush1.xpose.msra.mxu0 0.0
    %1139 = vmatprep.subr.mxu0 0.0
    %1140 = vmatpush1.xpose.msra.mxu0 0.0
    %1141 = vmatprep.subr.mxu0 0.0
    %1142 = vmatpush1.xpose.msra.mxu0 0.0
    %1143 = vmatprep.subr.mxu0 0.0
    %1144 = vmatpush1.xpose.msra.mxu0 0.0
    %1145 = vmatprep.subr.mxu0 0.0
    %1146 = vmatpush1.xpose.msra.mxu0 0.0
    %1147 = vmatprep.subr.mxu0 0.0
    %1148 = vmatpush1.xpose.msra.mxu0 0.0
    %1149 = vmatprep.subr.mxu0 0.0
    %1150 = vmatpush1.xpose.msra.mxu0 0.0
    %1151 = vmatprep.subr.mxu0 0.0
    %1152 = vmatpush1.xpose.msra.mxu0 0.0
    %1153 = vmatprep.subr.mxu0 0.0
    %1154 = vmatpush1.xpose.msra.mxu0 0.0
    %1155 = vmatprep.subr.mxu0 0.0
    %1156 = vmatpush1.xpose.msra.mxu0 0.0
    %1157 = vmatprep.subr.mxu0 0.0
    %1158 = vmatpush1.xpose.msra.mxu0 0.0
    %1159 = vmatprep.subr.mxu0 0.0
    %1160 = vmatpush1.xpose.msra.mxu0 0.0
    %1161 = vmatprep.subr.mxu0 0.0
    %1162 = vmatpush1.xpose.msra.mxu0 0.0
    %1163 = vmatprep.subr.mxu0 0.0
    %1164 = vmatpush1.xpose.msra.mxu0 0.0
    %1165 = vmatprep.subr.mxu0 0.0
    %1166 = vmatpush1.xpose.msra.mxu0 %v1133
    %1167 = vmatprep.subr.mxu0 0.0
    %1168 = vmatpush2.xpose.msra.mxu0 0.0
    %1169 = vmatprep.subr.mxu0 0.0
    %1170 = vmatpush2.xpose.msra.mxu0 0.0
    %1171 = vmatprep.subr.mxu0 0.0
    %1172 = vmatpush2.xpose.msra.mxu0 0.0
    %1173 = vmatprep.subr.mxu0 0.0
    %1174 = vmatpush2.xpose.msra.mxu0 0.0
    %1175 = vmatprep.subr.mxu0 0.0
    %1176 = vmatpush2.xpose.msra.mxu0 0.0
    %1177 = vmatprep.subr.mxu0 0.0
    %1178 = vmatpush2.xpose.msra.mxu0 0.0
    %1179 = vmatprep.subr.mxu0 0.0
    %1180 = vmatpush2.xpose.msra.mxu0 0.0
    %1181 = vmatprep.subr.mxu0 0.0
    %1182 = vmatpush2.xpose.msra.mxu0 0.0
    %1183 = vmatprep.subr.mxu0 0.0
    %1184 = vmatpush2.xpose.msra.mxu0 0.0
    %1185 = vmatprep.subr.mxu0 0.0
    %1186 = vmatpush2.xpose.msra.mxu0 0.0
    %1187 = vmatprep.subr.mxu0 0.0
    %1188 = vmatpush2.xpose.msra.mxu0 0.0
    %1189 = vmatprep.subr.mxu0 0.0
    %1190 = vmatpush2.xpose.msra.mxu0 0.0
    %1191 = vmatprep.subr.mxu0 0.0
    %1192 = vmatpush2.xpose.msra.mxu0 0.0
    %1193 = vmatprep.subr.mxu0 0.0
    %1194 = vmatpush2.xpose.msra.mxu0 0.0
    %1195 = vmatprep.subr.mxu0 0.0
    %1196 = vmatpush2.xpose.msra.mxu0 0.0
    %1197 = vmatprep.subr.mxu0 0.0
    %1198 = vmatpush2.xpose.msra.mxu0 0.0
    %1199 = vmatprep.mubr.f32.mxu0 0.0
    %1200 = vmatmul.mubr.f32.gmra.mxu0 %v1130
    %v1201 = vpop.f32.mrf.mxu0
    %v1202 = vadd.f32 0.0, %v1201
    %v1203 = vpop.f32.mrf.mxu0
    %1204 = vdwg.mxu0
    %v1206 = vsel %vm65, %v1128, 0
    %v1209 = vsel %vm65, %v332, 0
    %1211 = vmatprep.subr.mxu0 0.0
    %1212 = vmatpush1.xpose.msra.mxu0 0.0
    %1213 = vmatprep.subr.mxu0 0.0
    %1214 = vmatpush1.xpose.msra.mxu0 0.0
    %1215 = vmatprep.subr.mxu0 0.0
    %1216 = vmatpush1.xpose.msra.mxu0 0.0
    %1217 = vmatprep.subr.mxu0 0.0
    %1218 = vmatpush1.xpose.msra.mxu0 0.0
    %1219 = vmatprep.subr.mxu0 0.0
    %1220 = vmatpush1.xpose.msra.mxu0 0.0
    %1221 = vmatprep.subr.mxu0 0.0
    %1222 = vmatpush1.xpose.msra.mxu0 0.0
    %1223 = vmatprep.subr.mxu0 0.0
    %1224 = vmatpush1.xpose.msra.mxu0 0.0
    %1225 = vmatprep.subr.mxu0 0.0
    %1226 = vmatpush1.xpose.msra.mxu0 0.0
    %1227 = vmatprep.subr.mxu0 0.0
    %1228 = vmatpush1.xpose.msra.mxu0 0.0
    %1229 = vmatprep.subr.mxu0 0.0
    %1230 = vmatpush1.xpose.msra.mxu0 0.0
    %1231 = vmatprep.subr.mxu0 0.0
    %1232 = vmatpush1.xpose.msra.mxu0 0.0
    %1233 = vmatprep.subr.mxu0 0.0
    %1234 = vmatpush1.xpose.msra.mxu0 0.0
    %1235 = vmatprep.subr.mxu0 0.0
    %1236 = vmatpush1.xpose.msra.mxu0 0.0
    %1237 = vmatprep.subr.mxu0 0.0
    %1238 = vmatpush1.xpose.msra.mxu0 0.0
    %1239 = vmatprep.subr.mxu0 0.0
    %1240 = vmatpush1.xpose.msra.mxu0 0.0
    %1241 = vmatprep.subr.mxu0 0.0
    %1242 = vmatpush1.xpose.msra.mxu0 %v1209
    %1243 = vmatprep.subr.mxu0 0.0
    %1244 = vmatpush2.xpose.msra.mxu0 0.0
    %1245 = vmatprep.subr.mxu0 0.0
    %1246 = vmatpush2.xpose.msra.mxu0 0.0
    %1247 = vmatprep.subr.mxu0 0.0
    %1248 = vmatpush2.xpose.msra.mxu0 0.0
    %1249 = vmatprep.subr.mxu0 0.0
    %1250 = vmatpush2.xpose.msra.mxu0 0.0
    %1251 = vmatprep.subr.mxu0 0.0
    %1252 = vmatpush2.xpose.msra.mxu0 0.0
    %1253 = vmatprep.subr.mxu0 0.0
    %1254 = vmatpush2.xpose.msra.mxu0 0.0
    %1255 = vmatprep.subr.mxu0 0.0
    %1256 = vmatpush2.xpose.msra.mxu0 0.0
    %1257 = vmatprep.subr.mxu0 0.0
    %1258 = vmatpush2.xpose.msra.mxu0 0.0
    %1259 = vmatprep.subr.mxu0 0.0
    %1260 = vmatpush2.xpose.msra.mxu0 0.0
    %1261 = vmatprep.subr.mxu0 0.0
    %1262 = vmatpush2.xpose.msra.mxu0 0.0
    %1263 = vmatprep.subr.mxu0 0.0
    %1264 = vmatpush2.xpose.msra.mxu0 0.0
    %1265 = vmatprep.subr.mxu0 0.0
    %1266 = vmatpush2.xpose.msra.mxu0 0.0
    %1267 = vmatprep.subr.mxu0 0.0
    %1268 = vmatpush2.xpose.msra.mxu0 0.0
    %1269 = vmatprep.subr.mxu0 0.0
    %1270 = vmatpush2.xpose.msra.mxu0 0.0
    %1271 = vmatprep.subr.mxu0 0.0
    %1272 = vmatpush2.xpose.msra.mxu0 0.0
    %1273 = vmatprep.subr.mxu0 0.0
    %1274 = vmatpush2.xpose.msra.mxu0 0.0
    %1275 = vmatprep.mubr.f32.mxu0 0.0
    %1276 = vmatmul.mubr.f32.gmra.mxu0 %v1206
    %v1277 = vpop.f32.mrf.mxu0
    %v1278 = vadd.f32 0.0, %v1277
    %v1279 = vpop.f32.mrf.mxu0
    %1280 = vdwg.mxu0
    %vm1281 = vcmask 57344
    %v1282 = vsel %vm1281, %v1202, -inf
    %1283 = vmax.xlane.f32.xlu0 %v1282
    %v1284 = vpop.xlane.xlu0 %1283
    %v1285 = vsel %vm1281, %v1278, -inf
    %1286 = vmax.xlane.f32.xlu0 %v1285
    %v1287 = vpop.xlane.xlu0 %1286
    %v1288 = vsub.f32 %v1202, %v1284
    %v1289 = vsub.f32 %v1278, %v1287
    %v1290 = vmul.f32 %v1288, 1.442695
    %v1291 = vpow.pop %v1290
    %v1292 = vmul.f32 %v1289, 1.442695
    %v1293 = vpow.pop %v1292
    %v1294 = vsel %vm1281, %v1291, 0.0
    %1295 = vadd.xlane.f32.xlu0 %v1294
    %v1296 = vpop.xlane.xlu0 %1295
    %v1297 = vsel %vm1281, %v1293, 0.0
    %1298 = vadd.xlane.f32.xlu0 %v1297
    %v1299 = vpop.xlane.xlu0 %1298
    %v1300 = vrcp.pop %v1296
    %v1301 = vrcp.pop %v1299
    %v1302 = vmul.f32 %v1291, %v1300
    %v1303 = vmul.f32 %v1293, %v1301
    %vm1304 = vcmask 64512
    %v1306 = vsel %vm1304, %v1302, 0
    %1308 = vmatprep.subr.mxu0 0.0
    %1309 = vmatpush1.msra.mxu0 0.0
    %1310 = vmatprep.subr.mxu0 0.0
    %1311 = vmatpush1.msra.mxu0 0.0
    %1312 = vmatprep.subr.mxu0 0.0
    %1313 = vmatpush1.msra.mxu0 0.0
    %1314 = vmatprep.subr.mxu0 0.0
    %1315 = vmatpush1.msra.mxu0 0.0
    %1316 = vmatprep.subr.mxu0 0.0
    %1317 = vmatpush1.msra.mxu0 0.0
    %1318 = vmatprep.subr.mxu0 0.0
    %1319 = vmatpush1.msra.mxu0 0.0
    %1320 = vmatprep.subr.mxu0 0.0
    %1321 = vmatpush1.msra.mxu0 0.0
    %1322 = vmatprep.subr.mxu0 0.0
    %1323 = vmatpush1.msra.mxu0 0.0
    %1324 = vmatprep.subr.mxu0 0.0
    %1325 = vmatpush1.msra.mxu0 0.0
    %1326 = vmatprep.subr.mxu0 0.0
    %1327 = vmatpush1.msra.mxu0 0.0
    %1328 = vmatprep.subr.mxu0 0.0
    %1329 = vmatpush1.msra.mxu0 0.0
    %1330 = vmatprep.subr.mxu0 0.0
    %1331 = vmatpush1.msra.mxu0 0.0
    %1332 = vmatprep.subr.mxu0 0.0
    %1333 = vmatpush1.msra.mxu0 0.0
    %1334 = vmatprep.subr.mxu0 0.0
    %1335 = vmatpush1.msra.mxu0 0.0
    %1336 = vmatprep.subr.mxu0 0.0
    %1337 = vmatpush1.msra.mxu0 0.0
    %1338 = vmatprep.subr.mxu0 0.0
    %1339 = vmatpush1.msra.mxu0 %v412
    %1340 = vmatprep.subr.mxu0 0.0
    %1341 = vmatpush2.msra.mxu0 0.0
    %1342 = vmatprep.subr.mxu0 0.0
    %1343 = vmatpush2.msra.mxu0 0.0
    %1344 = vmatprep.subr.mxu0 0.0
    %1345 = vmatpush2.msra.mxu0 0.0
    %1346 = vmatprep.subr.mxu0 0.0
    %1347 = vmatpush2.msra.mxu0 0.0
    %1348 = vmatprep.subr.mxu0 0.0
    %1349 = vmatpush2.msra.mxu0 0.0
    %1350 = vmatprep.subr.mxu0 0.0
    %1351 = vmatpush2.msra.mxu0 0.0
    %1352 = vmatprep.subr.mxu0 0.0
    %1353 = vmatpush2.msra.mxu0 0.0
    %1354 = vmatprep.subr.mxu0 0.0
    %1355 = vmatpush2.msra.mxu0 0.0
    %1356 = vmatprep.subr.mxu0 0.0
    %1357 = vmatpush2.msra.mxu0 0.0
    %1358 = vmatprep.subr.mxu0 0.0
    %1359 = vmatpush2.msra.mxu0 0.0
    %1360 = vmatprep.subr.mxu0 0.0
    %1361 = vmatpush2.msra.mxu0 0.0
    %1362 = vmatprep.subr.mxu0 0.0
    %1363 = vmatpush2.msra.mxu0 0.0
    %1364 = vmatprep.subr.mxu0 0.0
    %1365 = vmatpush2.msra.mxu0 0.0
    %1366 = vmatprep.subr.mxu0 0.0
    %1367 = vmatpush2.msra.mxu0 0.0
    %1368 = vmatprep.subr.mxu0 0.0
    %1369 = vmatpush2.msra.mxu0 0.0
    %1370 = vmatprep.subr.mxu0 0.0
    %1371 = vmatpush2.msra.mxu0 0.0
    %1372 = vmatprep.mubr.f32.mxu0 0.0
    %1373 = vmatmul.mubr.f32.gmra.mxu0 %v1306
    %v1374 = vpop.f32.mrf.mxu0
    %v1375 = vadd.f32 0.0, %v1374
    %v1376 = vpop.f32.mrf.mxu0
    %1377 = vdwg.mxu0
    %v1379 = vsel %vm1304, %v1303, 0
    %1381 = vmatprep.subr.mxu0 0.0
    %1382 = vmatpush1.msra.mxu0 0.0
    %1383 = vmatprep.subr.mxu0 0.0
    %1384 = vmatpush1.msra.mxu0 0.0
    %1385 = vmatprep.subr.mxu0 0.0
    %1386 = vmatpush1.msra.mxu0 0.0
    %1387 = vmatprep.subr.mxu0 0.0
    %1388 = vmatpush1.msra.mxu0 0.0
    %1389 = vmatprep.subr.mxu0 0.0
    %1390 = vmatpush1.msra.mxu0 0.0
    %1391 = vmatprep.subr.mxu0 0.0
    %1392 = vmatpush1.msra.mxu0 0.0
    %1393 = vmatprep.subr.mxu0 0.0
    %1394 = vmatpush1.msra.mxu0 0.0
    %1395 = vmatprep.subr.mxu0 0.0
    %1396 = vmatpush1.msra.mxu0 0.0
    %1397 = vmatprep.subr.mxu0 0.0
    %1398 = vmatpush1.msra.mxu0 0.0
    %1399 = vmatprep.subr.mxu0 0.0
    %1400 = vmatpush1.msra.mxu0 0.0
    %1401 = vmatprep.subr.mxu0 0.0
    %1402 = vmatpush1.msra.mxu0 0.0
    %1403 = vmatprep.subr.mxu0 0.0
    %1404 = vmatpush1.msra.mxu0 0.0
    %1405 = vmatprep.subr.mxu0 0.0
    %1406 = vmatpush1.msra.mxu0 0.0
    %1407 = vmatprep.subr.mxu0 0.0
    %1408 = vmatpush1.msra.mxu0 0.0
    %1409 = vmatprep.subr.mxu0 0.0
    %1410 = vmatpush1.msra.mxu0 0.0
    %1411 = vmatprep.subr.mxu0 0.0
    %1412 = vmatpush1.msra.mxu0 %v417
    %1413 = vmatprep.subr.mxu0 0.0
    %1414 = vmatpush2.msra.mxu0 0.0
    %1415 = vmatprep.subr.mxu0 0.0
    %1416 = vmatpush2.msra.mxu0 0.0
    %1417 = vmatprep.subr.mxu0 0.0
    %1418 = vmatpush2.msra.mxu0 0.0
    %1419 = vmatprep.subr.mxu0 0.0
    %1420 = vmatpush2.msra.mxu0 0.0
    %1421 = vmatprep.subr.mxu0 0.0
    %1422 = vmatpush2.msra.mxu0 0.0
    %1423 = vmatprep.subr.mxu0 0.0
    %1424 = vmatpush2.msra.mxu0 0.0
    %1425 = vmatprep.subr.mxu0 0.0
    %1426 = vmatpush2.msra.mxu0 0.0
    %1427 = vmatprep.subr.mxu0 0.0
    %1428 = vmatpush2.msra.mxu0 0.0
    %1429 = vmatprep.subr.mxu0 0.0
    %1430 = vmatpush2.msra.mxu0 0.0
    %1431 = vmatprep.subr.mxu0 0.0
    %1432 = vmatpush2.msra.mxu0 0.0
    %1433 = vmatprep.subr.mxu0 0.0
    %1434 = vmatpush2.msra.mxu0 0.0
    %1435 = vmatprep.subr.mxu0 0.0
    %1436 = vmatpush2.msra.mxu0 0.0
    %1437 = vmatprep.subr.mxu0 0.0
    %1438 = vmatpush2.msra.mxu0 0.0
    %1439 = vmatprep.subr.mxu0 0.0
    %1440 = vmatpush2.msra.mxu0 0.0
    %1441 = vmatprep.subr.mxu0 0.0
    %1442 = vmatpush2.msra.mxu0 0.0
    %1443 = vmatprep.subr.mxu0 0.0
    %1444 = vmatpush2.msra.mxu0 0.0
    %1445 = vmatprep.mubr.f32.mxu0 0.0
    %1446 = vmatmul.mubr.f32.gmra.mxu0 %v1379
    %v1447 = vpop.f32.mrf.mxu0
    %v1448 = vadd.f32 0.0, %v1447
    %v1449 = vpop.f32.mrf.mxu0
    %1450 = vdwg.mxu0
    %v1451 = vld [vmem:[#allocation2 + $0x65] sm:$0xff]
    %v1452 = vld [vmem:[#allocation2 + $0x6d] sm:$0x3]
    %v1453 = vld [vmem:[#allocation2 + $0xf5] sm:$0x1]
    %v1454 = vmul.f32 %v1116, %v1453
    %v1455 = vmul.f32 %v1123, %v1453
    %v1457 = vsel %vm65, %v1454, 0
    %1459 = vmatprep.subr.mxu0 0.0
    %1460 = vmatpush1.xpose.msra.mxu0 0.0
    %1461 = vmatprep.subr.mxu0 0.0
    %1462 = vmatpush1.xpose.msra.mxu0 0.0
    %1463 = vmatprep.subr.mxu0 0.0
    %1464 = vmatpush1.xpose.msra.mxu0 0.0
    %1465 = vmatprep.subr.mxu0 0.0
    %1466 = vmatpush1.xpose.msra.mxu0 0.0
    %1467 = vmatprep.subr.mxu0 0.0
    %1468 = vmatpush1.xpose.msra.mxu0 0.0
    %1469 = vmatprep.subr.mxu0 0.0
    %1470 = vmatpush1.xpose.msra.mxu0 0.0
    %1471 = vmatprep.subr.mxu0 0.0
    %1472 = vmatpush1.xpose.msra.mxu0 0.0
    %1473 = vmatprep.subr.mxu0 0.0
    %1474 = vmatpush1.xpose.msra.mxu0 0.0
    %1475 = vmatprep.subr.mxu0 0.0
    %1476 = vmatpush1.xpose.msra.mxu0 0.0
    %1477 = vmatprep.subr.mxu0 0.0
    %1478 = vmatpush1.xpose.msra.mxu0 0.0
    %1479 = vmatprep.subr.mxu0 0.0
    %1480 = vmatpush1.xpose.msra.mxu0 0.0
    %1481 = vmatprep.subr.mxu0 0.0
    %1482 = vmatpush1.xpose.msra.mxu0 0.0
    %1483 = vmatprep.subr.mxu0 0.0
    %1484 = vmatpush1.xpose.msra.mxu0 0.0
    %1485 = vmatprep.subr.mxu0 0.0
    %1486 = vmatpush1.xpose.msra.mxu0 0.0
    %1487 = vmatprep.subr.mxu0 0.0
    %1488 = vmatpush1.xpose.msra.mxu0 0.0
    %1489 = vmatprep.subr.mxu0 0.0
    %1490 = vmatpush1.xpose.msra.mxu0 %v1133
    %1491 = vmatprep.subr.mxu0 0.0
    %1492 = vmatpush2.xpose.msra.mxu0 0.0
    %1493 = vmatprep.subr.mxu0 0.0
    %1494 = vmatpush2.xpose.msra.mxu0 0.0
    %1495 = vmatprep.subr.mxu0 0.0
    %1496 = vmatpush2.xpose.msra.mxu0 0.0
    %1497 = vmatprep.subr.mxu0 0.0
    %1498 = vmatpush2.xpose.msra.mxu0 0.0
    %1499 = vmatprep.subr.mxu0 0.0
    %1500 = vmatpush2.xpose.msra.mxu0 0.0
    %1501 = vmatprep.subr.mxu0 0.0
    %1502 = vmatpush2.xpose.msra.mxu0 0.0
    %1503 = vmatprep.subr.mxu0 0.0
    %1504 = vmatpush2.xpose.msra.mxu0 0.0
    %1505 = vmatprep.subr.mxu0 0.0
    %1506 = vmatpush2.xpose.msra.mxu0 0.0
    %1507 = vmatprep.subr.mxu0 0.0
    %1508 = vmatpush2.xpose.msra.mxu0 0.0
    %1509 = vmatprep.subr.mxu0 0.0
    %1510 = vmatpush2.xpose.msra.mxu0 0.0
    %1511 = vmatprep.subr.mxu0 0.0
    %1512 = vmatpush2.xpose.msra.mxu0 0.0
    %1513 = vmatprep.subr.mxu0 0.0
    %1514 = vmatpush2.xpose.msra.mxu0 0.0
    %1515 = vmatprep.subr.mxu0 0.0
    %1516 = vmatpush2.xpose.msra.mxu0 0.0
    %1517 = vmatprep.subr.mxu0 0.0
    %1518 = vmatpush2.xpose.msra.mxu0 0.0
    %1519 = vmatprep.subr.mxu0 0.0
    %1520 = vmatpush2.xpose.msra.mxu0 0.0
    %1521 = vmatprep.subr.mxu0 0.0
    %1522 = vmatpush2.xpose.msra.mxu0 0.0
    %1523 = vmatprep.mubr.f32.mxu0 0.0
    %1524 = vmatmul.mubr.f32.gmra.mxu0 %v1457
    %v1525 = vpop.f32.mrf.mxu0
    %v1526 = vadd.f32 0.0, %v1525
    %v1527 = vpop.f32.mrf.mxu0
    %1528 = vdwg.mxu0
    %v1530 = vsel %vm65, %v1455, 0
    %1532 = vmatprep.subr.mxu0 0.0
    %1533 = vmatpush1.xpose.msra.mxu0 0.0
    %1534 = vmatprep.subr.mxu0 0.0
    %1535 = vmatpush1.xpose.msra.mxu0 0.0
    %1536 = vmatprep.subr.mxu0 0.0
    %1537 = vmatpush1.xpose.msra.mxu0 0.0
    %1538 = vmatprep.subr.mxu0 0.0
    %1539 = vmatpush1.xpose.msra.mxu0 0.0
    %1540 = vmatprep.subr.mxu0 0.0
    %1541 = vmatpush1.xpose.msra.mxu0 0.0
    %1542 = vmatprep.subr.mxu0 0.0
    %1543 = vmatpush1.xpose.msra.mxu0 0.0
    %1544 = vmatprep.subr.mxu0 0.0
    %1545 = vmatpush1.xpose.msra.mxu0 0.0
    %1546 = vmatprep.subr.mxu0 0.0
    %1547 = vmatpush1.xpose.msra.mxu0 0.0
    %1548 = vmatprep.subr.mxu0 0.0
    %1549 = vmatpush1.xpose.msra.mxu0 0.0
    %1550 = vmatprep.subr.mxu0 0.0
    %1551 = vmatpush1.xpose.msra.mxu0 0.0
    %1552 = vmatprep.subr.mxu0 0.0
    %1553 = vmatpush1.xpose.msra.mxu0 0.0
    %1554 = vmatprep.subr.mxu0 0.0
    %1555 = vmatpush1.xpose.msra.mxu0 0.0
    %1556 = vmatprep.subr.mxu0 0.0
    %1557 = vmatpush1.xpose.msra.mxu0 0.0
    %1558 = vmatprep.subr.mxu0 0.0
    %1559 = vmatpush1.xpose.msra.mxu0 0.0
    %1560 = vmatprep.subr.mxu0 0.0
    %1561 = vmatpush1.xpose.msra.mxu0 0.0
    %1562 = vmatprep.subr.mxu0 0.0
    %1563 = vmatpush1.xpose.msra.mxu0 %v1209
    %1564 = vmatprep.subr.mxu0 0.0
    %1565 = vmatpush2.xpose.msra.mxu0 0.0
    %1566 = vmatprep.subr.mxu0 0.0
    %1567 = vmatpush2.xpose.msra.mxu0 0.0
    %1568 = vmatprep.subr.mxu0 0.0
    %1569 = vmatpush2.xpose.msra.mxu0 0.0
    %1570 = vmatprep.subr.mxu0 0.0
    %1571 = vmatpush2.xpose.msra.mxu0 0.0
    %1572 = vmatprep.subr.mxu0 0.0
    %1573 = vmatpush2.xpose.msra.mxu0 0.0
    %1574 = vmatprep.subr.mxu0 0.0
    %1575 = vmatpush2.xpose.msra.mxu0 0.0
    %1576 = vmatprep.subr.mxu0 0.0
    %1577 = vmatpush2.xpose.msra.mxu0 0.0
    %1578 = vmatprep.subr.mxu0 0.0
    %1579 = vmatpush2.xpose.msra.mxu0 0.0
    %1580 = vmatprep.subr.mxu0 0.0
    %1581 = vmatpush2.xpose.msra.mxu0 0.0
    %1582 = vmatprep.subr.mxu0 0.0
    %1583 = vmatpush2.xpose.msra.mxu0 0.0
    %1584 = vmatprep.subr.mxu0 0.0
    %1585 = vmatpush2.xpose.msra.mxu0 0.0
    %1586 = vmatprep.subr.mxu0 0.0
    %1587 = vmatpush2.xpose.msra.mxu0 0.0
    %1588 = vmatprep.subr.mxu0 0.0
    %1589 = vmatpush2.xpose.msra.mxu0 0.0
    %1590 = vmatprep.subr.mxu0 0.0
    %1591 = vmatpush2.xpose.msra.mxu0 0.0
    %1592 = vmatprep.subr.mxu0 0.0
    %1593 = vmatpush2.xpose.msra.mxu0 0.0
    %1594 = vmatprep.subr.mxu0 0.0
    %1595 = vmatpush2.xpose.msra.mxu0 0.0
    %1596 = vmatprep.mubr.f32.mxu0 0.0
    %1597 = vmatmul.mubr.f32.gmra.mxu0 %v1530
    %v1598 = vpop.f32.mrf.mxu0
    %v1599 = vadd.f32 0.0, %v1598
    %v1600 = vpop.f32.mrf.mxu0
    %1601 = vdwg.mxu0
    %v1602 = vsel %vm1281, %v1526, -inf
    %1603 = vmax.xlane.f32.xlu0 %v1602
    %v1604 = vpop.xlane.xlu0 %1603
    %v1605 = vsel %vm1281, %v1599, -inf
    %1606 = vmax.xlane.f32.xlu0 %v1605
    %v1607 = vpop.xlane.xlu0 %1606
    %v1608 = vsub.f32 %v1526, %v1604
    %v1609 = vsub.f32 %v1599, %v1607
    %v1610 = vmul.f32 %v1608, 1.442695
    %v1611 = vpow.pop %v1610
    %v1612 = vmul.f32 %v1609, 1.442695
    %v1613 = vpow.pop %v1612
    %v1614 = vsel %vm1281, %v1611, 0.0
    %1615 = vadd.xlane.f32.xlu0 %v1614
    %v1616 = vpop.xlane.xlu0 %1615
    %v1617 = vsel %vm1281, %v1613, 0.0
    %1618 = vadd.xlane.f32.xlu0 %v1617
    %v1619 = vpop.xlane.xlu0 %1618
    %v1620 = vrcp.pop %v1616
    %v1621 = vrcp.pop %v1619
    %v1622 = vmul.f32 %v1611, %v1620
    %v1623 = vmul.f32 %v1613, %v1621
    %v1625 = vsel %vm1304, %v1622, 0
    %1627 = vmatprep.subr.mxu0 0.0
    %1628 = vmatpush1.msra.mxu0 0.0
    %1629 = vmatprep.subr.mxu0 0.0
    %1630 = vmatpush1.msra.mxu0 0.0
    %1631 = vmatprep.subr.mxu0 0.0
    %1632 = vmatpush1.msra.mxu0 0.0
    %1633 = vmatprep.subr.mxu0 0.0
    %1634 = vmatpush1.msra.mxu0 0.0
    %1635 = vmatprep.subr.mxu0 0.0
    %1636 = vmatpush1.msra.mxu0 0.0
    %1637 = vmatprep.subr.mxu0 0.0
    %1638 = vmatpush1.msra.mxu0 0.0
    %1639 = vmatprep.subr.mxu0 0.0
    %1640 = vmatpush1.msra.mxu0 0.0
    %1641 = vmatprep.subr.mxu0 0.0
    %1642 = vmatpush1.msra.mxu0 0.0
    %1643 = vmatprep.subr.mxu0 0.0
    %1644 = vmatpush1.msra.mxu0 0.0
    %1645 = vmatprep.subr.mxu0 0.0
    %1646 = vmatpush1.msra.mxu0 0.0
    %1647 = vmatprep.subr.mxu0 0.0
    %1648 = vmatpush1.msra.mxu0 0.0
    %1649 = vmatprep.subr.mxu0 0.0
    %1650 = vmatpush1.msra.mxu0 0.0
    %1651 = vmatprep.subr.mxu0 0.0
    %1652 = vmatpush1.msra.mxu0 0.0
    %1653 = vmatprep.subr.mxu0 0.0
    %1654 = vmatpush1.msra.mxu0 0.0
    %1655 = vmatprep.subr.mxu0 0.0
    %1656 = vmatpush1.msra.mxu0 0.0
    %1657 = vmatprep.subr.mxu0 0.0
    %1658 = vmatpush1.msra.mxu0 %v412
    %1659 = vmatprep.subr.mxu0 0.0
    %1660 = vmatpush2.msra.mxu0 0.0
    %1661 = vmatprep.subr.mxu0 0.0
    %1662 = vmatpush2.msra.mxu0 0.0
    %1663 = vmatprep.subr.mxu0 0.0
    %1664 = vmatpush2.msra.mxu0 0.0
    %1665 = vmatprep.subr.mxu0 0.0
    %1666 = vmatpush2.msra.mxu0 0.0
    %1667 = vmatprep.subr.mxu0 0.0
    %1668 = vmatpush2.msra.mxu0 0.0
    %1669 = vmatprep.subr.mxu0 0.0
    %1670 = vmatpush2.msra.mxu0 0.0
    %1671 = vmatprep.subr.mxu0 0.0
    %1672 = vmatpush2.msra.mxu0 0.0
    %1673 = vmatprep.subr.mxu0 0.0
    %1674 = vmatpush2.msra.mxu0 0.0
    %1675 = vmatprep.subr.mxu0 0.0
    %1676 = vmatpush2.msra.mxu0 0.0
    %1677 = vmatprep.subr.mxu0 0.0
    %1678 = vmatpush2.msra.mxu0 0.0
    %1679 = vmatprep.subr.mxu0 0.0
    %1680 = vmatpush2.msra.mxu0 0.0
    %1681 = vmatprep.subr.mxu0 0.0
    %1682 = vmatpush2.msra.mxu0 0.0
    %1683 = vmatprep.subr.mxu0 0.0
    %1684 = vmatpush2.msra.mxu0 0.0
    %1685 = vmatprep.subr.mxu0 0.0
    %1686 = vmatpush2.msra.mxu0 0.0
    %1687 = vmatprep.subr.mxu0 0.0
    %1688 = vmatpush2.msra.mxu0 0.0
    %1689 = vmatprep.subr.mxu0 0.0
    %1690 = vmatpush2.msra.mxu0 0.0
    %1691 = vmatprep.mubr.f32.mxu0 0.0
    %1692 = vmatmul.mubr.f32.gmra.mxu0 %v1625
    %v1693 = vpop.f32.mrf.mxu0
    %v1694 = vadd.f32 0.0, %v1693
    %v1695 = vpop.f32.mrf.mxu0
    %1696 = vdwg.mxu0
    %v1698 = vsel %vm1304, %v1623, 0
    %1700 = vmatprep.subr.mxu0 0.0
    %1701 = vmatpush1.msra.mxu0 0.0
    %1702 = vmatprep.subr.mxu0 0.0
    %1703 = vmatpush1.msra.mxu0 0.0
    %1704 = vmatprep.subr.mxu0 0.0
    %1705 = vmatpush1.msra.mxu0 0.0
    %1706 = vmatprep.subr.mxu0 0.0
    %1707 = vmatpush1.msra.mxu0 0.0
    %1708 = vmatprep.subr.mxu0 0.0
    %1709 = vmatpush1.msra.mxu0 0.0
    %1710 = vmatprep.subr.mxu0 0.0
    %1711 = vmatpush1.msra.mxu0 0.0
    %1712 = vmatprep.subr.mxu0 0.0
    %1713 = vmatpush1.msra.mxu0 0.0
    %1714 = vmatprep.subr.mxu0 0.0
    %1715 = vmatpush1.msra.mxu0 0.0
    %1716 = vmatprep.subr.mxu0 0.0
    %1717 = vmatpush1.msra.mxu0 0.0
    %1718 = vmatprep.subr.mxu0 0.0
    %1719 = vmatpush1.msra.mxu0 0.0
    %1720 = vmatprep.subr.mxu0 0.0
    %1721 = vmatpush1.msra.mxu0 0.0
    %1722 = vmatprep.subr.mxu0 0.0
    %1723 = vmatpush1.msra.mxu0 0.0
    %1724 = vmatprep.subr.mxu0 0.0
    %1725 = vmatpush1.msra.mxu0 0.0
    %1726 = vmatprep.subr.mxu0 0.0
    %1727 = vmatpush1.msra.mxu0 0.0
    %1728 = vmatprep.subr.mxu0 0.0
    %1729 = vmatpush1.msra.mxu0 0.0
    %1730 = vmatprep.subr.mxu0 0.0
    %1731 = vmatpush1.msra.mxu0 %v417
    %1732 = vmatprep.subr.mxu0 0.0
    %1733 = vmatpush2.msra.mxu0 0.0
    %1734 = vmatprep.subr.mxu0 0.0
    %1735 = vmatpush2.msra.mxu0 0.0
    %1736 = vmatprep.subr.mxu0 0.0
    %1737 = vmatpush2.msra.mxu0 0.0
    %1738 = vmatprep.subr.mxu0 0.0
    %1739 = vmatpush2.msra.mxu0 0.0
    %1740 = vmatprep.subr.mxu0 0.0
    %1741 = vmatpush2.msra.mxu0 0.0
    %1742 = vmatprep.subr.mxu0 0.0
    %1743 = vmatpush2.msra.mxu0 0.0
    %1744 = vmatprep.subr.mxu0 0.0
    %1745 = vmatpush2.msra.mxu0 0.0
    %1746 = vmatprep.subr.mxu0 0.0
    %1747 = vmatpush2.msra.mxu0 0.0
    %1748 = vmatprep.subr.mxu0 0.0
    %1749 = vmatpush2.msra.mxu0 0.0
    %1750 = vmatprep.subr.mxu0 0.0
    %1751 = vmatpush2.msra.mxu0 0.0
    %1752 = vmatprep.subr.mxu0 0.0
    %1753 = vmatpush2.msra.mxu0 0.0
    %1754 = vmatprep.subr.mxu0 0.0
    %1755 = vmatpush2.msra.mxu0 0.0
    %1756 = vmatprep.subr.mxu0 0.0
    %1757 = vmatpush2.msra.mxu0 0.0
    %1758 = vmatprep.subr.mxu0 0.0
    %1759 = vmatpush2.msra.mxu0 0.0
    %1760 = vmatprep.subr.mxu0 0.0
    %1761 = vmatpush2.msra.mxu0 0.0
    %1762 = vmatprep.subr.mxu0 0.0
    %1763 = vmatpush2.msra.mxu0 0.0
    %1764 = vmatprep.mubr.f32.mxu0 0.0
    %1765 = vmatmul.mubr.f32.gmra.mxu0 %v1698
    %v1766 = vpop.f32.mrf.mxu0
    %v1767 = vadd.f32 0.0, %v1766
    %v1768 = vpop.f32.mrf.mxu0
    %1769 = vdwg.mxu0
    %v1770 = vld [vmem:[#allocation2 + $0x6f] sm:$0xff]
    %v1771 = vld [vmem:[#allocation2 + $0x77] sm:$0x3]
    %v1774 = vrot.slane %v1767, 7
    %vm1775 = vcmask 1041409
    %v1776 = vsel %vm1775, %v1774, %v1694
    %v1777 = vsel %vm65, %v1776, 0
    %v1780 = vsel %vm72, %v1771, 0
    %1782 = vmatprep.subr.mxu0 0.0
    %1783 = vmatpush1.msra.mxu0 0.0
    %1784 = vmatprep.subr.mxu0 0.0
    %1785 = vmatpush1.msra.mxu0 0.0
    %1786 = vmatprep.subr.mxu0 0.0
    %1787 = vmatpush1.msra.mxu0 0.0
    %1788 = vmatprep.subr.mxu0 0.0
    %1789 = vmatpush1.msra.mxu0 0.0
    %1790 = vmatprep.subr.mxu0 0.0
    %1791 = vmatpush1.msra.mxu0 0.0
    %1792 = vmatprep.subr.mxu0 0.0
    %1793 = vmatpush1.msra.mxu0 0.0
    %1794 = vmatprep.subr.mxu0 0.0
    %1795 = vmatpush1.msra.mxu0 0.0
    %1796 = vmatprep.subr.mxu0 0.0
    %1797 = vmatpush1.msra.mxu0 0.0
    %1798 = vmatprep.subr.mxu0 0.0
    %1799 = vmatpush1.msra.mxu0 0.0
    %1800 = vmatprep.subr.mxu0 0.0
    %1801 = vmatpush1.msra.mxu0 0.0
    %1802 = vmatprep.subr.mxu0 0.0
    %1803 = vmatpush1.msra.mxu0 0.0
    %1804 = vmatprep.subr.mxu0 0.0
    %1805 = vmatpush1.msra.mxu0 0.0
    %1806 = vmatprep.subr.mxu0 0.0
    %1807 = vmatpush1.msra.mxu0 0.0
    %1808 = vmatprep.subr.mxu0 0.0
    %1809 = vmatpush1.msra.mxu0 0.0
    %1810 = vmatprep.subr.mxu0 0.0
    %1811 = vmatpush1.msra.mxu0 %v1780
    %1812 = vmatprep.subr.mxu0 0.0
    %1813 = vmatpush1.msra.mxu0 %v1770
    %1814 = vmatprep.subr.mxu0 0.0
    %1815 = vmatpush2.msra.mxu0 0.0
    %1816 = vmatprep.subr.mxu0 0.0
    %1817 = vmatpush2.msra.mxu0 0.0
    %1818 = vmatprep.subr.mxu0 0.0
    %1819 = vmatpush2.msra.mxu0 0.0
    %1820 = vmatprep.subr.mxu0 0.0
    %1821 = vmatpush2.msra.mxu0 0.0
    %1822 = vmatprep.subr.mxu0 0.0
    %1823 = vmatpush2.msra.mxu0 0.0
    %1824 = vmatprep.subr.mxu0 0.0
    %1825 = vmatpush2.msra.mxu0 0.0
    %1826 = vmatprep.subr.mxu0 0.0
    %1827 = vmatpush2.msra.mxu0 0.0
    %1828 = vmatprep.subr.mxu0 0.0
    %1829 = vmatpush2.msra.mxu0 0.0
    %1830 = vmatprep.subr.mxu0 0.0
    %1831 = vmatpush2.msra.mxu0 0.0
    %1832 = vmatprep.subr.mxu0 0.0
    %1833 = vmatpush2.msra.mxu0 0.0
    %1834 = vmatprep.subr.mxu0 0.0
    %1835 = vmatpush2.msra.mxu0 0.0
    %1836 = vmatprep.subr.mxu0 0.0
    %1837 = vmatpush2.msra.mxu0 0.0
    %1838 = vmatprep.subr.mxu0 0.0
    %1839 = vmatpush2.msra.mxu0 0.0
    %1840 = vmatprep.subr.mxu0 0.0
    %1841 = vmatpush2.msra.mxu0 0.0
    %1842 = vmatprep.subr.mxu0 0.0
    %1843 = vmatpush2.msra.mxu0 0.0
    %1844 = vmatprep.subr.mxu0 0.0
    %1845 = vmatpush2.msra.mxu0 0.0
    %1846 = vmatprep.mubr.f32.mxu0 0.0
    %1847 = vmatmul.mubr.f32.gmra.mxu0 %v1777
    %v1848 = vpop.f32.mrf.mxu0
    %v1849 = vadd.f32 0.0, %v1848
    %v1850 = vpop.f32.mrf.mxu0
    %1851 = vdwg.mxu0
    %v1854 = vrot.slane %v1448, 7
    %v1855 = vsel %vm1775, %v1854, %v1375
    %v1856 = vsel %vm65, %v1855, 0
    %v1859 = vsel %vm72, %v1452, 0
    %1861 = vmatprep.subr.mxu0 0.0
    %1862 = vmatpush1.msra.mxu0 0.0
    %1863 = vmatprep.subr.mxu0 0.0
    %1864 = vmatpush1.msra.mxu0 0.0
    %1865 = vmatprep.subr.mxu0 0.0
    %1866 = vmatpush1.msra.mxu0 0.0
    %1867 = vmatprep.subr.mxu0 0.0
    %1868 = vmatpush1.msra.mxu0 0.0
    %1869 = vmatprep.subr.mxu0 0.0
    %1870 = vmatpush1.msra.mxu0 0.0
    %1871 = vmatprep.subr.mxu0 0.0
    %1872 = vmatpush1.msra.mxu0 0.0
    %1873 = vmatprep.subr.mxu0 0.0
    %1874 = vmatpush1.msra.mxu0 0.0
    %1875 = vmatprep.subr.mxu0 0.0
    %1876 = vmatpush1.msra.mxu0 0.0
    %1877 = vmatprep.subr.mxu0 0.0
    %1878 = vmatpush1.msra.mxu0 0.0
    %1879 = vmatprep.subr.mxu0 0.0
    %1880 = vmatpush1.msra.mxu0 0.0
    %1881 = vmatprep.subr.mxu0 0.0
    %1882 = vmatpush1.msra.mxu0 0.0
    %1883 = vmatprep.subr.mxu0 0.0
    %1884 = vmatpush1.msra.mxu0 0.0
    %1885 = vmatprep.subr.mxu0 0.0
    %1886 = vmatpush1.msra.mxu0 0.0
    %1887 = vmatprep.subr.mxu0 0.0
    %1888 = vmatpush1.msra.mxu0 0.0
    %1889 = vmatprep.subr.mxu0 0.0
    %1890 = vmatpush1.msra.mxu0 %v1859
    %1891 = vmatprep.subr.mxu0 0.0
    %1892 = vmatpush1.msra.mxu0 %v1451
    %1893 = vmatprep.subr.mxu0 0.0
    %1894 = vmatpush2.msra.mxu0 0.0
    %1895 = vmatprep.subr.mxu0 0.0
    %1896 = vmatpush2.msra.mxu0 0.0
    %1897 = vmatprep.subr.mxu0 0.0
    %1898 = vmatpush2.msra.mxu0 0.0
    %1899 = vmatprep.subr.mxu0 0.0
    %1900 = vmatpush2.msra.mxu0 0.0
    %1901 = vmatprep.subr.mxu0 0.0
    %1902 = vmatpush2.msra.mxu0 0.0
    %1903 = vmatprep.subr.mxu0 0.0
    %1904 = vmatpush2.msra.mxu0 0.0
    %1905 = vmatprep.subr.mxu0 0.0
    %1906 = vmatpush2.msra.mxu0 0.0
    %1907 = vmatprep.subr.mxu0 0.0
    %1908 = vmatpush2.msra.mxu0 0.0
    %1909 = vmatprep.subr.mxu0 0.0
    %1910 = vmatpush2.msra.mxu0 0.0
    %1911 = vmatprep.subr.mxu0 0.0
    %1912 = vmatpush2.msra.mxu0 0.0
    %1913 = vmatprep.subr.mxu0 0.0
    %1914 = vmatpush2.msra.mxu0 0.0
    %1915 = vmatprep.subr.mxu0 0.0
    %1916 = vmatpush2.msra.mxu0 0.0
    %1917 = vmatprep.subr.mxu0 0.0
    %1918 = vmatpush2.msra.mxu0 0.0
    %1919 = vmatprep.subr.mxu0 0.0
    %1920 = vmatpush2.msra.mxu0 0.0
    %1921 = vmatprep.subr.mxu0 0.0
    %1922 = vmatpush2.msra.mxu0 0.0
    %1923 = vmatprep.subr.mxu0 0.0
    %1924 = vmatpush2.msra.mxu0 0.0
    %1925 = vmatprep.mubr.f32.mxu0 0.0
    %1926 = vmatmul.mubr.f32.gmra.mxu0 %v1856
    %v1927 = vpop.f32.mrf.mxu0
    %v1928 = vadd.f32 %v1849, %v1927
    %v1929 = vpop.f32.mrf.mxu0
    %1930 = vdwg.mxu0
    %v1931 = vld [vmem:[#allocation2 + $0x79] sm:$0x1]
    %v1932 = vlaneseq
    %v1933 = vshrl.u32 %v1932, 7
    %v1934 = vsub.s32 0, %v1933
    %v1935 = vrot.slane %v1931, %v1934
    %v1936 = vadd.f32 %v1928, %v1935
    %v1937 = vadd.f32 %v1017, %v1936
    %v1938 = vsel %vm991, %v1937, 0.0
    %1939 = vadd.xlane.f32.xlu0 %v1938
    %v1940 = vpop.xlane.xlu0 %1939
    %v1941 = vmul.f32 %v1940, %v995
    %v1942 = vsub.f32 %v1937, %v1941
    %v1943 = vmul.f32 %v1942, %v1942
    %v1944 = vsel %vm991, %v1943, 0.0
    %1945 = vadd.xlane.f32.xlu0 %v1944
    %v1946 = vpop.xlane.xlu0 %1945
    %v1947 = vmul.f32 %v1946, %v995
    %v1948 = vadd.f32 %v1947, 1e-05
    %v1949 = vrsqrt.pop %v1948
    %v1950 = vmul.f32 %v1942, %v1949
    %v1951 = vld [vmem:[#allocation2 + $0x7c] sm:$0x1]
    %v1952 = vlaneseq
    %v1953 = vshrl.u32 %v1952, 7
    %v1954 = vsub.s32 0, %v1953
    %v1955 = vrot.slane %v1951, %v1954
    %v1956 = vmul.f32 %v1950, %v1955
    %v1957 = vld [vmem:[#allocation2 + $0x7d] sm:$0x1]
    %v1958 = vlaneseq
    %v1959 = vshrl.u32 %v1958, 7
    %v1960 = vsub.s32 0, %v1959
    %v1961 = vrot.slane %v1957, %v1960
    %v1962 = vadd.f32 %v1956, %v1961
    %v1963 = vld [vmem:[#allocation2 + $0x80] sm:$0xff]
    %v1964 = vld [vmem:[#allocation2 + $0x88] sm:$0x3]
    %v1965 = vld [vmem:[#allocation2 + $0x8a] sm:$0x1]
    %v1966 = vlaneseq
    %v1967 = vshrl.u32 %v1966, 7
    %v1968 = vsub.s32 0, %v1967
    %v1969 = vrot.slane %v1965, %v1968
    %v1971 = vsel %vm65, %v1962, 0
    %v1974 = vsel %vm72, %v1964, 0
    %1976 = vmatprep.subr.mxu0 0.0
    %1977 = vmatpush1.msra.mxu0 0.0
    %1978 = vmatprep.subr.mxu0 0.0
    %1979 = vmatpush1.msra.mxu0 0.0
    %1980 = vmatprep.subr.mxu0 0.0
    %1981 = vmatpush1.msra.mxu0 0.0
    %1982 = vmatprep.subr.mxu0 0.0
    %1983 = vmatpush1.msra.mxu0 0.0
    %1984 = vmatprep.subr.mxu0 0.0
    %1985 = vmatpush1.msra.mxu0 0.0
    %1986 = vmatprep.subr.mxu0 0.0
    %1987 = vmatpush1.msra.mxu0 0.0
    %1988 = vmatprep.subr.mxu0 0.0
    %1989 = vmatpush1.msra.mxu0 0.0
    %1990 = vmatprep.subr.mxu0 0.0
    %1991 = vmatpush1.msra.mxu0 0.0
    %1992 = vmatprep.subr.mxu0 0.0
    %1993 = vmatpush1.msra.mxu0 0.0
    %1994 = vmatprep.subr.mxu0 0.0
    %1995 = vmatpush1.msra.mxu0 0.0
    %1996 = vmatprep.subr.mxu0 0.0
    %1997 = vmatpush1.msra.mxu0 0.0
    %1998 = vmatprep.subr.mxu0 0.0
    %1999 = vmatpush1.msra.mxu0 0.0
    %2000 = vmatprep.subr.mxu0 0.0
    %2001 = vmatpush1.msra.mxu0 0.0
    %2002 = vmatprep.subr.mxu0 0.0
    %2003 = vmatpush1.msra.mxu0 0.0
    %2004 = vmatprep.subr.mxu0 0.0
    %2005 = vmatpush1.msra.mxu0 %v1974
    %2006 = vmatprep.subr.mxu0 0.0
    %2007 = vmatpush1.msra.mxu0 %v1963
    %2008 = vmatprep.subr.mxu0 0.0
    %2009 = vmatpush2.msra.mxu0 0.0
    %2010 = vmatprep.subr.mxu0 0.0
    %2011 = vmatpush2.msra.mxu0 0.0
    %2012 = vmatprep.subr.mxu0 0.0
    %2013 = vmatpush2.msra.mxu0 0.0
    %2014 = vmatprep.subr.mxu0 0.0
    %2015 = vmatpush2.msra.mxu0 0.0
    %2016 = vmatprep.subr.mxu0 0.0
    %2017 = vmatpush2.msra.mxu0 0.0
    %2018 = vmatprep.subr.mxu0 0.0
    %2019 = vmatpush2.msra.mxu0 0.0
    %2020 = vmatprep.subr.mxu0 0.0
    %2021 = vmatpush2.msra.mxu0 0.0
    %2022 = vmatprep.subr.mxu0 0.0
    %2023 = vmatpush2.msra.mxu0 0.0
    %2024 = vmatprep.subr.mxu0 0.0
    %2025 = vmatpush2.msra.mxu0 0.0
    %2026 = vmatprep.subr.mxu0 0.0
    %2027 = vmatpush2.msra.mxu0 0.0
    %2028 = vmatprep.subr.mxu0 0.0
    %2029 = vmatpush2.msra.mxu0 0.0
    %2030 = vmatprep.subr.mxu0 0.0
    %2031 = vmatpush2.msra.mxu0 0.0
    %2032 = vmatprep.subr.mxu0 0.0
    %2033 = vmatpush2.msra.mxu0 0.0
    %2034 = vmatprep.subr.mxu0 0.0
    %2035 = vmatpush2.msra.mxu0 0.0
    %2036 = vmatprep.subr.mxu0 0.0
    %2037 = vmatpush2.msra.mxu0 0.0
    %2038 = vmatprep.subr.mxu0 0.0
    %2039 = vmatpush2.msra.mxu0 0.0
    %2040 = vmatprep.mubr.f32.mxu0 0.0
    %2041 = vmatmul.mubr.f32.gmra.mxu0 %v1971
    %v2042 = vpop.f32.mrf.mxu0
    %v2043 = vadd.f32 %v1969, %v2042
    %v2044 = vpop.f32.mrf.mxu0
    %2045 = vdwg.mxu0
    %v2046 = vmax.f32 %v2043, 0.0
    %v2047 = vld [vmem:[#allocation2 + $0x8b] sm:$0xff]
    %v2048 = vld [vmem:[#allocation2 + $0x93] sm:$0xff]
    %v2049 = vld [vmem:[#allocation2 + $0x9b] sm:$0xf]
    %v2050 = vld [vmem:[#allocation2 + $0x9f] sm:$0x1]
    %v2051 = vlaneseq
    %v2052 = vshrl.u32 %v2051, 7
    %v2053 = vsub.s32 0, %v2052
    %v2054 = vrot.slane %v2050, %v2053
    %vm2055 = vcmask 162816
    %v2057 = vsel %vm2055, %v2046, 0
    %vm2059 = vcmask 1043456
    %v2061 = vsel %vm2059, %v2049, 0
    %2063 = vmatprep.subr.mxu0 0.0
    %2064 = vmatpush1.msra.mxu0 0.0
    %2065 = vmatprep.subr.mxu0 0.0
    %2066 = vmatpush1.msra.mxu0 0.0
    %2067 = vmatprep.subr.mxu0 0.0
    %2068 = vmatpush1.msra.mxu0 0.0
    %2069 = vmatprep.subr.mxu0 0.0
    %2070 = vmatpush1.msra.mxu0 0.0
    %2071 = vmatprep.subr.mxu0 0.0
    %2072 = vmatpush1.msra.mxu0 0.0
    %2073 = vmatprep.subr.mxu0 0.0
    %2074 = vmatpush1.msra.mxu0 0.0
    %2075 = vmatprep.subr.mxu0 0.0
    %2076 = vmatpush1.msra.mxu0 0.0
    %2077 = vmatprep.subr.mxu0 0.0
    %2078 = vmatpush1.msra.mxu0 0.0
    %2079 = vmatprep.subr.mxu0 0.0
    %2080 = vmatpush1.msra.mxu0 0.0
    %2081 = vmatprep.subr.mxu0 0.0
    %2082 = vmatpush1.msra.mxu0 0.0
    %2083 = vmatprep.subr.mxu0 0.0
    %2084 = vmatpush1.msra.mxu0 0.0
    %2085 = vmatprep.subr.mxu0 0.0
    %2086 = vmatpush1.msra.mxu0 0.0
    %2087 = vmatprep.subr.mxu0 0.0
    %2088 = vmatpush1.msra.mxu0 0.0
    %2089 = vmatprep.subr.mxu0 0.0
    %2090 = vmatpush1.msra.mxu0 %v2061
    %2091 = vmatprep.subr.mxu0 0.0
    %2092 = vmatpush1.msra.mxu0 %v2048
    %2093 = vmatprep.subr.mxu0 0.0
    %2094 = vmatpush1.msra.mxu0 %v2047
    %2095 = vmatprep.subr.mxu0 0.0
    %2096 = vmatpush2.msra.mxu0 0.0
    %2097 = vmatprep.subr.mxu0 0.0
    %2098 = vmatpush2.msra.mxu0 0.0
    %2099 = vmatprep.subr.mxu0 0.0
    %2100 = vmatpush2.msra.mxu0 0.0
    %2101 = vmatprep.subr.mxu0 0.0
    %2102 = vmatpush2.msra.mxu0 0.0
    %2103 = vmatprep.subr.mxu0 0.0
    %2104 = vmatpush2.msra.mxu0 0.0
    %2105 = vmatprep.subr.mxu0 0.0
    %2106 = vmatpush2.msra.mxu0 0.0
    %2107 = vmatprep.subr.mxu0 0.0
    %2108 = vmatpush2.msra.mxu0 0.0
    %2109 = vmatprep.subr.mxu0 0.0
    %2110 = vmatpush2.msra.mxu0 0.0
    %2111 = vmatprep.subr.mxu0 0.0
    %2112 = vmatpush2.msra.mxu0 0.0
    %2113 = vmatprep.subr.mxu0 0.0
    %2114 = vmatpush2.msra.mxu0 0.0
    %2115 = vmatprep.subr.mxu0 0.0
    %2116 = vmatpush2.msra.mxu0 0.0
    %2117 = vmatprep.subr.mxu0 0.0
    %2118 = vmatpush2.msra.mxu0 0.0
    %2119 = vmatprep.subr.mxu0 0.0
    %2120 = vmatpush2.msra.mxu0 0.0
    %2121 = vmatprep.subr.mxu0 0.0
    %2122 = vmatpush2.msra.mxu0 0.0
    %2123 = vmatprep.subr.mxu0 0.0
    %2124 = vmatpush2.msra.mxu0 0.0
    %2125 = vmatprep.subr.mxu0 0.0
    %2126 = vmatpush2.msra.mxu0 0.0
    %2127 = vmatprep.mubr.f32.mxu0 0.0
    %2128 = vmatmul.mubr.f32.gmra.mxu0 %v2057
    %v2129 = vpop.f32.mrf.mxu0
    %v2130 = vadd.f32 %v2054, %v2129
    %v2131 = vpop.f32.mrf.mxu0
    %2132 = vdwg.mxu0
    %v2133 = vadd.f32 %v1962, %v2130
    %v2134 = vsel %vm991, %v2133, 0.0
    %2135 = vadd.xlane.f32.xlu0 %v2134
    %v2136 = vpop.xlane.xlu0 %2135
    %v2137 = vmul.f32 %v2136, %v995
    %v2138 = vsub.f32 %v2133, %v2137
    %v2139 = vmul.f32 %v2138, %v2138
    %v2140 = vsel %vm991, %v2139, 0.0
    %2141 = vadd.xlane.f32.xlu0 %v2140
    %v2142 = vpop.xlane.xlu0 %2141
    %v2143 = vmul.f32 %v2142, %v995
    %v2144 = vadd.f32 %v2143, 1e-05
    %v2145 = vrsqrt.pop %v2144
    %v2146 = vmul.f32 %v2138, %v2145
    %v2147 = vld [vmem:[#allocation2 + $0x7e] sm:$0x1]
    %v2148 = vlaneseq
    %v2149 = vshrl.u32 %v2148, 7
    %v2150 = vsub.s32 0, %v2149
    %v2151 = vrot.slane %v2147, %v2150
    %v2152 = vmul.f32 %v2146, %v2151
    %v2153 = vld [vmem:[#allocation2 + $0x7f] sm:$0x1]
    %v2154 = vlaneseq
    %v2155 = vshrl.u32 %v2154, 7
    %v2156 = vsub.s32 0, %v2155
    %v2157 = vrot.slane %v2153, %v2156
    %v2158 = vadd.f32 %v2152, %v2157
    %v2159 = vld [vmem:[#allocation2 + $0xa0] sm:$0xff]
    %v2160 = vld [vmem:[#allocation2 + $0xa8] sm:$0x3]
    %v2161 = vld [vmem:[#allocation2 + $0xaa] sm:$0x1]
    %v2162 = vlaneseq
    %v2163 = vshrl.u32 %v2162, 7
    %v2164 = vsub.s32 0, %v2163
    %v2165 = vrot.slane %v2161, %v2164
    %v2167 = vsel %vm65, %v2158, 0
    %v2170 = vsel %vm72, %v2160, 0
    %2172 = vmatprep.subr.mxu0 0.0
    %2173 = vmatpush1.msra.mxu0 0.0
    %2174 = vmatprep.subr.mxu0 0.0
    %2175 = vmatpush1.msra.mxu0 0.0
    %2176 = vmatprep.subr.mxu0 0.0
    %2177 = vmatpush1.msra.mxu0 0.0
    %2178 = vmatprep.subr.mxu0 0.0
    %2179 = vmatpush1.msra.mxu0 0.0
    %2180 = vmatprep.subr.mxu0 0.0
    %2181 = vmatpush1.msra.mxu0 0.0
    %2182 = vmatprep.subr.mxu0 0.0
    %2183 = vmatpush1.msra.mxu0 0.0
    %2184 = vmatprep.subr.mxu0 0.0
    %2185 = vmatpush1.msra.mxu0 0.0
    %2186 = vmatprep.subr.mxu0 0.0
    %2187 = vmatpush1.msra.mxu0 0.0
    %2188 = vmatprep.subr.mxu0 0.0
    %2189 = vmatpush1.msra.mxu0 0.0
    %2190 = vmatprep.subr.mxu0 0.0
    %2191 = vmatpush1.msra.mxu0 0.0
    %2192 = vmatprep.subr.mxu0 0.0
    %2193 = vmatpush1.msra.mxu0 0.0
    %2194 = vmatprep.subr.mxu0 0.0
    %2195 = vmatpush1.msra.mxu0 0.0
    %2196 = vmatprep.subr.mxu0 0.0
    %2197 = vmatpush1.msra.mxu0 0.0
    %2198 = vmatprep.subr.mxu0 0.0
    %2199 = vmatpush1.msra.mxu0 0.0
    %2200 = vmatprep.subr.mxu0 0.0
    %2201 = vmatpush1.msra.mxu0 %v2170
    %2202 = vmatprep.subr.mxu0 0.0
    %2203 = vmatpush1.msra.mxu0 %v2159
    %2204 = vmatprep.subr.mxu0 0.0
    %2205 = vmatpush2.msra.mxu0 0.0
    %2206 = vmatprep.subr.mxu0 0.0
    %2207 = vmatpush2.msra.mxu0 0.0
    %2208 = vmatprep.subr.mxu0 0.0
    %2209 = vmatpush2.msra.mxu0 0.0
    %2210 = vmatprep.subr.mxu0 0.0
    %2211 = vmatpush2.msra.mxu0 0.0
    %2212 = vmatprep.subr.mxu0 0.0
    %2213 = vmatpush2.msra.mxu0 0.0
    %2214 = vmatprep.subr.mxu0 0.0
    %2215 = vmatpush2.msra.mxu0 0.0
    %2216 = vmatprep.subr.mxu0 0.0
    %2217 = vmatpush2.msra.mxu0 0.0
    %2218 = vmatprep.subr.mxu0 0.0
    %2219 = vmatpush2.msra.mxu0 0.0
    %2220 = vmatprep.subr.mxu0 0.0
    %2221 = vmatpush2.msra.mxu0 0.0
    %2222 = vmatprep.subr.mxu0 0.0
    %2223 = vmatpush2.msra.mxu0 0.0
    %2224 = vmatprep.subr.mxu0 0.0
    %2225 = vmatpush2.msra.mxu0 0.0
    %2226 = vmatprep.subr.mxu0 0.0
    %2227 = vmatpush2.msra.mxu0 0.0
    %2228 = vmatprep.subr.mxu0 0.0
    %2229 = vmatpush2.msra.mxu0 0.0
    %2230 = vmatprep.subr.mxu0 0.0
    %2231 = vmatpush2.msra.mxu0 0.0
    %2232 = vmatprep.subr.mxu0 0.0
    %2233 = vmatpush2.msra.mxu0 0.0
    %2234 = vmatprep.subr.mxu0 0.0
    %2235 = vmatpush2.msra.mxu0 0.0
    %2236 = vmatprep.mubr.f32.mxu0 0.0
    %2237 = vmatmul.mubr.f32.gmra.mxu0 %v2167
    %v2238 = vpop.f32.mrf.mxu0
    %v2239 = vadd.f32 %v2165, %v2238
    %v2240 = vpop.f32.mrf.mxu0
    %2241 = vdwg.mxu0
    %v2242 = vmax.f32 %v2239, 0.0
    %v2243 = vld [vmem:[#allocation2 + $0xab] sm:$0xff]
    %v2244 = vld [vmem:[#allocation2 + $0xb3] sm:$0xf]
    %v2245 = vld [vmem:[#allocation2 + $0xb7] sm:$0x1]
    %v2246 = vlaneseq
    %v2247 = vshrl.u32 %v2246, 7
    %v2248 = vsub.s32 0, %v2247
    %v2249 = vrot.slane %v2245, %v2248
    %vm2250 = vcmask 97280
    %v2252 = vsel %vm2250, %v2242, 0
    %v2255 = vsel %vm2059, %v2244, 0
    %2257 = vmatprep.subr.mxu0 0.0
    %2258 = vmatpush1.msra.mxu0 0.0
    %2259 = vmatprep.subr.mxu0 0.0
    %2260 = vmatpush1.msra.mxu0 0.0
    %2261 = vmatprep.subr.mxu0 0.0
    %2262 = vmatpush1.msra.mxu0 0.0
    %2263 = vmatprep.subr.mxu0 0.0
    %2264 = vmatpush1.msra.mxu0 0.0
    %2265 = vmatprep.subr.mxu0 0.0
    %2266 = vmatpush1.msra.mxu0 0.0
    %2267 = vmatprep.subr.mxu0 0.0
    %2268 = vmatpush1.msra.mxu0 0.0
    %2269 = vmatprep.subr.mxu0 0.0
    %2270 = vmatpush1.msra.mxu0 0.0
    %2271 = vmatprep.subr.mxu0 0.0
    %2272 = vmatpush1.msra.mxu0 0.0
    %2273 = vmatprep.subr.mxu0 0.0
    %2274 = vmatpush1.msra.mxu0 0.0
    %2275 = vmatprep.subr.mxu0 0.0
    %2276 = vmatpush1.msra.mxu0 0.0
    %2277 = vmatprep.subr.mxu0 0.0
    %2278 = vmatpush1.msra.mxu0 0.0
    %2279 = vmatprep.subr.mxu0 0.0
    %2280 = vmatpush1.msra.mxu0 0.0
    %2281 = vmatprep.subr.mxu0 0.0
    %2282 = vmatpush1.msra.mxu0 0.0
    %2283 = vmatprep.subr.mxu0 0.0
    %2284 = vmatpush1.msra.mxu0 0.0
    %2285 = vmatprep.subr.mxu0 0.0
    %2286 = vmatpush1.msra.mxu0 %v2255
    %2287 = vmatprep.subr.mxu0 0.0
    %2288 = vmatpush1.msra.mxu0 %v2243
    %2289 = vmatprep.subr.mxu0 0.0
    %2290 = vmatpush2.msra.mxu0 0.0
    %2291 = vmatprep.subr.mxu0 0.0
    %2292 = vmatpush2.msra.mxu0 0.0
    %2293 = vmatprep.subr.mxu0 0.0
    %2294 = vmatpush2.msra.mxu0 0.0
    %2295 = vmatprep.subr.mxu0 0.0
    %2296 = vmatpush2.msra.mxu0 0.0
    %2297 = vmatprep.subr.mxu0 0.0
    %2298 = vmatpush2.msra.mxu0 0.0
    %2299 = vmatprep.subr.mxu0 0.0
    %2300 = vmatpush2.msra.mxu0 0.0
    %2301 = vmatprep.subr.mxu0 0.0
    %2302 = vmatpush2.msra.mxu0 0.0
    %2303 = vmatprep.subr.mxu0 0.0
    %2304 = vmatpush2.msra.mxu0 0.0
    %2305 = vmatprep.subr.mxu0 0.0
    %2306 = vmatpush2.msra.mxu0 0.0
    %2307 = vmatprep.subr.mxu0 0.0
    %2308 = vmatpush2.msra.mxu0 0.0
    %2309 = vmatprep.subr.mxu0 0.0
    %2310 = vmatpush2.msra.mxu0 0.0
    %2311 = vmatprep.subr.mxu0 0.0
    %2312 = vmatpush2.msra.mxu0 0.0
    %2313 = vmatprep.subr.mxu0 0.0
    %2314 = vmatpush2.msra.mxu0 0.0
    %2315 = vmatprep.subr.mxu0 0.0
    %2316 = vmatpush2.msra.mxu0 0.0
    %2317 = vmatprep.subr.mxu0 0.0
    %2318 = vmatpush2.msra.mxu0 0.0
    %2319 = vmatprep.subr.mxu0 0.0
    %2320 = vmatpush2.msra.mxu0 0.0
    %2321 = vmatprep.mubr.f32.mxu0 0.0
    %2322 = vmatmul.mubr.f32.gmra.mxu0 %v2252
    %v2323 = vpop.f32.mrf.mxu0
    %v2324 = vadd.f32 %v2249, %v2323
    %v2325 = vpop.f32.mrf.mxu0
    %2326 = vdwg.mxu0
    %v2327 = vld [vmem:[#allocation2 + $0xb8] sm:$0xff]
    %v2328 = vld [vmem:[#allocation2 + $0xc0] sm:$0x3]
    %v2329 = vld [vmem:[#allocation2 + $0xc2] sm:$0x1]
    %v2330 = vlaneseq
    %v2331 = vshrl.u32 %v2330, 7
    %v2332 = vsub.s32 0, %v2331
    %v2333 = vrot.slane %v2329, %v2332
    %v2335 = vsel %vm72, %v2328, 0
    %2337 = vmatprep.subr.mxu0 0.0
    %2338 = vmatpush1.msra.mxu0 0.0
    %2339 = vmatprep.subr.mxu0 0.0
    %2340 = vmatpush1.msra.mxu0 0.0
    %2341 = vmatprep.subr.mxu0 0.0
    %2342 = vmatpush1.msra.mxu0 0.0
    %2343 = vmatprep.subr.mxu0 0.0
    %2344 = vmatpush1.msra.mxu0 0.0
    %2345 = vmatprep.subr.mxu0 0.0
    %2346 = vmatpush1.msra.mxu0 0.0
    %2347 = vmatprep.subr.mxu0 0.0
    %2348 = vmatpush1.msra.mxu0 0.0
    %2349 = vmatprep.subr.mxu0 0.0
    %2350 = vmatpush1.msra.mxu0 0.0
    %2351 = vmatprep.subr.mxu0 0.0
    %2352 = vmatpush1.msra.mxu0 0.0
    %2353 = vmatprep.subr.mxu0 0.0
    %2354 = vmatpush1.msra.mxu0 0.0
    %2355 = vmatprep.subr.mxu0 0.0
    %2356 = vmatpush1.msra.mxu0 0.0
    %2357 = vmatprep.subr.mxu0 0.0
    %2358 = vmatpush1.msra.mxu0 0.0
    %2359 = vmatprep.subr.mxu0 0.0
    %2360 = vmatpush1.msra.mxu0 0.0
    %2361 = vmatprep.subr.mxu0 0.0
    %2362 = vmatpush1.msra.mxu0 0.0
    %2363 = vmatprep.subr.mxu0 0.0
    %2364 = vmatpush1.msra.mxu0 0.0
    %2365 = vmatprep.subr.mxu0 0.0
    %2366 = vmatpush1.msra.mxu0 %v2335
    %2367 = vmatprep.subr.mxu0 0.0
    %2368 = vmatpush1.msra.mxu0 %v2327
    %2369 = vmatprep.subr.mxu0 0.0
    %2370 = vmatpush2.msra.mxu0 0.0
    %2371 = vmatprep.subr.mxu0 0.0
    %2372 = vmatpush2.msra.mxu0 0.0
    %2373 = vmatprep.subr.mxu0 0.0
    %2374 = vmatpush2.msra.mxu0 0.0
    %2375 = vmatprep.subr.mxu0 0.0
    %2376 = vmatpush2.msra.mxu0 0.0
    %2377 = vmatprep.subr.mxu0 0.0
    %2378 = vmatpush2.msra.mxu0 0.0
    %2379 = vmatprep.subr.mxu0 0.0
    %2380 = vmatpush2.msra.mxu0 0.0
    %2381 = vmatprep.subr.mxu0 0.0
    %2382 = vmatpush2.msra.mxu0 0.0
    %2383 = vmatprep.subr.mxu0 0.0
    %2384 = vmatpush2.msra.mxu0 0.0
    %2385 = vmatprep.subr.mxu0 0.0
    %2386 = vmatpush2.msra.mxu0 0.0
    %2387 = vmatprep.subr.mxu0 0.0
    %2388 = vmatpush2.msra.mxu0 0.0
    %2389 = vmatprep.subr.mxu0 0.0
    %2390 = vmatpush2.msra.mxu0 0.0
    %2391 = vmatprep.subr.mxu0 0.0
    %2392 = vmatpush2.msra.mxu0 0.0
    %2393 = vmatprep.subr.mxu0 0.0
    %2394 = vmatpush2.msra.mxu0 0.0
    %2395 = vmatprep.subr.mxu0 0.0
    %2396 = vmatpush2.msra.mxu0 0.0
    %2397 = vmatprep.subr.mxu0 0.0
    %2398 = vmatpush2.msra.mxu0 0.0
    %2399 = vmatprep.subr.mxu0 0.0
    %2400 = vmatpush2.msra.mxu0 0.0
    %2401 = vmatprep.mubr.f32.mxu0 0.0
    %2402 = vmatmul.mubr.f32.gmra.mxu0 %v2167
    %v2403 = vpop.f32.mrf.mxu0
    %v2404 = vadd.f32 %v2333, %v2403
    %v2405 = vpop.f32.mrf.mxu0
    %2406 = vdwg.mxu0
    %v2407 = vmax.f32 %v2404, 0.0
    %v2408 = vld [vmem:[#allocation2 + $0xc3] sm:$0xff]
    %v2409 = vld [vmem:[#allocation2 + $0xcb] sm:$0xf]
    %v2410 = vld [vmem:[#allocation2 + $0xcf] sm:$0x1]
    %v2411 = vlaneseq
    %v2412 = vshrl.u32 %v2411, 7
    %v2413 = vsub.s32 0, %v2412
    %v2414 = vrot.slane %v2410, %v2413
    %v2416 = vsel %vm2250, %v2407, 0
    %v2419 = vsel %vm2059, %v2409, 0
    %2421 = vmatprep.subr.mxu0 0.0
    %2422 = vmatpush1.msra.mxu0 0.0
    %2423 = vmatprep.subr.mxu0 0.0
    %2424 = vmatpush1.msra.mxu0 0.0
    %2425 = vmatprep.subr.mxu0 0.0
    %2426 = vmatpush1.msra.mxu0 0.0
    %2427 = vmatprep.subr.mxu0 0.0
    %2428 = vmatpush1.msra.mxu0 0.0
    %2429 = vmatprep.subr.mxu0 0.0
    %2430 = vmatpush1.msra.mxu0 0.0
    %2431 = vmatprep.subr.mxu0 0.0
    %2432 = vmatpush1.msra.mxu0 0.0
    %2433 = vmatprep.subr.mxu0 0.0
    %2434 = vmatpush1.msra.mxu0 0.0
    %2435 = vmatprep.subr.mxu0 0.0
    %2436 = vmatpush1.msra.mxu0 0.0
    %2437 = vmatprep.subr.mxu0 0.0
    %2438 = vmatpush1.msra.mxu0 0.0
    %2439 = vmatprep.subr.mxu0 0.0
    %2440 = vmatpush1.msra.mxu0 0.0
    %2441 = vmatprep.subr.mxu0 0.0
    %2442 = vmatpush1.msra.mxu0 0.0
    %2443 = vmatprep.subr.mxu0 0.0
    %2444 = vmatpush1.msra.mxu0 0.0
    %2445 = vmatprep.subr.mxu0 0.0
    %2446 = vmatpush1.msra.mxu0 0.0
    %2447 = vmatprep.subr.mxu0 0.0
    %2448 = vmatpush1.msra.mxu0 0.0
    %2449 = vmatprep.subr.mxu0 0.0
    %2450 = vmatpush1.msra.mxu0 %v2419
    %2451 = vmatprep.subr.mxu0 0.0
    %2452 = vmatpush1.msra.mxu0 %v2408
    %2453 = vmatprep.subr.mxu0 0.0
    %2454 = vmatpush2.msra.mxu0 0.0
    %2455 = vmatprep.subr.mxu0 0.0
    %2456 = vmatpush2.msra.mxu0 0.0
    %2457 = vmatprep.subr.mxu0 0.0
    %2458 = vmatpush2.msra.mxu0 0.0
    %2459 = vmatprep.subr.mxu0 0.0
    %2460 = vmatpush2.msra.mxu0 0.0
    %2461 = vmatprep.subr.mxu0 0.0
    %2462 = vmatpush2.msra.mxu0 0.0
    %2463 = vmatprep.subr.mxu0 0.0
    %2464 = vmatpush2.msra.mxu0 0.0
    %2465 = vmatprep.subr.mxu0 0.0
    %2466 = vmatpush2.msra.mxu0 0.0
    %2467 = vmatprep.subr.mxu0 0.0
    %2468 = vmatpush2.msra.mxu0 0.0
    %2469 = vmatprep.subr.mxu0 0.0
    %2470 = vmatpush2.msra.mxu0 0.0
    %2471 = vmatprep.subr.mxu0 0.0
    %2472 = vmatpush2.msra.mxu0 0.0
    %2473 = vmatprep.subr.mxu0 0.0
    %2474 = vmatpush2.msra.mxu0 0.0
    %2475 = vmatprep.subr.mxu0 0.0
    %2476 = vmatpush2.msra.mxu0 0.0
    %2477 = vmatprep.subr.mxu0 0.0
    %2478 = vmatpush2.msra.mxu0 0.0
    %2479 = vmatprep.subr.mxu0 0.0
    %2480 = vmatpush2.msra.mxu0 0.0
    %2481 = vmatprep.subr.mxu0 0.0
    %2482 = vmatpush2.msra.mxu0 0.0
    %2483 = vmatprep.subr.mxu0 0.0
    %2484 = vmatpush2.msra.mxu0 0.0
    %2485 = vmatprep.mubr.f32.mxu0 0.0
    %2486 = vmatmul.mubr.f32.gmra.mxu0 %v2416
    %v2487 = vpop.f32.mrf.mxu0
    %v2488 = vadd.f32 %v2414, %v2487
    %v2489 = vpop.f32.mrf.mxu0
    %2490 = vdwg.mxu0
    %v2491 = vld [vmem:[#allocation2 + $0xd0] sm:$0xff]
    %v2492 = vld [vmem:[#allocation2 + $0xd8] sm:$0x3]
    %v2493 = vld [vmem:[#allocation2 + $0xda] sm:$0x1]
    %v2494 = vlaneseq
    %v2495 = vshrl.u32 %v2494, 7
    %v2496 = vsub.s32 0, %v2495
    %v2497 = vrot.slane %v2493, %v2496
    %v2499 = vsel %vm72, %v2492, 0
    %2501 = vmatprep.subr.mxu0 0.0
    %2502 = vmatpush1.msra.mxu0 0.0
    %2503 = vmatprep.subr.mxu0 0.0
    %2504 = vmatpush1.msra.mxu0 0.0
    %2505 = vmatprep.subr.mxu0 0.0
    %2506 = vmatpush1.msra.mxu0 0.0
    %2507 = vmatprep.subr.mxu0 0.0
    %2508 = vmatpush1.msra.mxu0 0.0
    %2509 = vmatprep.subr.mxu0 0.0
    %2510 = vmatpush1.msra.mxu0 0.0
    %2511 = vmatprep.subr.mxu0 0.0
    %2512 = vmatpush1.msra.mxu0 0.0
    %2513 = vmatprep.subr.mxu0 0.0
    %2514 = vmatpush1.msra.mxu0 0.0
    %2515 = vmatprep.subr.mxu0 0.0
    %2516 = vmatpush1.msra.mxu0 0.0
    %2517 = vmatprep.subr.mxu0 0.0
    %2518 = vmatpush1.msra.mxu0 0.0
    %2519 = vmatprep.subr.mxu0 0.0
    %2520 = vmatpush1.msra.mxu0 0.0
    %2521 = vmatprep.subr.mxu0 0.0
    %2522 = vmatpush1.msra.mxu0 0.0
    %2523 = vmatprep.subr.mxu0 0.0
    %2524 = vmatpush1.msra.mxu0 0.0
    %2525 = vmatprep.subr.mxu0 0.0
    %2526 = vmatpush1.msra.mxu0 0.0
    %2527 = vmatprep.subr.mxu0 0.0
    %2528 = vmatpush1.msra.mxu0 0.0
    %2529 = vmatprep.subr.mxu0 0.0
    %2530 = vmatpush1.msra.mxu0 %v2499
    %2531 = vmatprep.subr.mxu0 0.0
    %2532 = vmatpush1.msra.mxu0 %v2491
    %2533 = vmatprep.subr.mxu0 0.0
    %2534 = vmatpush2.msra.mxu0 0.0
    %2535 = vmatprep.subr.mxu0 0.0
    %2536 = vmatpush2.msra.mxu0 0.0
    %2537 = vmatprep.subr.mxu0 0.0
    %2538 = vmatpush2.msra.mxu0 0.0
    %2539 = vmatprep.subr.mxu0 0.0
    %2540 = vmatpush2.msra.mxu0 0.0
    %2541 = vmatprep.subr.mxu0 0.0
    %2542 = vmatpush2.msra.mxu0 0.0
    %2543 = vmatprep.subr.mxu0 0.0
    %2544 = vmatpush2.msra.mxu0 0.0
    %2545 = vmatprep.subr.mxu0 0.0
    %2546 = vmatpush2.msra.mxu0 0.0
    %2547 = vmatprep.subr.mxu0 0.0
    %2548 = vmatpush2.msra.mxu0 0.0
    %2549 = vmatprep.subr.mxu0 0.0
    %2550 = vmatpush2.msra.mxu0 0.0
    %2551 = vmatprep.subr.mxu0 0.0
    %2552 = vmatpush2.msra.mxu0 0.0
    %2553 = vmatprep.subr.mxu0 0.0
    %2554 = vmatpush2.msra.mxu0 0.0
    %2555 = vmatprep.subr.mxu0 0.0
    %2556 = vmatpush2.msra.mxu0 0.0
    %2557 = vmatprep.subr.mxu0 0.0
    %2558 = vmatpush2.msra.mxu0 0.0
    %2559 = vmatprep.subr.mxu0 0.0
    %2560 = vmatpush2.msra.mxu0 0.0
    %2561 = vmatprep.subr.mxu0 0.0
    %2562 = vmatpush2.msra.mxu0 0.0
    %2563 = vmatprep.subr.mxu0 0.0
    %2564 = vmatpush2.msra.mxu0 0.0
    %2565 = vmatprep.mubr.f32.mxu0 0.0
    %2566 = vmatmul.mubr.f32.gmra.mxu0 %v2167
    %v2567 = vpop.f32.mrf.mxu0
    %v2568 = vadd.f32 %v2497, %v2567
    %v2569 = vpop.f32.mrf.mxu0
    %2570 = vdwg.mxu0
    %v2571 = vmax.f32 %v2568, 0.0
    %v2572 = vld [vmem:[#allocation2 + $0xdb] sm:$0xff]
    %v2573 = vld [vmem:[#allocation2 + $0xe3] sm:$0xf]
    %v2574 = vld [vmem:[#allocation2 + $0xe7] sm:$0x1]
    %v2575 = vlaneseq
    %v2576 = vshrl.u32 %v2575, 7
    %v2577 = vsub.s32 0, %v2576
    %v2578 = vrot.slane %v2574, %v2577
    %v2580 = vsel %vm2250, %v2571, 0
    %v2583 = vsel %vm2059, %v2573, 0
    %2585 = vmatprep.subr.mxu0 0.0
    %2586 = vmatpush1.msra.mxu0 0.0
    %2587 = vmatprep.subr.mxu0 0.0
    %2588 = vmatpush1.msra.mxu0 0.0
    %2589 = vmatprep.subr.mxu0 0.0
    %2590 = vmatpush1.msra.mxu0 0.0
    %2591 = vmatprep.subr.mxu0 0.0
    %2592 = vmatpush1.msra.mxu0 0.0
    %2593 = vmatprep.subr.mxu0 0.0
    %2594 = vmatpush1.msra.mxu0 0.0
    %2595 = vmatprep.subr.mxu0 0.0
    %2596 = vmatpush1.msra.mxu0 0.0
    %2597 = vmatprep.subr.mxu0 0.0
    %2598 = vmatpush1.msra.mxu0 0.0
    %2599 = vmatprep.subr.mxu0 0.0
    %2600 = vmatpush1.msra.mxu0 0.0
    %2601 = vmatprep.subr.mxu0 0.0
    %2602 = vmatpush1.msra.mxu0 0.0
    %2603 = vmatprep.subr.mxu0 0.0
    %2604 = vmatpush1.msra.mxu0 0.0
    %2605 = vmatprep.subr.mxu0 0.0
    %2606 = vmatpush1.msra.mxu0 0.0
    %2607 = vmatprep.subr.mxu0 0.0
    %2608 = vmatpush1.msra.mxu0 0.0
    %2609 = vmatprep.subr.mxu0 0.0
    %2610 = vmatpush1.msra.mxu0 0.0
    %2611 = vmatprep.subr.mxu0 0.0
    %2612 = vmatpush1.msra.mxu0 0.0
    %2613 = vmatprep.subr.mxu0 0.0
    %2614 = vmatpush1.msra.mxu0 %v2583
    %2615 = vmatprep.subr.mxu0 0.0
    %2616 = vmatpush1.msra.mxu0 %v2572
    %2617 = vmatprep.subr.mxu0 0.0
    %2618 = vmatpush2.msra.mxu0 0.0
    %2619 = vmatprep.subr.mxu0 0.0
    %2620 = vmatpush2.msra.mxu0 0.0
    %2621 = vmatprep.subr.mxu0 0.0
    %2622 = vmatpush2.msra.mxu0 0.0
    %2623 = vmatprep.subr.mxu0 0.0
    %2624 = vmatpush2.msra.mxu0 0.0
    %2625 = vmatprep.subr.mxu0 0.0
    %2626 = vmatpush2.msra.mxu0 0.0
    %2627 = vmatprep.subr.mxu0 0.0
    %2628 = vmatpush2.msra.mxu0 0.0
    %2629 = vmatprep.subr.mxu0 0.0
    %2630 = vmatpush2.msra.mxu0 0.0
    %2631 = vmatprep.subr.mxu0 0.0
    %2632 = vmatpush2.msra.mxu0 0.0
    %2633 = vmatprep.subr.mxu0 0.0
    %2634 = vmatpush2.msra.mxu0 0.0
    %2635 = vmatprep.subr.mxu0 0.0
    %2636 = vmatpush2.msra.mxu0 0.0
    %2637 = vmatprep.subr.mxu0 0.0
    %2638 = vmatpush2.msra.mxu0 0.0
    %2639 = vmatprep.subr.mxu0 0.0
    %2640 = vmatpush2.msra.mxu0 0.0
    %2641 = vmatprep.subr.mxu0 0.0
    %2642 = vmatpush2.msra.mxu0 0.0
    %2643 = vmatprep.subr.mxu0 0.0
    %2644 = vmatpush2.msra.mxu0 0.0
    %2645 = vmatprep.subr.mxu0 0.0
    %2646 = vmatpush2.msra.mxu0 0.0
    %2647 = vmatprep.subr.mxu0 0.0
    %2648 = vmatpush2.msra.mxu0 0.0
    %2649 = vmatprep.mubr.f32.mxu0 0.0
    %2650 = vmatmul.mubr.f32.gmra.mxu0 %v2580
    %v2651 = vpop.f32.mrf.mxu0
    %v2652 = vadd.f32 %v2578, %v2651
    %v2653 = vpop.f32.mrf.mxu0
    %2654 = vdwg.mxu0
    %v2655 = vtanh.pop %v2324
    %v2656 = vmul.f32 %v2655, 10.0
    %v2657 = vsub.f32 %v29, %v2656
    %v2658 = vsub.f32 0.0, %v2488
    %v2659 = vmul.f32 %v2658, 1.442695
    %v2660 = vpow.pop %v2659
    %v2661 = vmul.f32 %v2657, %v2660
    %v2662 = vmul.f32 %v2661, -0.5
    %v2663 = vmul.f32 %v2662, %v2661
    %v2664 = vsub.f32 %v2663, %v2488
    %v2665 = vsub.f32 %v2664, 0.9189385
    %v2666 = vadd.f32 %v2665, %v2652
    %v2667 = vld [vmem:[#allocation2 + $0x23] sm:$0xff]
    %v2668 = vld [vmem:[#allocation2 + $0x2b] sm:$0x3]
    %v2669 = vld [vmem:[#allocation2 + $0x2d] sm:$0x1]
    %v2670 = vlaneseq
    %v2671 = vshrl.u32 %v2670, 7
    %v2672 = vsub.s32 0, %v2671
    %v2673 = vrot.slane %v2669, %v2672
    %v2675 = vsel %vm72, %v2668, 0
    %2677 = vmatprep.subr.mxu0 0.0
    %2678 = vmatpush1.msra.mxu0 0.0
    %2679 = vmatprep.subr.mxu0 0.0
    %2680 = vmatpush1.msra.mxu0 0.0
    %2681 = vmatprep.subr.mxu0 0.0
    %2682 = vmatpush1.msra.mxu0 0.0
    %2683 = vmatprep.subr.mxu0 0.0
    %2684 = vmatpush1.msra.mxu0 0.0
    %2685 = vmatprep.subr.mxu0 0.0
    %2686 = vmatpush1.msra.mxu0 0.0
    %2687 = vmatprep.subr.mxu0 0.0
    %2688 = vmatpush1.msra.mxu0 0.0
    %2689 = vmatprep.subr.mxu0 0.0
    %2690 = vmatpush1.msra.mxu0 0.0
    %2691 = vmatprep.subr.mxu0 0.0
    %2692 = vmatpush1.msra.mxu0 0.0
    %2693 = vmatprep.subr.mxu0 0.0
    %2694 = vmatpush1.msra.mxu0 0.0
    %2695 = vmatprep.subr.mxu0 0.0
    %2696 = vmatpush1.msra.mxu0 0.0
    %2697 = vmatprep.subr.mxu0 0.0
    %2698 = vmatpush1.msra.mxu0 0.0
    %2699 = vmatprep.subr.mxu0 0.0
    %2700 = vmatpush1.msra.mxu0 0.0
    %2701 = vmatprep.subr.mxu0 0.0
    %2702 = vmatpush1.msra.mxu0 0.0
    %2703 = vmatprep.subr.mxu0 0.0
    %2704 = vmatpush1.msra.mxu0 0.0
    %2705 = vmatprep.subr.mxu0 0.0
    %2706 = vmatpush1.msra.mxu0 %v2675
    %2707 = vmatprep.subr.mxu0 0.0
    %2708 = vmatpush1.msra.mxu0 %v2667
    %2709 = vmatprep.subr.mxu0 0.0
    %2710 = vmatpush2.msra.mxu0 0.0
    %2711 = vmatprep.subr.mxu0 0.0
    %2712 = vmatpush2.msra.mxu0 0.0
    %2713 = vmatprep.subr.mxu0 0.0
    %2714 = vmatpush2.msra.mxu0 0.0
    %2715 = vmatprep.subr.mxu0 0.0
    %2716 = vmatpush2.msra.mxu0 0.0
    %2717 = vmatprep.subr.mxu0 0.0
    %2718 = vmatpush2.msra.mxu0 0.0
    %2719 = vmatprep.subr.mxu0 0.0
    %2720 = vmatpush2.msra.mxu0 0.0
    %2721 = vmatprep.subr.mxu0 0.0
    %2722 = vmatpush2.msra.mxu0 0.0
    %2723 = vmatprep.subr.mxu0 0.0
    %2724 = vmatpush2.msra.mxu0 0.0
    %2725 = vmatprep.subr.mxu0 0.0
    %2726 = vmatpush2.msra.mxu0 0.0
    %2727 = vmatprep.subr.mxu0 0.0
    %2728 = vmatpush2.msra.mxu0 0.0
    %2729 = vmatprep.subr.mxu0 0.0
    %2730 = vmatpush2.msra.mxu0 0.0
    %2731 = vmatprep.subr.mxu0 0.0
    %2732 = vmatpush2.msra.mxu0 0.0
    %2733 = vmatprep.subr.mxu0 0.0
    %2734 = vmatpush2.msra.mxu0 0.0
    %2735 = vmatprep.subr.mxu0 0.0
    %2736 = vmatpush2.msra.mxu0 0.0
    %2737 = vmatprep.subr.mxu0 0.0
    %2738 = vmatpush2.msra.mxu0 0.0
    %2739 = vmatprep.subr.mxu0 0.0
    %2740 = vmatpush2.msra.mxu0 0.0
    %2741 = vmatprep.mubr.f32.mxu0 0.0
    %2742 = vmatmul.mubr.f32.gmra.mxu0 %v2167
    %v2743 = vpop.f32.mrf.mxu0
    %v2744 = vadd.f32 %v2673, %v2743
    %v2745 = vpop.f32.mrf.mxu0
    %2746 = vdwg.mxu0
    %v2747 = vld [vmem:[#allocation2 + $0x2e] sm:$0xff]
    %v2748 = vld [vmem:[#allocation2 + $0x36] sm:$0x3]
    %v2749 = vld [vmem:[#allocation2 + $0x38] sm:$0x1]
    %v2750 = vlaneseq
    %v2751 = vshrl.u32 %v2750, 7
    %v2752 = vsub.s32 0, %v2751
    %v2753 = vrot.slane %v2749, %v2752
    %v2755 = vsel %vm72, %v2748, 0
    %2757 = vmatprep.subr.mxu0 0.0
    %2758 = vmatpush1.msra.mxu0 0.0
    %2759 = vmatprep.subr.mxu0 0.0
    %2760 = vmatpush1.msra.mxu0 0.0
    %2761 = vmatprep.subr.mxu0 0.0
    %2762 = vmatpush1.msra.mxu0 0.0
    %2763 = vmatprep.subr.mxu0 0.0
    %2764 = vmatpush1.msra.mxu0 0.0
    %2765 = vmatprep.subr.mxu0 0.0
    %2766 = vmatpush1.msra.mxu0 0.0
    %2767 = vmatprep.subr.mxu0 0.0
    %2768 = vmatpush1.msra.mxu0 0.0
    %2769 = vmatprep.subr.mxu0 0.0
    %2770 = vmatpush1.msra.mxu0 0.0
    %2771 = vmatprep.subr.mxu0 0.0
    %2772 = vmatpush1.msra.mxu0 0.0
    %2773 = vmatprep.subr.mxu0 0.0
    %2774 = vmatpush1.msra.mxu0 0.0
    %2775 = vmatprep.subr.mxu0 0.0
    %2776 = vmatpush1.msra.mxu0 0.0
    %2777 = vmatprep.subr.mxu0 0.0
    %2778 = vmatpush1.msra.mxu0 0.0
    %2779 = vmatprep.subr.mxu0 0.0
    %2780 = vmatpush1.msra.mxu0 0.0
    %2781 = vmatprep.subr.mxu0 0.0
    %2782 = vmatpush1.msra.mxu0 0.0
    %2783 = vmatprep.subr.mxu0 0.0
    %2784 = vmatpush1.msra.mxu0 0.0
    %2785 = vmatprep.subr.mxu0 0.0
    %2786 = vmatpush1.msra.mxu0 %v2755
    %2787 = vmatprep.subr.mxu0 0.0
    %2788 = vmatpush1.msra.mxu0 %v2747
    %2789 = vmatprep.subr.mxu0 0.0
    %2790 = vmatpush2.msra.mxu0 0.0
    %2791 = vmatprep.subr.mxu0 0.0
    %2792 = vmatpush2.msra.mxu0 0.0
    %2793 = vmatprep.subr.mxu0 0.0
    %2794 = vmatpush2.msra.mxu0 0.0
    %2795 = vmatprep.subr.mxu0 0.0
    %2796 = vmatpush2.msra.mxu0 0.0
    %2797 = vmatprep.subr.mxu0 0.0
    %2798 = vmatpush2.msra.mxu0 0.0
    %2799 = vmatprep.subr.mxu0 0.0
    %2800 = vmatpush2.msra.mxu0 0.0
    %2801 = vmatprep.subr.mxu0 0.0
    %2802 = vmatpush2.msra.mxu0 0.0
    %2803 = vmatprep.subr.mxu0 0.0
    %2804 = vmatpush2.msra.mxu0 0.0
    %2805 = vmatprep.subr.mxu0 0.0
    %2806 = vmatpush2.msra.mxu0 0.0
    %2807 = vmatprep.subr.mxu0 0.0
    %2808 = vmatpush2.msra.mxu0 0.0
    %2809 = vmatprep.subr.mxu0 0.0
    %2810 = vmatpush2.msra.mxu0 0.0
    %2811 = vmatprep.subr.mxu0 0.0
    %2812 = vmatpush2.msra.mxu0 0.0
    %2813 = vmatprep.subr.mxu0 0.0
    %2814 = vmatpush2.msra.mxu0 0.0
    %2815 = vmatprep.subr.mxu0 0.0
    %2816 = vmatpush2.msra.mxu0 0.0
    %2817 = vmatprep.subr.mxu0 0.0
    %2818 = vmatpush2.msra.mxu0 0.0
    %2819 = vmatprep.subr.mxu0 0.0
    %2820 = vmatpush2.msra.mxu0 0.0
    %2821 = vmatprep.mubr.f32.mxu0 0.0
    %2822 = vmatmul.mubr.f32.gmra.mxu0 %v2167
    %v2823 = vpop.f32.mrf.mxu0
    %v2824 = vadd.f32 %v2753, %v2823
    %v2825 = vpop.f32.mrf.mxu0
    %2826 = vdwg.mxu0
    %v2827 = vld [vmem:[#allocation2 + $0x18] sm:$0xff]
    %v2828 = vld [vmem:[#allocation2 + $0x20] sm:$0x3]
    %v2829 = vld [vmem:[#allocation2 + $0x22] sm:$0x1]
    %v2830 = vlaneseq
    %v2831 = vshrl.u32 %v2830, 7
    %v2832 = vsub.s32 0, %v2831
    %v2833 = vrot.slane %v2829, %v2832
    %v2835 = vsel %vm72, %v2828, 0
    %2837 = vmatprep.subr.mxu0 0.0
    %2838 = vmatpush1.msra.mxu0 0.0
    %2839 = vmatprep.subr.mxu0 0.0
    %2840 = vmatpush1.msra.mxu0 0.0
    %2841 = vmatprep.subr.mxu0 0.0
    %2842 = vmatpush1.msra.mxu0 0.0
    %2843 = vmatprep.subr.mxu0 0.0
    %2844 = vmatpush1.msra.mxu0 0.0
    %2845 = vmatprep.subr.mxu0 0.0
    %2846 = vmatpush1.msra.mxu0 0.0
    %2847 = vmatprep.subr.mxu0 0.0
    %2848 = vmatpush1.msra.mxu0 0.0
    %2849 = vmatprep.subr.mxu0 0.0
    %2850 = vmatpush1.msra.mxu0 0.0
    %2851 = vmatprep.subr.mxu0 0.0
    %2852 = vmatpush1.msra.mxu0 0.0
    %2853 = vmatprep.subr.mxu0 0.0
    %2854 = vmatpush1.msra.mxu0 0.0
    %2855 = vmatprep.subr.mxu0 0.0
    %2856 = vmatpush1.msra.mxu0 0.0
    %2857 = vmatprep.subr.mxu0 0.0
    %2858 = vmatpush1.msra.mxu0 0.0
    %2859 = vmatprep.subr.mxu0 0.0
    %2860 = vmatpush1.msra.mxu0 0.0
    %2861 = vmatprep.subr.mxu0 0.0
    %2862 = vmatpush1.msra.mxu0 0.0
    %2863 = vmatprep.subr.mxu0 0.0
    %2864 = vmatpush1.msra.mxu0 0.0
    %2865 = vmatprep.subr.mxu0 0.0
    %2866 = vmatpush1.msra.mxu0 %v2835
    %2867 = vmatprep.subr.mxu0 0.0
    %2868 = vmatpush1.msra.mxu0 %v2827
    %2869 = vmatprep.subr.mxu0 0.0
    %2870 = vmatpush2.msra.mxu0 0.0
    %2871 = vmatprep.subr.mxu0 0.0
    %2872 = vmatpush2.msra.mxu0 0.0
    %2873 = vmatprep.subr.mxu0 0.0
    %2874 = vmatpush2.msra.mxu0 0.0
    %2875 = vmatprep.subr.mxu0 0.0
    %2876 = vmatpush2.msra.mxu0 0.0
    %2877 = vmatprep.subr.mxu0 0.0
    %2878 = vmatpush2.msra.mxu0 0.0
    %2879 = vmatprep.subr.mxu0 0.0
    %2880 = vmatpush2.msra.mxu0 0.0
    %2881 = vmatprep.subr.mxu0 0.0
    %2882 = vmatpush2.msra.mxu0 0.0
    %2883 = vmatprep.subr.mxu0 0.0
    %2884 = vmatpush2.msra.mxu0 0.0
    %2885 = vmatprep.subr.mxu0 0.0
    %2886 = vmatpush2.msra.mxu0 0.0
    %2887 = vmatprep.subr.mxu0 0.0
    %2888 = vmatpush2.msra.mxu0 0.0
    %2889 = vmatprep.subr.mxu0 0.0
    %2890 = vmatpush2.msra.mxu0 0.0
    %2891 = vmatprep.subr.mxu0 0.0
    %2892 = vmatpush2.msra.mxu0 0.0
    %2893 = vmatprep.subr.mxu0 0.0
    %2894 = vmatpush2.msra.mxu0 0.0
    %2895 = vmatprep.subr.mxu0 0.0
    %2896 = vmatpush2.msra.mxu0 0.0
    %2897 = vmatprep.subr.mxu0 0.0
    %2898 = vmatpush2.msra.mxu0 0.0
    %2899 = vmatprep.subr.mxu0 0.0
    %2900 = vmatpush2.msra.mxu0 0.0
    %2901 = vmatprep.mubr.f32.mxu0 0.0
    %2902 = vmatmul.mubr.f32.gmra.mxu0 %v2167
    %v2903 = vpop.f32.mrf.mxu0
    %v2904 = vadd.f32 %v2833, %v2903
    %v2905 = vpop.f32.mrf.mxu0
    %2906 = vdwg.mxu0
    %v2907 = vld [vmem:[#allocation2 + $0xe8] sm:$0xff]
    %v2908 = vld [vmem:[#allocation2 + $0xf0] sm:$0x3]
    %v2909 = vld [vmem:[#allocation2 + $0xf2] sm:$0x3]
    %v2910 = vmul.f32 %v2904, %v669
    %v2912 = vsel %vm65, %v2910, 0
    %v2915 = vsel %vm72, %v2908, 0
    %2917 = vmatprep.subr.mxu0 0.0
    %2918 = vmatpush1.msra.mxu0 0.0
    %2919 = vmatprep.subr.mxu0 0.0
    %2920 = vmatpush1.msra.mxu0 0.0
    %2921 = vmatprep.subr.mxu0 0.0
    %2922 = vmatpush1.msra.mxu0 0.0
    %2923 = vmatprep.subr.mxu0 0.0
    %2924 = vmatpush1.msra.mxu0 0.0
    %2925 = vmatprep.subr.mxu0 0.0
    %2926 = vmatpush1.msra.mxu0 0.0
    %2927 = vmatprep.subr.mxu0 0.0
    %2928 = vmatpush1.msra.mxu0 0.0
    %2929 = vmatprep.subr.mxu0 0.0
    %2930 = vmatpush1.msra.mxu0 0.0
    %2931 = vmatprep.subr.mxu0 0.0
    %2932 = vmatpush1.msra.mxu0 0.0
    %2933 = vmatprep.subr.mxu0 0.0
    %2934 = vmatpush1.msra.mxu0 0.0
    %2935 = vmatprep.subr.mxu0 0.0
    %2936 = vmatpush1.msra.mxu0 0.0
    %2937 = vmatprep.subr.mxu0 0.0
    %2938 = vmatpush1.msra.mxu0 0.0
    %2939 = vmatprep.subr.mxu0 0.0
    %2940 = vmatpush1.msra.mxu0 0.0
    %2941 = vmatprep.subr.mxu0 0.0
    %2942 = vmatpush1.msra.mxu0 0.0
    %2943 = vmatprep.subr.mxu0 0.0
    %2944 = vmatpush1.msra.mxu0 0.0
    %2945 = vmatprep.subr.mxu0 0.0
    %2946 = vmatpush1.msra.mxu0 %v2915
    %2947 = vmatprep.subr.mxu0 0.0
    %2948 = vmatpush1.msra.mxu0 %v2907
    %2949 = vmatprep.subr.mxu0 0.0
    %2950 = vmatpush2.msra.mxu0 0.0
    %2951 = vmatprep.subr.mxu0 0.0
    %2952 = vmatpush2.msra.mxu0 0.0
    %2953 = vmatprep.subr.mxu0 0.0
    %2954 = vmatpush2.msra.mxu0 0.0
    %2955 = vmatprep.subr.mxu0 0.0
    %2956 = vmatpush2.msra.mxu0 0.0
    %2957 = vmatprep.subr.mxu0 0.0
    %2958 = vmatpush2.msra.mxu0 0.0
    %2959 = vmatprep.subr.mxu0 0.0
    %2960 = vmatpush2.msra.mxu0 0.0
    %2961 = vmatprep.subr.mxu0 0.0
    %2962 = vmatpush2.msra.mxu0 0.0
    %2963 = vmatprep.subr.mxu0 0.0
    %2964 = vmatpush2.msra.mxu0 0.0
    %2965 = vmatprep.subr.mxu0 0.0
    %2966 = vmatpush2.msra.mxu0 0.0
    %2967 = vmatprep.subr.mxu0 0.0
    %2968 = vmatpush2.msra.mxu0 0.0
    %2969 = vmatprep.subr.mxu0 0.0
    %2970 = vmatpush2.msra.mxu0 0.0
    %2971 = vmatprep.subr.mxu0 0.0
    %2972 = vmatpush2.msra.mxu0 0.0
    %2973 = vmatprep.subr.mxu0 0.0
    %2974 = vmatpush2.msra.mxu0 0.0
    %2975 = vmatprep.subr.mxu0 0.0
    %2976 = vmatpush2.msra.mxu0 0.0
    %2977 = vmatprep.subr.mxu0 0.0
    %2978 = vmatpush2.msra.mxu0 0.0
    %2979 = vmatprep.subr.mxu0 0.0
    %2980 = vmatpush2.msra.mxu0 0.0
    %2981 = vmatprep.mubr.f32.mxu0 0.0
    %2982 = vmatmul.mubr.f32.gmra.mxu0 %v2912
    %v2983 = vpop.f32.mrf.mxu0
    %v2984 = vadd.f32 2.0794415, %v2983
    %v2985 = vpop.f32.mrf.mxu0
    %2986 = vdwg.mxu0
    %v2987 = vmul.f32 %v2904, %v2744
    %v2989 = vsel %vm65, %v2987, 0
    %2991 = vmatprep.subr.mxu0 0.0
    %2992 = vmatpush1.msra.mxu0 0.0
    %2993 = vmatprep.subr.mxu0 0.0
    %2994 = vmatpush1.msra.mxu0 0.0
    %2995 = vmatprep.subr.mxu0 0.0
    %2996 = vmatpush1.msra.mxu0 0.0
    %2997 = vmatprep.subr.mxu0 0.0
    %2998 = vmatpush1.msra.mxu0 0.0
    %2999 = vmatprep.subr.mxu0 0.0
    %3000 = vmatpush1.msra.mxu0 0.0
    %3001 = vmatprep.subr.mxu0 0.0
    %3002 = vmatpush1.msra.mxu0 0.0
    %3003 = vmatprep.subr.mxu0 0.0
    %3004 = vmatpush1.msra.mxu0 0.0
    %3005 = vmatprep.subr.mxu0 0.0
    %3006 = vmatpush1.msra.mxu0 0.0
    %3007 = vmatprep.subr.mxu0 0.0
    %3008 = vmatpush1.msra.mxu0 0.0
    %3009 = vmatprep.subr.mxu0 0.0
    %3010 = vmatpush1.msra.mxu0 0.0
    %3011 = vmatprep.subr.mxu0 0.0
    %3012 = vmatpush1.msra.mxu0 0.0
    %3013 = vmatprep.subr.mxu0 0.0
    %3014 = vmatpush1.msra.mxu0 0.0
    %3015 = vmatprep.subr.mxu0 0.0
    %3016 = vmatpush1.msra.mxu0 0.0
    %3017 = vmatprep.subr.mxu0 0.0
    %3018 = vmatpush1.msra.mxu0 0.0
    %3019 = vmatprep.subr.mxu0 0.0
    %3020 = vmatpush1.msra.mxu0 %v2915
    %3021 = vmatprep.subr.mxu0 0.0
    %3022 = vmatpush1.msra.mxu0 %v2907
    %3023 = vmatprep.subr.mxu0 0.0
    %3024 = vmatpush2.msra.mxu0 0.0
    %3025 = vmatprep.subr.mxu0 0.0
    %3026 = vmatpush2.msra.mxu0 0.0
    %3027 = vmatprep.subr.mxu0 0.0
    %3028 = vmatpush2.msra.mxu0 0.0
    %3029 = vmatprep.subr.mxu0 0.0
    %3030 = vmatpush2.msra.mxu0 0.0
    %3031 = vmatprep.subr.mxu0 0.0
    %3032 = vmatpush2.msra.mxu0 0.0
    %3033 = vmatprep.subr.mxu0 0.0
    %3034 = vmatpush2.msra.mxu0 0.0
    %3035 = vmatprep.subr.mxu0 0.0
    %3036 = vmatpush2.msra.mxu0 0.0
    %3037 = vmatprep.subr.mxu0 0.0
    %3038 = vmatpush2.msra.mxu0 0.0
    %3039 = vmatprep.subr.mxu0 0.0
    %3040 = vmatpush2.msra.mxu0 0.0
    %3041 = vmatprep.subr.mxu0 0.0
    %3042 = vmatpush2.msra.mxu0 0.0
    %3043 = vmatprep.subr.mxu0 0.0
    %3044 = vmatpush2.msra.mxu0 0.0
    %3045 = vmatprep.subr.mxu0 0.0
    %3046 = vmatpush2.msra.mxu0 0.0
    %3047 = vmatprep.subr.mxu0 0.0
    %3048 = vmatpush2.msra.mxu0 0.0
    %3049 = vmatprep.subr.mxu0 0.0
    %3050 = vmatpush2.msra.mxu0 0.0
    %3051 = vmatprep.subr.mxu0 0.0
    %3052 = vmatpush2.msra.mxu0 0.0
    %3053 = vmatprep.subr.mxu0 0.0
    %3054 = vmatpush2.msra.mxu0 0.0
    %3055 = vmatprep.mubr.f32.mxu0 0.0
    %3056 = vmatmul.mubr.f32.gmra.mxu0 %v2989
    %v3057 = vpop.f32.mrf.mxu0
    %v3058 = vadd.f32 0.0, %v3057
    %v3059 = vpop.f32.mrf.mxu0
    %3060 = vdwg.mxu0
    %v3061 = vmax.f32 %v2984, %v3058
    %v3062 = vsub.f32 %v2984, %v3061
    %v3063 = vmul.f32 %v3062, 1.442695
    %v3064 = vpow.pop %v3063
    %v3065 = vsub.f32 %v3058, %v3061
    %v3066 = vmul.f32 %v3065, 1.442695
    %v3067 = vpow.pop %v3066
    %v3068 = vadd.f32 %v3064, %v3067
    %v3069 = vrcp.pop %v3068
    %v3071 = vsel %vm751, %v3064, 0
    %v3074 = vsel %vm72, %v2909, 0
    %3076 = vmatprep.subr.mxu0 0.0
    %3077 = vmatpush1.msra.mxu0 0.0
    %3078 = vmatprep.subr.mxu0 0.0
    %3079 = vmatpush1.msra.mxu0 0.0
    %3080 = vmatprep.subr.mxu0 0.0
    %3081 = vmatpush1.msra.mxu0 0.0
    %3082 = vmatprep.subr.mxu0 0.0
    %3083 = vmatpush1.msra.mxu0 0.0
    %3084 = vmatprep.subr.mxu0 0.0
    %3085 = vmatpush1.msra.mxu0 0.0
    %3086 = vmatprep.subr.mxu0 0.0
    %3087 = vmatpush1.msra.mxu0 0.0
    %3088 = vmatprep.subr.mxu0 0.0
    %3089 = vmatpush1.msra.mxu0 0.0
    %3090 = vmatprep.subr.mxu0 0.0
    %3091 = vmatpush1.msra.mxu0 0.0
    %3092 = vmatprep.subr.mxu0 0.0
    %3093 = vmatpush1.msra.mxu0 0.0
    %3094 = vmatprep.subr.mxu0 0.0
    %3095 = vmatpush1.msra.mxu0 0.0
    %3096 = vmatprep.subr.mxu0 0.0
    %3097 = vmatpush1.msra.mxu0 0.0
    %3098 = vmatprep.subr.mxu0 0.0
    %3099 = vmatpush1.msra.mxu0 0.0
    %3100 = vmatprep.subr.mxu0 0.0
    %3101 = vmatpush1.msra.mxu0 0.0
    %3102 = vmatprep.subr.mxu0 0.0
    %3103 = vmatpush1.msra.mxu0 0.0
    %3104 = vmatprep.subr.mxu0 0.0
    %3105 = vmatpush1.msra.mxu0 0.0
    %3106 = vmatprep.subr.mxu0 0.0
    %3107 = vmatpush1.msra.mxu0 %v3074
    %3108 = vmatprep.subr.mxu0 0.0
    %3109 = vmatpush2.msra.mxu0 0.0
    %3110 = vmatprep.subr.mxu0 0.0
    %3111 = vmatpush2.msra.mxu0 0.0
    %3112 = vmatprep.subr.mxu0 0.0
    %3113 = vmatpush2.msra.mxu0 0.0
    %3114 = vmatprep.subr.mxu0 0.0
    %3115 = vmatpush2.msra.mxu0 0.0
    %3116 = vmatprep.subr.mxu0 0.0
    %3117 = vmatpush2.msra.mxu0 0.0
    %3118 = vmatprep.subr.mxu0 0.0
    %3119 = vmatpush2.msra.mxu0 0.0
    %3120 = vmatprep.subr.mxu0 0.0
    %3121 = vmatpush2.msra.mxu0 0.0
    %3122 = vmatprep.subr.mxu0 0.0
    %3123 = vmatpush2.msra.mxu0 0.0
    %3124 = vmatprep.subr.mxu0 0.0
    %3125 = vmatpush2.msra.mxu0 0.0
    %3126 = vmatprep.subr.mxu0 0.0
    %3127 = vmatpush2.msra.mxu0 0.0
    %3128 = vmatprep.subr.mxu0 0.0
    %3129 = vmatpush2.msra.mxu0 0.0
    %3130 = vmatprep.subr.mxu0 0.0
    %3131 = vmatpush2.msra.mxu0 0.0
    %3132 = vmatprep.subr.mxu0 0.0
    %3133 = vmatpush2.msra.mxu0 0.0
    %3134 = vmatprep.subr.mxu0 0.0
    %3135 = vmatpush2.msra.mxu0 0.0
    %3136 = vmatprep.subr.mxu0 0.0
    %3137 = vmatpush2.msra.mxu0 0.0
    %3138 = vmatprep.subr.mxu0 0.0
    %3139 = vmatpush2.msra.mxu0 0.0
    %3140 = vmatprep.mubr.f32.mxu0 0.0
    %3141 = vmatmul.mubr.f32.gmra.mxu0 %v3071
    %v3142 = vpop.f32.mrf.mxu0
    %v3143 = vadd.f32 0.0, %v3142
    %v3144 = vpop.f32.mrf.mxu0
    %3145 = vdwg.mxu0
    %v3146 = vmul.f32 %v3143, %v831
    %v3148 = vsel %vm751, %v3067, 0
    %3150 = vmatprep.subr.mxu0 0.0
    %3151 = vmatpush1.msra.mxu0 0.0
    %3152 = vmatprep.subr.mxu0 0.0
    %3153 = vmatpush1.msra.mxu0 0.0
    %3154 = vmatprep.subr.mxu0 0.0
    %3155 = vmatpush1.msra.mxu0 0.0
    %3156 = vmatprep.subr.mxu0 0.0
    %3157 = vmatpush1.msra.mxu0 0.0
    %3158 = vmatprep.subr.mxu0 0.0
    %3159 = vmatpush1.msra.mxu0 0.0
    %3160 = vmatprep.subr.mxu0 0.0
    %3161 = vmatpush1.msra.mxu0 0.0
    %3162 = vmatprep.subr.mxu0 0.0
    %3163 = vmatpush1.msra.mxu0 0.0
    %3164 = vmatprep.subr.mxu0 0.0
    %3165 = vmatpush1.msra.mxu0 0.0
    %3166 = vmatprep.subr.mxu0 0.0
    %3167 = vmatpush1.msra.mxu0 0.0
    %3168 = vmatprep.subr.mxu0 0.0
    %3169 = vmatpush1.msra.mxu0 0.0
    %3170 = vmatprep.subr.mxu0 0.0
    %3171 = vmatpush1.msra.mxu0 0.0
    %3172 = vmatprep.subr.mxu0 0.0
    %3173 = vmatpush1.msra.mxu0 0.0
    %3174 = vmatprep.subr.mxu0 0.0
    %3175 = vmatpush1.msra.mxu0 0.0
    %3176 = vmatprep.subr.mxu0 0.0
    %3177 = vmatpush1.msra.mxu0 0.0
    %3178 = vmatprep.subr.mxu0 0.0
    %3179 = vmatpush1.msra.mxu0 0.0
    %3180 = vmatprep.subr.mxu0 0.0
    %3181 = vmatpush1.msra.mxu0 %v3074
    %3182 = vmatprep.subr.mxu0 0.0
    %3183 = vmatpush2.msra.mxu0 0.0
    %3184 = vmatprep.subr.mxu0 0.0
    %3185 = vmatpush2.msra.mxu0 0.0
    %3186 = vmatprep.subr.mxu0 0.0
    %3187 = vmatpush2.msra.mxu0 0.0
    %3188 = vmatprep.subr.mxu0 0.0
    %3189 = vmatpush2.msra.mxu0 0.0
    %3190 = vmatprep.subr.mxu0 0.0
    %3191 = vmatpush2.msra.mxu0 0.0
    %3192 = vmatprep.subr.mxu0 0.0
    %3193 = vmatpush2.msra.mxu0 0.0
    %3194 = vmatprep.subr.mxu0 0.0
    %3195 = vmatpush2.msra.mxu0 0.0
    %3196 = vmatprep.subr.mxu0 0.0
    %3197 = vmatpush2.msra.mxu0 0.0
    %3198 = vmatprep.subr.mxu0 0.0
    %3199 = vmatpush2.msra.mxu0 0.0
    %3200 = vmatprep.subr.mxu0 0.0
    %3201 = vmatpush2.msra.mxu0 0.0
    %3202 = vmatprep.subr.mxu0 0.0
    %3203 = vmatpush2.msra.mxu0 0.0
    %3204 = vmatprep.subr.mxu0 0.0
    %3205 = vmatpush2.msra.mxu0 0.0
    %3206 = vmatprep.subr.mxu0 0.0
    %3207 = vmatpush2.msra.mxu0 0.0
    %3208 = vmatprep.subr.mxu0 0.0
    %3209 = vmatpush2.msra.mxu0 0.0
    %3210 = vmatprep.subr.mxu0 0.0
    %3211 = vmatpush2.msra.mxu0 0.0
    %3212 = vmatprep.subr.mxu0 0.0
    %3213 = vmatpush2.msra.mxu0 0.0
    %3214 = vmatprep.mubr.f32.mxu0 0.0
    %3215 = vmatmul.mubr.f32.gmra.mxu0 %v3148
    %v3216 = vpop.f32.mrf.mxu0
    %v3217 = vadd.f32 0.0, %v3216
    %v3218 = vpop.f32.mrf.mxu0
    %3219 = vdwg.mxu0
    %v3220 = vmul.f32 %v3217, %v2824
    %v3221 = vadd.f32 %v3146, %v3220
    %v3223 = vsel %vm751, %v3069, 0
    %3225 = vmatprep.subr.mxu0 0.0
    %3226 = vmatpush1.msra.mxu0 0.0
    %3227 = vmatprep.subr.mxu0 0.0
    %3228 = vmatpush1.msra.mxu0 0.0
    %3229 = vmatprep.subr.mxu0 0.0
    %3230 = vmatpush1.msra.mxu0 0.0
    %3231 = vmatprep.subr.mxu0 0.0
    %3232 = vmatpush1.msra.mxu0 0.0
    %3233 = vmatprep.subr.mxu0 0.0
    %3234 = vmatpush1.msra.mxu0 0.0
    %3235 = vmatprep.subr.mxu0 0.0
    %3236 = vmatpush1.msra.mxu0 0.0
    %3237 = vmatprep.subr.mxu0 0.0
    %3238 = vmatpush1.msra.mxu0 0.0
    %3239 = vmatprep.subr.mxu0 0.0
    %3240 = vmatpush1.msra.mxu0 0.0
    %3241 = vmatprep.subr.mxu0 0.0
    %3242 = vmatpush1.msra.mxu0 0.0
    %3243 = vmatprep.subr.mxu0 0.0
    %3244 = vmatpush1.msra.mxu0 0.0
    %3245 = vmatprep.subr.mxu0 0.0
    %3246 = vmatpush1.msra.mxu0 0.0
    %3247 = vmatprep.subr.mxu0 0.0
    %3248 = vmatpush1.msra.mxu0 0.0
    %3249 = vmatprep.subr.mxu0 0.0
    %3250 = vmatpush1.msra.mxu0 0.0
    %3251 = vmatprep.subr.mxu0 0.0
    %3252 = vmatpush1.msra.mxu0 0.0
    %3253 = vmatprep.subr.mxu0 0.0
    %3254 = vmatpush1.msra.mxu0 0.0
    %3255 = vmatprep.subr.mxu0 0.0
    %3256 = vmatpush1.msra.mxu0 %v3074
    %3257 = vmatprep.subr.mxu0 0.0
    %3258 = vmatpush2.msra.mxu0 0.0
    %3259 = vmatprep.subr.mxu0 0.0
    %3260 = vmatpush2.msra.mxu0 0.0
    %3261 = vmatprep.subr.mxu0 0.0
    %3262 = vmatpush2.msra.mxu0 0.0
    %3263 = vmatprep.subr.mxu0 0.0
    %3264 = vmatpush2.msra.mxu0 0.0
    %3265 = vmatprep.subr.mxu0 0.0
    %3266 = vmatpush2.msra.mxu0 0.0
    %3267 = vmatprep.subr.mxu0 0.0
    %3268 = vmatpush2.msra.mxu0 0.0
    %3269 = vmatprep.subr.mxu0 0.0
    %3270 = vmatpush2.msra.mxu0 0.0
    %3271 = vmatprep.subr.mxu0 0.0
    %3272 = vmatpush2.msra.mxu0 0.0
    %3273 = vmatprep.subr.mxu0 0.0
    %3274 = vmatpush2.msra.mxu0 0.0
    %3275 = vmatprep.subr.mxu0 0.0
    %3276 = vmatpush2.msra.mxu0 0.0
    %3277 = vmatprep.subr.mxu0 0.0
    %3278 = vmatpush2.msra.mxu0 0.0
    %3279 = vmatprep.subr.mxu0 0.0
    %3280 = vmatpush2.msra.mxu0 0.0
    %3281 = vmatprep.subr.mxu0 0.0
    %3282 = vmatpush2.msra.mxu0 0.0
    %3283 = vmatprep.subr.mxu0 0.0
    %3284 = vmatpush2.msra.mxu0 0.0
    %3285 = vmatprep.subr.mxu0 0.0
    %3286 = vmatpush2.msra.mxu0 0.0
    %3287 = vmatprep.subr.mxu0 0.0
    %3288 = vmatpush2.msra.mxu0 0.0
    %3289 = vmatprep.mubr.f32.mxu0 0.0
    %3290 = vmatmul.mubr.f32.gmra.mxu0 %v3223
    %v3291 = vpop.f32.mrf.mxu0
    %v3292 = vadd.f32 0.0, %v3291
    %v3293 = vpop.f32.mrf.mxu0
    %3294 = vdwg.mxu0
    %v3295 = vmul.f32 %v3221, %v3292
    %v3296 = vld [vmem:[#allocation2 + $0x39] sm:$0xff]
    %v3297 = vld [vmem:[#allocation2 + $0x41] sm:$0x3]
    %v3298 = vld [vmem:[#allocation2 + $0x43] sm:$0x1]
    %v3299 = vlaneseq
    %v3300 = vshrl.u32 %v3299, 7
    %v3301 = vsub.s32 0, %v3300
    %v3302 = vrot.slane %v3298, %v3301
    %v3304 = vsel %vm65, %v3295, 0
    %v3307 = vsel %vm72, %v3297, 0
    %3309 = vmatprep.subr.mxu0 0.0
    %3310 = vmatpush1.msra.mxu0 0.0
    %3311 = vmatprep.subr.mxu0 0.0
    %3312 = vmatpush1.msra.mxu0 0.0
    %3313 = vmatprep.subr.mxu0 0.0
    %3314 = vmatpush1.msra.mxu0 0.0
    %3315 = vmatprep.subr.mxu0 0.0
    %3316 = vmatpush1.msra.mxu0 0.0
    %3317 = vmatprep.subr.mxu0 0.0
    %3318 = vmatpush1.msra.mxu0 0.0
    %3319 = vmatprep.subr.mxu0 0.0
    %3320 = vmatpush1.msra.mxu0 0.0
    %3321 = vmatprep.subr.mxu0 0.0
    %3322 = vmatpush1.msra.mxu0 0.0
    %3323 = vmatprep.subr.mxu0 0.0
    %3324 = vmatpush1.msra.mxu0 0.0
    %3325 = vmatprep.subr.mxu0 0.0
    %3326 = vmatpush1.msra.mxu0 0.0
    %3327 = vmatprep.subr.mxu0 0.0
    %3328 = vmatpush1.msra.mxu0 0.0
    %3329 = vmatprep.subr.mxu0 0.0
    %3330 = vmatpush1.msra.mxu0 0.0
    %3331 = vmatprep.subr.mxu0 0.0
    %3332 = vmatpush1.msra.mxu0 0.0
    %3333 = vmatprep.subr.mxu0 0.0
    %3334 = vmatpush1.msra.mxu0 0.0
    %3335 = vmatprep.subr.mxu0 0.0
    %3336 = vmatpush1.msra.mxu0 0.0
    %3337 = vmatprep.subr.mxu0 0.0
    %3338 = vmatpush1.msra.mxu0 %v3307
    %3339 = vmatprep.subr.mxu0 0.0
    %3340 = vmatpush1.msra.mxu0 %v3296
    %3341 = vmatprep.subr.mxu0 0.0
    %3342 = vmatpush2.msra.mxu0 0.0
    %3343 = vmatprep.subr.mxu0 0.0
    %3344 = vmatpush2.msra.mxu0 0.0
    %3345 = vmatprep.subr.mxu0 0.0
    %3346 = vmatpush2.msra.mxu0 0.0
    %3347 = vmatprep.subr.mxu0 0.0
    %3348 = vmatpush2.msra.mxu0 0.0
    %3349 = vmatprep.subr.mxu0 0.0
    %3350 = vmatpush2.msra.mxu0 0.0
    %3351 = vmatprep.subr.mxu0 0.0
    %3352 = vmatpush2.msra.mxu0 0.0
    %3353 = vmatprep.subr.mxu0 0.0
    %3354 = vmatpush2.msra.mxu0 0.0
    %3355 = vmatprep.subr.mxu0 0.0
    %3356 = vmatpush2.msra.mxu0 0.0
    %3357 = vmatprep.subr.mxu0 0.0
    %3358 = vmatpush2.msra.mxu0 0.0
    %3359 = vmatprep.subr.mxu0 0.0
    %3360 = vmatpush2.msra.mxu0 0.0
    %3361 = vmatprep.subr.mxu0 0.0
    %3362 = vmatpush2.msra.mxu0 0.0
    %3363 = vmatprep.subr.mxu0 0.0
    %3364 = vmatpush2.msra.mxu0 0.0
    %3365 = vmatprep.subr.mxu0 0.0
    %3366 = vmatpush2.msra.mxu0 0.0
    %3367 = vmatprep.subr.mxu0 0.0
    %3368 = vmatpush2.msra.mxu0 0.0
    %3369 = vmatprep.subr.mxu0 0.0
    %3370 = vmatpush2.msra.mxu0 0.0
    %3371 = vmatprep.subr.mxu0 0.0
    %3372 = vmatpush2.msra.mxu0 0.0
    %3373 = vmatprep.mubr.f32.mxu0 0.0
    %3374 = vmatmul.mubr.f32.gmra.mxu0 %v3304
    %v3375 = vpop.f32.mrf.mxu0
    %v3376 = vadd.f32 %v3302, %v3375
    %v3377 = vpop.f32.mrf.mxu0
    %3378 = vdwg.mxu0
    %v3379 = vadd.f32 %v2158, %v3376
    %v3380 = vsel %vm991, %v3379, 0.0
    %3381 = vadd.xlane.f32.xlu0 %v3380
    %v3382 = vpop.xlane.xlu0 %3381
    %v3383 = vmul.f32 %v3382, %v995
    %v3384 = vsub.f32 %v3379, %v3383
    %v3385 = vmul.f32 %v3384, %v3384
    %v3386 = vsel %vm991, %v3385, 0.0
    %3387 = vadd.xlane.f32.xlu0 %v3386
    %v3388 = vpop.xlane.xlu0 %3387
    %v3389 = vmul.f32 %v3388, %v995
    %v3390 = vadd.f32 %v3389, 1e-05
    %v3391 = vrsqrt.pop %v3390
    %v3392 = vmul.f32 %v3384, %v3391
    %v3393 = vld [vmem:[#allocation2 + $0x7a] sm:$0x1]
    %v3394 = vlaneseq
    %v3395 = vshrl.u32 %v3394, 7
    %v3396 = vsub.s32 0, %v3395
    %v3397 = vrot.slane %v3393, %v3396
    %v3398 = vmul.f32 %v3392, %v3397
    %v3399 = vld [vmem:[#allocation2 + $0x7b] sm:$0x1]
    %v3400 = vlaneseq
    %v3401 = vshrl.u32 %v3400, 7
    %v3402 = vsub.s32 0, %v3401
    %v3403 = vrot.slane %v3399, %v3402
    %v3404 = vadd.f32 %v3398, %v3403
    %v3405 = vld [vmem:[#allocation2 + $0x44] sm:$0xff]
    %v3406 = vld [vmem:[#allocation2 + $0x4c] sm:$0x3]
    %v3407 = vld [vmem:[#allocation2 + $0x4e] sm:$0x1]
    %v3408 = vlaneseq
    %v3409 = vshrl.u32 %v3408, 7
    %v3410 = vsub.s32 0, %v3409
    %v3411 = vrot.slane %v3407, %v3410
    %v3413 = vsel %vm65, %v3404, 0
    %v3416 = vsel %vm72, %v3406, 0
    %3418 = vmatprep.subr.mxu0 0.0
    %3419 = vmatpush1.msra.mxu0 0.0
    %3420 = vmatprep.subr.mxu0 0.0
    %3421 = vmatpush1.msra.mxu0 0.0
    %3422 = vmatprep.subr.mxu0 0.0
    %3423 = vmatpush1.msra.mxu0 0.0
    %3424 = vmatprep.subr.mxu0 0.0
    %3425 = vmatpush1.msra.mxu0 0.0
    %3426 = vmatprep.subr.mxu0 0.0
    %3427 = vmatpush1.msra.mxu0 0.0
    %3428 = vmatprep.subr.mxu0 0.0
    %3429 = vmatpush1.msra.mxu0 0.0
    %3430 = vmatprep.subr.mxu0 0.0
    %3431 = vmatpush1.msra.mxu0 0.0
    %3432 = vmatprep.subr.mxu0 0.0
    %3433 = vmatpush1.msra.mxu0 0.0
    %3434 = vmatprep.subr.mxu0 0.0
    %3435 = vmatpush1.msra.mxu0 0.0
    %3436 = vmatprep.subr.mxu0 0.0
    %3437 = vmatpush1.msra.mxu0 0.0
    %3438 = vmatprep.subr.mxu0 0.0
    %3439 = vmatpush1.msra.mxu0 0.0
    %3440 = vmatprep.subr.mxu0 0.0
    %3441 = vmatpush1.msra.mxu0 0.0
    %3442 = vmatprep.subr.mxu0 0.0
    %3443 = vmatpush1.msra.mxu0 0.0
    %3444 = vmatprep.subr.mxu0 0.0
    %3445 = vmatpush1.msra.mxu0 0.0
    %3446 = vmatprep.subr.mxu0 0.0
    %3447 = vmatpush1.msra.mxu0 %v3416
    %3448 = vmatprep.subr.mxu0 0.0
    %3449 = vmatpush1.msra.mxu0 %v3405
    %3450 = vmatprep.subr.mxu0 0.0
    %3451 = vmatpush2.msra.mxu0 0.0
    %3452 = vmatprep.subr.mxu0 0.0
    %3453 = vmatpush2.msra.mxu0 0.0
    %3454 = vmatprep.subr.mxu0 0.0
    %3455 = vmatpush2.msra.mxu0 0.0
    %3456 = vmatprep.subr.mxu0 0.0
    %3457 = vmatpush2.msra.mxu0 0.0
    %3458 = vmatprep.subr.mxu0 0.0
    %3459 = vmatpush2.msra.mxu0 0.0
    %3460 = vmatprep.subr.mxu0 0.0
    %3461 = vmatpush2.msra.mxu0 0.0
    %3462 = vmatprep.subr.mxu0 0.0
    %3463 = vmatpush2.msra.mxu0 0.0
    %3464 = vmatprep.subr.mxu0 0.0
    %3465 = vmatpush2.msra.mxu0 0.0
    %3466 = vmatprep.subr.mxu0 0.0
    %3467 = vmatpush2.msra.mxu0 0.0
    %3468 = vmatprep.subr.mxu0 0.0
    %3469 = vmatpush2.msra.mxu0 0.0
    %3470 = vmatprep.subr.mxu0 0.0
    %3471 = vmatpush2.msra.mxu0 0.0
    %3472 = vmatprep.subr.mxu0 0.0
    %3473 = vmatpush2.msra.mxu0 0.0
    %3474 = vmatprep.subr.mxu0 0.0
    %3475 = vmatpush2.msra.mxu0 0.0
    %3476 = vmatprep.subr.mxu0 0.0
    %3477 = vmatpush2.msra.mxu0 0.0
    %3478 = vmatprep.subr.mxu0 0.0
    %3479 = vmatpush2.msra.mxu0 0.0
    %3480 = vmatprep.subr.mxu0 0.0
    %3481 = vmatpush2.msra.mxu0 0.0
    %3482 = vmatprep.mubr.f32.mxu0 0.0
    %3483 = vmatmul.mubr.f32.gmra.mxu0 %v3413
    %v3484 = vpop.f32.mrf.mxu0
    %v3485 = vadd.f32 %v3411, %v3484
    %v3486 = vpop.f32.mrf.mxu0
    %3487 = vdwg.mxu0
    %v3490 = vunpack.c.l.s4 1966171168
    %v3491 = vunpack.c.0.s8 %v3490
    %v3492 = vlaneseq
    %v3493 = vshrl.u32 %v3492, 7
    %v3494 = vsub.s32 %v3491, %v3493
    %v3495 = vrot.slane %v3485, %v3494
    %v3496 = vcombine.high %v3495, %v3495
    %v3498 = vunpack.c.l.s4 1966171168
    %v3499 = vunpack.c.0.s8 %v3498
    %v3500 = vlaneseq
    %v3501 = vshrl.u32 %v3500, 7
    %v3502 = vsub.s32 %v3499, %v3501
    %v3503 = vrot.slane %v3495, %v3502
    %v3505 = vunpack.c.l.s4 1966171168
    %v3506 = vunpack.c.0.s8 %v3505
    %v3507 = vlaneseq
    %v3508 = vshrl.u32 %v3507, 7
    %v3509 = vsub.s32 %v3506, %v3508
    %v3510 = vrot.slane %v3496, %v3509
    %v3513 = vld [vmem:[#allocation2 + $0xf4] sm:$0x1]
    %v3514 = vmul.f32 %v3503, %v3513
    %v3515 = vmul.f32 %v3510, %v3513
    %v3517 = vsel %vm65, %v3514, 0
    %3519 = vmatprep.subr.mxu0 0.0
    %3520 = vmatpush1.xpose.msra.mxu0 0.0
    %3521 = vmatprep.subr.mxu0 0.0
    %3522 = vmatpush1.xpose.msra.mxu0 0.0
    %3523 = vmatprep.subr.mxu0 0.0
    %3524 = vmatpush1.xpose.msra.mxu0 0.0
    %3525 = vmatprep.subr.mxu0 0.0
    %3526 = vmatpush1.xpose.msra.mxu0 0.0
    %3527 = vmatprep.subr.mxu0 0.0
    %3528 = vmatpush1.xpose.msra.mxu0 0.0
    %3529 = vmatprep.subr.mxu0 0.0
    %3530 = vmatpush1.xpose.msra.mxu0 0.0
    %3531 = vmatprep.subr.mxu0 0.0
    %3532 = vmatpush1.xpose.msra.mxu0 0.0
    %3533 = vmatprep.subr.mxu0 0.0
    %3534 = vmatpush1.xpose.msra.mxu0 0.0
    %3535 = vmatprep.subr.mxu0 0.0
    %3536 = vmatpush1.xpose.msra.mxu0 0.0
    %3537 = vmatprep.subr.mxu0 0.0
    %3538 = vmatpush1.xpose.msra.mxu0 0.0
    %3539 = vmatprep.subr.mxu0 0.0
    %3540 = vmatpush1.xpose.msra.mxu0 0.0
    %3541 = vmatprep.subr.mxu0 0.0
    %3542 = vmatpush1.xpose.msra.mxu0 0.0
    %3543 = vmatprep.subr.mxu0 0.0
    %3544 = vmatpush1.xpose.msra.mxu0 0.0
    %3545 = vmatprep.subr.mxu0 0.0
    %3546 = vmatpush1.xpose.msra.mxu0 0.0
    %3547 = vmatprep.subr.mxu0 0.0
    %3548 = vmatpush1.xpose.msra.mxu0 0.0
    %3549 = vmatprep.subr.mxu0 0.0
    %3550 = vmatpush1.xpose.msra.mxu0 %v1133
    %3551 = vmatprep.subr.mxu0 0.0
    %3552 = vmatpush2.xpose.msra.mxu0 0.0
    %3553 = vmatprep.subr.mxu0 0.0
    %3554 = vmatpush2.xpose.msra.mxu0 0.0
    %3555 = vmatprep.subr.mxu0 0.0
    %3556 = vmatpush2.xpose.msra.mxu0 0.0
    %3557 = vmatprep.subr.mxu0 0.0
    %3558 = vmatpush2.xpose.msra.mxu0 0.0
    %3559 = vmatprep.subr.mxu0 0.0
    %3560 = vmatpush2.xpose.msra.mxu0 0.0
    %3561 = vmatprep.subr.mxu0 0.0
    %3562 = vmatpush2.xpose.msra.mxu0 0.0
    %3563 = vmatprep.subr.mxu0 0.0
    %3564 = vmatpush2.xpose.msra.mxu0 0.0
    %3565 = vmatprep.subr.mxu0 0.0
    %3566 = vmatpush2.xpose.msra.mxu0 0.0
    %3567 = vmatprep.subr.mxu0 0.0
    %3568 = vmatpush2.xpose.msra.mxu0 0.0
    %3569 = vmatprep.subr.mxu0 0.0
    %3570 = vmatpush2.xpose.msra.mxu0 0.0
    %3571 = vmatprep.subr.mxu0 0.0
    %3572 = vmatpush2.xpose.msra.mxu0 0.0
    %3573 = vmatprep.subr.mxu0 0.0
    %3574 = vmatpush2.xpose.msra.mxu0 0.0
    %3575 = vmatprep.subr.mxu0 0.0
    %3576 = vmatpush2.xpose.msra.mxu0 0.0
    %3577 = vmatprep.subr.mxu0 0.0
    %3578 = vmatpush2.xpose.msra.mxu0 0.0
    %3579 = vmatprep.subr.mxu0 0.0
    %3580 = vmatpush2.xpose.msra.mxu0 0.0
    %3581 = vmatprep.subr.mxu0 0.0
    %3582 = vmatpush2.xpose.msra.mxu0 0.0
    %3583 = vmatprep.mubr.f32.mxu0 0.0
    %3584 = vmatmul.mubr.f32.gmra.mxu0 %v3517
    %v3585 = vpop.f32.mrf.mxu0
    %v3586 = vadd.f32 0.0, %v3585
    %v3587 = vpop.f32.mrf.mxu0
    %3588 = vdwg.mxu0
    %v3590 = vsel %vm65, %v3515, 0
    %3592 = vmatprep.subr.mxu0 0.0
    %3593 = vmatpush1.xpose.msra.mxu0 0.0
    %3594 = vmatprep.subr.mxu0 0.0
    %3595 = vmatpush1.xpose.msra.mxu0 0.0
    %3596 = vmatprep.subr.mxu0 0.0
    %3597 = vmatpush1.xpose.msra.mxu0 0.0
    %3598 = vmatprep.subr.mxu0 0.0
    %3599 = vmatpush1.xpose.msra.mxu0 0.0
    %3600 = vmatprep.subr.mxu0 0.0
    %3601 = vmatpush1.xpose.msra.mxu0 0.0
    %3602 = vmatprep.subr.mxu0 0.0
    %3603 = vmatpush1.xpose.msra.mxu0 0.0
    %3604 = vmatprep.subr.mxu0 0.0
    %3605 = vmatpush1.xpose.msra.mxu0 0.0
    %3606 = vmatprep.subr.mxu0 0.0
    %3607 = vmatpush1.xpose.msra.mxu0 0.0
    %3608 = vmatprep.subr.mxu0 0.0
    %3609 = vmatpush1.xpose.msra.mxu0 0.0
    %3610 = vmatprep.subr.mxu0 0.0
    %3611 = vmatpush1.xpose.msra.mxu0 0.0
    %3612 = vmatprep.subr.mxu0 0.0
    %3613 = vmatpush1.xpose.msra.mxu0 0.0
    %3614 = vmatprep.subr.mxu0 0.0
    %3615 = vmatpush1.xpose.msra.mxu0 0.0
    %3616 = vmatprep.subr.mxu0 0.0
    %3617 = vmatpush1.xpose.msra.mxu0 0.0
    %3618 = vmatprep.subr.mxu0 0.0
    %3619 = vmatpush1.xpose.msra.mxu0 0.0
    %3620 = vmatprep.subr.mxu0 0.0
    %3621 = vmatpush1.xpose.msra.mxu0 0.0
    %3622 = vmatprep.subr.mxu0 0.0
    %3623 = vmatpush1.xpose.msra.mxu0 %v1209
    %3624 = vmatprep.subr.mxu0 0.0
    %3625 = vmatpush2.xpose.msra.mxu0 0.0
    %3626 = vmatprep.subr.mxu0 0.0
    %3627 = vmatpush2.xpose.msra.mxu0 0.0
    %3628 = vmatprep.subr.mxu0 0.0
    %3629 = vmatpush2.xpose.msra.mxu0 0.0
    %3630 = vmatprep.subr.mxu0 0.0
    %3631 = vmatpush2.xpose.msra.mxu0 0.0
    %3632 = vmatprep.subr.mxu0 0.0
    %3633 = vmatpush2.xpose.msra.mxu0 0.0
    %3634 = vmatprep.subr.mxu0 0.0
    %3635 = vmatpush2.xpose.msra.mxu0 0.0
    %3636 = vmatprep.subr.mxu0 0.0
    %3637 = vmatpush2.xpose.msra.mxu0 0.0
    %3638 = vmatprep.subr.mxu0 0.0
    %3639 = vmatpush2.xpose.msra.mxu0 0.0
    %3640 = vmatprep.subr.mxu0 0.0
    %3641 = vmatpush2.xpose.msra.mxu0 0.0
    %3642 = vmatprep.subr.mxu0 0.0
    %3643 = vmatpush2.xpose.msra.mxu0 0.0
    %3644 = vmatprep.subr.mxu0 0.0
    %3645 = vmatpush2.xpose.msra.mxu0 0.0
    %3646 = vmatprep.subr.mxu0 0.0
    %3647 = vmatpush2.xpose.msra.mxu0 0.0
    %3648 = vmatprep.subr.mxu0 0.0
    %3649 = vmatpush2.xpose.msra.mxu0 0.0
    %3650 = vmatprep.subr.mxu0 0.0
    %3651 = vmatpush2.xpose.msra.mxu0 0.0
    %3652 = vmatprep.subr.mxu0 0.0
    %3653 = vmatpush2.xpose.msra.mxu0 0.0
    %3654 = vmatprep.subr.mxu0 0.0
    %3655 = vmatpush2.xpose.msra.mxu0 0.0
    %3656 = vmatprep.mubr.f32.mxu0 0.0
    %3657 = vmatmul.mubr.f32.gmra.mxu0 %v3590
    %v3658 = vpop.f32.mrf.mxu0
    %v3659 = vadd.f32 0.0, %v3658
    %v3660 = vpop.f32.mrf.mxu0
    %3661 = vdwg.mxu0
    %v3662 = vsel %vm1281, %v3586, -inf
    %3663 = vmax.xlane.f32.xlu0 %v3662
    %v3664 = vpop.xlane.xlu0 %3663
    %v3665 = vsel %vm1281, %v3659, -inf
    %3666 = vmax.xlane.f32.xlu0 %v3665
    %v3667 = vpop.xlane.xlu0 %3666
    %v3668 = vsub.f32 %v3586, %v3664
    %v3669 = vsub.f32 %v3659, %v3667
    %v3670 = vmul.f32 %v3668, 1.442695
    %v3671 = vpow.pop %v3670
    %v3672 = vmul.f32 %v3669, 1.442695
    %v3673 = vpow.pop %v3672
    %v3674 = vsel %vm1281, %v3671, 0.0
    %3675 = vadd.xlane.f32.xlu0 %v3674
    %v3676 = vpop.xlane.xlu0 %3675
    %v3677 = vsel %vm1281, %v3673, 0.0
    %3678 = vadd.xlane.f32.xlu0 %v3677
    %v3679 = vpop.xlane.xlu0 %3678
    %v3680 = vrcp.pop %v3676
    %v3681 = vrcp.pop %v3679
    %v3682 = vmul.f32 %v3671, %v3680
    %v3683 = vmul.f32 %v3673, %v3681
    %v3685 = vsel %vm1304, %v3682, 0
    %3687 = vmatprep.subr.mxu0 0.0
    %3688 = vmatpush1.msra.mxu0 0.0
    %3689 = vmatprep.subr.mxu0 0.0
    %3690 = vmatpush1.msra.mxu0 0.0
    %3691 = vmatprep.subr.mxu0 0.0
    %3692 = vmatpush1.msra.mxu0 0.0
    %3693 = vmatprep.subr.mxu0 0.0
    %3694 = vmatpush1.msra.mxu0 0.0
    %3695 = vmatprep.subr.mxu0 0.0
    %3696 = vmatpush1.msra.mxu0 0.0
    %3697 = vmatprep.subr.mxu0 0.0
    %3698 = vmatpush1.msra.mxu0 0.0
    %3699 = vmatprep.subr.mxu0 0.0
    %3700 = vmatpush1.msra.mxu0 0.0
    %3701 = vmatprep.subr.mxu0 0.0
    %3702 = vmatpush1.msra.mxu0 0.0
    %3703 = vmatprep.subr.mxu0 0.0
    %3704 = vmatpush1.msra.mxu0 0.0
    %3705 = vmatprep.subr.mxu0 0.0
    %3706 = vmatpush1.msra.mxu0 0.0
    %3707 = vmatprep.subr.mxu0 0.0
    %3708 = vmatpush1.msra.mxu0 0.0
    %3709 = vmatprep.subr.mxu0 0.0
    %3710 = vmatpush1.msra.mxu0 0.0
    %3711 = vmatprep.subr.mxu0 0.0
    %3712 = vmatpush1.msra.mxu0 0.0
    %3713 = vmatprep.subr.mxu0 0.0
    %3714 = vmatpush1.msra.mxu0 0.0
    %3715 = vmatprep.subr.mxu0 0.0
    %3716 = vmatpush1.msra.mxu0 0.0
    %3717 = vmatprep.subr.mxu0 0.0
    %3718 = vmatpush1.msra.mxu0 %v412
    %3719 = vmatprep.subr.mxu0 0.0
    %3720 = vmatpush2.msra.mxu0 0.0
    %3721 = vmatprep.subr.mxu0 0.0
    %3722 = vmatpush2.msra.mxu0 0.0
    %3723 = vmatprep.subr.mxu0 0.0
    %3724 = vmatpush2.msra.mxu0 0.0
    %3725 = vmatprep.subr.mxu0 0.0
    %3726 = vmatpush2.msra.mxu0 0.0
    %3727 = vmatprep.subr.mxu0 0.0
    %3728 = vmatpush2.msra.mxu0 0.0
    %3729 = vmatprep.subr.mxu0 0.0
    %3730 = vmatpush2.msra.mxu0 0.0
    %3731 = vmatprep.subr.mxu0 0.0
    %3732 = vmatpush2.msra.mxu0 0.0
    %3733 = vmatprep.subr.mxu0 0.0
    %3734 = vmatpush2.msra.mxu0 0.0
    %3735 = vmatprep.subr.mxu0 0.0
    %3736 = vmatpush2.msra.mxu0 0.0
    %3737 = vmatprep.subr.mxu0 0.0
    %3738 = vmatpush2.msra.mxu0 0.0
    %3739 = vmatprep.subr.mxu0 0.0
    %3740 = vmatpush2.msra.mxu0 0.0
    %3741 = vmatprep.subr.mxu0 0.0
    %3742 = vmatpush2.msra.mxu0 0.0
    %3743 = vmatprep.subr.mxu0 0.0
    %3744 = vmatpush2.msra.mxu0 0.0
    %3745 = vmatprep.subr.mxu0 0.0
    %3746 = vmatpush2.msra.mxu0 0.0
    %3747 = vmatprep.subr.mxu0 0.0
    %3748 = vmatpush2.msra.mxu0 0.0
    %3749 = vmatprep.subr.mxu0 0.0
    %3750 = vmatpush2.msra.mxu0 0.0
    %3751 = vmatprep.mubr.f32.mxu0 0.0
    %3752 = vmatmul.mubr.f32.gmra.mxu0 %v3685
    %v3753 = vpop.f32.mrf.mxu0
    %v3754 = vadd.f32 0.0, %v3753
    %v3755 = vpop.f32.mrf.mxu0
    %3756 = vdwg.mxu0
    %v3758 = vsel %vm1304, %v3683, 0
    %3760 = vmatprep.subr.mxu0 0.0
    %3761 = vmatpush1.msra.mxu0 0.0
    %3762 = vmatprep.subr.mxu0 0.0
    %3763 = vmatpush1.msra.mxu0 0.0
    %3764 = vmatprep.subr.mxu0 0.0
    %3765 = vmatpush1.msra.mxu0 0.0
    %3766 = vmatprep.subr.mxu0 0.0
    %3767 = vmatpush1.msra.mxu0 0.0
    %3768 = vmatprep.subr.mxu0 0.0
    %3769 = vmatpush1.msra.mxu0 0.0
    %3770 = vmatprep.subr.mxu0 0.0
    %3771 = vmatpush1.msra.mxu0 0.0
    %3772 = vmatprep.subr.mxu0 0.0
    %3773 = vmatpush1.msra.mxu0 0.0
    %3774 = vmatprep.subr.mxu0 0.0
    %3775 = vmatpush1.msra.mxu0 0.0
    %3776 = vmatprep.subr.mxu0 0.0
    %3777 = vmatpush1.msra.mxu0 0.0
    %3778 = vmatprep.subr.mxu0 0.0
    %3779 = vmatpush1.msra.mxu0 0.0
    %3780 = vmatprep.subr.mxu0 0.0
    %3781 = vmatpush1.msra.mxu0 0.0
    %3782 = vmatprep.subr.mxu0 0.0
    %3783 = vmatpush1.msra.mxu0 0.0
    %3784 = vmatprep.subr.mxu0 0.0
    %3785 = vmatpush1.msra.mxu0 0.0
    %3786 = vmatprep.subr.mxu0 0.0
    %3787 = vmatpush1.msra.mxu0 0.0
    %3788 = vmatprep.subr.mxu0 0.0
    %3789 = vmatpush1.msra.mxu0 0.0
    %3790 = vmatprep.subr.mxu0 0.0
    %3791 = vmatpush1.msra.mxu0 %v417
    %3792 = vmatprep.subr.mxu0 0.0
    %3793 = vmatpush2.msra.mxu0 0.0
    %3794 = vmatprep.subr.mxu0 0.0
    %3795 = vmatpush2.msra.mxu0 0.0
    %3796 = vmatprep.subr.mxu0 0.0
    %3797 = vmatpush2.msra.mxu0 0.0
    %3798 = vmatprep.subr.mxu0 0.0
    %3799 = vmatpush2.msra.mxu0 0.0
    %3800 = vmatprep.subr.mxu0 0.0
    %3801 = vmatpush2.msra.mxu0 0.0
    %3802 = vmatprep.subr.mxu0 0.0
    %3803 = vmatpush2.msra.mxu0 0.0
    %3804 = vmatprep.subr.mxu0 0.0
    %3805 = vmatpush2.msra.mxu0 0.0
    %3806 = vmatprep.subr.mxu0 0.0
    %3807 = vmatpush2.msra.mxu0 0.0
    %3808 = vmatprep.subr.mxu0 0.0
    %3809 = vmatpush2.msra.mxu0 0.0
    %3810 = vmatprep.subr.mxu0 0.0
    %3811 = vmatpush2.msra.mxu0 0.0
    %3812 = vmatprep.subr.mxu0 0.0
    %3813 = vmatpush2.msra.mxu0 0.0
    %3814 = vmatprep.subr.mxu0 0.0
    %3815 = vmatpush2.msra.mxu0 0.0
    %3816 = vmatprep.subr.mxu0 0.0
    %3817 = vmatpush2.msra.mxu0 0.0
    %3818 = vmatprep.subr.mxu0 0.0
    %3819 = vmatpush2.msra.mxu0 0.0
    %3820 = vmatprep.subr.mxu0 0.0
    %3821 = vmatpush2.msra.mxu0 0.0
    %3822 = vmatprep.subr.mxu0 0.0
    %3823 = vmatpush2.msra.mxu0 0.0
    %3824 = vmatprep.mubr.f32.mxu0 0.0
    %3825 = vmatmul.mubr.f32.gmra.mxu0 %v3758
    %v3826 = vpop.f32.mrf.mxu0
    %v3827 = vadd.f32 0.0, %v3826
    %v3828 = vpop.f32.mrf.mxu0
    %3829 = vdwg.mxu0
    %v3830 = vld [vmem:[#allocation2 + $0x65] sm:$0xff]
    %v3831 = vld [vmem:[#allocation2 + $0x6d] sm:$0x3]
    %v3832 = vld [vmem:[#allocation2 + $0xf5] sm:$0x1]
    %v3833 = vmul.f32 %v3503, %v3832
    %v3834 = vmul.f32 %v3510, %v3832
    %v3836 = vsel %vm65, %v3833, 0
    %3838 = vmatprep.subr.mxu0 0.0
    %3839 = vmatpush1.xpose.msra.mxu0 0.0
    %3840 = vmatprep.subr.mxu0 0.0
    %3841 = vmatpush1.xpose.msra.mxu0 0.0
    %3842 = vmatprep.subr.mxu0 0.0
    %3843 = vmatpush1.xpose.msra.mxu0 0.0
    %3844 = vmatprep.subr.mxu0 0.0
    %3845 = vmatpush1.xpose.msra.mxu0 0.0
    %3846 = vmatprep.subr.mxu0 0.0
    %3847 = vmatpush1.xpose.msra.mxu0 0.0
    %3848 = vmatprep.subr.mxu0 0.0
    %3849 = vmatpush1.xpose.msra.mxu0 0.0
    %3850 = vmatprep.subr.mxu0 0.0
    %3851 = vmatpush1.xpose.msra.mxu0 0.0
    %3852 = vmatprep.subr.mxu0 0.0
    %3853 = vmatpush1.xpose.msra.mxu0 0.0
    %3854 = vmatprep.subr.mxu0 0.0
    %3855 = vmatpush1.xpose.msra.mxu0 0.0
    %3856 = vmatprep.subr.mxu0 0.0
    %3857 = vmatpush1.xpose.msra.mxu0 0.0
    %3858 = vmatprep.subr.mxu0 0.0
    %3859 = vmatpush1.xpose.msra.mxu0 0.0
    %3860 = vmatprep.subr.mxu0 0.0
    %3861 = vmatpush1.xpose.msra.mxu0 0.0
    %3862 = vmatprep.subr.mxu0 0.0
    %3863 = vmatpush1.xpose.msra.mxu0 0.0
    %3864 = vmatprep.subr.mxu0 0.0
    %3865 = vmatpush1.xpose.msra.mxu0 0.0
    %3866 = vmatprep.subr.mxu0 0.0
    %3867 = vmatpush1.xpose.msra.mxu0 0.0
    %3868 = vmatprep.subr.mxu0 0.0
    %3869 = vmatpush1.xpose.msra.mxu0 %v1133
    %3870 = vmatprep.subr.mxu0 0.0
    %3871 = vmatpush2.xpose.msra.mxu0 0.0
    %3872 = vmatprep.subr.mxu0 0.0
    %3873 = vmatpush2.xpose.msra.mxu0 0.0
    %3874 = vmatprep.subr.mxu0 0.0
    %3875 = vmatpush2.xpose.msra.mxu0 0.0
    %3876 = vmatprep.subr.mxu0 0.0
    %3877 = vmatpush2.xpose.msra.mxu0 0.0
    %3878 = vmatprep.subr.mxu0 0.0
    %3879 = vmatpush2.xpose.msra.mxu0 0.0
    %3880 = vmatprep.subr.mxu0 0.0
    %3881 = vmatpush2.xpose.msra.mxu0 0.0
    %3882 = vmatprep.subr.mxu0 0.0
    %3883 = vmatpush2.xpose.msra.mxu0 0.0
    %3884 = vmatprep.subr.mxu0 0.0
    %3885 = vmatpush2.xpose.msra.mxu0 0.0
    %3886 = vmatprep.subr.mxu0 0.0
    %3887 = vmatpush2.xpose.msra.mxu0 0.0
    %3888 = vmatprep.subr.mxu0 0.0
    %3889 = vmatpush2.xpose.msra.mxu0 0.0
    %3890 = vmatprep.subr.mxu0 0.0
    %3891 = vmatpush2.xpose.msra.mxu0 0.0
    %3892 = vmatprep.subr.mxu0 0.0
    %3893 = vmatpush2.xpose.msra.mxu0 0.0
    %3894 = vmatprep.subr.mxu0 0.0
    %3895 = vmatpush2.xpose.msra.mxu0 0.0
    %3896 = vmatprep.subr.mxu0 0.0
    %3897 = vmatpush2.xpose.msra.mxu0 0.0
    %3898 = vmatprep.subr.mxu0 0.0
    %3899 = vmatpush2.xpose.msra.mxu0 0.0
    %3900 = vmatprep.subr.mxu0 0.0
    %3901 = vmatpush2.xpose.msra.mxu0 0.0
    %3902 = vmatprep.mubr.f32.mxu0 0.0
    %3903 = vmatmul.mubr.f32.gmra.mxu0 %v3836
    %v3904 = vpop.f32.mrf.mxu0
    %v3905 = vadd.f32 0.0, %v3904
    %v3906 = vpop.f32.mrf.mxu0
    %3907 = vdwg.mxu0
    %v3909 = vsel %vm65, %v3834, 0
    %3911 = vmatprep.subr.mxu0 0.0
    %3912 = vmatpush1.xpose.msra.mxu0 0.0
    %3913 = vmatprep.subr.mxu0 0.0
    %3914 = vmatpush1.xpose.msra.mxu0 0.0
    %3915 = vmatprep.subr.mxu0 0.0
    %3916 = vmatpush1.xpose.msra.mxu0 0.0
    %3917 = vmatprep.subr.mxu0 0.0
    %3918 = vmatpush1.xpose.msra.mxu0 0.0
    %3919 = vmatprep.subr.mxu0 0.0
    %3920 = vmatpush1.xpose.msra.mxu0 0.0
    %3921 = vmatprep.subr.mxu0 0.0
    %3922 = vmatpush1.xpose.msra.mxu0 0.0
    %3923 = vmatprep.subr.mxu0 0.0
    %3924 = vmatpush1.xpose.msra.mxu0 0.0
    %3925 = vmatprep.subr.mxu0 0.0
    %3926 = vmatpush1.xpose.msra.mxu0 0.0
    %3927 = vmatprep.subr.mxu0 0.0
    %3928 = vmatpush1.xpose.msra.mxu0 0.0
    %3929 = vmatprep.subr.mxu0 0.0
    %3930 = vmatpush1.xpose.msra.mxu0 0.0
    %3931 = vmatprep.subr.mxu0 0.0
    %3932 = vmatpush1.xpose.msra.mxu0 0.0
    %3933 = vmatprep.subr.mxu0 0.0
    %3934 = vmatpush1.xpose.msra.mxu0 0.0
    %3935 = vmatprep.subr.mxu0 0.0
    %3936 = vmatpush1.xpose.msra.mxu0 0.0
    %3937 = vmatprep.subr.mxu0 0.0
    %3938 = vmatpush1.xpose.msra.mxu0 0.0
    %3939 = vmatprep.subr.mxu0 0.0
    %3940 = vmatpush1.xpose.msra.mxu0 0.0
    %3941 = vmatprep.subr.mxu0 0.0
    %3942 = vmatpush1.xpose.msra.mxu0 %v1209
    %3943 = vmatprep.subr.mxu0 0.0
    %3944 = vmatpush2.xpose.msra.mxu0 0.0
    %3945 = vmatprep.subr.mxu0 0.0
    %3946 = vmatpush2.xpose.msra.mxu0 0.0
    %3947 = vmatprep.subr.mxu0 0.0
    %3948 = vmatpush2.xpose.msra.mxu0 0.0
    %3949 = vmatprep.subr.mxu0 0.0
    %3950 = vmatpush2.xpose.msra.mxu0 0.0
    %3951 = vmatprep.subr.mxu0 0.0
    %3952 = vmatpush2.xpose.msra.mxu0 0.0
    %3953 = vmatprep.subr.mxu0 0.0
    %3954 = vmatpush2.xpose.msra.mxu0 0.0
    %3955 = vmatprep.subr.mxu0 0.0
    %3956 = vmatpush2.xpose.msra.mxu0 0.0
    %3957 = vmatprep.subr.mxu0 0.0
    %3958 = vmatpush2.xpose.msra.mxu0 0.0
    %3959 = vmatprep.subr.mxu0 0.0
    %3960 = vmatpush2.xpose.msra.mxu0 0.0
    %3961 = vmatprep.subr.mxu0 0.0
    %3962 = vmatpush2.xpose.msra.mxu0 0.0
    %3963 = vmatprep.subr.mxu0 0.0
    %3964 = vmatpush2.xpose.msra.mxu0 0.0
    %3965 = vmatprep.subr.mxu0 0.0
    %3966 = vmatpush2.xpose.msra.mxu0 0.0
    %3967 = vmatprep.subr.mxu0 0.0
    %3968 = vmatpush2.xpose.msra.mxu0 0.0
    %3969 = vmatprep.subr.mxu0 0.0
    %3970 = vmatpush2.xpose.msra.mxu0 0.0
    %3971 = vmatprep.subr.mxu0 0.0
    %3972 = vmatpush2.xpose.msra.mxu0 0.0
    %3973 = vmatprep.subr.mxu0 0.0
    %3974 = vmatpush2.xpose.msra.mxu0 0.0
    %3975 = vmatprep.mubr.f32.mxu0 0.0
    %3976 = vmatmul.mubr.f32.gmra.mxu0 %v3909
    %v3977 = vpop.f32.mrf.mxu0
    %v3978 = vadd.f32 0.0, %v3977
    %v3979 = vpop.f32.mrf.mxu0
    %3980 = vdwg.mxu0
    %v3981 = vsel %vm1281, %v3905, -inf
    %3982 = vmax.xlane.f32.xlu0 %v3981
    %v3983 = vpop.xlane.xlu0 %3982
    %v3984 = vsel %vm1281, %v3978, -inf
    %3985 = vmax.xlane.f32.xlu0 %v3984
    %v3986 = vpop.xlane.xlu0 %3985
    %v3987 = vsub.f32 %v3905, %v3983
    %v3988 = vsub.f32 %v3978, %v3986
    %v3989 = vmul.f32 %v3987, 1.442695
    %v3990 = vpow.pop %v3989
    %v3991 = vmul.f32 %v3988, 1.442695
    %v3992 = vpow.pop %v3991
    %v3993 = vsel %vm1281, %v3990, 0.0
    %3994 = vadd.xlane.f32.xlu0 %v3993
    %v3995 = vpop.xlane.xlu0 %3994
    %v3996 = vsel %vm1281, %v3992, 0.0
    %3997 = vadd.xlane.f32.xlu0 %v3996
    %v3998 = vpop.xlane.xlu0 %3997
    %v3999 = vrcp.pop %v3995
    %v4000 = vrcp.pop %v3998
    %v4001 = vmul.f32 %v3990, %v3999
    %v4002 = vmul.f32 %v3992, %v4000
    %v4004 = vsel %vm1304, %v4001, 0
    %4006 = vmatprep.subr.mxu0 0.0
    %4007 = vmatpush1.msra.mxu0 0.0
    %4008 = vmatprep.subr.mxu0 0.0
    %4009 = vmatpush1.msra.mxu0 0.0
    %4010 = vmatprep.subr.mxu0 0.0
    %4011 = vmatpush1.msra.mxu0 0.0
    %4012 = vmatprep.subr.mxu0 0.0
    %4013 = vmatpush1.msra.mxu0 0.0
    %4014 = vmatprep.subr.mxu0 0.0
    %4015 = vmatpush1.msra.mxu0 0.0
    %4016 = vmatprep.subr.mxu0 0.0
    %4017 = vmatpush1.msra.mxu0 0.0
    %4018 = vmatprep.subr.mxu0 0.0
    %4019 = vmatpush1.msra.mxu0 0.0
    %4020 = vmatprep.subr.mxu0 0.0
    %4021 = vmatpush1.msra.mxu0 0.0
    %4022 = vmatprep.subr.mxu0 0.0
    %4023 = vmatpush1.msra.mxu0 0.0
    %4024 = vmatprep.subr.mxu0 0.0
    %4025 = vmatpush1.msra.mxu0 0.0
    %4026 = vmatprep.subr.mxu0 0.0
    %4027 = vmatpush1.msra.mxu0 0.0
    %4028 = vmatprep.subr.mxu0 0.0
    %4029 = vmatpush1.msra.mxu0 0.0
    %4030 = vmatprep.subr.mxu0 0.0
    %4031 = vmatpush1.msra.mxu0 0.0
    %4032 = vmatprep.subr.mxu0 0.0
    %4033 = vmatpush1.msra.mxu0 0.0
    %4034 = vmatprep.subr.mxu0 0.0
    %4035 = vmatpush1.msra.mxu0 0.0
    %4036 = vmatprep.subr.mxu0 0.0
    %4037 = vmatpush1.msra.mxu0 %v412
    %4038 = vmatprep.subr.mxu0 0.0
    %4039 = vmatpush2.msra.mxu0 0.0
    %4040 = vmatprep.subr.mxu0 0.0
    %4041 = vmatpush2.msra.mxu0 0.0
    %4042 = vmatprep.subr.mxu0 0.0
    %4043 = vmatpush2.msra.mxu0 0.0
    %4044 = vmatprep.subr.mxu0 0.0
    %4045 = vmatpush2.msra.mxu0 0.0
    %4046 = vmatprep.subr.mxu0 0.0
    %4047 = vmatpush2.msra.mxu0 0.0
    %4048 = vmatprep.subr.mxu0 0.0
    %4049 = vmatpush2.msra.mxu0 0.0
    %4050 = vmatprep.subr.mxu0 0.0
    %4051 = vmatpush2.msra.mxu0 0.0
    %4052 = vmatprep.subr.mxu0 0.0
    %4053 = vmatpush2.msra.mxu0 0.0
    %4054 = vmatprep.subr.mxu0 0.0
    %4055 = vmatpush2.msra.mxu0 0.0
    %4056 = vmatprep.subr.mxu0 0.0
    %4057 = vmatpush2.msra.mxu0 0.0
    %4058 = vmatprep.subr.mxu0 0.0
    %4059 = vmatpush2.msra.mxu0 0.0
    %4060 = vmatprep.subr.mxu0 0.0
    %4061 = vmatpush2.msra.mxu0 0.0
    %4062 = vmatprep.subr.mxu0 0.0
    %4063 = vmatpush2.msra.mxu0 0.0
    %4064 = vmatprep.subr.mxu0 0.0
    %4065 = vmatpush2.msra.mxu0 0.0
    %4066 = vmatprep.subr.mxu0 0.0
    %4067 = vmatpush2.msra.mxu0 0.0
    %4068 = vmatprep.subr.mxu0 0.0
    %4069 = vmatpush2.msra.mxu0 0.0
    %4070 = vmatprep.mubr.f32.mxu0 0.0
    %4071 = vmatmul.mubr.f32.gmra.mxu0 %v4004
    %v4072 = vpop.f32.mrf.mxu0
    %v4073 = vadd.f32 0.0, %v4072
    %v4074 = vpop.f32.mrf.mxu0
    %4075 = vdwg.mxu0
    %v4077 = vsel %vm1304, %v4002, 0
    %4079 = vmatprep.subr.mxu0 0.0
    %4080 = vmatpush1.msra.mxu0 0.0
    %4081 = vmatprep.subr.mxu0 0.0
    %4082 = vmatpush1.msra.mxu0 0.0
    %4083 = vmatprep.subr.mxu0 0.0
    %4084 = vmatpush1.msra.mxu0 0.0
    %4085 = vmatprep.subr.mxu0 0.0
    %4086 = vmatpush1.msra.mxu0 0.0
    %4087 = vmatprep.subr.mxu0 0.0
    %4088 = vmatpush1.msra.mxu0 0.0
    %4089 = vmatprep.subr.mxu0 0.0
    %4090 = vmatpush1.msra.mxu0 0.0
    %4091 = vmatprep.subr.mxu0 0.0
    %4092 = vmatpush1.msra.mxu0 0.0
    %4093 = vmatprep.subr.mxu0 0.0
    %4094 = vmatpush1.msra.mxu0 0.0
    %4095 = vmatprep.subr.mxu0 0.0
    %4096 = vmatpush1.msra.mxu0 0.0
    %4097 = vmatprep.subr.mxu0 0.0
    %4098 = vmatpush1.msra.mxu0 0.0
    %4099 = vmatprep.subr.mxu0 0.0
    %4100 = vmatpush1.msra.mxu0 0.0
    %4101 = vmatprep.subr.mxu0 0.0
    %4102 = vmatpush1.msra.mxu0 0.0
    %4103 = vmatprep.subr.mxu0 0.0
    %4104 = vmatpush1.msra.mxu0 0.0
    %4105 = vmatprep.subr.mxu0 0.0
    %4106 = vmatpush1.msra.mxu0 0.0
    %4107 = vmatprep.subr.mxu0 0.0
    %4108 = vmatpush1.msra.mxu0 0.0
    %4109 = vmatprep.subr.mxu0 0.0
    %4110 = vmatpush1.msra.mxu0 %v417
    %4111 = vmatprep.subr.mxu0 0.0
    %4112 = vmatpush2.msra.mxu0 0.0
    %4113 = vmatprep.subr.mxu0 0.0
    %4114 = vmatpush2.msra.mxu0 0.0
    %4115 = vmatprep.subr.mxu0 0.0
    %4116 = vmatpush2.msra.mxu0 0.0
    %4117 = vmatprep.subr.mxu0 0.0
    %4118 = vmatpush2.msra.mxu0 0.0
    %4119 = vmatprep.subr.mxu0 0.0
    %4120 = vmatpush2.msra.mxu0 0.0
    %4121 = vmatprep.subr.mxu0 0.0
    %4122 = vmatpush2.msra.mxu0 0.0
    %4123 = vmatprep.subr.mxu0 0.0
    %4124 = vmatpush2.msra.mxu0 0.0
    %4125 = vmatprep.subr.mxu0 0.0
    %4126 = vmatpush2.msra.mxu0 0.0
    %4127 = vmatprep.subr.mxu0 0.0
    %4128 = vmatpush2.msra.mxu0 0.0
    %4129 = vmatprep.subr.mxu0 0.0
    %4130 = vmatpush2.msra.mxu0 0.0
    %4131 = vmatprep.subr.mxu0 0.0
    %4132 = vmatpush2.msra.mxu0 0.0
    %4133 = vmatprep.subr.mxu0 0.0
    %4134 = vmatpush2.msra.mxu0 0.0
    %4135 = vmatprep.subr.mxu0 0.0
    %4136 = vmatpush2.msra.mxu0 0.0
    %4137 = vmatprep.subr.mxu0 0.0
    %4138 = vmatpush2.msra.mxu0 0.0
    %4139 = vmatprep.subr.mxu0 0.0
    %4140 = vmatpush2.msra.mxu0 0.0
    %4141 = vmatprep.subr.mxu0 0.0
    %4142 = vmatpush2.msra.mxu0 0.0
    %4143 = vmatprep.mubr.f32.mxu0 0.0
    %4144 = vmatmul.mubr.f32.gmra.mxu0 %v4077
    %v4145 = vpop.f32.mrf.mxu0
    %v4146 = vadd.f32 0.0, %v4145
    %v4147 = vpop.f32.mrf.mxu0
    %4148 = vdwg.mxu0
    %v4149 = vld [vmem:[#allocation2 + $0x6f] sm:$0xff]
    %v4150 = vld [vmem:[#allocation2 + $0x77] sm:$0x3]
    %v4153 = vrot.slane %v4146, 7
    %v4154 = vsel %vm1775, %v4153, %v4073
    %v4155 = vsel %vm65, %v4154, 0
    %v4158 = vsel %vm72, %v4150, 0
    %4160 = vmatprep.subr.mxu0 0.0
    %4161 = vmatpush1.msra.mxu0 0.0
    %4162 = vmatprep.subr.mxu0 0.0
    %4163 = vmatpush1.msra.mxu0 0.0
    %4164 = vmatprep.subr.mxu0 0.0
    %4165 = vmatpush1.msra.mxu0 0.0
    %4166 = vmatprep.subr.mxu0 0.0
    %4167 = vmatpush1.msra.mxu0 0.0
    %4168 = vmatprep.subr.mxu0 0.0
    %4169 = vmatpush1.msra.mxu0 0.0
    %4170 = vmatprep.subr.mxu0 0.0
    %4171 = vmatpush1.msra.mxu0 0.0
    %4172 = vmatprep.subr.mxu0 0.0
    %4173 = vmatpush1.msra.mxu0 0.0
    %4174 = vmatprep.subr.mxu0 0.0
    %4175 = vmatpush1.msra.mxu0 0.0
    %4176 = vmatprep.subr.mxu0 0.0
    %4177 = vmatpush1.msra.mxu0 0.0
    %4178 = vmatprep.subr.mxu0 0.0
    %4179 = vmatpush1.msra.mxu0 0.0
    %4180 = vmatprep.subr.mxu0 0.0
    %4181 = vmatpush1.msra.mxu0 0.0
    %4182 = vmatprep.subr.mxu0 0.0
    %4183 = vmatpush1.msra.mxu0 0.0
    %4184 = vmatprep.subr.mxu0 0.0
    %4185 = vmatpush1.msra.mxu0 0.0
    %4186 = vmatprep.subr.mxu0 0.0
    %4187 = vmatpush1.msra.mxu0 0.0
    %4188 = vmatprep.subr.mxu0 0.0
    %4189 = vmatpush1.msra.mxu0 %v4158
    %4190 = vmatprep.subr.mxu0 0.0
    %4191 = vmatpush1.msra.mxu0 %v4149
    %4192 = vmatprep.subr.mxu0 0.0
    %4193 = vmatpush2.msra.mxu0 0.0
    %4194 = vmatprep.subr.mxu0 0.0
    %4195 = vmatpush2.msra.mxu0 0.0
    %4196 = vmatprep.subr.mxu0 0.0
    %4197 = vmatpush2.msra.mxu0 0.0
    %4198 = vmatprep.subr.mxu0 0.0
    %4199 = vmatpush2.msra.mxu0 0.0
    %4200 = vmatprep.subr.mxu0 0.0
    %4201 = vmatpush2.msra.mxu0 0.0
    %4202 = vmatprep.subr.mxu0 0.0
    %4203 = vmatpush2.msra.mxu0 0.0
    %4204 = vmatprep.subr.mxu0 0.0
    %4205 = vmatpush2.msra.mxu0 0.0
    %4206 = vmatprep.subr.mxu0 0.0
    %4207 = vmatpush2.msra.mxu0 0.0
    %4208 = vmatprep.subr.mxu0 0.0
    %4209 = vmatpush2.msra.mxu0 0.0
    %4210 = vmatprep.subr.mxu0 0.0
    %4211 = vmatpush2.msra.mxu0 0.0
    %4212 = vmatprep.subr.mxu0 0.0
    %4213 = vmatpush2.msra.mxu0 0.0
    %4214 = vmatprep.subr.mxu0 0.0
    %4215 = vmatpush2.msra.mxu0 0.0
    %4216 = vmatprep.subr.mxu0 0.0
    %4217 = vmatpush2.msra.mxu0 0.0
    %4218 = vmatprep.subr.mxu0 0.0
    %4219 = vmatpush2.msra.mxu0 0.0
    %4220 = vmatprep.subr.mxu0 0.0
    %4221 = vmatpush2.msra.mxu0 0.0
    %4222 = vmatprep.subr.mxu0 0.0
    %4223 = vmatpush2.msra.mxu0 0.0
    %4224 = vmatprep.mubr.f32.mxu0 0.0
    %4225 = vmatmul.mubr.f32.gmra.mxu0 %v4155
    %v4226 = vpop.f32.mrf.mxu0
    %v4227 = vadd.f32 0.0, %v4226
    %v4228 = vpop.f32.mrf.mxu0
    %4229 = vdwg.mxu0
    %v4232 = vrot.slane %v3827, 7
    %v4233 = vsel %vm1775, %v4232, %v3754
    %v4234 = vsel %vm65, %v4233, 0
    %v4237 = vsel %vm72, %v3831, 0
    %4239 = vmatprep.subr.mxu0 0.0
    %4240 = vmatpush1.msra.mxu0 0.0
    %4241 = vmatprep.subr.mxu0 0.0
    %4242 = vmatpush1.msra.mxu0 0.0
    %4243 = vmatprep.subr.mxu0 0.0
    %4244 = vmatpush1.msra.mxu0 0.0
    %4245 = vmatprep.subr.mxu0 0.0
    %4246 = vmatpush1.msra.mxu0 0.0
    %4247 = vmatprep.subr.mxu0 0.0
    %4248 = vmatpush1.msra.mxu0 0.0
    %4249 = vmatprep.subr.mxu0 0.0
    %4250 = vmatpush1.msra.mxu0 0.0
    %4251 = vmatprep.subr.mxu0 0.0
    %4252 = vmatpush1.msra.mxu0 0.0
    %4253 = vmatprep.subr.mxu0 0.0
    %4254 = vmatpush1.msra.mxu0 0.0
    %4255 = vmatprep.subr.mxu0 0.0
    %4256 = vmatpush1.msra.mxu0 0.0
    %4257 = vmatprep.subr.mxu0 0.0
    %4258 = vmatpush1.msra.mxu0 0.0
    %4259 = vmatprep.subr.mxu0 0.0
    %4260 = vmatpush1.msra.mxu0 0.0
    %4261 = vmatprep.subr.mxu0 0.0
    %4262 = vmatpush1.msra.mxu0 0.0
    %4263 = vmatprep.subr.mxu0 0.0
    %4264 = vmatpush1.msra.mxu0 0.0
    %4265 = vmatprep.subr.mxu0 0.0
    %4266 = vmatpush1.msra.mxu0 0.0
    %4267 = vmatprep.subr.mxu0 0.0
    %4268 = vmatpush1.msra.mxu0 %v4237
    %4269 = vmatprep.subr.mxu0 0.0
    %4270 = vmatpush1.msra.mxu0 %v3830
    %4271 = vmatprep.subr.mxu0 0.0
    %4272 = vmatpush2.msra.mxu0 0.0
    %4273 = vmatprep.subr.mxu0 0.0
    %4274 = vmatpush2.msra.mxu0 0.0
    %4275 = vmatprep.subr.mxu0 0.0
    %4276 = vmatpush2.msra.mxu0 0.0
    %4277 = vmatprep.subr.mxu0 0.0
    %4278 = vmatpush2.msra.mxu0 0.0
    %4279 = vmatprep.subr.mxu0 0.0
    %4280 = vmatpush2.msra.mxu0 0.0
    %4281 = vmatprep.subr.mxu0 0.0
    %4282 = vmatpush2.msra.mxu0 0.0
    %4283 = vmatprep.subr.mxu0 0.0
    %4284 = vmatpush2.msra.mxu0 0.0
    %4285 = vmatprep.subr.mxu0 0.0
    %4286 = vmatpush2.msra.mxu0 0.0
    %4287 = vmatprep.subr.mxu0 0.0
    %4288 = vmatpush2.msra.mxu0 0.0
    %4289 = vmatprep.subr.mxu0 0.0
    %4290 = vmatpush2.msra.mxu0 0.0
    %4291 = vmatprep.subr.mxu0 0.0
    %4292 = vmatpush2.msra.mxu0 0.0
    %4293 = vmatprep.subr.mxu0 0.0
    %4294 = vmatpush2.msra.mxu0 0.0
    %4295 = vmatprep.subr.mxu0 0.0
    %4296 = vmatpush2.msra.mxu0 0.0
    %4297 = vmatprep.subr.mxu0 0.0
    %4298 = vmatpush2.msra.mxu0 0.0
    %4299 = vmatprep.subr.mxu0 0.0
    %4300 = vmatpush2.msra.mxu0 0.0
    %4301 = vmatprep.subr.mxu0 0.0
    %4302 = vmatpush2.msra.mxu0 0.0
    %4303 = vmatprep.mubr.f32.mxu0 0.0
    %4304 = vmatmul.mubr.f32.gmra.mxu0 %v4234
    %v4305 = vpop.f32.mrf.mxu0
    %v4306 = vadd.f32 %v4227, %v4305
    %v4307 = vpop.f32.mrf.mxu0
    %4308 = vdwg.mxu0
    %v4309 = vld [vmem:[#allocation2 + $0x79] sm:$0x1]
    %v4310 = vlaneseq
    %v4311 = vshrl.u32 %v4310, 7
    %v4312 = vsub.s32 0, %v4311
    %v4313 = vrot.slane %v4309, %v4312
    %v4314 = vadd.f32 %v4306, %v4313
    %v4315 = vadd.f32 %v3404, %v4314
    %v4316 = vsel %vm991, %v4315, 0.0
    %4317 = vadd.xlane.f32.xlu0 %v4316
    %v4318 = vpop.xlane.xlu0 %4317
    %v4319 = vmul.f32 %v4318, %v995
    %v4320 = vsub.f32 %v4315, %v4319
    %v4321 = vmul.f32 %v4320, %v4320
    %v4322 = vsel %vm991, %v4321, 0.0
    %4323 = vadd.xlane.f32.xlu0 %v4322
    %v4324 = vpop.xlane.xlu0 %4323
    %v4325 = vmul.f32 %v4324, %v995
    %v4326 = vadd.f32 %v4325, 1e-05
    %v4327 = vrsqrt.pop %v4326
    %v4328 = vmul.f32 %v4320, %v4327
    %v4329 = vld [vmem:[#allocation2 + $0x7c] sm:$0x1]
    %v4330 = vlaneseq
    %v4331 = vshrl.u32 %v4330, 7
    %v4332 = vsub.s32 0, %v4331
    %v4333 = vrot.slane %v4329, %v4332
    %v4334 = vmul.f32 %v4328, %v4333
    %v4335 = vld [vmem:[#allocation2 + $0x7d] sm:$0x1]
    %v4336 = vlaneseq
    %v4337 = vshrl.u32 %v4336, 7
    %v4338 = vsub.s32 0, %v4337
    %v4339 = vrot.slane %v4335, %v4338
    %v4340 = vadd.f32 %v4334, %v4339
    %v4341 = vld [vmem:[#allocation2 + $0x80] sm:$0xff]
    %v4342 = vld [vmem:[#allocation2 + $0x88] sm:$0x3]
    %v4343 = vld [vmem:[#allocation2 + $0x8a] sm:$0x1]
    %v4344 = vlaneseq
    %v4345 = vshrl.u32 %v4344, 7
    %v4346 = vsub.s32 0, %v4345
    %v4347 = vrot.slane %v4343, %v4346
    %v4349 = vsel %vm65, %v4340, 0
    %v4352 = vsel %vm72, %v4342, 0
    %4354 = vmatprep.subr.mxu0 0.0
    %4355 = vmatpush1.msra.mxu0 0.0
    %4356 = vmatprep.subr.mxu0 0.0
    %4357 = vmatpush1.msra.mxu0 0.0
    %4358 = vmatprep.subr.mxu0 0.0
    %4359 = vmatpush1.msra.mxu0 0.0
    %4360 = vmatprep.subr.mxu0 0.0
    %4361 = vmatpush1.msra.mxu0 0.0
    %4362 = vmatprep.subr.mxu0 0.0
    %4363 = vmatpush1.msra.mxu0 0.0
    %4364 = vmatprep.subr.mxu0 0.0
    %4365 = vmatpush1.msra.mxu0 0.0
    %4366 = vmatprep.subr.mxu0 0.0
    %4367 = vmatpush1.msra.mxu0 0.0
    %4368 = vmatprep.subr.mxu0 0.0
    %4369 = vmatpush1.msra.mxu0 0.0
    %4370 = vmatprep.subr.mxu0 0.0
    %4371 = vmatpush1.msra.mxu0 0.0
    %4372 = vmatprep.subr.mxu0 0.0
    %4373 = vmatpush1.msra.mxu0 0.0
    %4374 = vmatprep.subr.mxu0 0.0
    %4375 = vmatpush1.msra.mxu0 0.0
    %4376 = vmatprep.subr.mxu0 0.0
    %4377 = vmatpush1.msra.mxu0 0.0
    %4378 = vmatprep.subr.mxu0 0.0
    %4379 = vmatpush1.msra.mxu0 0.0
    %4380 = vmatprep.subr.mxu0 0.0
    %4381 = vmatpush1.msra.mxu0 0.0
    %4382 = vmatprep.subr.mxu0 0.0
    %4383 = vmatpush1.msra.mxu0 %v4352
    %4384 = vmatprep.subr.mxu0 0.0
    %4385 = vmatpush1.msra.mxu0 %v4341
    %4386 = vmatprep.subr.mxu0 0.0
    %4387 = vmatpush2.msra.mxu0 0.0
    %4388 = vmatprep.subr.mxu0 0.0
    %4389 = vmatpush2.msra.mxu0 0.0
    %4390 = vmatprep.subr.mxu0 0.0
    %4391 = vmatpush2.msra.mxu0 0.0
    %4392 = vmatprep.subr.mxu0 0.0
    %4393 = vmatpush2.msra.mxu0 0.0
    %4394 = vmatprep.subr.mxu0 0.0
    %4395 = vmatpush2.msra.mxu0 0.0
    %4396 = vmatprep.subr.mxu0 0.0
    %4397 = vmatpush2.msra.mxu0 0.0
    %4398 = vmatprep.subr.mxu0 0.0
    %4399 = vmatpush2.msra.mxu0 0.0
    %4400 = vmatprep.subr.mxu0 0.0
    %4401 = vmatpush2.msra.mxu0 0.0
    %4402 = vmatprep.subr.mxu0 0.0
    %4403 = vmatpush2.msra.mxu0 0.0
    %4404 = vmatprep.subr.mxu0 0.0
    %4405 = vmatpush2.msra.mxu0 0.0
    %4406 = vmatprep.subr.mxu0 0.0
    %4407 = vmatpush2.msra.mxu0 0.0
    %4408 = vmatprep.subr.mxu0 0.0
    %4409 = vmatpush2.msra.mxu0 0.0
    %4410 = vmatprep.subr.mxu0 0.0
    %4411 = vmatpush2.msra.mxu0 0.0
    %4412 = vmatprep.subr.mxu0 0.0
    %4413 = vmatpush2.msra.mxu0 0.0
    %4414 = vmatprep.subr.mxu0 0.0
    %4415 = vmatpush2.msra.mxu0 0.0
    %4416 = vmatprep.subr.mxu0 0.0
    %4417 = vmatpush2.msra.mxu0 0.0
    %4418 = vmatprep.mubr.f32.mxu0 0.0
    %4419 = vmatmul.mubr.f32.gmra.mxu0 %v4349
    %v4420 = vpop.f32.mrf.mxu0
    %v4421 = vadd.f32 %v4347, %v4420
    %v4422 = vpop.f32.mrf.mxu0
    %4423 = vdwg.mxu0
    %v4424 = vmax.f32 %v4421, 0.0
    %v4425 = vld [vmem:[#allocation2 + $0x8b] sm:$0xff]
    %v4426 = vld [vmem:[#allocation2 + $0x93] sm:$0xff]
    %v4427 = vld [vmem:[#allocation2 + $0x9b] sm:$0xf]
    %v4428 = vld [vmem:[#allocation2 + $0x9f] sm:$0x1]
    %v4429 = vlaneseq
    %v4430 = vshrl.u32 %v4429, 7
    %v4431 = vsub.s32 0, %v4430
    %v4432 = vrot.slane %v4428, %v4431
    %v4434 = vsel %vm2055, %v4424, 0
    %v4437 = vsel %vm2059, %v4427, 0
    %4439 = vmatprep.subr.mxu0 0.0
    %4440 = vmatpush1.msra.mxu0 0.0
    %4441 = vmatprep.subr.mxu0 0.0
    %4442 = vmatpush1.msra.mxu0 0.0
    %4443 = vmatprep.subr.mxu0 0.0
    %4444 = vmatpush1.msra.mxu0 0.0
    %4445 = vmatprep.subr.mxu0 0.0
    %4446 = vmatpush1.msra.mxu0 0.0
    %4447 = vmatprep.subr.mxu0 0.0
    %4448 = vmatpush1.msra.mxu0 0.0
    %4449 = vmatprep.subr.mxu0 0.0
    %4450 = vmatpush1.msra.mxu0 0.0
    %4451 = vmatprep.subr.mxu0 0.0
    %4452 = vmatpush1.msra.mxu0 0.0
    %4453 = vmatprep.subr.mxu0 0.0
    %4454 = vmatpush1.msra.mxu0 0.0
    %4455 = vmatprep.subr.mxu0 0.0
    %4456 = vmatpush1.msra.mxu0 0.0
    %4457 = vmatprep.subr.mxu0 0.0
    %4458 = vmatpush1.msra.mxu0 0.0
    %4459 = vmatprep.subr.mxu0 0.0
    %4460 = vmatpush1.msra.mxu0 0.0
    %4461 = vmatprep.subr.mxu0 0.0
    %4462 = vmatpush1.msra.mxu0 0.0
    %4463 = vmatprep.subr.mxu0 0.0
    %4464 = vmatpush1.msra.mxu0 0.0
    %4465 = vmatprep.subr.mxu0 0.0
    %4466 = vmatpush1.msra.mxu0 %v4437
    %4467 = vmatprep.subr.mxu0 0.0
    %4468 = vmatpush1.msra.mxu0 %v4426
    %4469 = vmatprep.subr.mxu0 0.0
    %4470 = vmatpush1.msra.mxu0 %v4425
    %4471 = vmatprep.subr.mxu0 0.0
    %4472 = vmatpush2.msra.mxu0 0.0
    %4473 = vmatprep.subr.mxu0 0.0
    %4474 = vmatpush2.msra.mxu0 0.0
    %4475 = vmatprep.subr.mxu0 0.0
    %4476 = vmatpush2.msra.mxu0 0.0
    %4477 = vmatprep.subr.mxu0 0.0
    %4478 = vmatpush2.msra.mxu0 0.0
    %4479 = vmatprep.subr.mxu0 0.0
    %4480 = vmatpush2.msra.mxu0 0.0
    %4481 = vmatprep.subr.mxu0 0.0
    %4482 = vmatpush2.msra.mxu0 0.0
    %4483 = vmatprep.subr.mxu0 0.0
    %4484 = vmatpush2.msra.mxu0 0.0
    %4485 = vmatprep.subr.mxu0 0.0
    %4486 = vmatpush2.msra.mxu0 0.0
    %4487 = vmatprep.subr.mxu0 0.0
    %4488 = vmatpush2.msra.mxu0 0.0
    %4489 = vmatprep.subr.mxu0 0.0
    %4490 = vmatpush2.msra.mxu0 0.0
    %4491 = vmatprep.subr.mxu0 0.0
    %4492 = vmatpush2.msra.mxu0 0.0
    %4493 = vmatprep.subr.mxu0 0.0
    %4494 = vmatpush2.msra.mxu0 0.0
    %4495 = vmatprep.subr.mxu0 0.0
    %4496 = vmatpush2.msra.mxu0 0.0
    %4497 = vmatprep.subr.mxu0 0.0
    %4498 = vmatpush2.msra.mxu0 0.0
    %4499 = vmatprep.subr.mxu0 0.0
    %4500 = vmatpush2.msra.mxu0 0.0
    %4501 = vmatprep.subr.mxu0 0.0
    %4502 = vmatpush2.msra.mxu0 0.0
    %4503 = vmatprep.mubr.f32.mxu0 0.0
    %4504 = vmatmul.mubr.f32.gmra.mxu0 %v4434
    %v4505 = vpop.f32.mrf.mxu0
    %v4506 = vadd.f32 %v4432, %v4505
    %v4507 = vpop.f32.mrf.mxu0
    %4508 = vdwg.mxu0
    %v4509 = vadd.f32 %v4340, %v4506
    %v4510 = vsel %vm991, %v4509, 0.0
    %4511 = vadd.xlane.f32.xlu0 %v4510
    %v4512 = vpop.xlane.xlu0 %4511
    %v4513 = vmul.f32 %v4512, %v995
    %v4514 = vsub.f32 %v4509, %v4513
    %v4515 = vmul.f32 %v4514, %v4514
    %v4516 = vsel %vm991, %v4515, 0.0
    %4517 = vadd.xlane.f32.xlu0 %v4516
    %v4518 = vpop.xlane.xlu0 %4517
    %v4519 = vmul.f32 %v4518, %v995
    %v4520 = vadd.f32 %v4519, 1e-05
    %v4521 = vrsqrt.pop %v4520
    %v4522 = vmul.f32 %v4514, %v4521
    %v4523 = vld [vmem:[#allocation2 + $0x7e] sm:$0x1]
    %v4524 = vlaneseq
    %v4525 = vshrl.u32 %v4524, 7
    %v4526 = vsub.s32 0, %v4525
    %v4527 = vrot.slane %v4523, %v4526
    %v4528 = vmul.f32 %v4522, %v4527
    %v4529 = vld [vmem:[#allocation2 + $0x7f] sm:$0x1]
    %v4530 = vlaneseq
    %v4531 = vshrl.u32 %v4530, 7
    %v4532 = vsub.s32 0, %v4531
    %v4533 = vrot.slane %v4529, %v4532
    %v4534 = vadd.f32 %v4528, %v4533
    %v4535 = vld [vmem:[#allocation2 + $0xa0] sm:$0xff]
    %v4536 = vld [vmem:[#allocation2 + $0xa8] sm:$0x3]
    %v4537 = vld [vmem:[#allocation2 + $0xaa] sm:$0x1]
    %v4538 = vlaneseq
    %v4539 = vshrl.u32 %v4538, 7
    %v4540 = vsub.s32 0, %v4539
    %v4541 = vrot.slane %v4537, %v4540
    %v4543 = vsel %vm65, %v4534, 0
    %v4546 = vsel %vm72, %v4536, 0
    %4548 = vmatprep.subr.mxu0 0.0
    %4549 = vmatpush1.msra.mxu0 0.0
    %4550 = vmatprep.subr.mxu0 0.0
    %4551 = vmatpush1.msra.mxu0 0.0
    %4552 = vmatprep.subr.mxu0 0.0
    %4553 = vmatpush1.msra.mxu0 0.0
    %4554 = vmatprep.subr.mxu0 0.0
    %4555 = vmatpush1.msra.mxu0 0.0
    %4556 = vmatprep.subr.mxu0 0.0
    %4557 = vmatpush1.msra.mxu0 0.0
    %4558 = vmatprep.subr.mxu0 0.0
    %4559 = vmatpush1.msra.mxu0 0.0
    %4560 = vmatprep.subr.mxu0 0.0
    %4561 = vmatpush1.msra.mxu0 0.0
    %4562 = vmatprep.subr.mxu0 0.0
    %4563 = vmatpush1.msra.mxu0 0.0
    %4564 = vmatprep.subr.mxu0 0.0
    %4565 = vmatpush1.msra.mxu0 0.0
    %4566 = vmatprep.subr.mxu0 0.0
    %4567 = vmatpush1.msra.mxu0 0.0
    %4568 = vmatprep.subr.mxu0 0.0
    %4569 = vmatpush1.msra.mxu0 0.0
    %4570 = vmatprep.subr.mxu0 0.0
    %4571 = vmatpush1.msra.mxu0 0.0
    %4572 = vmatprep.subr.mxu0 0.0
    %4573 = vmatpush1.msra.mxu0 0.0
    %4574 = vmatprep.subr.mxu0 0.0
    %4575 = vmatpush1.msra.mxu0 0.0
    %4576 = vmatprep.subr.mxu0 0.0
    %4577 = vmatpush1.msra.mxu0 %v4546
    %4578 = vmatprep.subr.mxu0 0.0
    %4579 = vmatpush1.msra.mxu0 %v4535
    %4580 = vmatprep.subr.mxu0 0.0
    %4581 = vmatpush2.msra.mxu0 0.0
    %4582 = vmatprep.subr.mxu0 0.0
    %4583 = vmatpush2.msra.mxu0 0.0
    %4584 = vmatprep.subr.mxu0 0.0
    %4585 = vmatpush2.msra.mxu0 0.0
    %4586 = vmatprep.subr.mxu0 0.0
    %4587 = vmatpush2.msra.mxu0 0.0
    %4588 = vmatprep.subr.mxu0 0.0
    %4589 = vmatpush2.msra.mxu0 0.0
    %4590 = vmatprep.subr.mxu0 0.0
    %4591 = vmatpush2.msra.mxu0 0.0
    %4592 = vmatprep.subr.mxu0 0.0
    %4593 = vmatpush2.msra.mxu0 0.0
    %4594 = vmatprep.subr.mxu0 0.0
    %4595 = vmatpush2.msra.mxu0 0.0
    %4596 = vmatprep.subr.mxu0 0.0
    %4597 = vmatpush2.msra.mxu0 0.0
    %4598 = vmatprep.subr.mxu0 0.0
    %4599 = vmatpush2.msra.mxu0 0.0
    %4600 = vmatprep.subr.mxu0 0.0
    %4601 = vmatpush2.msra.mxu0 0.0
    %4602 = vmatprep.subr.mxu0 0.0
    %4603 = vmatpush2.msra.mxu0 0.0
    %4604 = vmatprep.subr.mxu0 0.0
    %4605 = vmatpush2.msra.mxu0 0.0
    %4606 = vmatprep.subr.mxu0 0.0
    %4607 = vmatpush2.msra.mxu0 0.0
    %4608 = vmatprep.subr.mxu0 0.0
    %4609 = vmatpush2.msra.mxu0 0.0
    %4610 = vmatprep.subr.mxu0 0.0
    %4611 = vmatpush2.msra.mxu0 0.0
    %4612 = vmatprep.mubr.f32.mxu0 0.0
    %4613 = vmatmul.mubr.f32.gmra.mxu0 %v4543
    %v4614 = vpop.f32.mrf.mxu0
    %v4615 = vadd.f32 %v4541, %v4614
    %v4616 = vpop.f32.mrf.mxu0
    %4617 = vdwg.mxu0
    %v4618 = vmax.f32 %v4615, 0.0
    %v4619 = vld [vmem:[#allocation2 + $0xab] sm:$0xff]
    %v4620 = vld [vmem:[#allocation2 + $0xb3] sm:$0xf]
    %v4621 = vld [vmem:[#allocation2 + $0xb7] sm:$0x1]
    %v4622 = vlaneseq
    %v4623 = vshrl.u32 %v4622, 7
    %v4624 = vsub.s32 0, %v4623
    %v4625 = vrot.slane %v4621, %v4624
    %v4627 = vsel %vm2250, %v4618, 0
    %v4630 = vsel %vm2059, %v4620, 0
    %4632 = vmatprep.subr.mxu0 0.0
    %4633 = vmatpush1.msra.mxu0 0.0
    %4634 = vmatprep.subr.mxu0 0.0
    %4635 = vmatpush1.msra.mxu0 0.0
    %4636 = vmatprep.subr.mxu0 0.0
    %4637 = vmatpush1.msra.mxu0 0.0
    %4638 = vmatprep.subr.mxu0 0.0
    %4639 = vmatpush1.msra.mxu0 0.0
    %4640 = vmatprep.subr.mxu0 0.0
    %4641 = vmatpush1.msra.mxu0 0.0
    %4642 = vmatprep.subr.mxu0 0.0
    %4643 = vmatpush1.msra.mxu0 0.0
    %4644 = vmatprep.subr.mxu0 0.0
    %4645 = vmatpush1.msra.mxu0 0.0
    %4646 = vmatprep.subr.mxu0 0.0
    %4647 = vmatpush1.msra.mxu0 0.0
    %4648 = vmatprep.subr.mxu0 0.0
    %4649 = vmatpush1.msra.mxu0 0.0
    %4650 = vmatprep.subr.mxu0 0.0
    %4651 = vmatpush1.msra.mxu0 0.0
    %4652 = vmatprep.subr.mxu0 0.0
    %4653 = vmatpush1.msra.mxu0 0.0
    %4654 = vmatprep.subr.mxu0 0.0
    %4655 = vmatpush1.msra.mxu0 0.0
    %4656 = vmatprep.subr.mxu0 0.0
    %4657 = vmatpush1.msra.mxu0 0.0
    %4658 = vmatprep.subr.mxu0 0.0
    %4659 = vmatpush1.msra.mxu0 0.0
    %4660 = vmatprep.subr.mxu0 0.0
    %4661 = vmatpush1.msra.mxu0 %v4630
    %4662 = vmatprep.subr.mxu0 0.0
    %4663 = vmatpush1.msra.mxu0 %v4619
    %4664 = vmatprep.subr.mxu0 0.0
    %4665 = vmatpush2.msra.mxu0 0.0
    %4666 = vmatprep.subr.mxu0 0.0
    %4667 = vmatpush2.msra.mxu0 0.0
    %4668 = vmatprep.subr.mxu0 0.0
    %4669 = vmatpush2.msra.mxu0 0.0
    %4670 = vmatprep.subr.mxu0 0.0
    %4671 = vmatpush2.msra.mxu0 0.0
    %4672 = vmatprep.subr.mxu0 0.0
    %4673 = vmatpush2.msra.mxu0 0.0
    %4674 = vmatprep.subr.mxu0 0.0
    %4675 = vmatpush2.msra.mxu0 0.0
    %4676 = vmatprep.subr.mxu0 0.0
    %4677 = vmatpush2.msra.mxu0 0.0
    %4678 = vmatprep.subr.mxu0 0.0
    %4679 = vmatpush2.msra.mxu0 0.0
    %4680 = vmatprep.subr.mxu0 0.0
    %4681 = vmatpush2.msra.mxu0 0.0
    %4682 = vmatprep.subr.mxu0 0.0
    %4683 = vmatpush2.msra.mxu0 0.0
    %4684 = vmatprep.subr.mxu0 0.0
    %4685 = vmatpush2.msra.mxu0 0.0
    %4686 = vmatprep.subr.mxu0 0.0
    %4687 = vmatpush2.msra.mxu0 0.0
    %4688 = vmatprep.subr.mxu0 0.0
    %4689 = vmatpush2.msra.mxu0 0.0
    %4690 = vmatprep.subr.mxu0 0.0
    %4691 = vmatpush2.msra.mxu0 0.0
    %4692 = vmatprep.subr.mxu0 0.0
    %4693 = vmatpush2.msra.mxu0 0.0
    %4694 = vmatprep.subr.mxu0 0.0
    %4695 = vmatpush2.msra.mxu0 0.0
    %4696 = vmatprep.mubr.f32.mxu0 0.0
    %4697 = vmatmul.mubr.f32.gmra.mxu0 %v4627
    %v4698 = vpop.f32.mrf.mxu0
    %v4699 = vadd.f32 %v4625, %v4698
    %v4700 = vpop.f32.mrf.mxu0
    %4701 = vdwg.mxu0
    %v4702 = vld [vmem:[#allocation2 + $0xb8] sm:$0xff]
    %v4703 = vld [vmem:[#allocation2 + $0xc0] sm:$0x3]
    %v4704 = vld [vmem:[#allocation2 + $0xc2] sm:$0x1]
    %v4705 = vlaneseq
    %v4706 = vshrl.u32 %v4705, 7
    %v4707 = vsub.s32 0, %v4706
    %v4708 = vrot.slane %v4704, %v4707
    %v4710 = vsel %vm72, %v4703, 0
    %4712 = vmatprep.subr.mxu0 0.0
    %4713 = vmatpush1.msra.mxu0 0.0
    %4714 = vmatprep.subr.mxu0 0.0
    %4715 = vmatpush1.msra.mxu0 0.0
    %4716 = vmatprep.subr.mxu0 0.0
    %4717 = vmatpush1.msra.mxu0 0.0
    %4718 = vmatprep.subr.mxu0 0.0
    %4719 = vmatpush1.msra.mxu0 0.0
    %4720 = vmatprep.subr.mxu0 0.0
    %4721 = vmatpush1.msra.mxu0 0.0
    %4722 = vmatprep.subr.mxu0 0.0
    %4723 = vmatpush1.msra.mxu0 0.0
    %4724 = vmatprep.subr.mxu0 0.0
    %4725 = vmatpush1.msra.mxu0 0.0
    %4726 = vmatprep.subr.mxu0 0.0
    %4727 = vmatpush1.msra.mxu0 0.0
    %4728 = vmatprep.subr.mxu0 0.0
    %4729 = vmatpush1.msra.mxu0 0.0
    %4730 = vmatprep.subr.mxu0 0.0
    %4731 = vmatpush1.msra.mxu0 0.0
    %4732 = vmatprep.subr.mxu0 0.0
    %4733 = vmatpush1.msra.mxu0 0.0
    %4734 = vmatprep.subr.mxu0 0.0
    %4735 = vmatpush1.msra.mxu0 0.0
    %4736 = vmatprep.subr.mxu0 0.0
    %4737 = vmatpush1.msra.mxu0 0.0
    %4738 = vmatprep.subr.mxu0 0.0
    %4739 = vmatpush1.msra.mxu0 0.0
    %4740 = vmatprep.subr.mxu0 0.0
    %4741 = vmatpush1.msra.mxu0 %v4710
    %4742 = vmatprep.subr.mxu0 0.0
    %4743 = vmatpush1.msra.mxu0 %v4702
    %4744 = vmatprep.subr.mxu0 0.0
    %4745 = vmatpush2.msra.mxu0 0.0
    %4746 = vmatprep.subr.mxu0 0.0
    %4747 = vmatpush2.msra.mxu0 0.0
    %4748 = vmatprep.subr.mxu0 0.0
    %4749 = vmatpush2.msra.mxu0 0.0
    %4750 = vmatprep.subr.mxu0 0.0
    %4751 = vmatpush2.msra.mxu0 0.0
    %4752 = vmatprep.subr.mxu0 0.0
    %4753 = vmatpush2.msra.mxu0 0.0
    %4754 = vmatprep.subr.mxu0 0.0
    %4755 = vmatpush2.msra.mxu0 0.0
    %4756 = vmatprep.subr.mxu0 0.0
    %4757 = vmatpush2.msra.mxu0 0.0
    %4758 = vmatprep.subr.mxu0 0.0
    %4759 = vmatpush2.msra.mxu0 0.0
    %4760 = vmatprep.subr.mxu0 0.0
    %4761 = vmatpush2.msra.mxu0 0.0
    %4762 = vmatprep.subr.mxu0 0.0
    %4763 = vmatpush2.msra.mxu0 0.0
    %4764 = vmatprep.subr.mxu0 0.0
    %4765 = vmatpush2.msra.mxu0 0.0
    %4766 = vmatprep.subr.mxu0 0.0
    %4767 = vmatpush2.msra.mxu0 0.0
    %4768 = vmatprep.subr.mxu0 0.0
    %4769 = vmatpush2.msra.mxu0 0.0
    %4770 = vmatprep.subr.mxu0 0.0
    %4771 = vmatpush2.msra.mxu0 0.0
    %4772 = vmatprep.subr.mxu0 0.0
    %4773 = vmatpush2.msra.mxu0 0.0
    %4774 = vmatprep.subr.mxu0 0.0
    %4775 = vmatpush2.msra.mxu0 0.0
    %4776 = vmatprep.mubr.f32.mxu0 0.0
    %4777 = vmatmul.mubr.f32.gmra.mxu0 %v4543
    %v4778 = vpop.f32.mrf.mxu0
    %v4779 = vadd.f32 %v4708, %v4778
    %v4780 = vpop.f32.mrf.mxu0
    %4781 = vdwg.mxu0
    %v4782 = vmax.f32 %v4779, 0.0
    %v4783 = vld [vmem:[#allocation2 + $0xc3] sm:$0xff]
    %v4784 = vld [vmem:[#allocation2 + $0xcb] sm:$0xf]
    %v4785 = vld [vmem:[#allocation2 + $0xcf] sm:$0x1]
    %v4786 = vlaneseq
    %v4787 = vshrl.u32 %v4786, 7
    %v4788 = vsub.s32 0, %v4787
    %v4789 = vrot.slane %v4785, %v4788
    %v4791 = vsel %vm2250, %v4782, 0
    %v4794 = vsel %vm2059, %v4784, 0
    %4796 = vmatprep.subr.mxu0 0.0
    %4797 = vmatpush1.msra.mxu0 0.0
    %4798 = vmatprep.subr.mxu0 0.0
    %4799 = vmatpush1.msra.mxu0 0.0
    %4800 = vmatprep.subr.mxu0 0.0
    %4801 = vmatpush1.msra.mxu0 0.0
    %4802 = vmatprep.subr.mxu0 0.0
    %4803 = vmatpush1.msra.mxu0 0.0
    %4804 = vmatprep.subr.mxu0 0.0
    %4805 = vmatpush1.msra.mxu0 0.0
    %4806 = vmatprep.subr.mxu0 0.0
    %4807 = vmatpush1.msra.mxu0 0.0
    %4808 = vmatprep.subr.mxu0 0.0
    %4809 = vmatpush1.msra.mxu0 0.0
    %4810 = vmatprep.subr.mxu0 0.0
    %4811 = vmatpush1.msra.mxu0 0.0
    %4812 = vmatprep.subr.mxu0 0.0
    %4813 = vmatpush1.msra.mxu0 0.0
    %4814 = vmatprep.subr.mxu0 0.0
    %4815 = vmatpush1.msra.mxu0 0.0
    %4816 = vmatprep.subr.mxu0 0.0
    %4817 = vmatpush1.msra.mxu0 0.0
    %4818 = vmatprep.subr.mxu0 0.0
    %4819 = vmatpush1.msra.mxu0 0.0
    %4820 = vmatprep.subr.mxu0 0.0
    %4821 = vmatpush1.msra.mxu0 0.0
    %4822 = vmatprep.subr.mxu0 0.0
    %4823 = vmatpush1.msra.mxu0 0.0
    %4824 = vmatprep.subr.mxu0 0.0
    %4825 = vmatpush1.msra.mxu0 %v4794
    %4826 = vmatprep.subr.mxu0 0.0
    %4827 = vmatpush1.msra.mxu0 %v4783
    %4828 = vmatprep.subr.mxu0 0.0
    %4829 = vmatpush2.msra.mxu0 0.0
    %4830 = vmatprep.subr.mxu0 0.0
    %4831 = vmatpush2.msra.mxu0 0.0
    %4832 = vmatprep.subr.mxu0 0.0
    %4833 = vmatpush2.msra.mxu0 0.0
    %4834 = vmatprep.subr.mxu0 0.0
    %4835 = vmatpush2.msra.mxu0 0.0
    %4836 = vmatprep.subr.mxu0 0.0
    %4837 = vmatpush2.msra.mxu0 0.0
    %4838 = vmatprep.subr.mxu0 0.0
    %4839 = vmatpush2.msra.mxu0 0.0
    %4840 = vmatprep.subr.mxu0 0.0
    %4841 = vmatpush2.msra.mxu0 0.0
    %4842 = vmatprep.subr.mxu0 0.0
    %4843 = vmatpush2.msra.mxu0 0.0
    %4844 = vmatprep.subr.mxu0 0.0
    %4845 = vmatpush2.msra.mxu0 0.0
    %4846 = vmatprep.subr.mxu0 0.0
    %4847 = vmatpush2.msra.mxu0 0.0
    %4848 = vmatprep.subr.mxu0 0.0
    %4849 = vmatpush2.msra.mxu0 0.0
    %4850 = vmatprep.subr.mxu0 0.0
    %4851 = vmatpush2.msra.mxu0 0.0
    %4852 = vmatprep.subr.mxu0 0.0
    %4853 = vmatpush2.msra.mxu0 0.0
    %4854 = vmatprep.subr.mxu0 0.0
    %4855 = vmatpush2.msra.mxu0 0.0
    %4856 = vmatprep.subr.mxu0 0.0
    %4857 = vmatpush2.msra.mxu0 0.0
    %4858 = vmatprep.subr.mxu0 0.0
    %4859 = vmatpush2.msra.mxu0 0.0
    %4860 = vmatprep.mubr.f32.mxu0 0.0
    %4861 = vmatmul.mubr.f32.gmra.mxu0 %v4791
    %v4862 = vpop.f32.mrf.mxu0
    %v4863 = vadd.f32 %v4789, %v4862
    %v4864 = vpop.f32.mrf.mxu0
    %4865 = vdwg.mxu0
    %v4866 = vld [vmem:[#allocation2 + $0xd0] sm:$0xff]
    %v4867 = vld [vmem:[#allocation2 + $0xd8] sm:$0x3]
    %v4868 = vld [vmem:[#allocation2 + $0xda] sm:$0x1]
    %v4869 = vlaneseq
    %v4870 = vshrl.u32 %v4869, 7
    %v4871 = vsub.s32 0, %v4870
    %v4872 = vrot.slane %v4868, %v4871
    %v4874 = vsel %vm72, %v4867, 0
    %4876 = vmatprep.subr.mxu0 0.0
    %4877 = vmatpush1.msra.mxu0 0.0
    %4878 = vmatprep.subr.mxu0 0.0
    %4879 = vmatpush1.msra.mxu0 0.0
    %4880 = vmatprep.subr.mxu0 0.0
    %4881 = vmatpush1.msra.mxu0 0.0
    %4882 = vmatprep.subr.mxu0 0.0
    %4883 = vmatpush1.msra.mxu0 0.0
    %4884 = vmatprep.subr.mxu0 0.0
    %4885 = vmatpush1.msra.mxu0 0.0
    %4886 = vmatprep.subr.mxu0 0.0
    %4887 = vmatpush1.msra.mxu0 0.0
    %4888 = vmatprep.subr.mxu0 0.0
    %4889 = vmatpush1.msra.mxu0 0.0
    %4890 = vmatprep.subr.mxu0 0.0
    %4891 = vmatpush1.msra.mxu0 0.0
    %4892 = vmatprep.subr.mxu0 0.0
    %4893 = vmatpush1.msra.mxu0 0.0
    %4894 = vmatprep.subr.mxu0 0.0
    %4895 = vmatpush1.msra.mxu0 0.0
    %4896 = vmatprep.subr.mxu0 0.0
    %4897 = vmatpush1.msra.mxu0 0.0
    %4898 = vmatprep.subr.mxu0 0.0
    %4899 = vmatpush1.msra.mxu0 0.0
    %4900 = vmatprep.subr.mxu0 0.0
    %4901 = vmatpush1.msra.mxu0 0.0
    %4902 = vmatprep.subr.mxu0 0.0
    %4903 = vmatpush1.msra.mxu0 0.0
    %4904 = vmatprep.subr.mxu0 0.0
    %4905 = vmatpush1.msra.mxu0 %v4874
    %4906 = vmatprep.subr.mxu0 0.0
    %4907 = vmatpush1.msra.mxu0 %v4866
    %4908 = vmatprep.subr.mxu0 0.0
    %4909 = vmatpush2.msra.mxu0 0.0
    %4910 = vmatprep.subr.mxu0 0.0
    %4911 = vmatpush2.msra.mxu0 0.0
    %4912 = vmatprep.subr.mxu0 0.0
    %4913 = vmatpush2.msra.mxu0 0.0
    %4914 = vmatprep.subr.mxu0 0.0
    %4915 = vmatpush2.msra.mxu0 0.0
    %4916 = vmatprep.subr.mxu0 0.0
    %4917 = vmatpush2.msra.mxu0 0.0
    %4918 = vmatprep.subr.mxu0 0.0
    %4919 = vmatpush2.msra.mxu0 0.0
    %4920 = vmatprep.subr.mxu0 0.0
    %4921 = vmatpush2.msra.mxu0 0.0
    %4922 = vmatprep.subr.mxu0 0.0
    %4923 = vmatpush2.msra.mxu0 0.0
    %4924 = vmatprep.subr.mxu0 0.0
    %4925 = vmatpush2.msra.mxu0 0.0
    %4926 = vmatprep.subr.mxu0 0.0
    %4927 = vmatpush2.msra.mxu0 0.0
    %4928 = vmatprep.subr.mxu0 0.0
    %4929 = vmatpush2.msra.mxu0 0.0
    %4930 = vmatprep.subr.mxu0 0.0
    %4931 = vmatpush2.msra.mxu0 0.0
    %4932 = vmatprep.subr.mxu0 0.0
    %4933 = vmatpush2.msra.mxu0 0.0
    %4934 = vmatprep.subr.mxu0 0.0
    %4935 = vmatpush2.msra.mxu0 0.0
    %4936 = vmatprep.subr.mxu0 0.0
    %4937 = vmatpush2.msra.mxu0 0.0
    %4938 = vmatprep.subr.mxu0 0.0
    %4939 = vmatpush2.msra.mxu0 0.0
    %4940 = vmatprep.mubr.f32.mxu0 0.0
    %4941 = vmatmul.mubr.f32.gmra.mxu0 %v4543
    %v4942 = vpop.f32.mrf.mxu0
    %v4943 = vadd.f32 %v4872, %v4942
    %v4944 = vpop.f32.mrf.mxu0
    %4945 = vdwg.mxu0
    %v4946 = vmax.f32 %v4943, 0.0
    %v4947 = vld [vmem:[#allocation2 + $0xdb] sm:$0xff]
    %v4948 = vld [vmem:[#allocation2 + $0xe3] sm:$0xf]
    %v4949 = vld [vmem:[#allocation2 + $0xe7] sm:$0x1]
    %v4950 = vlaneseq
    %v4951 = vshrl.u32 %v4950, 7
    %v4952 = vsub.s32 0, %v4951
    %v4953 = vrot.slane %v4949, %v4952
    %v4955 = vsel %vm2250, %v4946, 0
    %v4958 = vsel %vm2059, %v4948, 0
    %4960 = vmatprep.subr.mxu0 0.0
    %4961 = vmatpush1.msra.mxu0 0.0
    %4962 = vmatprep.subr.mxu0 0.0
    %4963 = vmatpush1.msra.mxu0 0.0
    %4964 = vmatprep.subr.mxu0 0.0
    %4965 = vmatpush1.msra.mxu0 0.0
    %4966 = vmatprep.subr.mxu0 0.0
    %4967 = vmatpush1.msra.mxu0 0.0
    %4968 = vmatprep.subr.mxu0 0.0
    %4969 = vmatpush1.msra.mxu0 0.0
    %4970 = vmatprep.subr.mxu0 0.0
    %4971 = vmatpush1.msra.mxu0 0.0
    %4972 = vmatprep.subr.mxu0 0.0
    %4973 = vmatpush1.msra.mxu0 0.0
    %4974 = vmatprep.subr.mxu0 0.0
    %4975 = vmatpush1.msra.mxu0 0.0
    %4976 = vmatprep.subr.mxu0 0.0
    %4977 = vmatpush1.msra.mxu0 0.0
    %4978 = vmatprep.subr.mxu0 0.0
    %4979 = vmatpush1.msra.mxu0 0.0
    %4980 = vmatprep.subr.mxu0 0.0
    %4981 = vmatpush1.msra.mxu0 0.0
    %4982 = vmatprep.subr.mxu0 0.0
    %4983 = vmatpush1.msra.mxu0 0.0
    %4984 = vmatprep.subr.mxu0 0.0
    %4985 = vmatpush1.msra.mxu0 0.0
    %4986 = vmatprep.subr.mxu0 0.0
    %4987 = vmatpush1.msra.mxu0 0.0
    %4988 = vmatprep.subr.mxu0 0.0
    %4989 = vmatpush1.msra.mxu0 %v4958
    %4990 = vmatprep.subr.mxu0 0.0
    %4991 = vmatpush1.msra.mxu0 %v4947
    %4992 = vmatprep.subr.mxu0 0.0
    %4993 = vmatpush2.msra.mxu0 0.0
    %4994 = vmatprep.subr.mxu0 0.0
    %4995 = vmatpush2.msra.mxu0 0.0
    %4996 = vmatprep.subr.mxu0 0.0
    %4997 = vmatpush2.msra.mxu0 0.0
    %4998 = vmatprep.subr.mxu0 0.0
    %4999 = vmatpush2.msra.mxu0 0.0
    %5000 = vmatprep.subr.mxu0 0.0
    %5001 = vmatpush2.msra.mxu0 0.0
    %5002 = vmatprep.subr.mxu0 0.0
    %5003 = vmatpush2.msra.mxu0 0.0
    %5004 = vmatprep.subr.mxu0 0.0
    %5005 = vmatpush2.msra.mxu0 0.0
    %5006 = vmatprep.subr.mxu0 0.0
    %5007 = vmatpush2.msra.mxu0 0.0
    %5008 = vmatprep.subr.mxu0 0.0
    %5009 = vmatpush2.msra.mxu0 0.0
    %5010 = vmatprep.subr.mxu0 0.0
    %5011 = vmatpush2.msra.mxu0 0.0
    %5012 = vmatprep.subr.mxu0 0.0
    %5013 = vmatpush2.msra.mxu0 0.0
    %5014 = vmatprep.subr.mxu0 0.0
    %5015 = vmatpush2.msra.mxu0 0.0
    %5016 = vmatprep.subr.mxu0 0.0
    %5017 = vmatpush2.msra.mxu0 0.0
    %5018 = vmatprep.subr.mxu0 0.0
    %5019 = vmatpush2.msra.mxu0 0.0
    %5020 = vmatprep.subr.mxu0 0.0
    %5021 = vmatpush2.msra.mxu0 0.0
    %5022 = vmatprep.subr.mxu0 0.0
    %5023 = vmatpush2.msra.mxu0 0.0
    %5024 = vmatprep.mubr.f32.mxu0 0.0
    %5025 = vmatmul.mubr.f32.gmra.mxu0 %v4955
    %v5026 = vpop.f32.mrf.mxu0
    %v5027 = vadd.f32 %v4953, %v5026
    %v5028 = vpop.f32.mrf.mxu0
    %5029 = vdwg.mxu0
    %v5030 = vtanh.pop %v4699
    %v5031 = vmul.f32 %v5030, 10.0
    %v5032 = vsub.f32 %v29, %v5031
    %v5033 = vsub.f32 0.0, %v4863
    %v5034 = vmul.f32 %v5033, 1.442695
    %v5035 = vpow.pop %v5034
    %v5036 = vmul.f32 %v5032, %v5035
    %v5037 = vmul.f32 %v5036, -0.5
    %v5038 = vmul.f32 %v5037, %v5036
    %v5039 = vsub.f32 %v5038, %v4863
    %v5040 = vsub.f32 %v5039, 0.9189385
    %v5041 = vadd.f32 %v5040, %v5027
    %v5042 = vld [vmem:[#allocation2 + $0x23] sm:$0xff]
    %v5043 = vld [vmem:[#allocation2 + $0x2b] sm:$0x3]
    %v5044 = vld [vmem:[#allocation2 + $0x2d] sm:$0x1]
    %v5045 = vlaneseq
    %v5046 = vshrl.u32 %v5045, 7
    %v5047 = vsub.s32 0, %v5046
    %v5048 = vrot.slane %v5044, %v5047
    %v5050 = vsel %vm72, %v5043, 0
    %5052 = vmatprep.subr.mxu0 0.0
    %5053 = vmatpush1.msra.mxu0 0.0
    %5054 = vmatprep.subr.mxu0 0.0
    %5055 = vmatpush1.msra.mxu0 0.0
    %5056 = vmatprep.subr.mxu0 0.0
    %5057 = vmatpush1.msra.mxu0 0.0
    %5058 = vmatprep.subr.mxu0 0.0
    %5059 = vmatpush1.msra.mxu0 0.0
    %5060 = vmatprep.subr.mxu0 0.0
    %5061 = vmatpush1.msra.mxu0 0.0
    %5062 = vmatprep.subr.mxu0 0.0
    %5063 = vmatpush1.msra.mxu0 0.0
    %5064 = vmatprep.subr.mxu0 0.0
    %5065 = vmatpush1.msra.mxu0 0.0
    %5066 = vmatprep.subr.mxu0 0.0
    %5067 = vmatpush1.msra.mxu0 0.0
    %5068 = vmatprep.subr.mxu0 0.0
    %5069 = vmatpush1.msra.mxu0 0.0
    %5070 = vmatprep.subr.mxu0 0.0
    %5071 = vmatpush1.msra.mxu0 0.0
    %5072 = vmatprep.subr.mxu0 0.0
    %5073 = vmatpush1.msra.mxu0 0.0
    %5074 = vmatprep.subr.mxu0 0.0
    %5075 = vmatpush1.msra.mxu0 0.0
    %5076 = vmatprep.subr.mxu0 0.0
    %5077 = vmatpush1.msra.mxu0 0.0
    %5078 = vmatprep.subr.mxu0 0.0
    %5079 = vmatpush1.msra.mxu0 0.0
    %5080 = vmatprep.subr.mxu0 0.0
    %5081 = vmatpush1.msra.mxu0 %v5050
    %5082 = vmatprep.subr.mxu0 0.0
    %5083 = vmatpush1.msra.mxu0 %v5042
    %5084 = vmatprep.subr.mxu0 0.0
    %5085 = vmatpush2.msra.mxu0 0.0
    %5086 = vmatprep.subr.mxu0 0.0
    %5087 = vmatpush2.msra.mxu0 0.0
    %5088 = vmatprep.subr.mxu0 0.0
    %5089 = vmatpush2.msra.mxu0 0.0
    %5090 = vmatprep.subr.mxu0 0.0
    %5091 = vmatpush2.msra.mxu0 0.0
    %5092 = vmatprep.subr.mxu0 0.0
    %5093 = vmatpush2.msra.mxu0 0.0
    %5094 = vmatprep.subr.mxu0 0.0
    %5095 = vmatpush2.msra.mxu0 0.0
    %5096 = vmatprep.subr.mxu0 0.0
    %5097 = vmatpush2.msra.mxu0 0.0
    %5098 = vmatprep.subr.mxu0 0.0
    %5099 = vmatpush2.msra.mxu0 0.0
    %5100 = vmatprep.subr.mxu0 0.0
    %5101 = vmatpush2.msra.mxu0 0.0
    %5102 = vmatprep.subr.mxu0 0.0
    %5103 = vmatpush2.msra.mxu0 0.0
    %5104 = vmatprep.subr.mxu0 0.0
    %5105 = vmatpush2.msra.mxu0 0.0
    %5106 = vmatprep.subr.mxu0 0.0
    %5107 = vmatpush2.msra.mxu0 0.0
    %5108 = vmatprep.subr.mxu0 0.0
    %5109 = vmatpush2.msra.mxu0 0.0
    %5110 = vmatprep.subr.mxu0 0.0
    %5111 = vmatpush2.msra.mxu0 0.0
    %5112 = vmatprep.subr.mxu0 0.0
    %5113 = vmatpush2.msra.mxu0 0.0
    %5114 = vmatprep.subr.mxu0 0.0
    %5115 = vmatpush2.msra.mxu0 0.0
    %5116 = vmatprep.mubr.f32.mxu0 0.0
    %5117 = vmatmul.mubr.f32.gmra.mxu0 %v4543
    %v5118 = vpop.f32.mrf.mxu0
    %v5119 = vadd.f32 %v5048, %v5118
    %v5120 = vpop.f32.mrf.mxu0
    %5121 = vdwg.mxu0
    %v5122 = vld [vmem:[#allocation2 + $0x2e] sm:$0xff]
    %v5123 = vld [vmem:[#allocation2 + $0x36] sm:$0x3]
    %v5124 = vld [vmem:[#allocation2 + $0x38] sm:$0x1]
    %v5125 = vlaneseq
    %v5126 = vshrl.u32 %v5125, 7
    %v5127 = vsub.s32 0, %v5126
    %v5128 = vrot.slane %v5124, %v5127
    %v5130 = vsel %vm72, %v5123, 0
    %5132 = vmatprep.subr.mxu0 0.0
    %5133 = vmatpush1.msra.mxu0 0.0
    %5134 = vmatprep.subr.mxu0 0.0
    %5135 = vmatpush1.msra.mxu0 0.0
    %5136 = vmatprep.subr.mxu0 0.0
    %5137 = vmatpush1.msra.mxu0 0.0
    %5138 = vmatprep.subr.mxu0 0.0
    %5139 = vmatpush1.msra.mxu0 0.0
    %5140 = vmatprep.subr.mxu0 0.0
    %5141 = vmatpush1.msra.mxu0 0.0
    %5142 = vmatprep.subr.mxu0 0.0
    %5143 = vmatpush1.msra.mxu0 0.0
    %5144 = vmatprep.subr.mxu0 0.0
    %5145 = vmatpush1.msra.mxu0 0.0
    %5146 = vmatprep.subr.mxu0 0.0
    %5147 = vmatpush1.msra.mxu0 0.0
    %5148 = vmatprep.subr.mxu0 0.0
    %5149 = vmatpush1.msra.mxu0 0.0
    %5150 = vmatprep.subr.mxu0 0.0
    %5151 = vmatpush1.msra.mxu0 0.0
    %5152 = vmatprep.subr.mxu0 0.0
    %5153 = vmatpush1.msra.mxu0 0.0
    %5154 = vmatprep.subr.mxu0 0.0
    %5155 = vmatpush1.msra.mxu0 0.0
    %5156 = vmatprep.subr.mxu0 0.0
    %5157 = vmatpush1.msra.mxu0 0.0
    %5158 = vmatprep.subr.mxu0 0.0
    %5159 = vmatpush1.msra.mxu0 0.0
    %5160 = vmatprep.subr.mxu0 0.0
    %5161 = vmatpush1.msra.mxu0 %v5130
    %5162 = vmatprep.subr.mxu0 0.0
    %5163 = vmatpush1.msra.mxu0 %v5122
    %5164 = vmatprep.subr.mxu0 0.0
    %5165 = vmatpush2.msra.mxu0 0.0
    %5166 = vmatprep.subr.mxu0 0.0
    %5167 = vmatpush2.msra.mxu0 0.0
    %5168 = vmatprep.subr.mxu0 0.0
    %5169 = vmatpush2.msra.mxu0 0.0
    %5170 = vmatprep.subr.mxu0 0.0
    %5171 = vmatpush2.msra.mxu0 0.0
    %5172 = vmatprep.subr.mxu0 0.0
    %5173 = vmatpush2.msra.mxu0 0.0
    %5174 = vmatprep.subr.mxu0 0.0
    %5175 = vmatpush2.msra.mxu0 0.0
    %5176 = vmatprep.subr.mxu0 0.0
    %5177 = vmatpush2.msra.mxu0 0.0
    %5178 = vmatprep.subr.mxu0 0.0
    %5179 = vmatpush2.msra.mxu0 0.0
    %5180 = vmatprep.subr.mxu0 0.0
    %5181 = vmatpush2.msra.mxu0 0.0
    %5182 = vmatprep.subr.mxu0 0.0
    %5183 = vmatpush2.msra.mxu0 0.0
    %5184 = vmatprep.subr.mxu0 0.0
    %5185 = vmatpush2.msra.mxu0 0.0
    %5186 = vmatprep.subr.mxu0 0.0
    %5187 = vmatpush2.msra.mxu0 0.0
    %5188 = vmatprep.subr.mxu0 0.0
    %5189 = vmatpush2.msra.mxu0 0.0
    %5190 = vmatprep.subr.mxu0 0.0
    %5191 = vmatpush2.msra.mxu0 0.0
    %5192 = vmatprep.subr.mxu0 0.0
    %5193 = vmatpush2.msra.mxu0 0.0
    %5194 = vmatprep.subr.mxu0 0.0
    %5195 = vmatpush2.msra.mxu0 0.0
    %5196 = vmatprep.mubr.f32.mxu0 0.0
    %5197 = vmatmul.mubr.f32.gmra.mxu0 %v4543
    %v5198 = vpop.f32.mrf.mxu0
    %v5199 = vadd.f32 %v5128, %v5198
    %v5200 = vpop.f32.mrf.mxu0
    %5201 = vdwg.mxu0
    %v5202 = vld [vmem:[#allocation2 + $0x18] sm:$0xff]
    %v5203 = vld [vmem:[#allocation2 + $0x20] sm:$0x3]
    %v5204 = vld [vmem:[#allocation2 + $0x22] sm:$0x1]
    %v5205 = vlaneseq
    %v5206 = vshrl.u32 %v5205, 7
    %v5207 = vsub.s32 0, %v5206
    %v5208 = vrot.slane %v5204, %v5207
    %v5210 = vsel %vm72, %v5203, 0
    %5212 = vmatprep.subr.mxu0 0.0
    %5213 = vmatpush1.msra.mxu0 0.0
    %5214 = vmatprep.subr.mxu0 0.0
    %5215 = vmatpush1.msra.mxu0 0.0
    %5216 = vmatprep.subr.mxu0 0.0
    %5217 = vmatpush1.msra.mxu0 0.0
    %5218 = vmatprep.subr.mxu0 0.0
    %5219 = vmatpush1.msra.mxu0 0.0
    %5220 = vmatprep.subr.mxu0 0.0
    %5221 = vmatpush1.msra.mxu0 0.0
    %5222 = vmatprep.subr.mxu0 0.0
    %5223 = vmatpush1.msra.mxu0 0.0
    %5224 = vmatprep.subr.mxu0 0.0
    %5225 = vmatpush1.msra.mxu0 0.0
    %5226 = vmatprep.subr.mxu0 0.0
    %5227 = vmatpush1.msra.mxu0 0.0
    %5228 = vmatprep.subr.mxu0 0.0
    %5229 = vmatpush1.msra.mxu0 0.0
    %5230 = vmatprep.subr.mxu0 0.0
    %5231 = vmatpush1.msra.mxu0 0.0
    %5232 = vmatprep.subr.mxu0 0.0
    %5233 = vmatpush1.msra.mxu0 0.0
    %5234 = vmatprep.subr.mxu0 0.0
    %5235 = vmatpush1.msra.mxu0 0.0
    %5236 = vmatprep.subr.mxu0 0.0
    %5237 = vmatpush1.msra.mxu0 0.0
    %5238 = vmatprep.subr.mxu0 0.0
    %5239 = vmatpush1.msra.mxu0 0.0
    %5240 = vmatprep.subr.mxu0 0.0
    %5241 = vmatpush1.msra.mxu0 %v5210
    %5242 = vmatprep.subr.mxu0 0.0
    %5243 = vmatpush1.msra.mxu0 %v5202
    %5244 = vmatprep.subr.mxu0 0.0
    %5245 = vmatpush2.msra.mxu0 0.0
    %5246 = vmatprep.subr.mxu0 0.0
    %5247 = vmatpush2.msra.mxu0 0.0
    %5248 = vmatprep.subr.mxu0 0.0
    %5249 = vmatpush2.msra.mxu0 0.0
    %5250 = vmatprep.subr.mxu0 0.0
    %5251 = vmatpush2.msra.mxu0 0.0
    %5252 = vmatprep.subr.mxu0 0.0
    %5253 = vmatpush2.msra.mxu0 0.0
    %5254 = vmatprep.subr.mxu0 0.0
    %5255 = vmatpush2.msra.mxu0 0.0
    %5256 = vmatprep.subr.mxu0 0.0
    %5257 = vmatpush2.msra.mxu0 0.0
    %5258 = vmatprep.subr.mxu0 0.0
    %5259 = vmatpush2.msra.mxu0 0.0
    %5260 = vmatprep.subr.mxu0 0.0
    %5261 = vmatpush2.msra.mxu0 0.0
    %5262 = vmatprep.subr.mxu0 0.0
    %5263 = vmatpush2.msra.mxu0 0.0
    %5264 = vmatprep.subr.mxu0 0.0
    %5265 = vmatpush2.msra.mxu0 0.0
    %5266 = vmatprep.subr.mxu0 0.0
    %5267 = vmatpush2.msra.mxu0 0.0
    %5268 = vmatprep.subr.mxu0 0.0
    %5269 = vmatpush2.msra.mxu0 0.0
    %5270 = vmatprep.subr.mxu0 0.0
    %5271 = vmatpush2.msra.mxu0 0.0
    %5272 = vmatprep.subr.mxu0 0.0
    %5273 = vmatpush2.msra.mxu0 0.0
    %5274 = vmatprep.subr.mxu0 0.0
    %5275 = vmatpush2.msra.mxu0 0.0
    %5276 = vmatprep.mubr.f32.mxu0 0.0
    %5277 = vmatmul.mubr.f32.gmra.mxu0 %v4543
    %v5278 = vpop.f32.mrf.mxu0
    %v5279 = vadd.f32 %v5208, %v5278
    %v5280 = vpop.f32.mrf.mxu0
    %5281 = vdwg.mxu0
    %v5282 = vld [vmem:[#allocation2 + $0xe8] sm:$0xff]
    %v5283 = vld [vmem:[#allocation2 + $0xf0] sm:$0x3]
    %v5284 = vld [vmem:[#allocation2 + $0xf2] sm:$0x3]
    %v5285 = vmul.f32 %v5279, %v669
    %v5287 = vsel %vm65, %v5285, 0
    %v5290 = vsel %vm72, %v5283, 0
    %5292 = vmatprep.subr.mxu0 0.0
    %5293 = vmatpush1.msra.mxu0 0.0
    %5294 = vmatprep.subr.mxu0 0.0
    %5295 = vmatpush1.msra.mxu0 0.0
    %5296 = vmatprep.subr.mxu0 0.0
    %5297 = vmatpush1.msra.mxu0 0.0
    %5298 = vmatprep.subr.mxu0 0.0
    %5299 = vmatpush1.msra.mxu0 0.0
    %5300 = vmatprep.subr.mxu0 0.0
    %5301 = vmatpush1.msra.mxu0 0.0
    %5302 = vmatprep.subr.mxu0 0.0
    %5303 = vmatpush1.msra.mxu0 0.0
    %5304 = vmatprep.subr.mxu0 0.0
    %5305 = vmatpush1.msra.mxu0 0.0
    %5306 = vmatprep.subr.mxu0 0.0
    %5307 = vmatpush1.msra.mxu0 0.0
    %5308 = vmatprep.subr.mxu0 0.0
    %5309 = vmatpush1.msra.mxu0 0.0
    %5310 = vmatprep.subr.mxu0 0.0
    %5311 = vmatpush1.msra.mxu0 0.0
    %5312 = vmatprep.subr.mxu0 0.0
    %5313 = vmatpush1.msra.mxu0 0.0
    %5314 = vmatprep.subr.mxu0 0.0
    %5315 = vmatpush1.msra.mxu0 0.0
    %5316 = vmatprep.subr.mxu0 0.0
    %5317 = vmatpush1.msra.mxu0 0.0
    %5318 = vmatprep.subr.mxu0 0.0
    %5319 = vmatpush1.msra.mxu0 0.0
    %5320 = vmatprep.subr.mxu0 0.0
    %5321 = vmatpush1.msra.mxu0 %v5290
    %5322 = vmatprep.subr.mxu0 0.0
    %5323 = vmatpush1.msra.mxu0 %v5282
    %5324 = vmatprep.subr.mxu0 0.0
    %5325 = vmatpush2.msra.mxu0 0.0
    %5326 = vmatprep.subr.mxu0 0.0
    %5327 = vmatpush2.msra.mxu0 0.0
    %5328 = vmatprep.subr.mxu0 0.0
    %5329 = vmatpush2.msra.mxu0 0.0
    %5330 = vmatprep.subr.mxu0 0.0
    %5331 = vmatpush2.msra.mxu0 0.0
    %5332 = vmatprep.subr.mxu0 0.0
    %5333 = vmatpush2.msra.mxu0 0.0
    %5334 = vmatprep.subr.mxu0 0.0
    %5335 = vmatpush2.msra.mxu0 0.0
    %5336 = vmatprep.subr.mxu0 0.0
    %5337 = vmatpush2.msra.mxu0 0.0
    %5338 = vmatprep.subr.mxu0 0.0
    %5339 = vmatpush2.msra.mxu0 0.0
    %5340 = vmatprep.subr.mxu0 0.0
    %5341 = vmatpush2.msra.mxu0 0.0
    %5342 = vmatprep.subr.mxu0 0.0
    %5343 = vmatpush2.msra.mxu0 0.0
    %5344 = vmatprep.subr.mxu0 0.0
    %5345 = vmatpush2.msra.mxu0 0.0
    %5346 = vmatprep.subr.mxu0 0.0
    %5347 = vmatpush2.msra.mxu0 0.0
    %5348 = vmatprep.subr.mxu0 0.0
    %5349 = vmatpush2.msra.mxu0 0.0
    %5350 = vmatprep.subr.mxu0 0.0
    %5351 = vmatpush2.msra.mxu0 0.0
    %5352 = vmatprep.subr.mxu0 0.0
    %5353 = vmatpush2.msra.mxu0 0.0
    %5354 = vmatprep.subr.mxu0 0.0
    %5355 = vmatpush2.msra.mxu0 0.0
    %5356 = vmatprep.mubr.f32.mxu0 0.0
    %5357 = vmatmul.mubr.f32.gmra.mxu0 %v5287
    %v5358 = vpop.f32.mrf.mxu0
    %v5359 = vadd.f32 2.0794415, %v5358
    %v5360 = vpop.f32.mrf.mxu0
    %5361 = vdwg.mxu0
    %v5362 = vmul.f32 %v5279, %v2744
    %v5364 = vsel %vm65, %v5362, 0
    %5366 = vmatprep.subr.mxu0 0.0
    %5367 = vmatpush1.msra.mxu0 0.0
    %5368 = vmatprep.subr.mxu0 0.0
    %5369 = vmatpush1.msra.mxu0 0.0
    %5370 = vmatprep.subr.mxu0 0.0
    %5371 = vmatpush1.msra.mxu0 0.0
    %5372 = vmatprep.subr.mxu0 0.0
    %5373 = vmatpush1.msra.mxu0 0.0
    %5374 = vmatprep.subr.mxu0 0.0
    %5375 = vmatpush1.msra.mxu0 0.0
    %5376 = vmatprep.subr.mxu0 0.0
    %5377 = vmatpush1.msra.mxu0 0.0
    %5378 = vmatprep.subr.mxu0 0.0
    %5379 = vmatpush1.msra.mxu0 0.0
    %5380 = vmatprep.subr.mxu0 0.0
    %5381 = vmatpush1.msra.mxu0 0.0
    %5382 = vmatprep.subr.mxu0 0.0
    %5383 = vmatpush1.msra.mxu0 0.0
    %5384 = vmatprep.subr.mxu0 0.0
    %5385 = vmatpush1.msra.mxu0 0.0
    %5386 = vmatprep.subr.mxu0 0.0
    %5387 = vmatpush1.msra.mxu0 0.0
    %5388 = vmatprep.subr.mxu0 0.0
    %5389 = vmatpush1.msra.mxu0 0.0
    %5390 = vmatprep.subr.mxu0 0.0
    %5391 = vmatpush1.msra.mxu0 0.0
    %5392 = vmatprep.subr.mxu0 0.0
    %5393 = vmatpush1.msra.mxu0 0.0
    %5394 = vmatprep.subr.mxu0 0.0
    %5395 = vmatpush1.msra.mxu0 %v5290
    %5396 = vmatprep.subr.mxu0 0.0
    %5397 = vmatpush1.msra.mxu0 %v5282
    %5398 = vmatprep.subr.mxu0 0.0
    %5399 = vmatpush2.msra.mxu0 0.0
    %5400 = vmatprep.subr.mxu0 0.0
    %5401 = vmatpush2.msra.mxu0 0.0
    %5402 = vmatprep.subr.mxu0 0.0
    %5403 = vmatpush2.msra.mxu0 0.0
    %5404 = vmatprep.subr.mxu0 0.0
    %5405 = vmatpush2.msra.mxu0 0.0
    %5406 = vmatprep.subr.mxu0 0.0
    %5407 = vmatpush2.msra.mxu0 0.0
    %5408 = vmatprep.subr.mxu0 0.0
    %5409 = vmatpush2.msra.mxu0 0.0
    %5410 = vmatprep.subr.mxu0 0.0
    %5411 = vmatpush2.msra.mxu0 0.0
    %5412 = vmatprep.subr.mxu0 0.0
    %5413 = vmatpush2.msra.mxu0 0.0
    %5414 = vmatprep.subr.mxu0 0.0
    %5415 = vmatpush2.msra.mxu0 0.0
    %5416 = vmatprep.subr.mxu0 0.0
    %5417 = vmatpush2.msra.mxu0 0.0
    %5418 = vmatprep.subr.mxu0 0.0
    %5419 = vmatpush2.msra.mxu0 0.0
    %5420 = vmatprep.subr.mxu0 0.0
    %5421 = vmatpush2.msra.mxu0 0.0
    %5422 = vmatprep.subr.mxu0 0.0
    %5423 = vmatpush2.msra.mxu0 0.0
    %5424 = vmatprep.subr.mxu0 0.0
    %5425 = vmatpush2.msra.mxu0 0.0
    %5426 = vmatprep.subr.mxu0 0.0
    %5427 = vmatpush2.msra.mxu0 0.0
    %5428 = vmatprep.subr.mxu0 0.0
    %5429 = vmatpush2.msra.mxu0 0.0
    %5430 = vmatprep.mubr.f32.mxu0 0.0
    %5431 = vmatmul.mubr.f32.gmra.mxu0 %v5364
    %v5432 = vpop.f32.mrf.mxu0
    %v5433 = vadd.f32 0.0, %v5432
    %v5434 = vpop.f32.mrf.mxu0
    %5435 = vdwg.mxu0
    %v5436 = vmul.f32 %v5279, %v5119
    %v5438 = vsel %vm65, %v5436, 0
    %5440 = vmatprep.subr.mxu0 0.0
    %5441 = vmatpush1.msra.mxu0 0.0
    %5442 = vmatprep.subr.mxu0 0.0
    %5443 = vmatpush1.msra.mxu0 0.0
    %5444 = vmatprep.subr.mxu0 0.0
    %5445 = vmatpush1.msra.mxu0 0.0
    %5446 = vmatprep.subr.mxu0 0.0
    %5447 = vmatpush1.msra.mxu0 0.0
    %5448 = vmatprep.subr.mxu0 0.0
    %5449 = vmatpush1.msra.mxu0 0.0
    %5450 = vmatprep.subr.mxu0 0.0
    %5451 = vmatpush1.msra.mxu0 0.0
    %5452 = vmatprep.subr.mxu0 0.0
    %5453 = vmatpush1.msra.mxu0 0.0
    %5454 = vmatprep.subr.mxu0 0.0
    %5455 = vmatpush1.msra.mxu0 0.0
    %5456 = vmatprep.subr.mxu0 0.0
    %5457 = vmatpush1.msra.mxu0 0.0
    %5458 = vmatprep.subr.mxu0 0.0
    %5459 = vmatpush1.msra.mxu0 0.0
    %5460 = vmatprep.subr.mxu0 0.0
    %5461 = vmatpush1.msra.mxu0 0.0
    %5462 = vmatprep.subr.mxu0 0.0
    %5463 = vmatpush1.msra.mxu0 0.0
    %5464 = vmatprep.subr.mxu0 0.0
    %5465 = vmatpush1.msra.mxu0 0.0
    %5466 = vmatprep.subr.mxu0 0.0
    %5467 = vmatpush1.msra.mxu0 0.0
    %5468 = vmatprep.subr.mxu0 0.0
    %5469 = vmatpush1.msra.mxu0 %v5290
    %5470 = vmatprep.subr.mxu0 0.0
    %5471 = vmatpush1.msra.mxu0 %v5282
    %5472 = vmatprep.subr.mxu0 0.0
    %5473 = vmatpush2.msra.mxu0 0.0
    %5474 = vmatprep.subr.mxu0 0.0
    %5475 = vmatpush2.msra.mxu0 0.0
    %5476 = vmatprep.subr.mxu0 0.0
    %5477 = vmatpush2.msra.mxu0 0.0
    %5478 = vmatprep.subr.mxu0 0.0
    %5479 = vmatpush2.msra.mxu0 0.0
    %5480 = vmatprep.subr.mxu0 0.0
    %5481 = vmatpush2.msra.mxu0 0.0
    %5482 = vmatprep.subr.mxu0 0.0
    %5483 = vmatpush2.msra.mxu0 0.0
    %5484 = vmatprep.subr.mxu0 0.0
    %5485 = vmatpush2.msra.mxu0 0.0
    %5486 = vmatprep.subr.mxu0 0.0
    %5487 = vmatpush2.msra.mxu0 0.0
    %5488 = vmatprep.subr.mxu0 0.0
    %5489 = vmatpush2.msra.mxu0 0.0
    %5490 = vmatprep.subr.mxu0 0.0
    %5491 = vmatpush2.msra.mxu0 0.0
    %5492 = vmatprep.subr.mxu0 0.0
    %5493 = vmatpush2.msra.mxu0 0.0
    %5494 = vmatprep.subr.mxu0 0.0
    %5495 = vmatpush2.msra.mxu0 0.0
    %5496 = vmatprep.subr.mxu0 0.0
    %5497 = vmatpush2.msra.mxu0 0.0
    %5498 = vmatprep.subr.mxu0 0.0
    %5499 = vmatpush2.msra.mxu0 0.0
    %5500 = vmatprep.subr.mxu0 0.0
    %5501 = vmatpush2.msra.mxu0 0.0
    %5502 = vmatprep.subr.mxu0 0.0
    %5503 = vmatpush2.msra.mxu0 0.0
    %5504 = vmatprep.mubr.f32.mxu0 0.0
    %5505 = vmatmul.mubr.f32.gmra.mxu0 %v5438
    %v5506 = vpop.f32.mrf.mxu0
    %v5507 = vadd.f32 0.0, %v5506
    %v5508 = vpop.f32.mrf.mxu0
    %5509 = vdwg.mxu0
    %v5510 = vmax.f32 %v5359, %v5433
    %v5511 = vmax.f32 %v5510, %v5507
    %v5512 = vsub.f32 %v5359, %v5511
    %v5513 = vmul.f32 %v5512, 1.442695
    %v5514 = vpow.pop %v5513
    %v5515 = vsub.f32 %v5433, %v5511
    %v5516 = vmul.f32 %v5515, 1.442695
    %v5517 = vpow.pop %v5516
    %v5518 = vsub.f32 %v5507, %v5511
    %v5519 = vmul.f32 %v5518, 1.442695
    %v5520 = vpow.pop %v5519
    %v5521 = vadd.f32 %v5514, %v5517
    %v5522 = vadd.f32 %v5521, %v5520
    %v5523 = vrcp.pop %v5522
    %v5525 = vsel %vm751, %v5514, 0
    %v5528 = vsel %vm72, %v5284, 0
    %5530 = vmatprep.subr.mxu0 0.0
    %5531 = vmatpush1.msra.mxu0 0.0
    %5532 = vmatprep.subr.mxu0 0.0
    %5533 = vmatpush1.msra.mxu0 0.0
    %5534 = vmatprep.subr.mxu0 0.0
    %5535 = vmatpush1.msra.mxu0 0.0
    %5536 = vmatprep.subr.mxu0 0.0
    %5537 = vmatpush1.msra.mxu0 0.0
    %5538 = vmatprep.subr.mxu0 0.0
    %5539 = vmatpush1.msra.mxu0 0.0
    %5540 = vmatprep.subr.mxu0 0.0
    %5541 = vmatpush1.msra.mxu0 0.0
    %5542 = vmatprep.subr.mxu0 0.0
    %5543 = vmatpush1.msra.mxu0 0.0
    %5544 = vmatprep.subr.mxu0 0.0
    %5545 = vmatpush1.msra.mxu0 0.0
    %5546 = vmatprep.subr.mxu0 0.0
    %5547 = vmatpush1.msra.mxu0 0.0
    %5548 = vmatprep.subr.mxu0 0.0
    %5549 = vmatpush1.msra.mxu0 0.0
    %5550 = vmatprep.subr.mxu0 0.0
    %5551 = vmatpush1.msra.mxu0 0.0
    %5552 = vmatprep.subr.mxu0 0.0
    %5553 = vmatpush1.msra.mxu0 0.0
    %5554 = vmatprep.subr.mxu0 0.0
    %5555 = vmatpush1.msra.mxu0 0.0
    %5556 = vmatprep.subr.mxu0 0.0
    %5557 = vmatpush1.msra.mxu0 0.0
    %5558 = vmatprep.subr.mxu0 0.0
    %5559 = vmatpush1.msra.mxu0 0.0
    %5560 = vmatprep.subr.mxu0 0.0
    %5561 = vmatpush1.msra.mxu0 %v5528
    %5562 = vmatprep.subr.mxu0 0.0
    %5563 = vmatpush2.msra.mxu0 0.0
    %5564 = vmatprep.subr.mxu0 0.0
    %5565 = vmatpush2.msra.mxu0 0.0
    %5566 = vmatprep.subr.mxu0 0.0
    %5567 = vmatpush2.msra.mxu0 0.0
    %5568 = vmatprep.subr.mxu0 0.0
    %5569 = vmatpush2.msra.mxu0 0.0
    %5570 = vmatprep.subr.mxu0 0.0
    %5571 = vmatpush2.msra.mxu0 0.0
    %5572 = vmatprep.subr.mxu0 0.0
    %5573 = vmatpush2.msra.mxu0 0.0
    %5574 = vmatprep.subr.mxu0 0.0
    %5575 = vmatpush2.msra.mxu0 0.0
    %5576 = vmatprep.subr.mxu0 0.0
    %5577 = vmatpush2.msra.mxu0 0.0
    %5578 = vmatprep.subr.mxu0 0.0
    %5579 = vmatpush2.msra.mxu0 0.0
    %5580 = vmatprep.subr.mxu0 0.0
    %5581 = vmatpush2.msra.mxu0 0.0
    %5582 = vmatprep.subr.mxu0 0.0
    %5583 = vmatpush2.msra.mxu0 0.0
    %5584 = vmatprep.subr.mxu0 0.0
    %5585 = vmatpush2.msra.mxu0 0.0
    %5586 = vmatprep.subr.mxu0 0.0
    %5587 = vmatpush2.msra.mxu0 0.0
    %5588 = vmatprep.subr.mxu0 0.0
    %5589 = vmatpush2.msra.mxu0 0.0
    %5590 = vmatprep.subr.mxu0 0.0
    %5591 = vmatpush2.msra.mxu0 0.0
    %5592 = vmatprep.subr.mxu0 0.0
    %5593 = vmatpush2.msra.mxu0 0.0
    %5594 = vmatprep.mubr.f32.mxu0 0.0
    %5595 = vmatmul.mubr.f32.gmra.mxu0 %v5525
    %v5596 = vpop.f32.mrf.mxu0
    %v5597 = vadd.f32 0.0, %v5596
    %v5598 = vpop.f32.mrf.mxu0
    %5599 = vdwg.mxu0
    %v5600 = vmul.f32 %v5597, %v831
    %v5602 = vsel %vm751, %v5517, 0
    %5604 = vmatprep.subr.mxu0 0.0
    %5605 = vmatpush1.msra.mxu0 0.0
    %5606 = vmatprep.subr.mxu0 0.0
    %5607 = vmatpush1.msra.mxu0 0.0
    %5608 = vmatprep.subr.mxu0 0.0
    %5609 = vmatpush1.msra.mxu0 0.0
    %5610 = vmatprep.subr.mxu0 0.0
    %5611 = vmatpush1.msra.mxu0 0.0
    %5612 = vmatprep.subr.mxu0 0.0
    %5613 = vmatpush1.msra.mxu0 0.0
    %5614 = vmatprep.subr.mxu0 0.0
    %5615 = vmatpush1.msra.mxu0 0.0
    %5616 = vmatprep.subr.mxu0 0.0
    %5617 = vmatpush1.msra.mxu0 0.0
    %5618 = vmatprep.subr.mxu0 0.0
    %5619 = vmatpush1.msra.mxu0 0.0
    %5620 = vmatprep.subr.mxu0 0.0
    %5621 = vmatpush1.msra.mxu0 0.0
    %5622 = vmatprep.subr.mxu0 0.0
    %5623 = vmatpush1.msra.mxu0 0.0
    %5624 = vmatprep.subr.mxu0 0.0
    %5625 = vmatpush1.msra.mxu0 0.0
    %5626 = vmatprep.subr.mxu0 0.0
    %5627 = vmatpush1.msra.mxu0 0.0
    %5628 = vmatprep.subr.mxu0 0.0
    %5629 = vmatpush1.msra.mxu0 0.0
    %5630 = vmatprep.subr.mxu0 0.0
    %5631 = vmatpush1.msra.mxu0 0.0
    %5632 = vmatprep.subr.mxu0 0.0
    %5633 = vmatpush1.msra.mxu0 0.0
    %5634 = vmatprep.subr.mxu0 0.0
    %5635 = vmatpush1.msra.mxu0 %v5528
    %5636 = vmatprep.subr.mxu0 0.0
    %5637 = vmatpush2.msra.mxu0 0.0
    %5638 = vmatprep.subr.mxu0 0.0
    %5639 = vmatpush2.msra.mxu0 0.0
    %5640 = vmatprep.subr.mxu0 0.0
    %5641 = vmatpush2.msra.mxu0 0.0
    %5642 = vmatprep.subr.mxu0 0.0
    %5643 = vmatpush2.msra.mxu0 0.0
    %5644 = vmatprep.subr.mxu0 0.0
    %5645 = vmatpush2.msra.mxu0 0.0
    %5646 = vmatprep.subr.mxu0 0.0
    %5647 = vmatpush2.msra.mxu0 0.0
    %5648 = vmatprep.subr.mxu0 0.0
    %5649 = vmatpush2.msra.mxu0 0.0
    %5650 = vmatprep.subr.mxu0 0.0
    %5651 = vmatpush2.msra.mxu0 0.0
    %5652 = vmatprep.subr.mxu0 0.0
    %5653 = vmatpush2.msra.mxu0 0.0
    %5654 = vmatprep.subr.mxu0 0.0
    %5655 = vmatpush2.msra.mxu0 0.0
    %5656 = vmatprep.subr.mxu0 0.0
    %5657 = vmatpush2.msra.mxu0 0.0
    %5658 = vmatprep.subr.mxu0 0.0
    %5659 = vmatpush2.msra.mxu0 0.0
    %5660 = vmatprep.subr.mxu0 0.0
    %5661 = vmatpush2.msra.mxu0 0.0
    %5662 = vmatprep.subr.mxu0 0.0
    %5663 = vmatpush2.msra.mxu0 0.0
    %5664 = vmatprep.subr.mxu0 0.0
    %5665 = vmatpush2.msra.mxu0 0.0
    %5666 = vmatprep.subr.mxu0 0.0
    %5667 = vmatpush2.msra.mxu0 0.0
    %5668 = vmatprep.mubr.f32.mxu0 0.0
    %5669 = vmatmul.mubr.f32.gmra.mxu0 %v5602
    %v5670 = vpop.f32.mrf.mxu0
    %v5671 = vadd.f32 0.0, %v5670
    %v5672 = vpop.f32.mrf.mxu0
    %5673 = vdwg.mxu0
    %v5674 = vmul.f32 %v5671, %v2824
    %v5675 = vadd.f32 %v5600, %v5674
    %v5677 = vsel %vm751, %v5520, 0
    %5679 = vmatprep.subr.mxu0 0.0
    %5680 = vmatpush1.msra.mxu0 0.0
    %5681 = vmatprep.subr.mxu0 0.0
    %5682 = vmatpush1.msra.mxu0 0.0
    %5683 = vmatprep.subr.mxu0 0.0
    %5684 = vmatpush1.msra.mxu0 0.0
    %5685 = vmatprep.subr.mxu0 0.0
    %5686 = vmatpush1.msra.mxu0 0.0
    %5687 = vmatprep.subr.mxu0 0.0
    %5688 = vmatpush1.msra.mxu0 0.0
    %5689 = vmatprep.subr.mxu0 0.0
    %5690 = vmatpush1.msra.mxu0 0.0
    %5691 = vmatprep.subr.mxu0 0.0
    %5692 = vmatpush1.msra.mxu0 0.0
    %5693 = vmatprep.subr.mxu0 0.0
    %5694 = vmatpush1.msra.mxu0 0.0
    %5695 = vmatprep.subr.mxu0 0.0
    %5696 = vmatpush1.msra.mxu0 0.0
    %5697 = vmatprep.subr.mxu0 0.0
    %5698 = vmatpush1.msra.mxu0 0.0
    %5699 = vmatprep.subr.mxu0 0.0
    %5700 = vmatpush1.msra.mxu0 0.0
    %5701 = vmatprep.subr.mxu0 0.0
    %5702 = vmatpush1.msra.mxu0 0.0
    %5703 = vmatprep.subr.mxu0 0.0
    %5704 = vmatpush1.msra.mxu0 0.0
    %5705 = vmatprep.subr.mxu0 0.0
    %5706 = vmatpush1.msra.mxu0 0.0
    %5707 = vmatprep.subr.mxu0 0.0
    %5708 = vmatpush1.msra.mxu0 0.0
    %5709 = vmatprep.subr.mxu0 0.0
    %5710 = vmatpush1.msra.mxu0 %v5528
    %5711 = vmatprep.subr.mxu0 0.0
    %5712 = vmatpush2.msra.mxu0 0.0
    %5713 = vmatprep.subr.mxu0 0.0
    %5714 = vmatpush2.msra.mxu0 0.0
    %5715 = vmatprep.subr.mxu0 0.0
    %5716 = vmatpush2.msra.mxu0 0.0
    %5717 = vmatprep.subr.mxu0 0.0
    %5718 = vmatpush2.msra.mxu0 0.0
    %5719 = vmatprep.subr.mxu0 0.0
    %5720 = vmatpush2.msra.mxu0 0.0
    %5721 = vmatprep.subr.mxu0 0.0
    %5722 = vmatpush2.msra.mxu0 0.0
    %5723 = vmatprep.subr.mxu0 0.0
    %5724 = vmatpush2.msra.mxu0 0.0
    %5725 = vmatprep.subr.mxu0 0.0
    %5726 = vmatpush2.msra.mxu0 0.0
    %5727 = vmatprep.subr.mxu0 0.0
    %5728 = vmatpush2.msra.mxu0 0.0
    %5729 = vmatprep.subr.mxu0 0.0
    %5730 = vmatpush2.msra.mxu0 0.0
    %5731 = vmatprep.subr.mxu0 0.0
    %5732 = vmatpush2.msra.mxu0 0.0
    %5733 = vmatprep.subr.mxu0 0.0
    %5734 = vmatpush2.msra.mxu0 0.0
    %5735 = vmatprep.subr.mxu0 0.0
    %5736 = vmatpush2.msra.mxu0 0.0
    %5737 = vmatprep.subr.mxu0 0.0
    %5738 = vmatpush2.msra.mxu0 0.0
    %5739 = vmatprep.subr.mxu0 0.0
    %5740 = vmatpush2.msra.mxu0 0.0
    %5741 = vmatprep.subr.mxu0 0.0
    %5742 = vmatpush2.msra.mxu0 0.0
    %5743 = vmatprep.mubr.f32.mxu0 0.0
    %5744 = vmatmul.mubr.f32.gmra.mxu0 %v5677
    %v5745 = vpop.f32.mrf.mxu0
    %v5746 = vadd.f32 0.0, %v5745
    %v5747 = vpop.f32.mrf.mxu0
    %5748 = vdwg.mxu0
    %v5749 = vmul.f32 %v5746, %v5199
    %v5750 = vadd.f32 %v5675, %v5749
    %v5752 = vsel %vm751, %v5523, 0
    %5754 = vmatprep.subr.mxu0 0.0
    %5755 = vmatpush1.msra.mxu0 0.0
    %5756 = vmatprep.subr.mxu0 0.0
    %5757 = vmatpush1.msra.mxu0 0.0
    %5758 = vmatprep.subr.mxu0 0.0
    %5759 = vmatpush1.msra.mxu0 0.0
    %5760 = vmatprep.subr.mxu0 0.0
    %5761 = vmatpush1.msra.mxu0 0.0
    %5762 = vmatprep.subr.mxu0 0.0
    %5763 = vmatpush1.msra.mxu0 0.0
    %5764 = vmatprep.subr.mxu0 0.0
    %5765 = vmatpush1.msra.mxu0 0.0
    %5766 = vmatprep.subr.mxu0 0.0
    %5767 = vmatpush1.msra.mxu0 0.0
    %5768 = vmatprep.subr.mxu0 0.0
    %5769 = vmatpush1.msra.mxu0 0.0
    %5770 = vmatprep.subr.mxu0 0.0
    %5771 = vmatpush1.msra.mxu0 0.0
    %5772 = vmatprep.subr.mxu0 0.0
    %5773 = vmatpush1.msra.mxu0 0.0
    %5774 = vmatprep.subr.mxu0 0.0
    %5775 = vmatpush1.msra.mxu0 0.0
    %5776 = vmatprep.subr.mxu0 0.0
    %5777 = vmatpush1.msra.mxu0 0.0
    %5778 = vmatprep.subr.mxu0 0.0
    %5779 = vmatpush1.msra.mxu0 0.0
    %5780 = vmatprep.subr.mxu0 0.0
    %5781 = vmatpush1.msra.mxu0 0.0
    %5782 = vmatprep.subr.mxu0 0.0
    %5783 = vmatpush1.msra.mxu0 0.0
    %5784 = vmatprep.subr.mxu0 0.0
    %5785 = vmatpush1.msra.mxu0 %v5528
    %5786 = vmatprep.subr.mxu0 0.0
    %5787 = vmatpush2.msra.mxu0 0.0
    %5788 = vmatprep.subr.mxu0 0.0
    %5789 = vmatpush2.msra.mxu0 0.0
    %5790 = vmatprep.subr.mxu0 0.0
    %5791 = vmatpush2.msra.mxu0 0.0
    %5792 = vmatprep.subr.mxu0 0.0
    %5793 = vmatpush2.msra.mxu0 0.0
    %5794 = vmatprep.subr.mxu0 0.0
    %5795 = vmatpush2.msra.mxu0 0.0
    %5796 = vmatprep.subr.mxu0 0.0
    %5797 = vmatpush2.msra.mxu0 0.0
    %5798 = vmatprep.subr.mxu0 0.0
    %5799 = vmatpush2.msra.mxu0 0.0
    %5800 = vmatprep.subr.mxu0 0.0
    %5801 = vmatpush2.msra.mxu0 0.0
    %5802 = vmatprep.subr.mxu0 0.0
    %5803 = vmatpush2.msra.mxu0 0.0
    %5804 = vmatprep.subr.mxu0 0.0
    %5805 = vmatpush2.msra.mxu0 0.0
    %5806 = vmatprep.subr.mxu0 0.0
    %5807 = vmatpush2.msra.mxu0 0.0
    %5808 = vmatprep.subr.mxu0 0.0
    %5809 = vmatpush2.msra.mxu0 0.0
    %5810 = vmatprep.subr.mxu0 0.0
    %5811 = vmatpush2.msra.mxu0 0.0
    %5812 = vmatprep.subr.mxu0 0.0
    %5813 = vmatpush2.msra.mxu0 0.0
    %5814 = vmatprep.subr.mxu0 0.0
    %5815 = vmatpush2.msra.mxu0 0.0
    %5816 = vmatprep.subr.mxu0 0.0
    %5817 = vmatpush2.msra.mxu0 0.0
    %5818 = vmatprep.mubr.f32.mxu0 0.0
    %5819 = vmatmul.mubr.f32.gmra.mxu0 %v5752
    %v5820 = vpop.f32.mrf.mxu0
    %v5821 = vadd.f32 0.0, %v5820
    %v5822 = vpop.f32.mrf.mxu0
    %5823 = vdwg.mxu0
    %v5824 = vmul.f32 %v5750, %v5821
    %v5825 = vld [vmem:[#allocation2 + $0x39] sm:$0xff]
    %v5826 = vld [vmem:[#allocation2 + $0x41] sm:$0x3]
    %v5827 = vld [vmem:[#allocation2 + $0x43] sm:$0x1]
    %v5828 = vlaneseq
    %v5829 = vshrl.u32 %v5828, 7
    %v5830 = vsub.s32 0, %v5829
    %v5831 = vrot.slane %v5827, %v5830
    %v5833 = vsel %vm65, %v5824, 0
    %v5836 = vsel %vm72, %v5826, 0
    %5838 = vmatprep.subr.mxu0 0.0
    %5839 = vmatpush1.msra.mxu0 0.0
    %5840 = vmatprep.subr.mxu0 0.0
    %5841 = vmatpush1.msra.mxu0 0.0
    %5842 = vmatprep.subr.mxu0 0.0
    %5843 = vmatpush1.msra.mxu0 0.0
    %5844 = vmatprep.subr.mxu0 0.0
    %5845 = vmatpush1.msra.mxu0 0.0
    %5846 = vmatprep.subr.mxu0 0.0
    %5847 = vmatpush1.msra.mxu0 0.0
    %5848 = vmatprep.subr.mxu0 0.0
    %5849 = vmatpush1.msra.mxu0 0.0
    %5850 = vmatprep.subr.mxu0 0.0
    %5851 = vmatpush1.msra.mxu0 0.0
    %5852 = vmatprep.subr.mxu0 0.0
    %5853 = vmatpush1.msra.mxu0 0.0
    %5854 = vmatprep.subr.mxu0 0.0
    %5855 = vmatpush1.msra.mxu0 0.0
    %5856 = vmatprep.subr.mxu0 0.0
    %5857 = vmatpush1.msra.mxu0 0.0
    %5858 = vmatprep.subr.mxu0 0.0
    %5859 = vmatpush1.msra.mxu0 0.0
    %5860 = vmatprep.subr.mxu0 0.0
    %5861 = vmatpush1.msra.mxu0 0.0
    %5862 = vmatprep.subr.mxu0 0.0
    %5863 = vmatpush1.msra.mxu0 0.0
    %5864 = vmatprep.subr.mxu0 0.0
    %5865 = vmatpush1.msra.mxu0 0.0
    %5866 = vmatprep.subr.mxu0 0.0
    %5867 = vmatpush1.msra.mxu0 %v5836
    %5868 = vmatprep.subr.mxu0 0.0
    %5869 = vmatpush1.msra.mxu0 %v5825
    %5870 = vmatprep.subr.mxu0 0.0
    %5871 = vmatpush2.msra.mxu0 0.0
    %5872 = vmatprep.subr.mxu0 0.0
    %5873 = vmatpush2.msra.mxu0 0.0
    %5874 = vmatprep.subr.mxu0 0.0
    %5875 = vmatpush2.msra.mxu0 0.0
    %5876 = vmatprep.subr.mxu0 0.0
    %5877 = vmatpush2.msra.mxu0 0.0
    %5878 = vmatprep.subr.mxu0 0.0
    %5879 = vmatpush2.msra.mxu0 0.0
    %5880 = vmatprep.subr.mxu0 0.0
    %5881 = vmatpush2.msra.mxu0 0.0
    %5882 = vmatprep.subr.mxu0 0.0
    %5883 = vmatpush2.msra.mxu0 0.0
    %5884 = vmatprep.subr.mxu0 0.0
    %5885 = vmatpush2.msra.mxu0 0.0
    %5886 = vmatprep.subr.mxu0 0.0
    %5887 = vmatpush2.msra.mxu0 0.0
    %5888 = vmatprep.subr.mxu0 0.0
    %5889 = vmatpush2.msra.mxu0 0.0
    %5890 = vmatprep.subr.mxu0 0.0
    %5891 = vmatpush2.msra.mxu0 0.0
    %5892 = vmatprep.subr.mxu0 0.0
    %5893 = vmatpush2.msra.mxu0 0.0
    %5894 = vmatprep.subr.mxu0 0.0
    %5895 = vmatpush2.msra.mxu0 0.0
    %5896 = vmatprep.subr.mxu0 0.0
    %5897 = vmatpush2.msra.mxu0 0.0
    %5898 = vmatprep.subr.mxu0 0.0
    %5899 = vmatpush2.msra.mxu0 0.0
    %5900 = vmatprep.subr.mxu0 0.0
    %5901 = vmatpush2.msra.mxu0 0.0
    %5902 = vmatprep.mubr.f32.mxu0 0.0
    %5903 = vmatmul.mubr.f32.gmra.mxu0 %v5833
    %v5904 = vpop.f32.mrf.mxu0
    %v5905 = vadd.f32 %v5831, %v5904
    %v5906 = vpop.f32.mrf.mxu0
    %5907 = vdwg.mxu0
    %v5908 = vadd.f32 %v4534, %v5905
    %v5909 = vsel %vm991, %v5908, 0.0
    %5910 = vadd.xlane.f32.xlu0 %v5909
    %v5911 = vpop.xlane.xlu0 %5910
    %v5912 = vmul.f32 %v5911, %v995
    %v5913 = vsub.f32 %v5908, %v5912
    %v5914 = vmul.f32 %v5913, %v5913
    %v5915 = vsel %vm991, %v5914, 0.0
    %5916 = vadd.xlane.f32.xlu0 %v5915
    %v5917 = vpop.xlane.xlu0 %5916
    %v5918 = vmul.f32 %v5917, %v995
    %v5919 = vadd.f32 %v5918, 1e-05
    %v5920 = vrsqrt.pop %v5919
    %v5921 = vmul.f32 %v5913, %v5920
    %v5922 = vld [vmem:[#allocation2 + $0x7a] sm:$0x1]
    %v5923 = vlaneseq
    %v5924 = vshrl.u32 %v5923, 7
    %v5925 = vsub.s32 0, %v5924
    %v5926 = vrot.slane %v5922, %v5925
    %v5927 = vmul.f32 %v5921, %v5926
    %v5928 = vld [vmem:[#allocation2 + $0x7b] sm:$0x1]
    %v5929 = vlaneseq
    %v5930 = vshrl.u32 %v5929, 7
    %v5931 = vsub.s32 0, %v5930
    %v5932 = vrot.slane %v5928, %v5931
    %v5933 = vadd.f32 %v5927, %v5932
    %v5934 = vld [vmem:[#allocation2 + $0x44] sm:$0xff]
    %v5935 = vld [vmem:[#allocation2 + $0x4c] sm:$0x3]
    %v5936 = vld [vmem:[#allocation2 + $0x4e] sm:$0x1]
    %v5937 = vlaneseq
    %v5938 = vshrl.u32 %v5937, 7
    %v5939 = vsub.s32 0, %v5938
    %v5940 = vrot.slane %v5936, %v5939
    %v5942 = vsel %vm65, %v5933, 0
    %v5945 = vsel %vm72, %v5935, 0
    %5947 = vmatprep.subr.mxu0 0.0
    %5948 = vmatpush1.msra.mxu0 0.0
    %5949 = vmatprep.subr.mxu0 0.0
    %5950 = vmatpush1.msra.mxu0 0.0
    %5951 = vmatprep.subr.mxu0 0.0
    %5952 = vmatpush1.msra.mxu0 0.0
    %5953 = vmatprep.subr.mxu0 0.0
    %5954 = vmatpush1.msra.mxu0 0.0
    %5955 = vmatprep.subr.mxu0 0.0
    %5956 = vmatpush1.msra.mxu0 0.0
    %5957 = vmatprep.subr.mxu0 0.0
    %5958 = vmatpush1.msra.mxu0 0.0
    %5959 = vmatprep.subr.mxu0 0.0
    %5960 = vmatpush1.msra.mxu0 0.0
    %5961 = vmatprep.subr.mxu0 0.0
    %5962 = vmatpush1.msra.mxu0 0.0
    %5963 = vmatprep.subr.mxu0 0.0
    %5964 = vmatpush1.msra.mxu0 0.0
    %5965 = vmatprep.subr.mxu0 0.0
    %5966 = vmatpush1.msra.mxu0 0.0
    %5967 = vmatprep.subr.mxu0 0.0
    %5968 = vmatpush1.msra.mxu0 0.0
    %5969 = vmatprep.subr.mxu0 0.0
    %5970 = vmatpush1.msra.mxu0 0.0
    %5971 = vmatprep.subr.mxu0 0.0
    %5972 = vmatpush1.msra.mxu0 0.0
    %5973 = vmatprep.subr.mxu0 0.0
    %5974 = vmatpush1.msra.mxu0 0.0
    %5975 = vmatprep.subr.mxu0 0.0
    %5976 = vmatpush1.msra.mxu0 %v5945
    %5977 = vmatprep.subr.mxu0 0.0
    %5978 = vmatpush1.msra.mxu0 %v5934
    %5979 = vmatprep.subr.mxu0 0.0
    %5980 = vmatpush2.msra.mxu0 0.0
    %5981 = vmatprep.subr.mxu0 0.0
    %5982 = vmatpush2.msra.mxu0 0.0
    %5983 = vmatprep.subr.mxu0 0.0
    %5984 = vmatpush2.msra.mxu0 0.0
    %5985 = vmatprep.subr.mxu0 0.0
    %5986 = vmatpush2.msra.mxu0 0.0
    %5987 = vmatprep.subr.mxu0 0.0
    %5988 = vmatpush2.msra.mxu0 0.0
    %5989 = vmatprep.subr.mxu0 0.0
    %5990 = vmatpush2.msra.mxu0 0.0
    %5991 = vmatprep.subr.mxu0 0.0
    %5992 = vmatpush2.msra.mxu0 0.0
    %5993 = vmatprep.subr.mxu0 0.0
    %5994 = vmatpush2.msra.mxu0 0.0
    %5995 = vmatprep.subr.mxu0 0.0
    %5996 = vmatpush2.msra.mxu0 0.0
    %5997 = vmatprep.subr.mxu0 0.0
    %5998 = vmatpush2.msra.mxu0 0.0
    %5999 = vmatprep.subr.mxu0 0.0
    %6000 = vmatpush2.msra.mxu0 0.0
    %6001 = vmatprep.subr.mxu0 0.0
    %6002 = vmatpush2.msra.mxu0 0.0
    %6003 = vmatprep.subr.mxu0 0.0
    %6004 = vmatpush2.msra.mxu0 0.0
    %6005 = vmatprep.subr.mxu0 0.0
    %6006 = vmatpush2.msra.mxu0 0.0
    %6007 = vmatprep.subr.mxu0 0.0
    %6008 = vmatpush2.msra.mxu0 0.0
    %6009 = vmatprep.subr.mxu0 0.0
    %6010 = vmatpush2.msra.mxu0 0.0
    %6011 = vmatprep.mubr.f32.mxu0 0.0
    %6012 = vmatmul.mubr.f32.gmra.mxu0 %v5942
    %v6013 = vpop.f32.mrf.mxu0
    %v6014 = vadd.f32 %v5940, %v6013
    %v6015 = vpop.f32.mrf.mxu0
    %6016 = vdwg.mxu0
    %v6019 = vunpack.c.l.s4 1966171168
    %v6020 = vunpack.c.0.s8 %v6019
    %v6021 = vlaneseq
    %v6022 = vshrl.u32 %v6021, 7
    %v6023 = vsub.s32 %v6020, %v6022
    %v6024 = vrot.slane %v6014, %v6023
    %v6025 = vcombine.high %v6024, %v6024
    %v6027 = vunpack.c.l.s4 1966171168
    %v6028 = vunpack.c.0.s8 %v6027
    %v6029 = vlaneseq
    %v6030 = vshrl.u32 %v6029, 7
    %v6031 = vsub.s32 %v6028, %v6030
    %v6032 = vrot.slane %v6024, %v6031
    %v6034 = vunpack.c.l.s4 1966171168
    %v6035 = vunpack.c.0.s8 %v6034
    %v6036 = vlaneseq
    %v6037 = vshrl.u32 %v6036, 7
    %v6038 = vsub.s32 %v6035, %v6037
    %v6039 = vrot.slane %v6025, %v6038
    %v6042 = vld [vmem:[#allocation2 + $0xf4] sm:$0x1]
    %v6043 = vmul.f32 %v6032, %v6042
    %v6044 = vmul.f32 %v6039, %v6042
    %v6046 = vsel %vm65, %v6043, 0
    %6048 = vmatprep.subr.mxu0 0.0
    %6049 = vmatpush1.xpose.msra.mxu0 0.0
    %6050 = vmatprep.subr.mxu0 0.0
    %6051 = vmatpush1.xpose.msra.mxu0 0.0
    %6052 = vmatprep.subr.mxu0 0.0
    %6053 = vmatpush1.xpose.msra.mxu0 0.0
    %6054 = vmatprep.subr.mxu0 0.0
    %6055 = vmatpush1.xpose.msra.mxu0 0.0
    %6056 = vmatprep.subr.mxu0 0.0
    %6057 = vmatpush1.xpose.msra.mxu0 0.0
    %6058 = vmatprep.subr.mxu0 0.0
    %6059 = vmatpush1.xpose.msra.mxu0 0.0
    %6060 = vmatprep.subr.mxu0 0.0
    %6061 = vmatpush1.xpose.msra.mxu0 0.0
    %6062 = vmatprep.subr.mxu0 0.0
    %6063 = vmatpush1.xpose.msra.mxu0 0.0
    %6064 = vmatprep.subr.mxu0 0.0
    %6065 = vmatpush1.xpose.msra.mxu0 0.0
    %6066 = vmatprep.subr.mxu0 0.0
    %6067 = vmatpush1.xpose.msra.mxu0 0.0
    %6068 = vmatprep.subr.mxu0 0.0
    %6069 = vmatpush1.xpose.msra.mxu0 0.0
    %6070 = vmatprep.subr.mxu0 0.0
    %6071 = vmatpush1.xpose.msra.mxu0 0.0
    %6072 = vmatprep.subr.mxu0 0.0
    %6073 = vmatpush1.xpose.msra.mxu0 0.0
    %6074 = vmatprep.subr.mxu0 0.0
    %6075 = vmatpush1.xpose.msra.mxu0 0.0
    %6076 = vmatprep.subr.mxu0 0.0
    %6077 = vmatpush1.xpose.msra.mxu0 0.0
    %6078 = vmatprep.subr.mxu0 0.0
    %6079 = vmatpush1.xpose.msra.mxu0 %v1133
    %6080 = vmatprep.subr.mxu0 0.0
    %6081 = vmatpush2.xpose.msra.mxu0 0.0
    %6082 = vmatprep.subr.mxu0 0.0
    %6083 = vmatpush2.xpose.msra.mxu0 0.0
    %6084 = vmatprep.subr.mxu0 0.0
    %6085 = vmatpush2.xpose.msra.mxu0 0.0
    %6086 = vmatprep.subr.mxu0 0.0
    %6087 = vmatpush2.xpose.msra.mxu0 0.0
    %6088 = vmatprep.subr.mxu0 0.0
    %6089 = vmatpush2.xpose.msra.mxu0 0.0
    %6090 = vmatprep.subr.mxu0 0.0
    %6091 = vmatpush2.xpose.msra.mxu0 0.0
    %6092 = vmatprep.subr.mxu0 0.0
    %6093 = vmatpush2.xpose.msra.mxu0 0.0
    %6094 = vmatprep.subr.mxu0 0.0
    %6095 = vmatpush2.xpose.msra.mxu0 0.0
    %6096 = vmatprep.subr.mxu0 0.0
    %6097 = vmatpush2.xpose.msra.mxu0 0.0
    %6098 = vmatprep.subr.mxu0 0.0
    %6099 = vmatpush2.xpose.msra.mxu0 0.0
    %6100 = vmatprep.subr.mxu0 0.0
    %6101 = vmatpush2.xpose.msra.mxu0 0.0
    %6102 = vmatprep.subr.mxu0 0.0
    %6103 = vmatpush2.xpose.msra.mxu0 0.0
    %6104 = vmatprep.subr.mxu0 0.0
    %6105 = vmatpush2.xpose.msra.mxu0 0.0
    %6106 = vmatprep.subr.mxu0 0.0
    %6107 = vmatpush2.xpose.msra.mxu0 0.0
    %6108 = vmatprep.subr.mxu0 0.0
    %6109 = vmatpush2.xpose.msra.mxu0 0.0
    %6110 = vmatprep.subr.mxu0 0.0
    %6111 = vmatpush2.xpose.msra.mxu0 0.0
    %6112 = vmatprep.mubr.f32.mxu0 0.0
    %6113 = vmatmul.mubr.f32.gmra.mxu0 %v6046
    %v6114 = vpop.f32.mrf.mxu0
    %v6115 = vadd.f32 0.0, %v6114
    %v6116 = vpop.f32.mrf.mxu0
    %6117 = vdwg.mxu0
    %v6119 = vsel %vm65, %v6044, 0
    %6121 = vmatprep.subr.mxu0 0.0
    %6122 = vmatpush1.xpose.msra.mxu0 0.0
    %6123 = vmatprep.subr.mxu0 0.0
    %6124 = vmatpush1.xpose.msra.mxu0 0.0
    %6125 = vmatprep.subr.mxu0 0.0
    %6126 = vmatpush1.xpose.msra.mxu0 0.0
    %6127 = vmatprep.subr.mxu0 0.0
    %6128 = vmatpush1.xpose.msra.mxu0 0.0
    %6129 = vmatprep.subr.mxu0 0.0
    %6130 = vmatpush1.xpose.msra.mxu0 0.0
    %6131 = vmatprep.subr.mxu0 0.0
    %6132 = vmatpush1.xpose.msra.mxu0 0.0
    %6133 = vmatprep.subr.mxu0 0.0
    %6134 = vmatpush1.xpose.msra.mxu0 0.0
    %6135 = vmatprep.subr.mxu0 0.0
    %6136 = vmatpush1.xpose.msra.mxu0 0.0
    %6137 = vmatprep.subr.mxu0 0.0
    %6138 = vmatpush1.xpose.msra.mxu0 0.0
    %6139 = vmatprep.subr.mxu0 0.0
    %6140 = vmatpush1.xpose.msra.mxu0 0.0
    %6141 = vmatprep.subr.mxu0 0.0
    %6142 = vmatpush1.xpose.msra.mxu0 0.0
    %6143 = vmatprep.subr.mxu0 0.0
    %6144 = vmatpush1.xpose.msra.mxu0 0.0
    %6145 = vmatprep.subr.mxu0 0.0
    %6146 = vmatpush1.xpose.msra.mxu0 0.0
    %6147 = vmatprep.subr.mxu0 0.0
    %6148 = vmatpush1.xpose.msra.mxu0 0.0
    %6149 = vmatprep.subr.mxu0 0.0
    %6150 = vmatpush1.xpose.msra.mxu0 0.0
    %6151 = vmatprep.subr.mxu0 0.0
    %6152 = vmatpush1.xpose.msra.mxu0 %v1209
    %6153 = vmatprep.subr.mxu0 0.0
    %6154 = vmatpush2.xpose.msra.mxu0 0.0
    %6155 = vmatprep.subr.mxu0 0.0
    %6156 = vmatpush2.xpose.msra.mxu0 0.0
    %6157 = vmatprep.subr.mxu0 0.0
    %6158 = vmatpush2.xpose.msra.mxu0 0.0
    %6159 = vmatprep.subr.mxu0 0.0
    %6160 = vmatpush2.xpose.msra.mxu0 0.0
    %6161 = vmatprep.subr.mxu0 0.0
    %6162 = vmatpush2.xpose.msra.mxu0 0.0
    %6163 = vmatprep.subr.mxu0 0.0
    %6164 = vmatpush2.xpose.msra.mxu0 0.0
    %6165 = vmatprep.subr.mxu0 0.0
    %6166 = vmatpush2.xpose.msra.mxu0 0.0
    %6167 = vmatprep.subr.mxu0 0.0
    %6168 = vmatpush2.xpose.msra.mxu0 0.0
    %6169 = vmatprep.subr.mxu0 0.0
    %6170 = vmatpush2.xpose.msra.mxu0 0.0
    %6171 = vmatprep.subr.mxu0 0.0
    %6172 = vmatpush2.xpose.msra.mxu0 0.0
    %6173 = vmatprep.subr.mxu0 0.0
    %6174 = vmatpush2.xpose.msra.mxu0 0.0
    %6175 = vmatprep.subr.mxu0 0.0
    %6176 = vmatpush2.xpose.msra.mxu0 0.0
    %6177 = vmatprep.subr.mxu0 0.0
    %6178 = vmatpush2.xpose.msra.mxu0 0.0
    %6179 = vmatprep.subr.mxu0 0.0
    %6180 = vmatpush2.xpose.msra.mxu0 0.0
    %6181 = vmatprep.subr.mxu0 0.0
    %6182 = vmatpush2.xpose.msra.mxu0 0.0
    %6183 = vmatprep.subr.mxu0 0.0
    %6184 = vmatpush2.xpose.msra.mxu0 0.0
    %6185 = vmatprep.mubr.f32.mxu0 0.0
    %6186 = vmatmul.mubr.f32.gmra.mxu0 %v6119
    %v6187 = vpop.f32.mrf.mxu0
    %v6188 = vadd.f32 0.0, %v6187
    %v6189 = vpop.f32.mrf.mxu0
    %6190 = vdwg.mxu0
    %v6191 = vsel %vm1281, %v6115, -inf
    %6192 = vmax.xlane.f32.xlu0 %v6191
    %v6193 = vpop.xlane.xlu0 %6192
    %v6194 = vsel %vm1281, %v6188, -inf
    %6195 = vmax.xlane.f32.xlu0 %v6194
    %v6196 = vpop.xlane.xlu0 %6195
    %v6197 = vsub.f32 %v6115, %v6193
    %v6198 = vsub.f32 %v6188, %v6196
    %v6199 = vmul.f32 %v6197, 1.442695
    %v6200 = vpow.pop %v6199
    %v6201 = vmul.f32 %v6198, 1.442695
    %v6202 = vpow.pop %v6201
    %v6203 = vsel %vm1281, %v6200, 0.0
    %6204 = vadd.xlane.f32.xlu0 %v6203
    %v6205 = vpop.xlane.xlu0 %6204
    %v6206 = vsel %vm1281, %v6202, 0.0
    %6207 = vadd.xlane.f32.xlu0 %v6206
    %v6208 = vpop.xlane.xlu0 %6207
    %v6209 = vrcp.pop %v6205
    %v6210 = vrcp.pop %v6208
    %v6211 = vmul.f32 %v6200, %v6209
    %v6212 = vmul.f32 %v6202, %v6210
    %v6214 = vsel %vm1304, %v6211, 0
    %6216 = vmatprep.subr.mxu0 0.0
    %6217 = vmatpush1.msra.mxu0 0.0
    %6218 = vmatprep.subr.mxu0 0.0
    %6219 = vmatpush1.msra.mxu0 0.0
    %6220 = vmatprep.subr.mxu0 0.0
    %6221 = vmatpush1.msra.mxu0 0.0
    %6222 = vmatprep.subr.mxu0 0.0
    %6223 = vmatpush1.msra.mxu0 0.0
    %6224 = vmatprep.subr.mxu0 0.0
    %6225 = vmatpush1.msra.mxu0 0.0
    %6226 = vmatprep.subr.mxu0 0.0
    %6227 = vmatpush1.msra.mxu0 0.0
    %6228 = vmatprep.subr.mxu0 0.0
    %6229 = vmatpush1.msra.mxu0 0.0
    %6230 = vmatprep.subr.mxu0 0.0
    %6231 = vmatpush1.msra.mxu0 0.0
    %6232 = vmatprep.subr.mxu0 0.0
    %6233 = vmatpush1.msra.mxu0 0.0
    %6234 = vmatprep.subr.mxu0 0.0
    %6235 = vmatpush1.msra.mxu0 0.0
    %6236 = vmatprep.subr.mxu0 0.0
    %6237 = vmatpush1.msra.mxu0 0.0
    %6238 = vmatprep.subr.mxu0 0.0
    %6239 = vmatpush1.msra.mxu0 0.0
    %6240 = vmatprep.subr.mxu0 0.0
    %6241 = vmatpush1.msra.mxu0 0.0
    %6242 = vmatprep.subr.mxu0 0.0
    %6243 = vmatpush1.msra.mxu0 0.0
    %6244 = vmatprep.subr.mxu0 0.0
    %6245 = vmatpush1.msra.mxu0 0.0
    %6246 = vmatprep.subr.mxu0 0.0
    %6247 = vmatpush1.msra.mxu0 %v412
    %6248 = vmatprep.subr.mxu0 0.0
    %6249 = vmatpush2.msra.mxu0 0.0
    %6250 = vmatprep.subr.mxu0 0.0
    %6251 = vmatpush2.msra.mxu0 0.0
    %6252 = vmatprep.subr.mxu0 0.0
    %6253 = vmatpush2.msra.mxu0 0.0
    %6254 = vmatprep.subr.mxu0 0.0
    %6255 = vmatpush2.msra.mxu0 0.0
    %6256 = vmatprep.subr.mxu0 0.0
    %6257 = vmatpush2.msra.mxu0 0.0
    %6258 = vmatprep.subr.mxu0 0.0
    %6259 = vmatpush2.msra.mxu0 0.0
    %6260 = vmatprep.subr.mxu0 0.0
    %6261 = vmatpush2.msra.mxu0 0.0
    %6262 = vmatprep.subr.mxu0 0.0
    %6263 = vmatpush2.msra.mxu0 0.0
    %6264 = vmatprep.subr.mxu0 0.0
    %6265 = vmatpush2.msra.mxu0 0.0
    %6266 = vmatprep.subr.mxu0 0.0
    %6267 = vmatpush2.msra.mxu0 0.0
    %6268 = vmatprep.subr.mxu0 0.0
    %6269 = vmatpush2.msra.mxu0 0.0
    %6270 = vmatprep.subr.mxu0 0.0
    %6271 = vmatpush2.msra.mxu0 0.0
    %6272 = vmatprep.subr.mxu0 0.0
    %6273 = vmatpush2.msra.mxu0 0.0
    %6274 = vmatprep.subr.mxu0 0.0
    %6275 = vmatpush2.msra.mxu0 0.0
    %6276 = vmatprep.subr.mxu0 0.0
    %6277 = vmatpush2.msra.mxu0 0.0
    %6278 = vmatprep.subr.mxu0 0.0
    %6279 = vmatpush2.msra.mxu0 0.0
    %6280 = vmatprep.mubr.f32.mxu0 0.0
    %6281 = vmatmul.mubr.f32.gmra.mxu0 %v6214
    %v6282 = vpop.f32.mrf.mxu0
    %v6283 = vadd.f32 0.0, %v6282
    %v6284 = vpop.f32.mrf.mxu0
    %6285 = vdwg.mxu0
    %v6287 = vsel %vm1304, %v6212, 0
    %6289 = vmatprep.subr.mxu0 0.0
    %6290 = vmatpush1.msra.mxu0 0.0
    %6291 = vmatprep.subr.mxu0 0.0
    %6292 = vmatpush1.msra.mxu0 0.0
    %6293 = vmatprep.subr.mxu0 0.0
    %6294 = vmatpush1.msra.mxu0 0.0
    %6295 = vmatprep.subr.mxu0 0.0
    %6296 = vmatpush1.msra.mxu0 0.0
    %6297 = vmatprep.subr.mxu0 0.0
    %6298 = vmatpush1.msra.mxu0 0.0
    %6299 = vmatprep.subr.mxu0 0.0
    %6300 = vmatpush1.msra.mxu0 0.0
    %6301 = vmatprep.subr.mxu0 0.0
    %6302 = vmatpush1.msra.mxu0 0.0
    %6303 = vmatprep.subr.mxu0 0.0
    %6304 = vmatpush1.msra.mxu0 0.0
    %6305 = vmatprep.subr.mxu0 0.0
    %6306 = vmatpush1.msra.mxu0 0.0
    %6307 = vmatprep.subr.mxu0 0.0
    %6308 = vmatpush1.msra.mxu0 0.0
    %6309 = vmatprep.subr.mxu0 0.0
    %6310 = vmatpush1.msra.mxu0 0.0
    %6311 = vmatprep.subr.mxu0 0.0
    %6312 = vmatpush1.msra.mxu0 0.0
    %6313 = vmatprep.subr.mxu0 0.0
    %6314 = vmatpush1.msra.mxu0 0.0
    %6315 = vmatprep.subr.mxu0 0.0
    %6316 = vmatpush1.msra.mxu0 0.0
    %6317 = vmatprep.subr.mxu0 0.0
    %6318 = vmatpush1.msra.mxu0 0.0
    %6319 = vmatprep.subr.mxu0 0.0
    %6320 = vmatpush1.msra.mxu0 %v417
    %6321 = vmatprep.subr.mxu0 0.0
    %6322 = vmatpush2.msra.mxu0 0.0
    %6323 = vmatprep.subr.mxu0 0.0
    %6324 = vmatpush2.msra.mxu0 0.0
    %6325 = vmatprep.subr.mxu0 0.0
    %6326 = vmatpush2.msra.mxu0 0.0
    %6327 = vmatprep.subr.mxu0 0.0
    %6328 = vmatpush2.msra.mxu0 0.0
    %6329 = vmatprep.subr.mxu0 0.0
    %6330 = vmatpush2.msra.mxu0 0.0
    %6331 = vmatprep.subr.mxu0 0.0
    %6332 = vmatpush2.msra.mxu0 0.0
    %6333 = vmatprep.subr.mxu0 0.0
    %6334 = vmatpush2.msra.mxu0 0.0
    %6335 = vmatprep.subr.mxu0 0.0
    %6336 = vmatpush2.msra.mxu0 0.0
    %6337 = vmatprep.subr.mxu0 0.0
    %6338 = vmatpush2.msra.mxu0 0.0
    %6339 = vmatprep.subr.mxu0 0.0
    %6340 = vmatpush2.msra.mxu0 0.0
    %6341 = vmatprep.subr.mxu0 0.0
    %6342 = vmatpush2.msra.mxu0 0.0
    %6343 = vmatprep.subr.mxu0 0.0
    %6344 = vmatpush2.msra.mxu0 0.0
    %6345 = vmatprep.subr.mxu0 0.0
    %6346 = vmatpush2.msra.mxu0 0.0
    %6347 = vmatprep.subr.mxu0 0.0
    %6348 = vmatpush2.msra.mxu0 0.0
    %6349 = vmatprep.subr.mxu0 0.0
    %6350 = vmatpush2.msra.mxu0 0.0
    %6351 = vmatprep.subr.mxu0 0.0
    %6352 = vmatpush2.msra.mxu0 0.0
    %6353 = vmatprep.mubr.f32.mxu0 0.0
    %6354 = vmatmul.mubr.f32.gmra.mxu0 %v6287
    %v6355 = vpop.f32.mrf.mxu0
    %v6356 = vadd.f32 0.0, %v6355
    %v6357 = vpop.f32.mrf.mxu0
    %6358 = vdwg.mxu0
    %v6359 = vld [vmem:[#allocation2 + $0x65] sm:$0xff]
    %v6360 = vld [vmem:[#allocation2 + $0x6d] sm:$0x3]
    %v6361 = vld [vmem:[#allocation2 + $0xf5] sm:$0x1]
    %v6362 = vmul.f32 %v6032, %v6361
    %v6363 = vmul.f32 %v6039, %v6361
    %v6365 = vsel %vm65, %v6362, 0
    %6367 = vmatprep.subr.mxu0 0.0
    %6368 = vmatpush1.xpose.msra.mxu0 0.0
    %6369 = vmatprep.subr.mxu0 0.0
    %6370 = vmatpush1.xpose.msra.mxu0 0.0
    %6371 = vmatprep.subr.mxu0 0.0
    %6372 = vmatpush1.xpose.msra.mxu0 0.0
    %6373 = vmatprep.subr.mxu0 0.0
    %6374 = vmatpush1.xpose.msra.mxu0 0.0
    %6375 = vmatprep.subr.mxu0 0.0
    %6376 = vmatpush1.xpose.msra.mxu0 0.0
    %6377 = vmatprep.subr.mxu0 0.0
    %6378 = vmatpush1.xpose.msra.mxu0 0.0
    %6379 = vmatprep.subr.mxu0 0.0
    %6380 = vmatpush1.xpose.msra.mxu0 0.0
    %6381 = vmatprep.subr.mxu0 0.0
    %6382 = vmatpush1.xpose.msra.mxu0 0.0
    %6383 = vmatprep.subr.mxu0 0.0
    %6384 = vmatpush1.xpose.msra.mxu0 0.0
    %6385 = vmatprep.subr.mxu0 0.0
    %6386 = vmatpush1.xpose.msra.mxu0 0.0
    %6387 = vmatprep.subr.mxu0 0.0
    %6388 = vmatpush1.xpose.msra.mxu0 0.0
    %6389 = vmatprep.subr.mxu0 0.0
    %6390 = vmatpush1.xpose.msra.mxu0 0.0
    %6391 = vmatprep.subr.mxu0 0.0
    %6392 = vmatpush1.xpose.msra.mxu0 0.0
    %6393 = vmatprep.subr.mxu0 0.0
    %6394 = vmatpush1.xpose.msra.mxu0 0.0
    %6395 = vmatprep.subr.mxu0 0.0
    %6396 = vmatpush1.xpose.msra.mxu0 0.0
    %6397 = vmatprep.subr.mxu0 0.0
    %6398 = vmatpush1.xpose.msra.mxu0 %v1133
    %6399 = vmatprep.subr.mxu0 0.0
    %6400 = vmatpush2.xpose.msra.mxu0 0.0
    %6401 = vmatprep.subr.mxu0 0.0
    %6402 = vmatpush2.xpose.msra.mxu0 0.0
    %6403 = vmatprep.subr.mxu0 0.0
    %6404 = vmatpush2.xpose.msra.mxu0 0.0
    %6405 = vmatprep.subr.mxu0 0.0
    %6406 = vmatpush2.xpose.msra.mxu0 0.0
    %6407 = vmatprep.subr.mxu0 0.0
    %6408 = vmatpush2.xpose.msra.mxu0 0.0
    %6409 = vmatprep.subr.mxu0 0.0
    %6410 = vmatpush2.xpose.msra.mxu0 0.0
    %6411 = vmatprep.subr.mxu0 0.0
    %6412 = vmatpush2.xpose.msra.mxu0 0.0
    %6413 = vmatprep.subr.mxu0 0.0
    %6414 = vmatpush2.xpose.msra.mxu0 0.0
    %6415 = vmatprep.subr.mxu0 0.0
    %6416 = vmatpush2.xpose.msra.mxu0 0.0
    %6417 = vmatprep.subr.mxu0 0.0
    %6418 = vmatpush2.xpose.msra.mxu0 0.0
    %6419 = vmatprep.subr.mxu0 0.0
    %6420 = vmatpush2.xpose.msra.mxu0 0.0
    %6421 = vmatprep.subr.mxu0 0.0
    %6422 = vmatpush2.xpose.msra.mxu0 0.0
    %6423 = vmatprep.subr.mxu0 0.0
    %6424 = vmatpush2.xpose.msra.mxu0 0.0
    %6425 = vmatprep.subr.mxu0 0.0
    %6426 = vmatpush2.xpose.msra.mxu0 0.0
    %6427 = vmatprep.subr.mxu0 0.0
    %6428 = vmatpush2.xpose.msra.mxu0 0.0
    %6429 = vmatprep.subr.mxu0 0.0
    %6430 = vmatpush2.xpose.msra.mxu0 0.0
    %6431 = vmatprep.mubr.f32.mxu0 0.0
    %6432 = vmatmul.mubr.f32.gmra.mxu0 %v6365
    %v6433 = vpop.f32.mrf.mxu0
    %v6434 = vadd.f32 0.0, %v6433
    %v6435 = vpop.f32.mrf.mxu0
    %6436 = vdwg.mxu0
    %v6438 = vsel %vm65, %v6363, 0
    %6440 = vmatprep.subr.mxu0 0.0
    %6441 = vmatpush1.xpose.msra.mxu0 0.0
    %6442 = vmatprep.subr.mxu0 0.0
    %6443 = vmatpush1.xpose.msra.mxu0 0.0
    %6444 = vmatprep.subr.mxu0 0.0
    %6445 = vmatpush1.xpose.msra.mxu0 0.0
    %6446 = vmatprep.subr.mxu0 0.0
    %6447 = vmatpush1.xpose.msra.mxu0 0.0
    %6448 = vmatprep.subr.mxu0 0.0
    %6449 = vmatpush1.xpose.msra.mxu0 0.0
    %6450 = vmatprep.subr.mxu0 0.0
    %6451 = vmatpush1.xpose.msra.mxu0 0.0
    %6452 = vmatprep.subr.mxu0 0.0
    %6453 = vmatpush1.xpose.msra.mxu0 0.0
    %6454 = vmatprep.subr.mxu0 0.0
    %6455 = vmatpush1.xpose.msra.mxu0 0.0
    %6456 = vmatprep.subr.mxu0 0.0
    %6457 = vmatpush1.xpose.msra.mxu0 0.0
    %6458 = vmatprep.subr.mxu0 0.0
    %6459 = vmatpush1.xpose.msra.mxu0 0.0
    %6460 = vmatprep.subr.mxu0 0.0
    %6461 = vmatpush1.xpose.msra.mxu0 0.0
    %6462 = vmatprep.subr.mxu0 0.0
    %6463 = vmatpush1.xpose.msra.mxu0 0.0
    %6464 = vmatprep.subr.mxu0 0.0
    %6465 = vmatpush1.xpose.msra.mxu0 0.0
    %6466 = vmatprep.subr.mxu0 0.0
    %6467 = vmatpush1.xpose.msra.mxu0 0.0
    %6468 = vmatprep.subr.mxu0 0.0
    %6469 = vmatpush1.xpose.msra.mxu0 0.0
    %6470 = vmatprep.subr.mxu0 0.0
    %6471 = vmatpush1.xpose.msra.mxu0 %v1209
    %6472 = vmatprep.subr.mxu0 0.0
    %6473 = vmatpush2.xpose.msra.mxu0 0.0
    %6474 = vmatprep.subr.mxu0 0.0
    %6475 = vmatpush2.xpose.msra.mxu0 0.0
    %6476 = vmatprep.subr.mxu0 0.0
    %6477 = vmatpush2.xpose.msra.mxu0 0.0
    %6478 = vmatprep.subr.mxu0 0.0
    %6479 = vmatpush2.xpose.msra.mxu0 0.0
    %6480 = vmatprep.subr.mxu0 0.0
    %6481 = vmatpush2.xpose.msra.mxu0 0.0
    %6482 = vmatprep.subr.mxu0 0.0
    %6483 = vmatpush2.xpose.msra.mxu0 0.0
    %6484 = vmatprep.subr.mxu0 0.0
    %6485 = vmatpush2.xpose.msra.mxu0 0.0
    %6486 = vmatprep.subr.mxu0 0.0
    %6487 = vmatpush2.xpose.msra.mxu0 0.0
    %6488 = vmatprep.subr.mxu0 0.0
    %6489 = vmatpush2.xpose.msra.mxu0 0.0
    %6490 = vmatprep.subr.mxu0 0.0
    %6491 = vmatpush2.xpose.msra.mxu0 0.0
    %6492 = vmatprep.subr.mxu0 0.0
    %6493 = vmatpush2.xpose.msra.mxu0 0.0
    %6494 = vmatprep.subr.mxu0 0.0
    %6495 = vmatpush2.xpose.msra.mxu0 0.0
    %6496 = vmatprep.subr.mxu0 0.0
    %6497 = vmatpush2.xpose.msra.mxu0 0.0
    %6498 = vmatprep.subr.mxu0 0.0
    %6499 = vmatpush2.xpose.msra.mxu0 0.0
    %6500 = vmatprep.subr.mxu0 0.0
    %6501 = vmatpush2.xpose.msra.mxu0 0.0
    %6502 = vmatprep.subr.mxu0 0.0
    %6503 = vmatpush2.xpose.msra.mxu0 0.0
    %6504 = vmatprep.mubr.f32.mxu0 0.0
    %6505 = vmatmul.mubr.f32.gmra.mxu0 %v6438
    %v6506 = vpop.f32.mrf.mxu0
    %v6507 = vadd.f32 0.0, %v6506
    %v6508 = vpop.f32.mrf.mxu0
    %6509 = vdwg.mxu0
    %v6510 = vsel %vm1281, %v6434, -inf
    %6511 = vmax.xlane.f32.xlu0 %v6510
    %v6512 = vpop.xlane.xlu0 %6511
    %v6513 = vsel %vm1281, %v6507, -inf
    %6514 = vmax.xlane.f32.xlu0 %v6513
    %v6515 = vpop.xlane.xlu0 %6514
    %v6516 = vsub.f32 %v6434, %v6512
    %v6517 = vsub.f32 %v6507, %v6515
    %v6518 = vmul.f32 %v6516, 1.442695
    %v6519 = vpow.pop %v6518
    %v6520 = vmul.f32 %v6517, 1.442695
    %v6521 = vpow.pop %v6520
    %v6522 = vsel %vm1281, %v6519, 0.0
    %6523 = vadd.xlane.f32.xlu0 %v6522
    %v6524 = vpop.xlane.xlu0 %6523
    %v6525 = vsel %vm1281, %v6521, 0.0
    %6526 = vadd.xlane.f32.xlu0 %v6525
    %v6527 = vpop.xlane.xlu0 %6526
    %v6528 = vrcp.pop %v6524
    %v6529 = vrcp.pop %v6527
    %v6530 = vmul.f32 %v6519, %v6528
    %v6531 = vmul.f32 %v6521, %v6529
    %v6533 = vsel %vm1304, %v6530, 0
    %6535 = vmatprep.subr.mxu0 0.0
    %6536 = vmatpush1.msra.mxu0 0.0
    %6537 = vmatprep.subr.mxu0 0.0
    %6538 = vmatpush1.msra.mxu0 0.0
    %6539 = vmatprep.subr.mxu0 0.0
    %6540 = vmatpush1.msra.mxu0 0.0
    %6541 = vmatprep.subr.mxu0 0.0
    %6542 = vmatpush1.msra.mxu0 0.0
    %6543 = vmatprep.subr.mxu0 0.0
    %6544 = vmatpush1.msra.mxu0 0.0
    %6545 = vmatprep.subr.mxu0 0.0
    %6546 = vmatpush1.msra.mxu0 0.0
    %6547 = vmatprep.subr.mxu0 0.0
    %6548 = vmatpush1.msra.mxu0 0.0
    %6549 = vmatprep.subr.mxu0 0.0
    %6550 = vmatpush1.msra.mxu0 0.0
    %6551 = vmatprep.subr.mxu0 0.0
    %6552 = vmatpush1.msra.mxu0 0.0
    %6553 = vmatprep.subr.mxu0 0.0
    %6554 = vmatpush1.msra.mxu0 0.0
    %6555 = vmatprep.subr.mxu0 0.0
    %6556 = vmatpush1.msra.mxu0 0.0
    %6557 = vmatprep.subr.mxu0 0.0
    %6558 = vmatpush1.msra.mxu0 0.0
    %6559 = vmatprep.subr.mxu0 0.0
    %6560 = vmatpush1.msra.mxu0 0.0
    %6561 = vmatprep.subr.mxu0 0.0
    %6562 = vmatpush1.msra.mxu0 0.0
    %6563 = vmatprep.subr.mxu0 0.0
    %6564 = vmatpush1.msra.mxu0 0.0
    %6565 = vmatprep.subr.mxu0 0.0
    %6566 = vmatpush1.msra.mxu0 %v412
    %6567 = vmatprep.subr.mxu0 0.0
    %6568 = vmatpush2.msra.mxu0 0.0
    %6569 = vmatprep.subr.mxu0 0.0
    %6570 = vmatpush2.msra.mxu0 0.0
    %6571 = vmatprep.subr.mxu0 0.0
    %6572 = vmatpush2.msra.mxu0 0.0
    %6573 = vmatprep.subr.mxu0 0.0
    %6574 = vmatpush2.msra.mxu0 0.0
    %6575 = vmatprep.subr.mxu0 0.0
    %6576 = vmatpush2.msra.mxu0 0.0
    %6577 = vmatprep.subr.mxu0 0.0
    %6578 = vmatpush2.msra.mxu0 0.0
    %6579 = vmatprep.subr.mxu0 0.0
    %6580 = vmatpush2.msra.mxu0 0.0
    %6581 = vmatprep.subr.mxu0 0.0
    %6582 = vmatpush2.msra.mxu0 0.0
    %6583 = vmatprep.subr.mxu0 0.0
    %6584 = vmatpush2.msra.mxu0 0.0
    %6585 = vmatprep.subr.mxu0 0.0
    %6586 = vmatpush2.msra.mxu0 0.0
    %6587 = vmatprep.subr.mxu0 0.0
    %6588 = vmatpush2.msra.mxu0 0.0
    %6589 = vmatprep.subr.mxu0 0.0
    %6590 = vmatpush2.msra.mxu0 0.0
    %6591 = vmatprep.subr.mxu0 0.0
    %6592 = vmatpush2.msra.mxu0 0.0
    %6593 = vmatprep.subr.mxu0 0.0
    %6594 = vmatpush2.msra.mxu0 0.0
    %6595 = vmatprep.subr.mxu0 0.0
    %6596 = vmatpush2.msra.mxu0 0.0
    %6597 = vmatprep.subr.mxu0 0.0
    %6598 = vmatpush2.msra.mxu0 0.0
    %6599 = vmatprep.mubr.f32.mxu0 0.0
    %6600 = vmatmul.mubr.f32.gmra.mxu0 %v6533
    %v6601 = vpop.f32.mrf.mxu0
    %v6602 = vadd.f32 0.0, %v6601
    %v6603 = vpop.f32.mrf.mxu0
    %6604 = vdwg.mxu0
    %v6606 = vsel %vm1304, %v6531, 0
    %6608 = vmatprep.subr.mxu0 0.0
    %6609 = vmatpush1.msra.mxu0 0.0
    %6610 = vmatprep.subr.mxu0 0.0
    %6611 = vmatpush1.msra.mxu0 0.0
    %6612 = vmatprep.subr.mxu0 0.0
    %6613 = vmatpush1.msra.mxu0 0.0
    %6614 = vmatprep.subr.mxu0 0.0
    %6615 = vmatpush1.msra.mxu0 0.0
    %6616 = vmatprep.subr.mxu0 0.0
    %6617 = vmatpush1.msra.mxu0 0.0
    %6618 = vmatprep.subr.mxu0 0.0
    %6619 = vmatpush1.msra.mxu0 0.0
    %6620 = vmatprep.subr.mxu0 0.0
    %6621 = vmatpush1.msra.mxu0 0.0
    %6622 = vmatprep.subr.mxu0 0.0
    %6623 = vmatpush1.msra.mxu0 0.0
    %6624 = vmatprep.subr.mxu0 0.0
    %6625 = vmatpush1.msra.mxu0 0.0
    %6626 = vmatprep.subr.mxu0 0.0
    %6627 = vmatpush1.msra.mxu0 0.0
    %6628 = vmatprep.subr.mxu0 0.0
    %6629 = vmatpush1.msra.mxu0 0.0
    %6630 = vmatprep.subr.mxu0 0.0
    %6631 = vmatpush1.msra.mxu0 0.0
    %6632 = vmatprep.subr.mxu0 0.0
    %6633 = vmatpush1.msra.mxu0 0.0
    %6634 = vmatprep.subr.mxu0 0.0
    %6635 = vmatpush1.msra.mxu0 0.0
    %6636 = vmatprep.subr.mxu0 0.0
    %6637 = vmatpush1.msra.mxu0 0.0
    %6638 = vmatprep.subr.mxu0 0.0
    %6639 = vmatpush1.msra.mxu0 %v417
    %6640 = vmatprep.subr.mxu0 0.0
    %6641 = vmatpush2.msra.mxu0 0.0
    %6642 = vmatprep.subr.mxu0 0.0
    %6643 = vmatpush2.msra.mxu0 0.0
    %6644 = vmatprep.subr.mxu0 0.0
    %6645 = vmatpush2.msra.mxu0 0.0
    %6646 = vmatprep.subr.mxu0 0.0
    %6647 = vmatpush2.msra.mxu0 0.0
    %6648 = vmatprep.subr.mxu0 0.0
    %6649 = vmatpush2.msra.mxu0 0.0
    %6650 = vmatprep.subr.mxu0 0.0
    %6651 = vmatpush2.msra.mxu0 0.0
    %6652 = vmatprep.subr.mxu0 0.0
    %6653 = vmatpush2.msra.mxu0 0.0
    %6654 = vmatprep.subr.mxu0 0.0
    %6655 = vmatpush2.msra.mxu0 0.0
    %6656 = vmatprep.subr.mxu0 0.0
    %6657 = vmatpush2.msra.mxu0 0.0
    %6658 = vmatprep.subr.mxu0 0.0
    %6659 = vmatpush2.msra.mxu0 0.0
    %6660 = vmatprep.subr.mxu0 0.0
    %6661 = vmatpush2.msra.mxu0 0.0
    %6662 = vmatprep.subr.mxu0 0.0
    %6663 = vmatpush2.msra.mxu0 0.0
    %6664 = vmatprep.subr.mxu0 0.0
    %6665 = vmatpush2.msra.mxu0 0.0
    %6666 = vmatprep.subr.mxu0 0.0
    %6667 = vmatpush2.msra.mxu0 0.0
    %6668 = vmatprep.subr.mxu0 0.0
    %6669 = vmatpush2.msra.mxu0 0.0
    %6670 = vmatprep.subr.mxu0 0.0
    %6671 = vmatpush2.msra.mxu0 0.0
    %6672 = vmatprep.mubr.f32.mxu0 0.0
    %6673 = vmatmul.mubr.f32.gmra.mxu0 %v6606
    %v6674 = vpop.f32.mrf.mxu0
    %v6675 = vadd.f32 0.0, %v6674
    %v6676 = vpop.f32.mrf.mxu0
    %6677 = vdwg.mxu0
    %v6678 = vld [vmem:[#allocation2 + $0x6f] sm:$0xff]
    %v6679 = vld [vmem:[#allocation2 + $0x77] sm:$0x3]
    %v6682 = vrot.slane %v6675, 7
    %v6683 = vsel %vm1775, %v6682, %v6602
    %v6684 = vsel %vm65, %v6683, 0
    %v6687 = vsel %vm72, %v6679, 0
    %6689 = vmatprep.subr.mxu0 0.0
    %6690 = vmatpush1.msra.mxu0 0.0
    %6691 = vmatprep.subr.mxu0 0.0
    %6692 = vmatpush1.msra.mxu0 0.0
    %6693 = vmatprep.subr.mxu0 0.0
    %6694 = vmatpush1.msra.mxu0 0.0
    %6695 = vmatprep.subr.mxu0 0.0
    %6696 = vmatpush1.msra.mxu0 0.0
    %6697 = vmatprep.subr.mxu0 0.0
    %6698 = vmatpush1.msra.mxu0 0.0
    %6699 = vmatprep.subr.mxu0 0.0
    %6700 = vmatpush1.msra.mxu0 0.0
    %6701 = vmatprep.subr.mxu0 0.0
    %6702 = vmatpush1.msra.mxu0 0.0
    %6703 = vmatprep.subr.mxu0 0.0
    %6704 = vmatpush1.msra.mxu0 0.0
    %6705 = vmatprep.subr.mxu0 0.0
    %6706 = vmatpush1.msra.mxu0 0.0
    %6707 = vmatprep.subr.mxu0 0.0
    %6708 = vmatpush1.msra.mxu0 0.0
    %6709 = vmatprep.subr.mxu0 0.0
    %6710 = vmatpush1.msra.mxu0 0.0
    %6711 = vmatprep.subr.mxu0 0.0
    %6712 = vmatpush1.msra.mxu0 0.0
    %6713 = vmatprep.subr.mxu0 0.0
    %6714 = vmatpush1.msra.mxu0 0.0
    %6715 = vmatprep.subr.mxu0 0.0
    %6716 = vmatpush1.msra.mxu0 0.0
    %6717 = vmatprep.subr.mxu0 0.0
    %6718 = vmatpush1.msra.mxu0 %v6687
    %6719 = vmatprep.subr.mxu0 0.0
    %6720 = vmatpush1.msra.mxu0 %v6678
    %6721 = vmatprep.subr.mxu0 0.0
    %6722 = vmatpush2.msra.mxu0 0.0
    %6723 = vmatprep.subr.mxu0 0.0
    %6724 = vmatpush2.msra.mxu0 0.0
    %6725 = vmatprep.subr.mxu0 0.0
    %6726 = vmatpush2.msra.mxu0 0.0
    %6727 = vmatprep.subr.mxu0 0.0
    %6728 = vmatpush2.msra.mxu0 0.0
    %6729 = vmatprep.subr.mxu0 0.0
    %6730 = vmatpush2.msra.mxu0 0.0
    %6731 = vmatprep.subr.mxu0 0.0
    %6732 = vmatpush2.msra.mxu0 0.0
    %6733 = vmatprep.subr.mxu0 0.0
    %6734 = vmatpush2.msra.mxu0 0.0
    %6735 = vmatprep.subr.mxu0 0.0
    %6736 = vmatpush2.msra.mxu0 0.0
    %6737 = vmatprep.subr.mxu0 0.0
    %6738 = vmatpush2.msra.mxu0 0.0
    %6739 = vmatprep.subr.mxu0 0.0
    %6740 = vmatpush2.msra.mxu0 0.0
    %6741 = vmatprep.subr.mxu0 0.0
    %6742 = vmatpush2.msra.mxu0 0.0
    %6743 = vmatprep.subr.mxu0 0.0
    %6744 = vmatpush2.msra.mxu0 0.0
    %6745 = vmatprep.subr.mxu0 0.0
    %6746 = vmatpush2.msra.mxu0 0.0
    %6747 = vmatprep.subr.mxu0 0.0
    %6748 = vmatpush2.msra.mxu0 0.0
    %6749 = vmatprep.subr.mxu0 0.0
    %6750 = vmatpush2.msra.mxu0 0.0
    %6751 = vmatprep.subr.mxu0 0.0
    %6752 = vmatpush2.msra.mxu0 0.0
    %6753 = vmatprep.mubr.f32.mxu0 0.0
    %6754 = vmatmul.mubr.f32.gmra.mxu0 %v6684
    %v6755 = vpop.f32.mrf.mxu0
    %v6756 = vadd.f32 0.0, %v6755
    %v6757 = vpop.f32.mrf.mxu0
    %6758 = vdwg.mxu0
    %v6761 = vrot.slane %v6356, 7
    %v6762 = vsel %vm1775, %v6761, %v6283
    %v6763 = vsel %vm65, %v6762, 0
    %v6766 = vsel %vm72, %v6360, 0
    %6768 = vmatprep.subr.mxu0 0.0
    %6769 = vmatpush1.msra.mxu0 0.0
    %6770 = vmatprep.subr.mxu0 0.0
    %6771 = vmatpush1.msra.mxu0 0.0
    %6772 = vmatprep.subr.mxu0 0.0
    %6773 = vmatpush1.msra.mxu0 0.0
    %6774 = vmatprep.subr.mxu0 0.0
    %6775 = vmatpush1.msra.mxu0 0.0
    %6776 = vmatprep.subr.mxu0 0.0
    %6777 = vmatpush1.msra.mxu0 0.0
    %6778 = vmatprep.subr.mxu0 0.0
    %6779 = vmatpush1.msra.mxu0 0.0
    %6780 = vmatprep.subr.mxu0 0.0
    %6781 = vmatpush1.msra.mxu0 0.0
    %6782 = vmatprep.subr.mxu0 0.0
    %6783 = vmatpush1.msra.mxu0 0.0
    %6784 = vmatprep.subr.mxu0 0.0
    %6785 = vmatpush1.msra.mxu0 0.0
    %6786 = vmatprep.subr.mxu0 0.0
    %6787 = vmatpush1.msra.mxu0 0.0
    %6788 = vmatprep.subr.mxu0 0.0
    %6789 = vmatpush1.msra.mxu0 0.0
    %6790 = vmatprep.subr.mxu0 0.0
    %6791 = vmatpush1.msra.mxu0 0.0
    %6792 = vmatprep.subr.mxu0 0.0
    %6793 = vmatpush1.msra.mxu0 0.0
    %6794 = vmatprep.subr.mxu0 0.0
    %6795 = vmatpush1.msra.mxu0 0.0
    %6796 = vmatprep.subr.mxu0 0.0
    %6797 = vmatpush1.msra.mxu0 %v6766
    %6798 = vmatprep.subr.mxu0 0.0
    %6799 = vmatpush1.msra.mxu0 %v6359
    %6800 = vmatprep.subr.mxu0 0.0
    %6801 = vmatpush2.msra.mxu0 0.0
    %6802 = vmatprep.subr.mxu0 0.0
    %6803 = vmatpush2.msra.mxu0 0.0
    %6804 = vmatprep.subr.mxu0 0.0
    %6805 = vmatpush2.msra.mxu0 0.0
    %6806 = vmatprep.subr.mxu0 0.0
    %6807 = vmatpush2.msra.mxu0 0.0
    %6808 = vmatprep.subr.mxu0 0.0
    %6809 = vmatpush2.msra.mxu0 0.0
    %6810 = vmatprep.subr.mxu0 0.0
    %6811 = vmatpush2.msra.mxu0 0.0
    %6812 = vmatprep.subr.mxu0 0.0
    %6813 = vmatpush2.msra.mxu0 0.0
    %6814 = vmatprep.subr.mxu0 0.0
    %6815 = vmatpush2.msra.mxu0 0.0
    %6816 = vmatprep.subr.mxu0 0.0
    %6817 = vmatpush2.msra.mxu0 0.0
    %6818 = vmatprep.subr.mxu0 0.0
    %6819 = vmatpush2.msra.mxu0 0.0
    %6820 = vmatprep.subr.mxu0 0.0
    %6821 = vmatpush2.msra.mxu0 0.0
    %6822 = vmatprep.subr.mxu0 0.0
    %6823 = vmatpush2.msra.mxu0 0.0
    %6824 = vmatprep.subr.mxu0 0.0
    %6825 = vmatpush2.msra.mxu0 0.0
    %6826 = vmatprep.subr.mxu0 0.0
    %6827 = vmatpush2.msra.mxu0 0.0
    %6828 = vmatprep.subr.mxu0 0.0
    %6829 = vmatpush2.msra.mxu0 0.0
    %6830 = vmatprep.subr.mxu0 0.0
    %6831 = vmatpush2.msra.mxu0 0.0
    %6832 = vmatprep.mubr.f32.mxu0 0.0
    %6833 = vmatmul.mubr.f32.gmra.mxu0 %v6763
    %v6834 = vpop.f32.mrf.mxu0
    %v6835 = vadd.f32 %v6756, %v6834
    %v6836 = vpop.f32.mrf.mxu0
    %6837 = vdwg.mxu0
    %v6838 = vld [vmem:[#allocation2 + $0x79] sm:$0x1]
    %v6839 = vlaneseq
    %v6840 = vshrl.u32 %v6839, 7
    %v6841 = vsub.s32 0, %v6840
    %v6842 = vrot.slane %v6838, %v6841
    %v6843 = vadd.f32 %v6835, %v6842
    %v6844 = vadd.f32 %v5933, %v6843
    %v6845 = vsel %vm991, %v6844, 0.0
    %6846 = vadd.xlane.f32.xlu0 %v6845
    %v6847 = vpop.xlane.xlu0 %6846
    %v6848 = vmul.f32 %v6847, %v995
    %v6849 = vsub.f32 %v6844, %v6848
    %v6850 = vmul.f32 %v6849, %v6849
    %v6851 = vsel %vm991, %v6850, 0.0
    %6852 = vadd.xlane.f32.xlu0 %v6851
    %v6853 = vpop.xlane.xlu0 %6852
    %v6854 = vmul.f32 %v6853, %v995
    %v6855 = vadd.f32 %v6854, 1e-05
    %v6856 = vrsqrt.pop %v6855
    %v6857 = vmul.f32 %v6849, %v6856
    %v6858 = vld [vmem:[#allocation2 + $0x7c] sm:$0x1]
    %v6859 = vlaneseq
    %v6860 = vshrl.u32 %v6859, 7
    %v6861 = vsub.s32 0, %v6860
    %v6862 = vrot.slane %v6858, %v6861
    %v6863 = vmul.f32 %v6857, %v6862
    %v6864 = vld [vmem:[#allocation2 + $0x7d] sm:$0x1]
    %v6865 = vlaneseq
    %v6866 = vshrl.u32 %v6865, 7
    %v6867 = vsub.s32 0, %v6866
    %v6868 = vrot.slane %v6864, %v6867
    %v6869 = vadd.f32 %v6863, %v6868
    %v6870 = vld [vmem:[#allocation2 + $0x80] sm:$0xff]
    %v6871 = vld [vmem:[#allocation2 + $0x88] sm:$0x3]
    %v6872 = vld [vmem:[#allocation2 + $0x8a] sm:$0x1]
    %v6873 = vlaneseq
    %v6874 = vshrl.u32 %v6873, 7
    %v6875 = vsub.s32 0, %v6874
    %v6876 = vrot.slane %v6872, %v6875
    %v6878 = vsel %vm65, %v6869, 0
    %v6881 = vsel %vm72, %v6871, 0
    %6883 = vmatprep.subr.mxu0 0.0
    %6884 = vmatpush1.msra.mxu0 0.0
    %6885 = vmatprep.subr.mxu0 0.0
    %6886 = vmatpush1.msra.mxu0 0.0
    %6887 = vmatprep.subr.mxu0 0.0
    %6888 = vmatpush1.msra.mxu0 0.0
    %6889 = vmatprep.subr.mxu0 0.0
    %6890 = vmatpush1.msra.mxu0 0.0
    %6891 = vmatprep.subr.mxu0 0.0
    %6892 = vmatpush1.msra.mxu0 0.0
    %6893 = vmatprep.subr.mxu0 0.0
    %6894 = vmatpush1.msra.mxu0 0.0
    %6895 = vmatprep.subr.mxu0 0.0
    %6896 = vmatpush1.msra.mxu0 0.0
    %6897 = vmatprep.subr.mxu0 0.0
    %6898 = vmatpush1.msra.mxu0 0.0
    %6899 = vmatprep.subr.mxu0 0.0
    %6900 = vmatpush1.msra.mxu0 0.0
    %6901 = vmatprep.subr.mxu0 0.0
    %6902 = vmatpush1.msra.mxu0 0.0
    %6903 = vmatprep.subr.mxu0 0.0
    %6904 = vmatpush1.msra.mxu0 0.0
    %6905 = vmatprep.subr.mxu0 0.0
    %6906 = vmatpush1.msra.mxu0 0.0
    %6907 = vmatprep.subr.mxu0 0.0
    %6908 = vmatpush1.msra.mxu0 0.0
    %6909 = vmatprep.subr.mxu0 0.0
    %6910 = vmatpush1.msra.mxu0 0.0
    %6911 = vmatprep.subr.mxu0 0.0
    %6912 = vmatpush1.msra.mxu0 %v6881
    %6913 = vmatprep.subr.mxu0 0.0
    %6914 = vmatpush1.msra.mxu0 %v6870
    %6915 = vmatprep.subr.mxu0 0.0
    %6916 = vmatpush2.msra.mxu0 0.0
    %6917 = vmatprep.subr.mxu0 0.0
    %6918 = vmatpush2.msra.mxu0 0.0
    %6919 = vmatprep.subr.mxu0 0.0
    %6920 = vmatpush2.msra.mxu0 0.0
    %6921 = vmatprep.subr.mxu0 0.0
    %6922 = vmatpush2.msra.mxu0 0.0
    %6923 = vmatprep.subr.mxu0 0.0
    %6924 = vmatpush2.msra.mxu0 0.0
    %6925 = vmatprep.subr.mxu0 0.0
    %6926 = vmatpush2.msra.mxu0 0.0
    %6927 = vmatprep.subr.mxu0 0.0
    %6928 = vmatpush2.msra.mxu0 0.0
    %6929 = vmatprep.subr.mxu0 0.0
    %6930 = vmatpush2.msra.mxu0 0.0
    %6931 = vmatprep.subr.mxu0 0.0
    %6932 = vmatpush2.msra.mxu0 0.0
    %6933 = vmatprep.subr.mxu0 0.0
    %6934 = vmatpush2.msra.mxu0 0.0
    %6935 = vmatprep.subr.mxu0 0.0
    %6936 = vmatpush2.msra.mxu0 0.0
    %6937 = vmatprep.subr.mxu0 0.0
    %6938 = vmatpush2.msra.mxu0 0.0
    %6939 = vmatprep.subr.mxu0 0.0
    %6940 = vmatpush2.msra.mxu0 0.0
    %6941 = vmatprep.subr.mxu0 0.0
    %6942 = vmatpush2.msra.mxu0 0.0
    %6943 = vmatprep.subr.mxu0 0.0
    %6944 = vmatpush2.msra.mxu0 0.0
    %6945 = vmatprep.subr.mxu0 0.0
    %6946 = vmatpush2.msra.mxu0 0.0
    %6947 = vmatprep.mubr.f32.mxu0 0.0
    %6948 = vmatmul.mubr.f32.gmra.mxu0 %v6878
    %v6949 = vpop.f32.mrf.mxu0
    %v6950 = vadd.f32 %v6876, %v6949
    %v6951 = vpop.f32.mrf.mxu0
    %6952 = vdwg.mxu0
    %v6953 = vmax.f32 %v6950, 0.0
    %v6954 = vld [vmem:[#allocation2 + $0x8b] sm:$0xff]
    %v6955 = vld [vmem:[#allocation2 + $0x93] sm:$0xff]
    %v6956 = vld [vmem:[#allocation2 + $0x9b] sm:$0xf]
    %v6957 = vld [vmem:[#allocation2 + $0x9f] sm:$0x1]
    %v6958 = vlaneseq
    %v6959 = vshrl.u32 %v6958, 7
    %v6960 = vsub.s32 0, %v6959
    %v6961 = vrot.slane %v6957, %v6960
    %v6963 = vsel %vm2055, %v6953, 0
    %v6966 = vsel %vm2059, %v6956, 0
    %6968 = vmatprep.subr.mxu0 0.0
    %6969 = vmatpush1.msra.mxu0 0.0
    %6970 = vmatprep.subr.mxu0 0.0
    %6971 = vmatpush1.msra.mxu0 0.0
    %6972 = vmatprep.subr.mxu0 0.0
    %6973 = vmatpush1.msra.mxu0 0.0
    %6974 = vmatprep.subr.mxu0 0.0
    %6975 = vmatpush1.msra.mxu0 0.0
    %6976 = vmatprep.subr.mxu0 0.0
    %6977 = vmatpush1.msra.mxu0 0.0
    %6978 = vmatprep.subr.mxu0 0.0
    %6979 = vmatpush1.msra.mxu0 0.0
    %6980 = vmatprep.subr.mxu0 0.0
    %6981 = vmatpush1.msra.mxu0 0.0
    %6982 = vmatprep.subr.mxu0 0.0
    %6983 = vmatpush1.msra.mxu0 0.0
    %6984 = vmatprep.subr.mxu0 0.0
    %6985 = vmatpush1.msra.mxu0 0.0
    %6986 = vmatprep.subr.mxu0 0.0
    %6987 = vmatpush1.msra.mxu0 0.0
    %6988 = vmatprep.subr.mxu0 0.0
    %6989 = vmatpush1.msra.mxu0 0.0
    %6990 = vmatprep.subr.mxu0 0.0
    %6991 = vmatpush1.msra.mxu0 0.0
    %6992 = vmatprep.subr.mxu0 0.0
    %6993 = vmatpush1.msra.mxu0 0.0
    %6994 = vmatprep.subr.mxu0 0.0
    %6995 = vmatpush1.msra.mxu0 %v6966
    %6996 = vmatprep.subr.mxu0 0.0
    %6997 = vmatpush1.msra.mxu0 %v6955
    %6998 = vmatprep.subr.mxu0 0.0
    %6999 = vmatpush1.msra.mxu0 %v6954
    %7000 = vmatprep.subr.mxu0 0.0
    %7001 = vmatpush2.msra.mxu0 0.0
    %7002 = vmatprep.subr.mxu0 0.0
    %7003 = vmatpush2.msra.mxu0 0.0
    %7004 = vmatprep.subr.mxu0 0.0
    %7005 = vmatpush2.msra.mxu0 0.0
    %7006 = vmatprep.subr.mxu0 0.0
    %7007 = vmatpush2.msra.mxu0 0.0
    %7008 = vmatprep.subr.mxu0 0.0
    %7009 = vmatpush2.msra.mxu0 0.0
    %7010 = vmatprep.subr.mxu0 0.0
    %7011 = vmatpush2.msra.mxu0 0.0
    %7012 = vmatprep.subr.mxu0 0.0
    %7013 = vmatpush2.msra.mxu0 0.0
    %7014 = vmatprep.subr.mxu0 0.0
    %7015 = vmatpush2.msra.mxu0 0.0
    %7016 = vmatprep.subr.mxu0 0.0
    %7017 = vmatpush2.msra.mxu0 0.0
    %7018 = vmatprep.subr.mxu0 0.0
    %7019 = vmatpush2.msra.mxu0 0.0
    %7020 = vmatprep.subr.mxu0 0.0
    %7021 = vmatpush2.msra.mxu0 0.0
    %7022 = vmatprep.subr.mxu0 0.0
    %7023 = vmatpush2.msra.mxu0 0.0
    %7024 = vmatprep.subr.mxu0 0.0
    %7025 = vmatpush2.msra.mxu0 0.0
    %7026 = vmatprep.subr.mxu0 0.0
    %7027 = vmatpush2.msra.mxu0 0.0
    %7028 = vmatprep.subr.mxu0 0.0
    %7029 = vmatpush2.msra.mxu0 0.0
    %7030 = vmatprep.subr.mxu0 0.0
    %7031 = vmatpush2.msra.mxu0 0.0
    %7032 = vmatprep.mubr.f32.mxu0 0.0
    %7033 = vmatmul.mubr.f32.gmra.mxu0 %v6963
    %v7034 = vpop.f32.mrf.mxu0
    %v7035 = vadd.f32 %v6961, %v7034
    %v7036 = vpop.f32.mrf.mxu0
    %7037 = vdwg.mxu0
    %v7038 = vadd.f32 %v6869, %v7035
    %v7039 = vsel %vm991, %v7038, 0.0
    %7040 = vadd.xlane.f32.xlu0 %v7039
    %v7041 = vpop.xlane.xlu0 %7040
    %v7042 = vmul.f32 %v7041, %v995
    %v7043 = vsub.f32 %v7038, %v7042
    %v7044 = vmul.f32 %v7043, %v7043
    %v7045 = vsel %vm991, %v7044, 0.0
    %7046 = vadd.xlane.f32.xlu0 %v7045
    %v7047 = vpop.xlane.xlu0 %7046
    %v7048 = vmul.f32 %v7047, %v995
    %v7049 = vadd.f32 %v7048, 1e-05
    %v7050 = vrsqrt.pop %v7049
    %v7051 = vmul.f32 %v7043, %v7050
    %v7052 = vld [vmem:[#allocation2 + $0x7e] sm:$0x1]
    %v7053 = vlaneseq
    %v7054 = vshrl.u32 %v7053, 7
    %v7055 = vsub.s32 0, %v7054
    %v7056 = vrot.slane %v7052, %v7055
    %v7057 = vmul.f32 %v7051, %v7056
    %v7058 = vld [vmem:[#allocation2 + $0x7f] sm:$0x1]
    %v7059 = vlaneseq
    %v7060 = vshrl.u32 %v7059, 7
    %v7061 = vsub.s32 0, %v7060
    %v7062 = vrot.slane %v7058, %v7061
    %v7063 = vadd.f32 %v7057, %v7062
    %v7064 = vld [vmem:[#allocation2 + $0xa0] sm:$0xff]
    %v7065 = vld [vmem:[#allocation2 + $0xa8] sm:$0x3]
    %v7066 = vld [vmem:[#allocation2 + $0xaa] sm:$0x1]
    %v7067 = vlaneseq
    %v7068 = vshrl.u32 %v7067, 7
    %v7069 = vsub.s32 0, %v7068
    %v7070 = vrot.slane %v7066, %v7069
    %v7072 = vsel %vm65, %v7063, 0
    %v7075 = vsel %vm72, %v7065, 0
    %7077 = vmatprep.subr.mxu0 0.0
    %7078 = vmatpush1.msra.mxu0 0.0
    %7079 = vmatprep.subr.mxu0 0.0
    %7080 = vmatpush1.msra.mxu0 0.0
    %7081 = vmatprep.subr.mxu0 0.0
    %7082 = vmatpush1.msra.mxu0 0.0
    %7083 = vmatprep.subr.mxu0 0.0
    %7084 = vmatpush1.msra.mxu0 0.0
    %7085 = vmatprep.subr.mxu0 0.0
    %7086 = vmatpush1.msra.mxu0 0.0
    %7087 = vmatprep.subr.mxu0 0.0
    %7088 = vmatpush1.msra.mxu0 0.0
    %7089 = vmatprep.subr.mxu0 0.0
    %7090 = vmatpush1.msra.mxu0 0.0
    %7091 = vmatprep.subr.mxu0 0.0
    %7092 = vmatpush1.msra.mxu0 0.0
    %7093 = vmatprep.subr.mxu0 0.0
    %7094 = vmatpush1.msra.mxu0 0.0
    %7095 = vmatprep.subr.mxu0 0.0
    %7096 = vmatpush1.msra.mxu0 0.0
    %7097 = vmatprep.subr.mxu0 0.0
    %7098 = vmatpush1.msra.mxu0 0.0
    %7099 = vmatprep.subr.mxu0 0.0
    %7100 = vmatpush1.msra.mxu0 0.0
    %7101 = vmatprep.subr.mxu0 0.0
    %7102 = vmatpush1.msra.mxu0 0.0
    %7103 = vmatprep.subr.mxu0 0.0
    %7104 = vmatpush1.msra.mxu0 0.0
    %7105 = vmatprep.subr.mxu0 0.0
    %7106 = vmatpush1.msra.mxu0 %v7075
    %7107 = vmatprep.subr.mxu0 0.0
    %7108 = vmatpush1.msra.mxu0 %v7064
    %7109 = vmatprep.subr.mxu0 0.0
    %7110 = vmatpush2.msra.mxu0 0.0
    %7111 = vmatprep.subr.mxu0 0.0
    %7112 = vmatpush2.msra.mxu0 0.0
    %7113 = vmatprep.subr.mxu0 0.0
    %7114 = vmatpush2.msra.mxu0 0.0
    %7115 = vmatprep.subr.mxu0 0.0
    %7116 = vmatpush2.msra.mxu0 0.0
    %7117 = vmatprep.subr.mxu0 0.0
    %7118 = vmatpush2.msra.mxu0 0.0
    %7119 = vmatprep.subr.mxu0 0.0
    %7120 = vmatpush2.msra.mxu0 0.0
    %7121 = vmatprep.subr.mxu0 0.0
    %7122 = vmatpush2.msra.mxu0 0.0
    %7123 = vmatprep.subr.mxu0 0.0
    %7124 = vmatpush2.msra.mxu0 0.0
    %7125 = vmatprep.subr.mxu0 0.0
    %7126 = vmatpush2.msra.mxu0 0.0
    %7127 = vmatprep.subr.mxu0 0.0
    %7128 = vmatpush2.msra.mxu0 0.0
    %7129 = vmatprep.subr.mxu0 0.0
    %7130 = vmatpush2.msra.mxu0 0.0
    %7131 = vmatprep.subr.mxu0 0.0
    %7132 = vmatpush2.msra.mxu0 0.0
    %7133 = vmatprep.subr.mxu0 0.0
    %7134 = vmatpush2.msra.mxu0 0.0
    %7135 = vmatprep.subr.mxu0 0.0
    %7136 = vmatpush2.msra.mxu0 0.0
    %7137 = vmatprep.subr.mxu0 0.0
    %7138 = vmatpush2.msra.mxu0 0.0
    %7139 = vmatprep.subr.mxu0 0.0
    %7140 = vmatpush2.msra.mxu0 0.0
    %7141 = vmatprep.mubr.f32.mxu0 0.0
    %7142 = vmatmul.mubr.f32.gmra.mxu0 %v7072
    %v7143 = vpop.f32.mrf.mxu0
    %v7144 = vadd.f32 %v7070, %v7143
    %v7145 = vpop.f32.mrf.mxu0
    %7146 = vdwg.mxu0
    %v7147 = vmax.f32 %v7144, 0.0
    %v7148 = vld [vmem:[#allocation2 + $0xab] sm:$0xff]
    %v7149 = vld [vmem:[#allocation2 + $0xb3] sm:$0xf]
    %v7150 = vld [vmem:[#allocation2 + $0xb7] sm:$0x1]
    %v7151 = vlaneseq
    %v7152 = vshrl.u32 %v7151, 7
    %v7153 = vsub.s32 0, %v7152
    %v7154 = vrot.slane %v7150, %v7153
    %v7156 = vsel %vm2250, %v7147, 0
    %v7159 = vsel %vm2059, %v7149, 0
    %7161 = vmatprep.subr.mxu0 0.0
    %7162 = vmatpush1.msra.mxu0 0.0
    %7163 = vmatprep.subr.mxu0 0.0
    %7164 = vmatpush1.msra.mxu0 0.0
    %7165 = vmatprep.subr.mxu0 0.0
    %7166 = vmatpush1.msra.mxu0 0.0
    %7167 = vmatprep.subr.mxu0 0.0
    %7168 = vmatpush1.msra.mxu0 0.0
    %7169 = vmatprep.subr.mxu0 0.0
    %7170 = vmatpush1.msra.mxu0 0.0
    %7171 = vmatprep.subr.mxu0 0.0
    %7172 = vmatpush1.msra.mxu0 0.0
    %7173 = vmatprep.subr.mxu0 0.0
    %7174 = vmatpush1.msra.mxu0 0.0
    %7175 = vmatprep.subr.mxu0 0.0
    %7176 = vmatpush1.msra.mxu0 0.0
    %7177 = vmatprep.subr.mxu0 0.0
    %7178 = vmatpush1.msra.mxu0 0.0
    %7179 = vmatprep.subr.mxu0 0.0
    %7180 = vmatpush1.msra.mxu0 0.0
    %7181 = vmatprep.subr.mxu0 0.0
    %7182 = vmatpush1.msra.mxu0 0.0
    %7183 = vmatprep.subr.mxu0 0.0
    %7184 = vmatpush1.msra.mxu0 0.0
    %7185 = vmatprep.subr.mxu0 0.0
    %7186 = vmatpush1.msra.mxu0 0.0
    %7187 = vmatprep.subr.mxu0 0.0
    %7188 = vmatpush1.msra.mxu0 0.0
    %7189 = vmatprep.subr.mxu0 0.0
    %7190 = vmatpush1.msra.mxu0 %v7159
    %7191 = vmatprep.subr.mxu0 0.0
    %7192 = vmatpush1.msra.mxu0 %v7148
    %7193 = vmatprep.subr.mxu0 0.0
    %7194 = vmatpush2.msra.mxu0 0.0
    %7195 = vmatprep.subr.mxu0 0.0
    %7196 = vmatpush2.msra.mxu0 0.0
    %7197 = vmatprep.subr.mxu0 0.0
    %7198 = vmatpush2.msra.mxu0 0.0
    %7199 = vmatprep.subr.mxu0 0.0
    %7200 = vmatpush2.msra.mxu0 0.0
    %7201 = vmatprep.subr.mxu0 0.0
    %7202 = vmatpush2.msra.mxu0 0.0
    %7203 = vmatprep.subr.mxu0 0.0
    %7204 = vmatpush2.msra.mxu0 0.0
    %7205 = vmatprep.subr.mxu0 0.0
    %7206 = vmatpush2.msra.mxu0 0.0
    %7207 = vmatprep.subr.mxu0 0.0
    %7208 = vmatpush2.msra.mxu0 0.0
    %7209 = vmatprep.subr.mxu0 0.0
    %7210 = vmatpush2.msra.mxu0 0.0
    %7211 = vmatprep.subr.mxu0 0.0
    %7212 = vmatpush2.msra.mxu0 0.0
    %7213 = vmatprep.subr.mxu0 0.0
    %7214 = vmatpush2.msra.mxu0 0.0
    %7215 = vmatprep.subr.mxu0 0.0
    %7216 = vmatpush2.msra.mxu0 0.0
    %7217 = vmatprep.subr.mxu0 0.0
    %7218 = vmatpush2.msra.mxu0 0.0
    %7219 = vmatprep.subr.mxu0 0.0
    %7220 = vmatpush2.msra.mxu0 0.0
    %7221 = vmatprep.subr.mxu0 0.0
    %7222 = vmatpush2.msra.mxu0 0.0
    %7223 = vmatprep.subr.mxu0 0.0
    %7224 = vmatpush2.msra.mxu0 0.0
    %7225 = vmatprep.mubr.f32.mxu0 0.0
    %7226 = vmatmul.mubr.f32.gmra.mxu0 %v7156
    %v7227 = vpop.f32.mrf.mxu0
    %v7228 = vadd.f32 %v7154, %v7227
    %v7229 = vpop.f32.mrf.mxu0
    %7230 = vdwg.mxu0
    %v7231 = vld [vmem:[#allocation2 + $0xb8] sm:$0xff]
    %v7232 = vld [vmem:[#allocation2 + $0xc0] sm:$0x3]
    %v7233 = vld [vmem:[#allocation2 + $0xc2] sm:$0x1]
    %v7234 = vlaneseq
    %v7235 = vshrl.u32 %v7234, 7
    %v7236 = vsub.s32 0, %v7235
    %v7237 = vrot.slane %v7233, %v7236
    %v7239 = vsel %vm72, %v7232, 0
    %7241 = vmatprep.subr.mxu0 0.0
    %7242 = vmatpush1.msra.mxu0 0.0
    %7243 = vmatprep.subr.mxu0 0.0
    %7244 = vmatpush1.msra.mxu0 0.0
    %7245 = vmatprep.subr.mxu0 0.0
    %7246 = vmatpush1.msra.mxu0 0.0
    %7247 = vmatprep.subr.mxu0 0.0
    %7248 = vmatpush1.msra.mxu0 0.0
    %7249 = vmatprep.subr.mxu0 0.0
    %7250 = vmatpush1.msra.mxu0 0.0
    %7251 = vmatprep.subr.mxu0 0.0
    %7252 = vmatpush1.msra.mxu0 0.0
    %7253 = vmatprep.subr.mxu0 0.0
    %7254 = vmatpush1.msra.mxu0 0.0
    %7255 = vmatprep.subr.mxu0 0.0
    %7256 = vmatpush1.msra.mxu0 0.0
    %7257 = vmatprep.subr.mxu0 0.0
    %7258 = vmatpush1.msra.mxu0 0.0
    %7259 = vmatprep.subr.mxu0 0.0
    %7260 = vmatpush1.msra.mxu0 0.0
    %7261 = vmatprep.subr.mxu0 0.0
    %7262 = vmatpush1.msra.mxu0 0.0
    %7263 = vmatprep.subr.mxu0 0.0
    %7264 = vmatpush1.msra.mxu0 0.0
    %7265 = vmatprep.subr.mxu0 0.0
    %7266 = vmatpush1.msra.mxu0 0.0
    %7267 = vmatprep.subr.mxu0 0.0
    %7268 = vmatpush1.msra.mxu0 0.0
    %7269 = vmatprep.subr.mxu0 0.0
    %7270 = vmatpush1.msra.mxu0 %v7239
    %7271 = vmatprep.subr.mxu0 0.0
    %7272 = vmatpush1.msra.mxu0 %v7231
    %7273 = vmatprep.subr.mxu0 0.0
    %7274 = vmatpush2.msra.mxu0 0.0
    %7275 = vmatprep.subr.mxu0 0.0
    %7276 = vmatpush2.msra.mxu0 0.0
    %7277 = vmatprep.subr.mxu0 0.0
    %7278 = vmatpush2.msra.mxu0 0.0
    %7279 = vmatprep.subr.mxu0 0.0
    %7280 = vmatpush2.msra.mxu0 0.0
    %7281 = vmatprep.subr.mxu0 0.0
    %7282 = vmatpush2.msra.mxu0 0.0
    %7283 = vmatprep.subr.mxu0 0.0
    %7284 = vmatpush2.msra.mxu0 0.0
    %7285 = vmatprep.subr.mxu0 0.0
    %7286 = vmatpush2.msra.mxu0 0.0
    %7287 = vmatprep.subr.mxu0 0.0
    %7288 = vmatpush2.msra.mxu0 0.0
    %7289 = vmatprep.subr.mxu0 0.0
    %7290 = vmatpush2.msra.mxu0 0.0
    %7291 = vmatprep.subr.mxu0 0.0
    %7292 = vmatpush2.msra.mxu0 0.0
    %7293 = vmatprep.subr.mxu0 0.0
    %7294 = vmatpush2.msra.mxu0 0.0
    %7295 = vmatprep.subr.mxu0 0.0
    %7296 = vmatpush2.msra.mxu0 0.0
    %7297 = vmatprep.subr.mxu0 0.0
    %7298 = vmatpush2.msra.mxu0 0.0
    %7299 = vmatprep.subr.mxu0 0.0
    %7300 = vmatpush2.msra.mxu0 0.0
    %7301 = vmatprep.subr.mxu0 0.0
    %7302 = vmatpush2.msra.mxu0 0.0
    %7303 = vmatprep.subr.mxu0 0.0
    %7304 = vmatpush2.msra.mxu0 0.0
    %7305 = vmatprep.mubr.f32.mxu0 0.0
    %7306 = vmatmul.mubr.f32.gmra.mxu0 %v7072
    %v7307 = vpop.f32.mrf.mxu0
    %v7308 = vadd.f32 %v7237, %v7307
    %v7309 = vpop.f32.mrf.mxu0
    %7310 = vdwg.mxu0
    %v7311 = vmax.f32 %v7308, 0.0
    %v7312 = vld [vmem:[#allocation2 + $0xc3] sm:$0xff]
    %v7313 = vld [vmem:[#allocation2 + $0xcb] sm:$0xf]
    %v7314 = vld [vmem:[#allocation2 + $0xcf] sm:$0x1]
    %v7315 = vlaneseq
    %v7316 = vshrl.u32 %v7315, 7
    %v7317 = vsub.s32 0, %v7316
    %v7318 = vrot.slane %v7314, %v7317
    %v7320 = vsel %vm2250, %v7311, 0
    %v7323 = vsel %vm2059, %v7313, 0
    %7325 = vmatprep.subr.mxu0 0.0
    %7326 = vmatpush1.msra.mxu0 0.0
    %7327 = vmatprep.subr.mxu0 0.0
    %7328 = vmatpush1.msra.mxu0 0.0
    %7329 = vmatprep.subr.mxu0 0.0
    %7330 = vmatpush1.msra.mxu0 0.0
    %7331 = vmatprep.subr.mxu0 0.0
    %7332 = vmatpush1.msra.mxu0 0.0
    %7333 = vmatprep.subr.mxu0 0.0
    %7334 = vmatpush1.msra.mxu0 0.0
    %7335 = vmatprep.subr.mxu0 0.0
    %7336 = vmatpush1.msra.mxu0 0.0
    %7337 = vmatprep.subr.mxu0 0.0
    %7338 = vmatpush1.msra.mxu0 0.0
    %7339 = vmatprep.subr.mxu0 0.0
    %7340 = vmatpush1.msra.mxu0 0.0
    %7341 = vmatprep.subr.mxu0 0.0
    %7342 = vmatpush1.msra.mxu0 0.0
    %7343 = vmatprep.subr.mxu0 0.0
    %7344 = vmatpush1.msra.mxu0 0.0
    %7345 = vmatprep.subr.mxu0 0.0
    %7346 = vmatpush1.msra.mxu0 0.0
    %7347 = vmatprep.subr.mxu0 0.0
    %7348 = vmatpush1.msra.mxu0 0.0
    %7349 = vmatprep.subr.mxu0 0.0
    %7350 = vmatpush1.msra.mxu0 0.0
    %7351 = vmatprep.subr.mxu0 0.0
    %7352 = vmatpush1.msra.mxu0 0.0
    %7353 = vmatprep.subr.mxu0 0.0
    %7354 = vmatpush1.msra.mxu0 %v7323
    %7355 = vmatprep.subr.mxu0 0.0
    %7356 = vmatpush1.msra.mxu0 %v7312
    %7357 = vmatprep.subr.mxu0 0.0
    %7358 = vmatpush2.msra.mxu0 0.0
    %7359 = vmatprep.subr.mxu0 0.0
    %7360 = vmatpush2.msra.mxu0 0.0
    %7361 = vmatprep.subr.mxu0 0.0
    %7362 = vmatpush2.msra.mxu0 0.0
    %7363 = vmatprep.subr.mxu0 0.0
    %7364 = vmatpush2.msra.mxu0 0.0
    %7365 = vmatprep.subr.mxu0 0.0
    %7366 = vmatpush2.msra.mxu0 0.0
    %7367 = vmatprep.subr.mxu0 0.0
    %7368 = vmatpush2.msra.mxu0 0.0
    %7369 = vmatprep.subr.mxu0 0.0
    %7370 = vmatpush2.msra.mxu0 0.0
    %7371 = vmatprep.subr.mxu0 0.0
    %7372 = vmatpush2.msra.mxu0 0.0
    %7373 = vmatprep.subr.mxu0 0.0
    %7374 = vmatpush2.msra.mxu0 0.0
    %7375 = vmatprep.subr.mxu0 0.0
    %7376 = vmatpush2.msra.mxu0 0.0
    %7377 = vmatprep.subr.mxu0 0.0
    %7378 = vmatpush2.msra.mxu0 0.0
    %7379 = vmatprep.subr.mxu0 0.0
    %7380 = vmatpush2.msra.mxu0 0.0
    %7381 = vmatprep.subr.mxu0 0.0
    %7382 = vmatpush2.msra.mxu0 0.0
    %7383 = vmatprep.subr.mxu0 0.0
    %7384 = vmatpush2.msra.mxu0 0.0
    %7385 = vmatprep.subr.mxu0 0.0
    %7386 = vmatpush2.msra.mxu0 0.0
    %7387 = vmatprep.subr.mxu0 0.0
    %7388 = vmatpush2.msra.mxu0 0.0
    %7389 = vmatprep.mubr.f32.mxu0 0.0
    %7390 = vmatmul.mubr.f32.gmra.mxu0 %v7320
    %v7391 = vpop.f32.mrf.mxu0
    %v7392 = vadd.f32 %v7318, %v7391
    %v7393 = vpop.f32.mrf.mxu0
    %7394 = vdwg.mxu0
    %v7395 = vld [vmem:[#allocation2 + $0xd0] sm:$0xff]
    %v7396 = vld [vmem:[#allocation2 + $0xd8] sm:$0x3]
    %v7397 = vld [vmem:[#allocation2 + $0xda] sm:$0x1]
    %v7398 = vlaneseq
    %v7399 = vshrl.u32 %v7398, 7
    %v7400 = vsub.s32 0, %v7399
    %v7401 = vrot.slane %v7397, %v7400
    %v7403 = vsel %vm72, %v7396, 0
    %7405 = vmatprep.subr.mxu0 0.0
    %7406 = vmatpush1.msra.mxu0 0.0
    %7407 = vmatprep.subr.mxu0 0.0
    %7408 = vmatpush1.msra.mxu0 0.0
    %7409 = vmatprep.subr.mxu0 0.0
    %7410 = vmatpush1.msra.mxu0 0.0
    %7411 = vmatprep.subr.mxu0 0.0
    %7412 = vmatpush1.msra.mxu0 0.0
    %7413 = vmatprep.subr.mxu0 0.0
    %7414 = vmatpush1.msra.mxu0 0.0
    %7415 = vmatprep.subr.mxu0 0.0
    %7416 = vmatpush1.msra.mxu0 0.0
    %7417 = vmatprep.subr.mxu0 0.0
    %7418 = vmatpush1.msra.mxu0 0.0
    %7419 = vmatprep.subr.mxu0 0.0
    %7420 = vmatpush1.msra.mxu0 0.0
    %7421 = vmatprep.subr.mxu0 0.0
    %7422 = vmatpush1.msra.mxu0 0.0
    %7423 = vmatprep.subr.mxu0 0.0
    %7424 = vmatpush1.msra.mxu0 0.0
    %7425 = vmatprep.subr.mxu0 0.0
    %7426 = vmatpush1.msra.mxu0 0.0
    %7427 = vmatprep.subr.mxu0 0.0
    %7428 = vmatpush1.msra.mxu0 0.0
    %7429 = vmatprep.subr.mxu0 0.0
    %7430 = vmatpush1.msra.mxu0 0.0
    %7431 = vmatprep.subr.mxu0 0.0
    %7432 = vmatpush1.msra.mxu0 0.0
    %7433 = vmatprep.subr.mxu0 0.0
    %7434 = vmatpush1.msra.mxu0 %v7403
    %7435 = vmatprep.subr.mxu0 0.0
    %7436 = vmatpush1.msra.mxu0 %v7395
    %7437 = vmatprep.subr.mxu0 0.0
    %7438 = vmatpush2.msra.mxu0 0.0
    %7439 = vmatprep.subr.mxu0 0.0
    %7440 = vmatpush2.msra.mxu0 0.0
    %7441 = vmatprep.subr.mxu0 0.0
    %7442 = vmatpush2.msra.mxu0 0.0
    %7443 = vmatprep.subr.mxu0 0.0
    %7444 = vmatpush2.msra.mxu0 0.0
    %7445 = vmatprep.subr.mxu0 0.0
    %7446 = vmatpush2.msra.mxu0 0.0
    %7447 = vmatprep.subr.mxu0 0.0
    %7448 = vmatpush2.msra.mxu0 0.0
    %7449 = vmatprep.subr.mxu0 0.0
    %7450 = vmatpush2.msra.mxu0 0.0
    %7451 = vmatprep.subr.mxu0 0.0
    %7452 = vmatpush2.msra.mxu0 0.0
    %7453 = vmatprep.subr.mxu0 0.0
    %7454 = vmatpush2.msra.mxu0 0.0
    %7455 = vmatprep.subr.mxu0 0.0
    %7456 = vmatpush2.msra.mxu0 0.0
    %7457 = vmatprep.subr.mxu0 0.0
    %7458 = vmatpush2.msra.mxu0 0.0
    %7459 = vmatprep.subr.mxu0 0.0
    %7460 = vmatpush2.msra.mxu0 0.0
    %7461 = vmatprep.subr.mxu0 0.0
    %7462 = vmatpush2.msra.mxu0 0.0
    %7463 = vmatprep.subr.mxu0 0.0
    %7464 = vmatpush2.msra.mxu0 0.0
    %7465 = vmatprep.subr.mxu0 0.0
    %7466 = vmatpush2.msra.mxu0 0.0
    %7467 = vmatprep.subr.mxu0 0.0
    %7468 = vmatpush2.msra.mxu0 0.0
    %7469 = vmatprep.mubr.f32.mxu0 0.0
    %7470 = vmatmul.mubr.f32.gmra.mxu0 %v7072
    %v7471 = vpop.f32.mrf.mxu0
    %v7472 = vadd.f32 %v7401, %v7471
    %v7473 = vpop.f32.mrf.mxu0
    %7474 = vdwg.mxu0
    %v7475 = vmax.f32 %v7472, 0.0
    %v7476 = vld [vmem:[#allocation2 + $0xdb] sm:$0xff]
    %v7477 = vld [vmem:[#allocation2 + $0xe3] sm:$0xf]
    %v7478 = vld [vmem:[#allocation2 + $0xe7] sm:$0x1]
    %v7479 = vlaneseq
    %v7480 = vshrl.u32 %v7479, 7
    %v7481 = vsub.s32 0, %v7480
    %v7482 = vrot.slane %v7478, %v7481
    %v7484 = vsel %vm2250, %v7475, 0
    %v7487 = vsel %vm2059, %v7477, 0
    %7489 = vmatprep.subr.mxu0 0.0
    %7490 = vmatpush1.msra.mxu0 0.0
    %7491 = vmatprep.subr.mxu0 0.0
    %7492 = vmatpush1.msra.mxu0 0.0
    %7493 = vmatprep.subr.mxu0 0.0
    %7494 = vmatpush1.msra.mxu0 0.0
    %7495 = vmatprep.subr.mxu0 0.0
    %7496 = vmatpush1.msra.mxu0 0.0
    %7497 = vmatprep.subr.mxu0 0.0
    %7498 = vmatpush1.msra.mxu0 0.0
    %7499 = vmatprep.subr.mxu0 0.0
    %7500 = vmatpush1.msra.mxu0 0.0
    %7501 = vmatprep.subr.mxu0 0.0
    %7502 = vmatpush1.msra.mxu0 0.0
    %7503 = vmatprep.subr.mxu0 0.0
    %7504 = vmatpush1.msra.mxu0 0.0
    %7505 = vmatprep.subr.mxu0 0.0
    %7506 = vmatpush1.msra.mxu0 0.0
    %7507 = vmatprep.subr.mxu0 0.0
    %7508 = vmatpush1.msra.mxu0 0.0
    %7509 = vmatprep.subr.mxu0 0.0
    %7510 = vmatpush1.msra.mxu0 0.0
    %7511 = vmatprep.subr.mxu0 0.0
    %7512 = vmatpush1.msra.mxu0 0.0
    %7513 = vmatprep.subr.mxu0 0.0
    %7514 = vmatpush1.msra.mxu0 0.0
    %7515 = vmatprep.subr.mxu0 0.0
    %7516 = vmatpush1.msra.mxu0 0.0
    %7517 = vmatprep.subr.mxu0 0.0
    %7518 = vmatpush1.msra.mxu0 %v7487
    %7519 = vmatprep.subr.mxu0 0.0
    %7520 = vmatpush1.msra.mxu0 %v7476
    %7521 = vmatprep.subr.mxu0 0.0
    %7522 = vmatpush2.msra.mxu0 0.0
    %7523 = vmatprep.subr.mxu0 0.0
    %7524 = vmatpush2.msra.mxu0 0.0
    %7525 = vmatprep.subr.mxu0 0.0
    %7526 = vmatpush2.msra.mxu0 0.0
    %7527 = vmatprep.subr.mxu0 0.0
    %7528 = vmatpush2.msra.mxu0 0.0
    %7529 = vmatprep.subr.mxu0 0.0
    %7530 = vmatpush2.msra.mxu0 0.0
    %7531 = vmatprep.subr.mxu0 0.0
    %7532 = vmatpush2.msra.mxu0 0.0
    %7533 = vmatprep.subr.mxu0 0.0
    %7534 = vmatpush2.msra.mxu0 0.0
    %7535 = vmatprep.subr.mxu0 0.0
    %7536 = vmatpush2.msra.mxu0 0.0
    %7537 = vmatprep.subr.mxu0 0.0
    %7538 = vmatpush2.msra.mxu0 0.0
    %7539 = vmatprep.subr.mxu0 0.0
    %7540 = vmatpush2.msra.mxu0 0.0
    %7541 = vmatprep.subr.mxu0 0.0
    %7542 = vmatpush2.msra.mxu0 0.0
    %7543 = vmatprep.subr.mxu0 0.0
    %7544 = vmatpush2.msra.mxu0 0.0
    %7545 = vmatprep.subr.mxu0 0.0
    %7546 = vmatpush2.msra.mxu0 0.0
    %7547 = vmatprep.subr.mxu0 0.0
    %7548 = vmatpush2.msra.mxu0 0.0
    %7549 = vmatprep.subr.mxu0 0.0
    %7550 = vmatpush2.msra.mxu0 0.0
    %7551 = vmatprep.subr.mxu0 0.0
    %7552 = vmatpush2.msra.mxu0 0.0
    %7553 = vmatprep.mubr.f32.mxu0 0.0
    %7554 = vmatmul.mubr.f32.gmra.mxu0 %v7484
    %v7555 = vpop.f32.mrf.mxu0
    %v7556 = vadd.f32 %v7482, %v7555
    %v7557 = vpop.f32.mrf.mxu0
    %7558 = vdwg.mxu0
    %v7559 = vtanh.pop %v7228
    %v7560 = vmul.f32 %v7559, 10.0
    %v7561 = vsub.f32 %v29, %v7560
    %v7562 = vsub.f32 0.0, %v7392
    %v7563 = vmul.f32 %v7562, 1.442695
    %v7564 = vpow.pop %v7563
    %v7565 = vmul.f32 %v7561, %v7564
    %v7566 = vmul.f32 %v7565, -0.5
    %v7567 = vmul.f32 %v7566, %v7565
    %v7568 = vsub.f32 %v7567, %v7392
    %v7569 = vsub.f32 %v7568, 0.9189385
    %v7570 = vadd.f32 %v7569, %v7556
    %v7571 = vmax.f32 %v2666, %v5041
    %v7572 = vmax.f32 %v7571, %v7570
    %v7573 = vsub.f32 %v2666, %v7572
    %v7574 = vmul.f32 %v7573, 1.442695
    %v7575 = vpow.pop %v7574
    %v7576 = vadd.f32 %v7575, 0.0
    %v7577 = vsub.f32 %v5041, %v7572
    %v7578 = vmul.f32 %v7577, 1.442695
    %v7579 = vpow.pop %v7578
    %v7580 = vadd.f32 %v7576, %v7579
    %v7581 = vsub.f32 %v7570, %v7572
    %v7582 = vmul.f32 %v7581, 1.442695
    %v7583 = vpow.pop %v7582
    %v7584 = vadd.f32 %v7580, %v7583
    %v7585 = vlog2.pop %v7584
    %v7586 = vmul.f32 %v7585, 0.6931472
    %v7587 = vadd.f32 %v7572, %v7586
    %v7588 = vmax.f32 %v2652, %v5027
    %v7589 = vmax.f32 %v7588, %v7556
    %v7590 = vsub.f32 %v2652, %v7589
    %v7591 = vmul.f32 %v7590, 1.442695
    %v7592 = vpow.pop %v7591
    %v7593 = vadd.f32 %v7592, 0.0
    %v7594 = vsub.f32 %v5027, %v7589
    %v7595 = vmul.f32 %v7594, 1.442695
    %v7596 = vpow.pop %v7595
    %v7597 = vadd.f32 %v7593, %v7596
    %v7598 = vsub.f32 %v7556, %v7589
    %v7599 = vmul.f32 %v7598, 1.442695
    %v7600 = vpow.pop %v7599
    %v7601 = vadd.f32 %v7597, %v7600
    %v7602 = vlog2.pop %v7601
    %v7603 = vmul.f32 %v7602, 0.6931472
    %v7604 = vadd.f32 %v7589, %v7603
    %v7605 = vsub.f32 %v7587, %v7604
    %vm7606 = vcmask 1024
    %v7607 = vsel %vm7606, %v7605, 0.0
    %v7608 = vrot.slane %v7607, 4
    %v7609 = vadd.f32 %v7607, %v7608
    %v7610 = vrot.slane %v7609, 2
    %v7611 = vadd.f32 %v7609, %v7610
    %v7612 = vrot.slane %v7611, 1
    %v7613 = vadd.f32 %v7611, %v7612
    %v7614 = vmul.f32 %v7613, 0.5
    %v7615 = vsub.f32 0.0, %v7614
    %vm7616 = vcmask 0
    %7617 = vst.msk [vmem:[#allocation5] sm:$0x1] %vm7616, %v7615
    // Predicated region
    $region18: #{seq_gauss_mix_posterior_forward.1} parent=1 // pred_check
      _
    $region19: #{seq_gauss_mix_posterior_forward.1} parent=1 // pred_check_branch
      %7619 = sbr.rel (0) target = $region21
    $region20: #{seq_gauss_mix_posterior_forward.1} parent=1 // pred_region
      %s7621 = ssub.s32 16, 16
      %7622 = vsyncadd [#allocation4], %s7621
      %s7624 = sshll.u32 [#allocation5], 4
      %s7625 = int_to_ptr.vmem [resolvable:$true] %s7624
      %7627 = dma.vmem_to_hbm [thread:$0]  %s7625, 16, %s3, [#allocation4]
    $region21: #{seq_gauss_mix_posterior_forward.1} parent=1 // pred_fallthru
      _
    // Predicated region
    $region22: #{seq_gauss_mix_posterior_forward.1} parent=1 // pred_check
      _
    $region23: #{seq_gauss_mix_posterior_forward.1} parent=1 // pred_check_branch
      %7629 = sbr.rel (0) target = $region25
    $region24: #{seq_gauss_mix_posterior_forward.1} parent=1 // pred_region
      %7630 = dma.done [#allocation4], 16
    $region25: #{seq_gauss_mix_posterior_forward.1} parent=1 // pred_fallthru
      _
    %7631 = vsyncpa [#allocation3], 1
    %7632 = vsyncpa [#allocation4], 1

</llo_original>
